<compile_context>
chip_gen: v7x
topology: tpu7x:2x2x1
jax: 0.10.0
libtpu: 0.0.40
codegen_flags: <defaults>
</compile_context>

<pallas_src>
import functools

import jax
import jax.numpy as jnp
from jax import lax
from jax.experimental import pallas as pl
from jax.experimental.pallas import tpu as pltpu

MAX_PAD = 18  # largest dilation/padding used by ASPP (atrous_block18)


def aspp_kernel(x_ref, w_img_ref, w1_ref, w6_ref, w12_ref, w18_ref,
                b_eff_ref, out_ref, xpad_ref, *, H, W):
    Cin = x_ref.shape[-1]
    HW = H * W
    Wp = W + 2 * MAX_PAD
    cdt = x_ref.dtype

    # ---- stage the zero-padded image in the VMEM halo scratch.  Only the
    #      halo border strips are zeroed (interior is overwritten every step;
    #      re-zeroed each step so it is correct under megacore sharding). ----
    zrow = jnp.zeros((MAX_PAD, Wp, Cin), cdt)
    xpad_ref[:MAX_PAD] = zrow
    xpad_ref[MAX_PAD + H:] = zrow
    zcol = jnp.zeros((H, MAX_PAD, Cin), cdt)
    xpad_ref[MAX_PAD:MAX_PAD + H, :MAX_PAD, :] = zcol
    xpad_ref[MAX_PAD:MAX_PAD + H, MAX_PAD + W:, :] = zcol

    x = x_ref[0]                                              # [H, W, Cin]
    xpad_ref[MAX_PAD:MAX_PAD + H, MAX_PAD:MAX_PAD + W, :] = x
    x2d = x.reshape(HW, Cin)

    # ---- image-pool branch: column-sum via a ones-row MXU matmul (f32 acc),
    #      then the folded (w_img @ w_out[0:D]) projection.  Bilinear upsample
    #      of a 1x1 map is a constant broadcast == a single bias row. ----
    ones_row = jnp.ones((1, HW), cdt)
    col_sum = jnp.dot(ones_row, x2d, preferred_element_type=jnp.float32)  # [1, Cin]
    mean_row = (col_sum * (1.0 / HW)).astype(cdt)
    bias_row = b_eff_ref[...] + jnp.dot(mean_row, w_img_ref[...],
                                        preferred_element_type=jnp.float32)  # [1, D]

    # ---- atrous_block1 (1x1 conv, fusion conv already folded into weight) ----
    acc = jnp.dot(x2d, w1_ref[...], preferred_element_type=jnp.float32)      # [HW, D]

    # ---- dilated 3x3 branches: 9 accumulated matmuls per branch into the f32
    #      accumulator; W slice of the padded scratch taken once per kx. ----
    def dilated(w_ref, d, acc):
        for kx in range(3):
            ox = MAX_PAD + (kx - 1) * d
            xw = xpad_ref[:, ox:ox + W, :]                    # [Hp, W, Cin]
            for ky in range(3):
                oy = MAX_PAD + (ky - 1) * d
                tap = xw[oy:oy + H].reshape(HW, Cin)          # leading-dim slice: cheap
                acc = acc + jnp.dot(tap, w_ref[ky, kx],
                                    preferred_element_type=jnp.float32)
        return acc

    acc = dilated(w6_ref, 6, acc)
    acc = dilated(w12_ref, 12, acc)
    acc = dilated(w18_ref, 18, acc)

    # all branch biases + fusion-conv bias live in bias_row.
    out_ref[0] = (acc + bias_row).astype(out_ref.dtype)


def aspp_forward(x_nhwc, params, *, compute_dtype=jnp.float32):
    """ASPP forward.  compute_dtype=jnp.bfloat16 recommended on v6e/v7x."""
    N, H, W, Cin = x_nhwc.shape
    D = params['w1'].shape[-1]
    HW = H * W
    Hp, Wp = H + 2 * MAX_PAD, W + 2 * MAX_PAD
    cdt = compute_dtype
    f32 = jnp.float32

    # ---- fold the 5D->D fusion conv into each branch weight + one bias row ----
    w_out = params['w_out'].astype(f32)                       # [5D, D]
    wo = [w_out[i * D:(i + 1) * D] for i in range(5)]         # img, a1, a6, a12, a18
    w_img_eff = params['w_img'].astype(f32) @ wo[0]           # [Cin, D]
    w1_eff = params['w1'].astype(f32) @ wo[1]                 # [Cin, D]
    w6_eff = jnp.einsum('hwcd,de->hwce', params['w6'].astype(f32), wo[2])
    w12_eff = jnp.einsum('hwcd,de->hwce', params['w12'].astype(f32), wo[3])
    w18_eff = jnp.einsum('hwcd,de->hwce', params['w18'].astype(f32), wo[4])
    b_eff = (params['b_out'].astype(f32)
             + params['b_img'].astype(f32) @ wo[0]
             + params['b1'].astype(f32) @ wo[1]
             + params['b6'].astype(f32) @ wo[2]
             + params['b12'].astype(f32) @ wo[3]
             + params['b18'].astype(f32) @ wo[4])             # [1, D] f32

    args = (x_nhwc.astype(cdt),
            w_img_eff.astype(cdt), w1_eff.astype(cdt),
            w6_eff.astype(cdt), w12_eff.astype(cdt), w18_eff.astype(cdt),
            b_eff)

    def full_spec(a):
        nd = a.ndim
        return pl.BlockSpec(a.shape, lambda n, _nd=nd: (0,) * _nd)

    in_specs = ([pl.BlockSpec((1, H, W, Cin), lambda n: (n, 0, 0, 0))]
                + [full_spec(a) for a in args[1:]])
    # TODO(synk): if D < 128 in a deployed config, repack the output block to a
    #             lane-dense (1, H, W*D) layout to avoid masked vst stores.
    out_spec = pl.BlockSpec((1, HW, D), lambda n: (n, 0, 0))

    # ---- explicit VMEM budget, capped at ~85% of the chip's physical VMEM ----
    isz = jnp.dtype(cdt).itemsize
    weight_bytes = (2 * Cin * D + 3 * 9 * Cin * D) * isz + D * 4
    est = (2 * H * W * Cin * isz            # double-buffered input block
           + 2 * HW * D * isz               # double-buffered output block
           + Hp * Wp * Cin * isz            # halo scratch
           + 2 * weight_bytes               # resident weights (conservative 2x)
           + Hp * W * Cin * isz             # per-kx shifted slab
           + 2 * HW * max(Cin, D) * 4)      # tap copy + f32 accumulator
    try:
        phys_vmem = int(pltpu.get_tpu_info().vmem_capacity_bytes)
    except Exception:  # pragma: no cover - conservative fallback
        phys_vmem = 64 * 1024 * 1024
    vmem_limit = int(min(max(2 * est, 32 * 1024 * 1024), int(phys_vmem * 0.85)))

    flops = N * (2 * HW * Cin * D * 28      # 1x1 + 3 x 9 dilated taps (w_out folded)
                 + 2 * HW * Cin             # ones-row mean matmul
                 + 2 * Cin * D)             # image-pool projection
    bytes_accessed = int(x_nhwc.size * isz + weight_bytes
                         + N * HW * D * isz + D * 4)

    kernel = functools.partial(aspp_kernel, H=H, W=W)
    out = pl.pallas_call(
        kernel,
        out_shape=jax.ShapeDtypeStruct((N, HW, D), cdt),
        grid=(N,),
        in_specs=in_specs,
        out_specs=out_spec,
        scratch_shapes=[pltpu.VMEM((Hp, Wp, Cin), cdt)],
        compiler_params=pltpu.CompilerParams(
            dimension_semantics=("parallel",),      # independent per-batch work
            vmem_limit_bytes=vmem_limit),
        cost_estimate=pl.CostEstimate(flops=int(flops), transcendentals=0,
                                      bytes_accessed=bytes_accessed),
    )(*args)
    return out.reshape(N, H, W, D)


def init_params(key, in_channel, depth):
    ks = jax.random.split(key, 12)

    def w(k, shape, fan_in):
        return jax.random.normal(k, shape, jnp.float32) / jnp.sqrt(fan_in)

    return {
        # image-pool 1x1 conv
        'w_img': w(ks[0], (in_channel, depth), in_channel),
        'b_img': w(ks[1], (1, depth), in_channel),
        # atrous_block1 (1x1)
        'w1': w(ks[2], (in_channel, depth), in_channel),
        'b1': w(ks[3], (1, depth), in_channel),
        # atrous_block6/12/18 (3x3 dilated), HWIO layout
        'w6': w(ks[4], (3, 3, in_channel, depth), 9 * in_channel),
        'b6': w(ks[5], (1, depth), 9 * in_channel),
        'w12': w(ks[6], (3, 3, in_channel, depth), 9 * in_channel),
        'b12': w(ks[7], (1, depth), 9 * in_channel),
        'w18': w(ks[8], (3, 3, in_channel, depth), 9 * in_channel),
        'b18': w(ks[9], (1, depth), 9 * in_channel),
        # conv_1x1_output (5*depth -> depth)
        'w_out': w(ks[10], (5 * depth, depth), 5 * depth),
        'b_out': w(ks[11], (1, depth), 5 * depth),
    }


def ref_forward(x, p):
    """Pure-JAX reference matching the PyTorch ASPP forward (NHWC)."""
    N, H, W, Cin = x.shape
    D = p['w1'].shape[-1]
    img = jnp.mean(x, axis=(1, 2), keepdims=True)                      # [N,1,1,Cin]
    img = jnp.einsum('nhwc,cd->nhwd', img, p['w_img']) + p['b_img'][0]
    img = jnp.broadcast_to(img, (N, H, W, D))                          # bilinear up of 1x1
    a1 = jnp.einsum('nhwc,cd->nhwd', x, p['w1']) + p['b1'][0]

    def dil(wk, bk, d):
        y = lax.conv_general_dilated(
            x, wk, window_strides=(1, 1), padding=[(d, d), (d, d)],
            rhs_dilation=(d, d),
            dimension_numbers=('NHWC', 'HWIO', 'NHWC'))
        return y + bk[0]

    a6 = dil(p['w6'], p['b6'], 6)
    a12 = dil(p['w12'], p['b12'], 12)
    a18 = dil(p['w18'], p['b18'], 18)
    feat = jnp.concatenate([img, a1, a6, a12, a18], axis=-1)
    return jnp.einsum('nhwc,cd->nhwd', feat, p['w_out']) + p['b_out'][0]


if __name__ == "__main__":
    # small shapes consistent with the module's forward (in_channel, depth scaled down)
    N, H, W = 2, 16, 16
    in_channel, depth = 8, 8

    key = jax.random.PRNGKey(0)
    kx, kp = jax.random.split(key)
    x = jax.random.normal(kx, (N, H, W, in_channel), jnp.float32)
    params = init_params(kp, in_channel, depth)

    out = jax.block_until_ready(aspp_forward(x, params))
    ref = jax.block_until_ready(ref_forward(x, params))
    assert out.shape == (N, H, W, depth)
    assert jnp.allclose(out, ref, rtol=1e-4, atol=1e-4), "mismatch vs reference"

    print("KERNEL_OK")
</pallas_src>

<mosaic_0001>
module attributes {stable_mosaic.version = 11 : i64} {
  func.func @aspp_kernel(%arg0: i32, %arg1: memref<1x16x16x8xf32, #tpu.memory_space<vmem>>, %arg2: memref<8x8xf32, #tpu.memory_space<vmem>>, %arg3: memref<8x8xf32, #tpu.memory_space<vmem>>, %arg4: memref<3x3x8x8xf32, #tpu.memory_space<vmem>>, %arg5: memref<3x3x8x8xf32, #tpu.memory_space<vmem>>, %arg6: memref<3x3x8x8xf32, #tpu.memory_space<vmem>>, %arg7: memref<1x8xf32, #tpu.memory_space<vmem>>, %arg8: memref<1x256x8xf32, #tpu.memory_space<vmem>>, %arg9: memref<52x52x8xf32, #tpu.memory_space<vmem>>) attributes {dimension_semantics = [#tpu.dimension_semantics<parallel>], iteration_bounds = array<i64: 2>, scalar_prefetch = 0 : i64, scratch_operands = 1 : i64, tpu.core_type = #tpu.core_type<tc>, window_params = [{transform_indices = @transform_0, window_bounds = array<i64: 1, 16, 16, 8>}, {pipeline_mode = #tpu.pipeline_mode<synchronous>, transform_indices = @transform_1, window_bounds = array<i64: 8, 8>}, {pipeline_mode = #tpu.pipeline_mode<synchronous>, transform_indices = @transform_2, window_bounds = array<i64: 8, 8>}, {pipeline_mode = #tpu.pipeline_mode<synchronous>, transform_indices = @transform_3, window_bounds = array<i64: 3, 3, 8, 8>}, {pipeline_mode = #tpu.pipeline_mode<synchronous>, transform_indices = @transform_4, window_bounds = array<i64: 3, 3, 8, 8>}, {pipeline_mode = #tpu.pipeline_mode<synchronous>, transform_indices = @transform_5, window_bounds = array<i64: 3, 3, 8, 8>}, {pipeline_mode = #tpu.pipeline_mode<synchronous>, transform_indices = @transform_6, window_bounds = array<i64: 1, 8>}, {transform_indices = @transform_7, window_bounds = array<i64: 1, 256, 8>}]} {
    %cst = arith.constant 0.000000e+00 : f32
    %0 = vector.broadcast %cst : f32 to vector<18x52x8xf32>
    %c0 = arith.constant 0 : index
    %c0_0 = arith.constant 0 : index
    %c0_1 = arith.constant 0 : index
    %1 = vector.load %arg9[%c0, %c0_0, %c0_1] : memref<52x52x8xf32, #tpu.memory_space<vmem>>, vector<18x52x8xf32>
    tpu.vector_store %arg9[%c0, %c0_0, %c0_1], %0 {strides = array<i32>} : memref<52x52x8xf32, #tpu.memory_space<vmem>>, vector<18x52x8xf32>,
    %c34 = arith.constant 34 : index
    %c0_2 = arith.constant 0 : index
    %c0_3 = arith.constant 0 : index
    %2 = vector.load %arg9[%c34, %c0_2, %c0_3] : memref<52x52x8xf32, #tpu.memory_space<vmem>>, vector<18x52x8xf32>
    tpu.vector_store %arg9[%c34, %c0_2, %c0_3], %0 {strides = array<i32>} : memref<52x52x8xf32, #tpu.memory_space<vmem>>, vector<18x52x8xf32>,
    %cst_4 = arith.constant 0.000000e+00 : f32
    %3 = vector.broadcast %cst_4 : f32 to vector<16x18x8xf32>
    %c18 = arith.constant 18 : index
    %c0_5 = arith.constant 0 : index
    %c0_6 = arith.constant 0 : index
    %4 = vector.load %arg9[%c18, %c0_5, %c0_6] : memref<52x52x8xf32, #tpu.memory_space<vmem>>, vector<16x18x8xf32>
    tpu.vector_store %arg9[%c18, %c0_5, %c0_6], %3 {strides = array<i32>} : memref<52x52x8xf32, #tpu.memory_space<vmem>>, vector<16x18x8xf32>,
    %c18_7 = arith.constant 18 : index
    %c34_8 = arith.constant 34 : index
    %c0_9 = arith.constant 0 : index
    %5 = vector.load %arg9[%c18_7, %c34_8, %c0_9] : memref<52x52x8xf32, #tpu.memory_space<vmem>>, vector<16x18x8xf32>
    tpu.vector_store %arg9[%c18_7, %c34_8, %c0_9], %3 {strides = array<i32>} : memref<52x52x8xf32, #tpu.memory_space<vmem>>, vector<16x18x8xf32>,
    %c0_10 = arith.constant 0 : index
    %c0_11 = arith.constant 0 : index
    %c0_12 = arith.constant 0 : index
    %c0_13 = arith.constant 0 : index
    %6 = vector.load %arg1[%c0_10, %c0_11, %c0_12, %c0_13] : memref<1x16x16x8xf32, #tpu.memory_space<vmem>>, vector<1x16x16x8xf32>
    %7 = vector.shape_cast %6 : vector<1x16x16x8xf32> to vector<16x16x8xf32>
    %c18_14 = arith.constant 18 : index
    %c18_15 = arith.constant 18 : index
    %c0_16 = arith.constant 0 : index
    %8 = vector.load %arg9[%c18_14, %c18_15, %c0_16] : memref<52x52x8xf32, #tpu.memory_space<vmem>>, vector<16x16x8xf32>
    tpu.vector_store %arg9[%c18_14, %c18_15, %c0_16], %7 {strides = array<i32>} : memref<52x52x8xf32, #tpu.memory_space<vmem>>, vector<16x16x8xf32>,
    %9 = vector.shape_cast %7 : vector<16x16x8xf32> to vector<256x8xf32>
    %cst_17 = arith.constant 1.000000e+00 : f32
    %10 = vector.broadcast %cst_17 : f32 to vector<1x256xf32>
    %cst_18 = arith.constant dense<0.000000e+00> : vector<1x8xf32>
    %11 = tpu.matmul %10, %9, %cst_18 {dimension_numbers = #tpu.dot_dimension_numbers<[1], [0], [0], [1], [0, 0, 1, 1], [], []>} : vector<1x256xf32>, vector<256x8xf32>, vector<1x8xf32> -> vector<1x8xf32>
    %cst_19 = arith.constant 3.906250e-03 : f32
    %12 = vector.broadcast %cst_19 : f32 to vector<1x8xf32>
    %13 = arith.mulf %11, %12 : vector<1x8xf32>
    %c0_20 = arith.constant 0 : index
    %c0_21 = arith.constant 0 : index
    %14 = vector.load %arg7[%c0_20, %c0_21] : memref<1x8xf32, #tpu.memory_space<vmem>>, vector<1x8xf32>
    %c0_22 = arith.constant 0 : index
    %c0_23 = arith.constant 0 : index
    %15 = vector.load %arg2[%c0_22, %c0_23] : memref<8x8xf32, #tpu.memory_space<vmem>>, vector<8x8xf32>
    %cst_24 = arith.constant dense<0.000000e+00> : vector<1x8xf32>
    %16 = tpu.matmul %13, %15, %cst_24 {dimension_numbers = #tpu.dot_dimension_numbers<[1], [0], [0], [1], [0, 0, 1, 1], [], []>} : vector<1x8xf32>, vector<8x8xf32>, vector<1x8xf32> -> vector<1x8xf32>
    %17 = arith.addf %14, %16 : vector<1x8xf32>
    %c0_25 = arith.constant 0 : index
    %c0_26 = arith.constant 0 : index
    %18 = vector.load %arg3[%c0_25, %c0_26] : memref<8x8xf32, #tpu.memory_space<vmem>>, vector<8x8xf32>
    %cst_27 = arith.constant dense<0.000000e+00> : vector<256x8xf32>
    %19 = tpu.matmul %9, %18, %cst_27 {dimension_numbers = #tpu.dot_dimension_numbers<[1], [0], [0], [1], [0, 0, 1, 1], [], []>} : vector<256x8xf32>, vector<8x8xf32>, vector<256x8xf32> -> vector<256x8xf32>
    %c0_28 = arith.constant 0 : index
    %c12 = arith.constant 12 : index
    %c0_29 = arith.constant 0 : index
    %20 = vector.load %arg9[%c0_28, %c12, %c0_29] : memref<52x52x8xf32, #tpu.memory_space<vmem>>, vector<52x16x8xf32>
    %21 = vector.extract_strided_slice %20 {offsets = [12, 0, 0], sizes = [16, 16, 8], strides = [1, 1, 1]} : vector<52x16x8xf32> to vector<16x16x8xf32>
    %22 = vector.shape_cast %21 : vector<16x16x8xf32> to vector<256x8xf32>
    %c0_30 = arith.constant 0 : index
    %c0_31 = arith.constant 0 : index
    %c0_32 = arith.constant 0 : index
    %c0_33 = arith.constant 0 : index
    %23 = vector.load %arg4[%c0_30, %c0_31, %c0_32, %c0_33] : memref<3x3x8x8xf32, #tpu.memory_space<vmem>>, vector<1x1x8x8xf32>
    %24 = vector.shape_cast %23 : vector<1x1x8x8xf32> to vector<8x8xf32>
    %cst_34 = arith.constant dense<0.000000e+00> : vector<256x8xf32>
    %25 = tpu.matmul %22, %24, %cst_34 {dimension_numbers = #tpu.dot_dimension_numbers<[1], [0], [0], [1], [0, 0, 1, 1], [], []>} : vector<256x8xf32>, vector<8x8xf32>, vector<256x8xf32> -> vector<256x8xf32>
    %26 = arith.addf %19, %25 : vector<256x8xf32>
    %27 = vector.extract_strided_slice %20 {offsets = [18, 0, 0], sizes = [16, 16, 8], strides = [1, 1, 1]} : vector<52x16x8xf32> to vector<16x16x8xf32>
    %28 = vector.shape_cast %27 : vector<16x16x8xf32> to vector<256x8xf32>
    %c1 = arith.constant 1 : index
    %c0_35 = arith.constant 0 : index
    %c0_36 = arith.constant 0 : index
    %c0_37 = arith.constant 0 : index
    %29 = vector.load %arg4[%c1, %c0_35, %c0_36, %c0_37] : memref<3x3x8x8xf32, #tpu.memory_space<vmem>>, vector<1x1x8x8xf32>
    %30 = vector.shape_cast %29 : vector<1x1x8x8xf32> to vector<8x8xf32>
    %cst_38 = arith.constant dense<0.000000e+00> : vector<256x8xf32>
    %31 = tpu.matmul %28, %30, %cst_38 {dimension_numbers = #tpu.dot_dimension_numbers<[1], [0], [0], [1], [0, 0, 1, 1], [], []>} : vector<256x8xf32>, vector<8x8xf32>, vector<256x8xf32> -> vector<256x8xf32>
    %32 = arith.addf %26, %31 : vector<256x8xf32>
    %33 = vector.extract_strided_slice %20 {offsets = [24, 0, 0], sizes = [16, 16, 8], strides = [1, 1, 1]} : vector<52x16x8xf32> to vector<16x16x8xf32>
    %34 = vector.shape_cast %33 : vector<16x16x8xf32> to vector<256x8xf32>
    %c2 = arith.constant 2 : index
    %c0_39 = arith.constant 0 : index
    %c0_40 = arith.constant 0 : index
    %c0_41 = arith.constant 0 : index
    %35 = vector.load %arg4[%c2, %c0_39, %c0_40, %c0_41] : memref<3x3x8x8xf32, #tpu.memory_space<vmem>>, vector<1x1x8x8xf32>
    %36 = vector.shape_cast %35 : vector<1x1x8x8xf32> to vector<8x8xf32>
    %cst_42 = arith.constant dense<0.000000e+00> : vector<256x8xf32>
    %37 = tpu.matmul %34, %36, %cst_42 {dimension_numbers = #tpu.dot_dimension_numbers<[1], [0], [0], [1], [0, 0, 1, 1], [], []>} : vector<256x8xf32>, vector<8x8xf32>, vector<256x8xf32> -> vector<256x8xf32>
    %38 = arith.addf %32, %37 : vector<256x8xf32>
    %c0_43 = arith.constant 0 : index
    %c18_44 = arith.constant 18 : index
    %c0_45 = arith.constant 0 : index
    %39 = vector.load %arg9[%c0_43, %c18_44, %c0_45] : memref<52x52x8xf32, #tpu.memory_space<vmem>>, vector<52x16x8xf32>
    %40 = vector.extract_strided_slice %39 {offsets = [12, 0, 0], sizes = [16, 16, 8], strides = [1, 1, 1]} : vector<52x16x8xf32> to vector<16x16x8xf32>
    %41 = vector.shape_cast %40 : vector<16x16x8xf32> to vector<256x8xf32>
    %c0_46 = arith.constant 0 : index
    %c1_47 = arith.constant 1 : index
    %c0_48 = arith.constant 0 : index
    %c0_49 = arith.constant 0 : index
    %42 = vector.load %arg4[%c0_46, %c1_47, %c0_48, %c0_49] : memref<3x3x8x8xf32, #tpu.memory_space<vmem>>, vector<1x1x8x8xf32>
    %43 = vector.shape_cast %42 : vector<1x1x8x8xf32> to vector<8x8xf32>
    %cst_50 = arith.constant dense<0.000000e+00> : vector<256x8xf32>
    %44 = tpu.matmul %41, %43, %cst_50 {dimension_numbers = #tpu.dot_dimension_numbers<[1], [0], [0], [1], [0, 0, 1, 1], [], []>} : vector<256x8xf32>, vector<8x8xf32>, vector<256x8xf32> -> vector<256x8xf32>
    %45 = arith.addf %38, %44 : vector<256x8xf32>
    %46 = vector.extract_strided_slice %39 {offsets = [18, 0, 0], sizes = [16, 16, 8], strides = [1, 1, 1]} : vector<52x16x8xf32> to vector<16x16x8xf32>
    %47 = vector.shape_cast %46 : vector<16x16x8xf32> to vector<256x8xf32>
    %c1_51 = arith.constant 1 : index
    %c1_52 = arith.constant 1 : index
    %c0_53 = arith.constant 0 : index
    %c0_54 = arith.constant 0 : index
    %48 = vector.load %arg4[%c1_51, %c1_52, %c0_53, %c0_54] : memref<3x3x8x8xf32, #tpu.memory_space<vmem>>, vector<1x1x8x8xf32>
    %49 = vector.shape_cast %48 : vector<1x1x8x8xf32> to vector<8x8xf32>
    %cst_55 = arith.constant dense<0.000000e+00> : vector<256x8xf32>
    %50 = tpu.matmul %47, %49, %cst_55 {dimension_numbers = #tpu.dot_dimension_numbers<[1], [0], [0], [1], [0, 0, 1, 1], [], []>} : vector<256x8xf32>, vector<8x8xf32>, vector<256x8xf32> -> vector<256x8xf32>
    %51 = arith.addf %45, %50 : vector<256x8xf32>
    %52 = vector.extract_strided_slice %39 {offsets = [24, 0, 0], sizes = [16, 16, 8], strides = [1, 1, 1]} : vector<52x16x8xf32> to vector<16x16x8xf32>
    %53 = vector.shape_cast %52 : vector<16x16x8xf32> to vector<256x8xf32>
    %c2_56 = arith.constant 2 : index
    %c1_57 = arith.constant 1 : index
    %c0_58 = arith.constant 0 : index
    %c0_59 = arith.constant 0 : index
    %54 = vector.load %arg4[%c2_56, %c1_57, %c0_58, %c0_59] : memref<3x3x8x8xf32, #tpu.memory_space<vmem>>, vector<1x1x8x8xf32>
    %55 = vector.shape_cast %54 : vector<1x1x8x8xf32> to vector<8x8xf32>
    %cst_60 = arith.constant dense<0.000000e+00> : vector<256x8xf32>
    %56 = tpu.matmul %53, %55, %cst_60 {dimension_numbers = #tpu.dot_dimension_numbers<[1], [0], [0], [1], [0, 0, 1, 1], [], []>} : vector<256x8xf32>, vector<8x8xf32>, vector<256x8xf32> -> vector<256x8xf32>
    %57 = arith.addf %51, %56 : vector<256x8xf32>
    %c0_61 = arith.constant 0 : index
    %c24 = arith.constant 24 : index
    %c0_62 = arith.constant 0 : index
    %58 = vector.load %arg9[%c0_61, %c24, %c0_62] : memref<52x52x8xf32, #tpu.memory_space<vmem>>, vector<52x16x8xf32>
    %59 = vector.extract_strided_slice %58 {offsets = [12, 0, 0], sizes = [16, 16, 8], strides = [1, 1, 1]} : vector<52x16x8xf32> to vector<16x16x8xf32>
    %60 = vector.shape_cast %59 : vector<16x16x8xf32> to vector<256x8xf32>
    %c0_63 = arith.constant 0 : index
    %c2_64 = arith.constant 2 : index
    %c0_65 = arith.constant 0 : index
    %c0_66 = arith.constant 0 : index
    %61 = vector.load %arg4[%c0_63, %c2_64, %c0_65, %c0_66] : memref<3x3x8x8xf32, #tpu.memory_space<vmem>>, vector<1x1x8x8xf32>
    %62 = vector.shape_cast %61 : vector<1x1x8x8xf32> to vector<8x8xf32>
    %cst_67 = arith.constant dense<0.000000e+00> : vector<256x8xf32>
    %63 = tpu.matmul %60, %62, %cst_67 {dimension_numbers = #tpu.dot_dimension_numbers<[1], [0], [0], [1], [0, 0, 1, 1], [], []>} : vector<256x8xf32>, vector<8x8xf32>, vector<256x8xf32> -> vector<256x8xf32>
    %64 = arith.addf %57, %63 : vector<256x8xf32>
    %65 = vector.extract_strided_slice %58 {offsets = [18, 0, 0], sizes = [16, 16, 8], strides = [1, 1, 1]} : vector<52x16x8xf32> to vector<16x16x8xf32>
    %66 = vector.shape_cast %65 : vector<16x16x8xf32> to vector<256x8xf32>
    %c1_68 = arith.constant 1 : index
    %c2_69 = arith.constant 2 : index
    %c0_70 = arith.constant 0 : index
    %c0_71 = arith.constant 0 : index
    %67 = vector.load %arg4[%c1_68, %c2_69, %c0_70, %c0_71] : memref<3x3x8x8xf32, #tpu.memory_space<vmem>>, vector<1x1x8x8xf32>
    %68 = vector.shape_cast %67 : vector<1x1x8x8xf32> to vector<8x8xf32>
    %cst_72 = arith.constant dense<0.000000e+00> : vector<256x8xf32>
    %69 = tpu.matmul %66, %68, %cst_72 {dimension_numbers = #tpu.dot_dimension_numbers<[1], [0], [0], [1], [0, 0, 1, 1], [], []>} : vector<256x8xf32>, vector<8x8xf32>, vector<256x8xf32> -> vector<256x8xf32>
    %70 = arith.addf %64, %69 : vector<256x8xf32>
    %71 = vector.extract_strided_slice %58 {offsets = [24, 0, 0], sizes = [16, 16, 8], strides = [1, 1, 1]} : vector<52x16x8xf32> to vector<16x16x8xf32>
    %72 = vector.shape_cast %71 : vector<16x16x8xf32> to vector<256x8xf32>
    %c2_73 = arith.constant 2 : index
    %c2_74 = arith.constant 2 : index
    %c0_75 = arith.constant 0 : index
    %c0_76 = arith.constant 0 : index
    %73 = vector.load %arg4[%c2_73, %c2_74, %c0_75, %c0_76] : memref<3x3x8x8xf32, #tpu.memory_space<vmem>>, vector<1x1x8x8xf32>
    %74 = vector.shape_cast %73 : vector<1x1x8x8xf32> to vector<8x8xf32>
    %cst_77 = arith.constant dense<0.000000e+00> : vector<256x8xf32>
    %75 = tpu.matmul %72, %74, %cst_77 {dimension_numbers = #tpu.dot_dimension_numbers<[1], [0], [0], [1], [0, 0, 1, 1], [], []>} : vector<256x8xf32>, vector<8x8xf32>, vector<256x8xf32> -> vector<256x8xf32>
    %76 = arith.addf %70, %75 : vector<256x8xf32>
    %c0_78 = arith.constant 0 : index
    %c6 = arith.constant 6 : index
    %c0_79 = arith.constant 0 : index
    %77 = vector.load %arg9[%c0_78, %c6, %c0_79] : memref<52x52x8xf32, #tpu.memory_space<vmem>>, vector<52x16x8xf32>
    %78 = vector.extract_strided_slice %77 {offsets = [6, 0, 0], sizes = [16, 16, 8], strides = [1, 1, 1]} : vector<52x16x8xf32> to vector<16x16x8xf32>
    %79 = vector.shape_cast %78 : vector<16x16x8xf32> to vector<256x8xf32>
    %c0_80 = arith.constant 0 : index
    %c0_81 = arith.constant 0 : index
    %c0_82 = arith.constant 0 : index
    %c0_83 = arith.constant 0 : index
    %80 = vector.load %arg5[%c0_80, %c0_81, %c0_82, %c0_83] : memref<3x3x8x8xf32, #tpu.memory_space<vmem>>, vector<1x1x8x8xf32>
    %81 = vector.shape_cast %80 : vector<1x1x8x8xf32> to vector<8x8xf32>
    %cst_84 = arith.constant dense<0.000000e+00> : vector<256x8xf32>
    %82 = tpu.matmul %79, %81, %cst_84 {dimension_numbers = #tpu.dot_dimension_numbers<[1], [0], [0], [1], [0, 0, 1, 1], [], []>} : vector<256x8xf32>, vector<8x8xf32>, vector<256x8xf32> -> vector<256x8xf32>
    %83 = arith.addf %76, %82 : vector<256x8xf32>
    %84 = vector.extract_strided_slice %77 {offsets = [18, 0, 0], sizes = [16, 16, 8], strides = [1, 1, 1]} : vector<52x16x8xf32> to vector<16x16x8xf32>
    %85 = vector.shape_cast %84 : vector<16x16x8xf32> to vector<256x8xf32>
    %c1_85 = arith.constant 1 : index
    %c0_86 = arith.constant 0 : index
    %c0_87 = arith.constant 0 : index
    %c0_88 = arith.constant 0 : index
    %86 = vector.load %arg5[%c1_85, %c0_86, %c0_87, %c0_88] : memref<3x3x8x8xf32, #tpu.memory_space<vmem>>, vector<1x1x8x8xf32>
    %87 = vector.shape_cast %86 : vector<1x1x8x8xf32> to vector<8x8xf32>
    %cst_89 = arith.constant dense<0.000000e+00> : vector<256x8xf32>
    %88 = tpu.matmul %85, %87, %cst_89 {dimension_numbers = #tpu.dot_dimension_numbers<[1], [0], [0], [1], [0, 0, 1, 1], [], []>} : vector<256x8xf32>, vector<8x8xf32>, vector<256x8xf32> -> vector<256x8xf32>
    %89 = arith.addf %83, %88 : vector<256x8xf32>
    %90 = vector.extract_strided_slice %77 {offsets = [30, 0, 0], sizes = [16, 16, 8], strides = [1, 1, 1]} : vector<52x16x8xf32> to vector<16x16x8xf32>
    %91 = vector.shape_cast %90 : vector<16x16x8xf32> to vector<256x8xf32>
    %c2_90 = arith.constant 2 : index
    %c0_91 = arith.constant 0 : index
    %c0_92 = arith.constant 0 : index
    %c0_93 = arith.constant 0 : index
    %92 = vector.load %arg5[%c2_90, %c0_91, %c0_92, %c0_93] : memref<3x3x8x8xf32, #tpu.memory_space<vmem>>, vector<1x1x8x8xf32>
    %93 = vector.shape_cast %92 : vector<1x1x8x8xf32> to vector<8x8xf32>
    %cst_94 = arith.constant dense<0.000000e+00> : vector<256x8xf32>
    %94 = tpu.matmul %91, %93, %cst_94 {dimension_numbers = #tpu.dot_dimension_numbers<[1], [0], [0], [1], [0, 0, 1, 1], [], []>} : vector<256x8xf32>, vector<8x8xf32>, vector<256x8xf32> -> vector<256x8xf32>
    %95 = arith.addf %89, %94 : vector<256x8xf32>
    %c0_95 = arith.constant 0 : index
    %c18_96 = arith.constant 18 : index
    %c0_97 = arith.constant 0 : index
    %96 = vector.load %arg9[%c0_95, %c18_96, %c0_97] : memref<52x52x8xf32, #tpu.memory_space<vmem>>, vector<52x16x8xf32>
    %97 = vector.extract_strided_slice %96 {offsets = [6, 0, 0], sizes = [16, 16, 8], strides = [1, 1, 1]} : vector<52x16x8xf32> to vector<16x16x8xf32>
    %98 = vector.shape_cast %97 : vector<16x16x8xf32> to vector<256x8xf32>
    %c0_98 = arith.constant 0 : index
    %c1_99 = arith.constant 1 : index
    %c0_100 = arith.constant 0 : index
    %c0_101 = arith.constant 0 : index
    %99 = vector.load %arg5[%c0_98, %c1_99, %c0_100, %c0_101] : memref<3x3x8x8xf32, #tpu.memory_space<vmem>>, vector<1x1x8x8xf32>
    %100 = vector.shape_cast %99 : vector<1x1x8x8xf32> to vector<8x8xf32>
    %cst_102 = arith.constant dense<0.000000e+00> : vector<256x8xf32>
    %101 = tpu.matmul %98, %100, %cst_102 {dimension_numbers = #tpu.dot_dimension_numbers<[1], [0], [0], [1], [0, 0, 1, 1], [], []>} : vector<256x8xf32>, vector<8x8xf32>, vector<256x8xf32> -> vector<256x8xf32>
    %102 = arith.addf %95, %101 : vector<256x8xf32>
    %103 = vector.extract_strided_slice %96 {offsets = [18, 0, 0], sizes = [16, 16, 8], strides = [1, 1, 1]} : vector<52x16x8xf32> to vector<16x16x8xf32>
    %104 = vector.shape_cast %103 : vector<16x16x8xf32> to vector<256x8xf32>
    %c1_103 = arith.constant 1 : index
    %c1_104 = arith.constant 1 : index
    %c0_105 = arith.constant 0 : index
    %c0_106 = arith.constant 0 : index
    %105 = vector.load %arg5[%c1_103, %c1_104, %c0_105, %c0_106] : memref<3x3x8x8xf32, #tpu.memory_space<vmem>>, vector<1x1x8x8xf32>
    %106 = vector.shape_cast %105 : vector<1x1x8x8xf32> to vector<8x8xf32>
    %cst_107 = arith.constant dense<0.000000e+00> : vector<256x8xf32>
    %107 = tpu.matmul %104, %106, %cst_107 {dimension_numbers = #tpu.dot_dimension_numbers<[1], [0], [0], [1], [0, 0, 1, 1], [], []>} : vector<256x8xf32>, vector<8x8xf32>, vector<256x8xf32> -> vector<256x8xf32>
    %108 = arith.addf %102, %107 : vector<256x8xf32>
    %109 = vector.extract_strided_slice %96 {offsets = [30, 0, 0], sizes = [16, 16, 8], strides = [1, 1, 1]} : vector<52x16x8xf32> to vector<16x16x8xf32>
    %110 = vector.shape_cast %109 : vector<16x16x8xf32> to vector<256x8xf32>
    %c2_108 = arith.constant 2 : index
    %c1_109 = arith.constant 1 : index
    %c0_110 = arith.constant 0 : index
    %c0_111 = arith.constant 0 : index
    %111 = vector.load %arg5[%c2_108, %c1_109, %c0_110, %c0_111] : memref<3x3x8x8xf32, #tpu.memory_space<vmem>>, vector<1x1x8x8xf32>
    %112 = vector.shape_cast %111 : vector<1x1x8x8xf32> to vector<8x8xf32>
    %cst_112 = arith.constant dense<0.000000e+00> : vector<256x8xf32>
    %113 = tpu.matmul %110, %112, %cst_112 {dimension_numbers = #tpu.dot_dimension_numbers<[1], [0], [0], [1], [0, 0, 1, 1], [], []>} : vector<256x8xf32>, vector<8x8xf32>, vector<256x8xf32> -> vector<256x8xf32>
    %114 = arith.addf %108, %113 : vector<256x8xf32>
    %c0_113 = arith.constant 0 : index
    %c30 = arith.constant 30 : index
    %c0_114 = arith.constant 0 : index
    %115 = vector.load %arg9[%c0_113, %c30, %c0_114] : memref<52x52x8xf32, #tpu.memory_space<vmem>>, vector<52x16x8xf32>
    %116 = vector.extract_strided_slice %115 {offsets = [6, 0, 0], sizes = [16, 16, 8], strides = [1, 1, 1]} : vector<52x16x8xf32> to vector<16x16x8xf32>
    %117 = vector.shape_cast %116 : vector<16x16x8xf32> to vector<256x8xf32>
    %c0_115 = arith.constant 0 : index
    %c2_116 = arith.constant 2 : index
    %c0_117 = arith.constant 0 : index
    %c0_118 = arith.constant 0 : index
    %118 = vector.load %arg5[%c0_115, %c2_116, %c0_117, %c0_118] : memref<3x3x8x8xf32, #tpu.memory_space<vmem>>, vector<1x1x8x8xf32>
    %119 = vector.shape_cast %118 : vector<1x1x8x8xf32> to vector<8x8xf32>
    %cst_119 = arith.constant dense<0.000000e+00> : vector<256x8xf32>
    %120 = tpu.matmul %117, %119, %cst_119 {dimension_numbers = #tpu.dot_dimension_numbers<[1], [0], [0], [1], [0, 0, 1, 1], [], []>} : vector<256x8xf32>, vector<8x8xf32>, vector<256x8xf32> -> vector<256x8xf32>
    %121 = arith.addf %114, %120 : vector<256x8xf32>
    %122 = vector.extract_strided_slice %115 {offsets = [18, 0, 0], sizes = [16, 16, 8], strides = [1, 1, 1]} : vector<52x16x8xf32> to vector<16x16x8xf32>
    %123 = vector.shape_cast %122 : vector<16x16x8xf32> to vector<256x8xf32>
    %c1_120 = arith.constant 1 : index
    %c2_121 = arith.constant 2 : index
    %c0_122 = arith.constant 0 : index
    %c0_123 = arith.constant 0 : index
    %124 = vector.load %arg5[%c1_120, %c2_121, %c0_122, %c0_123] : memref<3x3x8x8xf32, #tpu.memory_space<vmem>>, vector<1x1x8x8xf32>
    %125 = vector.shape_cast %124 : vector<1x1x8x8xf32> to vector<8x8xf32>
    %cst_124 = arith.constant dense<0.000000e+00> : vector<256x8xf32>
    %126 = tpu.matmul %123, %125, %cst_124 {dimension_numbers = #tpu.dot_dimension_numbers<[1], [0], [0], [1], [0, 0, 1, 1], [], []>} : vector<256x8xf32>, vector<8x8xf32>, vector<256x8xf32> -> vector<256x8xf32>
    %127 = arith.addf %121, %126 : vector<256x8xf32>
    %128 = vector.extract_strided_slice %115 {offsets = [30, 0, 0], sizes = [16, 16, 8], strides = [1, 1, 1]} : vector<52x16x8xf32> to vector<16x16x8xf32>
    %129 = vector.shape_cast %128 : vector<16x16x8xf32> to vector<256x8xf32>
    %c2_125 = arith.constant 2 : index
    %c2_126 = arith.constant 2 : index
    %c0_127 = arith.constant 0 : index
    %c0_128 = arith.constant 0 : index
    %130 = vector.load %arg5[%c2_125, %c2_126, %c0_127, %c0_128] : memref<3x3x8x8xf32, #tpu.memory_space<vmem>>, vector<1x1x8x8xf32>
    %131 = vector.shape_cast %130 : vector<1x1x8x8xf32> to vector<8x8xf32>
    %cst_129 = arith.constant dense<0.000000e+00> : vector<256x8xf32>
    %132 = tpu.matmul %129, %131, %cst_129 {dimension_numbers = #tpu.dot_dimension_numbers<[1], [0], [0], [1], [0, 0, 1, 1], [], []>} : vector<256x8xf32>, vector<8x8xf32>, vector<256x8xf32> -> vector<256x8xf32>
    %133 = arith.addf %127, %132 : vector<256x8xf32>
    %c0_130 = arith.constant 0 : index
    %c0_131 = arith.constant 0 : index
    %c0_132 = arith.constant 0 : index
    %134 = vector.load %arg9[%c0_130, %c0_131, %c0_132] : memref<52x52x8xf32, #tpu.memory_space<vmem>>, vector<52x16x8xf32>
    %135 = vector.extract_strided_slice %134 {offsets = [0, 0, 0], sizes = [16, 16, 8], strides = [1, 1, 1]} : vector<52x16x8xf32> to vector<16x16x8xf32>
    %136 = vector.shape_cast %135 : vector<16x16x8xf32> to vector<256x8xf32>
    %c0_133 = arith.constant 0 : index
    %c0_134 = arith.constant 0 : index
    %c0_135 = arith.constant 0 : index
    %c0_136 = arith.constant 0 : index
    %137 = vector.load %arg6[%c0_133, %c0_134, %c0_135, %c0_136] : memref<3x3x8x8xf32, #tpu.memory_space<vmem>>, vector<1x1x8x8xf32>
    %138 = vector.shape_cast %137 : vector<1x1x8x8xf32> to vector<8x8xf32>
    %cst_137 = arith.constant dense<0.000000e+00> : vector<256x8xf32>
    %139 = tpu.matmul %136, %138, %cst_137 {dimension_numbers = #tpu.dot_dimension_numbers<[1], [0], [0], [1], [0, 0, 1, 1], [], []>} : vector<256x8xf32>, vector<8x8xf32>, vector<256x8xf32> -> vector<256x8xf32>
    %140 = arith.addf %133, %139 : vector<256x8xf32>
    %141 = vector.extract_strided_slice %134 {offsets = [18, 0, 0], sizes = [16, 16, 8], strides = [1, 1, 1]} : vector<52x16x8xf32> to vector<16x16x8xf32>
    %142 = vector.shape_cast %141 : vector<16x16x8xf32> to vector<256x8xf32>
    %c1_138 = arith.constant 1 : index
    %c0_139 = arith.constant 0 : index
    %c0_140 = arith.constant 0 : index
    %c0_141 = arith.constant 0 : index
    %143 = vector.load %arg6[%c1_138, %c0_139, %c0_140, %c0_141] : memref<3x3x8x8xf32, #tpu.memory_space<vmem>>, vector<1x1x8x8xf32>
    %144 = vector.shape_cast %143 : vector<1x1x8x8xf32> to vector<8x8xf32>
    %cst_142 = arith.constant dense<0.000000e+00> : vector<256x8xf32>
    %145 = tpu.matmul %142, %144, %cst_142 {dimension_numbers = #tpu.dot_dimension_numbers<[1], [0], [0], [1], [0, 0, 1, 1], [], []>} : vector<256x8xf32>, vector<8x8xf32>, vector<256x8xf32> -> vector<256x8xf32>
    %146 = arith.addf %140, %145 : vector<256x8xf32>
    %147 = vector.extract_strided_slice %134 {offsets = [36, 0, 0], sizes = [16, 16, 8], strides = [1, 1, 1]} : vector<52x16x8xf32> to vector<16x16x8xf32>
    %148 = vector.shape_cast %147 : vector<16x16x8xf32> to vector<256x8xf32>
    %c2_143 = arith.constant 2 : index
    %c0_144 = arith.constant 0 : index
    %c0_145 = arith.constant 0 : index
    %c0_146 = arith.constant 0 : index
    %149 = vector.load %arg6[%c2_143, %c0_144, %c0_145, %c0_146] : memref<3x3x8x8xf32, #tpu.memory_space<vmem>>, vector<1x1x8x8xf32>
    %150 = vector.shape_cast %149 : vector<1x1x8x8xf32> to vector<8x8xf32>
    %cst_147 = arith.constant dense<0.000000e+00> : vector<256x8xf32>
    %151 = tpu.matmul %148, %150, %cst_147 {dimension_numbers = #tpu.dot_dimension_numbers<[1], [0], [0], [1], [0, 0, 1, 1], [], []>} : vector<256x8xf32>, vector<8x8xf32>, vector<256x8xf32> -> vector<256x8xf32>
    %152 = arith.addf %146, %151 : vector<256x8xf32>
    %c0_148 = arith.constant 0 : index
    %c18_149 = arith.constant 18 : index
    %c0_150 = arith.constant 0 : index
    %153 = vector.load %arg9[%c0_148, %c18_149, %c0_150] : memref<52x52x8xf32, #tpu.memory_space<vmem>>, vector<52x16x8xf32>
    %154 = vector.extract_strided_slice %153 {offsets = [0, 0, 0], sizes = [16, 16, 8], strides = [1, 1, 1]} : vector<52x16x8xf32> to vector<16x16x8xf32>
    %155 = vector.shape_cast %154 : vector<16x16x8xf32> to vector<256x8xf32>
    %c0_151 = arith.constant 0 : index
    %c1_152 = arith.constant 1 : index
    %c0_153 = arith.constant 0 : index
    %c0_154 = arith.constant 0 : index
    %156 = vector.load %arg6[%c0_151, %c1_152, %c0_153, %c0_154] : memref<3x3x8x8xf32, #tpu.memory_space<vmem>>, vector<1x1x8x8xf32>
    %157 = vector.shape_cast %156 : vector<1x1x8x8xf32> to vector<8x8xf32>
    %cst_155 = arith.constant dense<0.000000e+00> : vector<256x8xf32>
    %158 = tpu.matmul %155, %157, %cst_155 {dimension_numbers = #tpu.dot_dimension_numbers<[1], [0], [0], [1], [0, 0, 1, 1], [], []>} : vector<256x8xf32>, vector<8x8xf32>, vector<256x8xf32> -> vector<256x8xf32>
    %159 = arith.addf %152, %158 : vector<256x8xf32>
    %160 = vector.extract_strided_slice %153 {offsets = [18, 0, 0], sizes = [16, 16, 8], strides = [1, 1, 1]} : vector<52x16x8xf32> to vector<16x16x8xf32>
    %161 = vector.shape_cast %160 : vector<16x16x8xf32> to vector<256x8xf32>
    %c1_156 = arith.constant 1 : index
    %c1_157 = arith.constant 1 : index
    %c0_158 = arith.constant 0 : index
    %c0_159 = arith.constant 0 : index
    %162 = vector.load %arg6[%c1_156, %c1_157, %c0_158, %c0_159] : memref<3x3x8x8xf32, #tpu.memory_space<vmem>>, vector<1x1x8x8xf32>
    %163 = vector.shape_cast %162 : vector<1x1x8x8xf32> to vector<8x8xf32>
    %cst_160 = arith.constant dense<0.000000e+00> : vector<256x8xf32>
    %164 = tpu.matmul %161, %163, %cst_160 {dimension_numbers = #tpu.dot_dimension_numbers<[1], [0], [0], [1], [0, 0, 1, 1], [], []>} : vector<256x8xf32>, vector<8x8xf32>, vector<256x8xf32> -> vector<256x8xf32>
    %165 = arith.addf %159, %164 : vector<256x8xf32>
    %166 = vector.extract_strided_slice %153 {offsets = [36, 0, 0], sizes = [16, 16, 8], strides = [1, 1, 1]} : vector<52x16x8xf32> to vector<16x16x8xf32>
    %167 = vector.shape_cast %166 : vector<16x16x8xf32> to vector<256x8xf32>
    %c2_161 = arith.constant 2 : index
    %c1_162 = arith.constant 1 : index
    %c0_163 = arith.constant 0 : index
    %c0_164 = arith.constant 0 : index
    %168 = vector.load %arg6[%c2_161, %c1_162, %c0_163, %c0_164] : memref<3x3x8x8xf32, #tpu.memory_space<vmem>>, vector<1x1x8x8xf32>
    %169 = vector.shape_cast %168 : vector<1x1x8x8xf32> to vector<8x8xf32>
    %cst_165 = arith.constant dense<0.000000e+00> : vector<256x8xf32>
    %170 = tpu.matmul %167, %169, %cst_165 {dimension_numbers = #tpu.dot_dimension_numbers<[1], [0], [0], [1], [0, 0, 1, 1], [], []>} : vector<256x8xf32>, vector<8x8xf32>, vector<256x8xf32> -> vector<256x8xf32>
    %171 = arith.addf %165, %170 : vector<256x8xf32>
    %c0_166 = arith.constant 0 : index
    %c36 = arith.constant 36 : index
    %c0_167 = arith.constant 0 : index
    %172 = vector.load %arg9[%c0_166, %c36, %c0_167] : memref<52x52x8xf32, #tpu.memory_space<vmem>>, vector<52x16x8xf32>
    %173 = vector.extract_strided_slice %172 {offsets = [0, 0, 0], sizes = [16, 16, 8], strides = [1, 1, 1]} : vector<52x16x8xf32> to vector<16x16x8xf32>
    %174 = vector.shape_cast %173 : vector<16x16x8xf32> to vector<256x8xf32>
    %c0_168 = arith.constant 0 : index
    %c2_169 = arith.constant 2 : index
    %c0_170 = arith.constant 0 : index
    %c0_171 = arith.constant 0 : index
    %175 = vector.load %arg6[%c0_168, %c2_169, %c0_170, %c0_171] : memref<3x3x8x8xf32, #tpu.memory_space<vmem>>, vector<1x1x8x8xf32>
    %176 = vector.shape_cast %175 : vector<1x1x8x8xf32> to vector<8x8xf32>
    %cst_172 = arith.constant dense<0.000000e+00> : vector<256x8xf32>
    %177 = tpu.matmul %174, %176, %cst_172 {dimension_numbers = #tpu.dot_dimension_numbers<[1], [0], [0], [1], [0, 0, 1, 1], [], []>} : vector<256x8xf32>, vector<8x8xf32>, vector<256x8xf32> -> vector<256x8xf32>
    %178 = arith.addf %171, %177 : vector<256x8xf32>
    %179 = vector.extract_strided_slice %172 {offsets = [18, 0, 0], sizes = [16, 16, 8], strides = [1, 1, 1]} : vector<52x16x8xf32> to vector<16x16x8xf32>
    %180 = vector.shape_cast %179 : vector<16x16x8xf32> to vector<256x8xf32>
    %c1_173 = arith.constant 1 : index
    %c2_174 = arith.constant 2 : index
    %c0_175 = arith.constant 0 : index
    %c0_176 = arith.constant 0 : index
    %181 = vector.load %arg6[%c1_173, %c2_174, %c0_175, %c0_176] : memref<3x3x8x8xf32, #tpu.memory_space<vmem>>, vector<1x1x8x8xf32>
    %182 = vector.shape_cast %181 : vector<1x1x8x8xf32> to vector<8x8xf32>
    %cst_177 = arith.constant dense<0.000000e+00> : vector<256x8xf32>
    %183 = tpu.matmul %180, %182, %cst_177 {dimension_numbers = #tpu.dot_dimension_numbers<[1], [0], [0], [1], [0, 0, 1, 1], [], []>} : vector<256x8xf32>, vector<8x8xf32>, vector<256x8xf32> -> vector<256x8xf32>
    %184 = arith.addf %178, %183 : vector<256x8xf32>
    %185 = vector.extract_strided_slice %172 {offsets = [36, 0, 0], sizes = [16, 16, 8], strides = [1, 1, 1]} : vector<52x16x8xf32> to vector<16x16x8xf32>
    %186 = vector.shape_cast %185 : vector<16x16x8xf32> to vector<256x8xf32>
    %c2_178 = arith.constant 2 : index
    %c2_179 = arith.constant 2 : index
    %c0_180 = arith.constant 0 : index
    %c0_181 = arith.constant 0 : index
    %187 = vector.load %arg6[%c2_178, %c2_179, %c0_180, %c0_181] : memref<3x3x8x8xf32, #tpu.memory_space<vmem>>, vector<1x1x8x8xf32>
    %188 = vector.shape_cast %187 : vector<1x1x8x8xf32> to vector<8x8xf32>
    %cst_182 = arith.constant dense<0.000000e+00> : vector<256x8xf32>
    %189 = tpu.matmul %186, %188, %cst_182 {dimension_numbers = #tpu.dot_dimension_numbers<[1], [0], [0], [1], [0, 0, 1, 1], [], []>} : vector<256x8xf32>, vector<8x8xf32>, vector<256x8xf32> -> vector<256x8xf32>
    %190 = arith.addf %184, %189 : vector<256x8xf32>
    %191 = vector.broadcast %17 : vector<1x8xf32> to vector<256x8xf32>
    %192 = arith.addf %190, %191 : vector<256x8xf32>
    %c0_183 = arith.constant 0 : index
    %c0_184 = arith.constant 0 : index
    %c0_185 = arith.constant 0 : index
    %193 = vector.load %arg8[%c0_183, %c0_184, %c0_185] : memref<1x256x8xf32, #tpu.memory_space<vmem>>, vector<1x256x8xf32>
    %194 = vector.shape_cast %193 : vector<1x256x8xf32> to vector<256x8xf32>
    %195 = vector.shape_cast %192 : vector<256x8xf32> to vector<1x256x8xf32>
    tpu.vector_store %arg8[%c0_183, %c0_184, %c0_185], %195 {strides = array<i32>} : memref<1x256x8xf32, #tpu.memory_space<vmem>>, vector<1x256x8xf32>,
    return
  }
  func.func @transform_0(%arg0: i32) -> (i32, i32, i32, i32) {
    %c0_i32 = arith.constant 0 : i32
    %c0_i32_0 = arith.constant 0 : i32
    %c0_i32_1 = arith.constant 0 : i32
    %c0_i32_2 = arith.constant 0 : i32
    return %arg0, %c0_i32, %c0_i32_0, %c0_i32_1 : i32, i32, i32, i32
  }
  func.func @transform_1(%arg0: i32) -> (i32, i32) {
    %c0_i32 = arith.constant 0 : i32
    %c0_i32_0 = arith.constant 0 : i32
    %c0_i32_1 = arith.constant 0 : i32
    return %c0_i32, %c0_i32_0 : i32, i32
  }
  func.func @transform_2(%arg0: i32) -> (i32, i32) {
    %c0_i32 = arith.constant 0 : i32
    %c0_i32_0 = arith.constant 0 : i32
    %c0_i32_1 = arith.constant 0 : i32
    return %c0_i32, %c0_i32_0 : i32, i32
  }
  func.func @transform_3(%arg0: i32) -> (i32, i32, i32, i32) {
    %c0_i32 = arith.constant 0 : i32
    %c0_i32_0 = arith.constant 0 : i32
    %c0_i32_1 = arith.constant 0 : i32
    %c0_i32_2 = arith.constant 0 : i32
    %c0_i32_3 = arith.constant 0 : i32
    return %c0_i32, %c0_i32_0, %c0_i32_1, %c0_i32_2 : i32, i32, i32, i32
  }
  func.func @transform_4(%arg0: i32) -> (i32, i32, i32, i32) {
    %c0_i32 = arith.constant 0 : i32
    %c0_i32_0 = arith.constant 0 : i32
    %c0_i32_1 = arith.constant 0 : i32
    %c0_i32_2 = arith.constant 0 : i32
    %c0_i32_3 = arith.constant 0 : i32
    return %c0_i32, %c0_i32_0, %c0_i32_1, %c0_i32_2 : i32, i32, i32, i32
  }
  func.func @transform_5(%arg0: i32) -> (i32, i32, i32, i32) {
    %c0_i32 = arith.constant 0 : i32
    %c0_i32_0 = arith.constant 0 : i32
    %c0_i32_1 = arith.constant 0 : i32
    %c0_i32_2 = arith.constant 0 : i32
    %c0_i32_3 = arith.constant 0 : i32
    return %c0_i32, %c0_i32_0, %c0_i32_1, %c0_i32_2 : i32, i32, i32, i32
  }
  func.func @transform_6(%arg0: i32) -> (i32, i32) {
    %c0_i32 = arith.constant 0 : i32
    %c0_i32_0 = arith.constant 0 : i32
    %c0_i32_1 = arith.constant 0 : i32
    return %c0_i32, %c0_i32_0 : i32, i32
  }
  func.func @transform_7(%arg0: i32) -> (i32, i32, i32) {
    %c0_i32 = arith.constant 0 : i32
    %c0_i32_0 = arith.constant 0 : i32
    %c0_i32_1 = arith.constant 0 : i32
    return %arg0, %c0_i32, %c0_i32_0 : i32, i32, i32
  }
}

</mosaic_0001>

<llo_original>
// kernel: tpu_custom_call.1
$region0: #{tpu_custom_call.1}
  #allocation0 [shape = 'u32[]', space=smem, size = 0x4, offset = 0x4, fixed_abs, tag = 'smem constant byte address 0x4 - core index']
  #allocation1 [shape = 'u32[144,128]{1,0:T(1,128)}', space=vmem, size = 0x12000, scoped, tag = 'internal scratch']
  #allocation2 [shape = 'f32[52,52,8]{2,1,0:T(8,128)}', space=vmem, size = 0x16c000, scoped, tag = 'scratch operand']
  %s0 = inlined_call_operand.vmem [shape: f32[2,16,16,8], index: 0, kind: input, shape index: {}]
  %s1 = inlined_call_operand.vmem [shape: f32[8,8], index: 1, kind: input, shape index: {}]
  %s2 = inlined_call_operand.vmem [shape: f32[8,8], index: 2, kind: input, shape index: {}]
  %s3 = inlined_call_operand.vmem [shape: f32[3,3,8,8], index: 3, kind: input, shape index: {}]
  %s4 = inlined_call_operand.vmem [shape: f32[3,3,8,8], index: 4, kind: input, shape index: {}]
  %s5 = inlined_call_operand.vmem [shape: f32[3,3,8,8], index: 5, kind: input, shape index: {}]
  %s6 = inlined_call_operand.vmem [shape: f32[1,8], index: 6, kind: input, shape index: {}]
  %s7 = inlined_call_operand.vmem [shape: f32[2,256,8], index: 7, kind: output, shape index: {}]
  %s8 = sld [smem:[#allocation0]]
  $region61: #{tpu_custom_call.1} parent=0
    _
  %s10 = ssub.s32 1, %s8
  %s11 = scalar_select 0, %s10, %s8
  loop: start=0, step=1, limit=4
  $region2: #{tpu_custom_call.1} parent=0 // loop_pre_header
    _
  $region3: #{tpu_custom_call.1} parent=0 // loop_header
    %s13 = sphi 0, %s17
    %p14 = scmp.ge.s32.totalorder %s13, 4
    %s23 = sphi 0, %s25
    %s26 = sphi 0, %s23
    %s27 = sphi 0, %s26
    %s43 = sphi 0, %s27
    %s47 = sphi 0, %s47
    %s49 = sphi 0, %s47
    %s50 = sphi 0, %s49
    %s64 = sphi 0, %s50
    %s68 = sphi 0, %s68
    %s70 = sphi 0, %s68
    %s71 = sphi 0, %s70
    %s85 = sphi 0, %s71
    %s89 = sphi 0, %s89
    %s91 = sphi 0, %s89
    %s92 = sphi 0, %s91
    %s106 = sphi 0, %s92
    %s110 = sphi 0, %s110
    %s112 = sphi 0, %s110
    %s113 = sphi 0, %s112
    %s127 = sphi 0, %s113
    %s131 = sphi 0, %s131
    %s133 = sphi 0, %s131
    %s134 = sphi 0, %s133
    %s148 = sphi 0, %s134
    %s152 = sphi 0, %s152
    %s154 = sphi 0, %s152
    %s155 = sphi 0, %s154
    %s169 = sphi 0, %s155
    %s175 = sphi 0, %s177
    %s178 = sphi 0, %s175
    %s179 = sphi 0, %s178
    %s195 = sphi 0, %s179
  $region4: #{tpu_custom_call.1} parent=0 // loop_header_branch
    %16 = sbr.rel (%p14) target = $region8
  $region5: #{tpu_custom_call.1} parent=0 // loop_body
    %s18 = ssub.s32 %s13, 1
    %s19 = ssub.s32 %s13, 2
    %s20 = sadd.s32 %s13, 1
    %s21 = ssub.s32 %s13, %s20
    %p22 = scmp.eq.s32.totalorder %s21, 0
    %s24 = sadd.s32 %s23, 1
    %s25 = scalar_select %p22, %s23, %s24
    %p28 = pneg %p22
    %p29 = scmp.eq.s32.totalorder %s13, 1
    %p30 = por %p28, %p29
    %p31 = scmp.ne.s32.totalorder %s23, %s26
    %p32 = scmp.eq.s32.totalorder %s13, 0
    %p33 = por %p31, %p32
    %p34 = scmp.ne.s32.totalorder %s23, %s26
    %p35 = scmp.eq.s32.totalorder %s18, 1
    %p36 = por %p34, %p35
    %p37 = scmp.ne.s32.totalorder %s26, %s27
    %p38 = scmp.eq.s32.totalorder %s18, 0
    %p39 = por %p37, %p38
    %p40 = scmp.ne.s32.totalorder %s26, %s27
    %p41 = scmp.eq.s32.totalorder %s19, 1
    %p42 = por %p40, %p41
    %p44 = scmp.ne.s32.totalorder %s27, %s43
    %p45 = scmp.eq.s32.totalorder %s19, 0
    %p46 = por %p44, %p45
    %s48 = sadd.s32 %s47, 1
    %p51 = scmp.eq.s32.totalorder %s13, 1
    %p52 = scmp.ne.s32.totalorder %s47, %s49
    %p53 = scmp.eq.s32.totalorder %s13, 0
    %p54 = por %p52, %p53
    %p55 = scmp.ne.s32.totalorder %s47, %s49
    %p56 = scmp.eq.s32.totalorder %s18, 1
    %p57 = por %p55, %p56
    %p58 = scmp.ne.s32.totalorder %s49, %s50
    %p59 = scmp.eq.s32.totalorder %s18, 0
    %p60 = por %p58, %p59
    %p61 = scmp.ne.s32.totalorder %s49, %s50
    %p62 = scmp.eq.s32.totalorder %s19, 1
    %p63 = por %p61, %p62
    %p65 = scmp.ne.s32.totalorder %s50, %s64
    %p66 = scmp.eq.s32.totalorder %s19, 0
    %p67 = por %p65, %p66
    %s69 = sadd.s32 %s68, 1
    %p72 = scmp.eq.s32.totalorder %s13, 1
    %p73 = scmp.ne.s32.totalorder %s68, %s70
    %p74 = scmp.eq.s32.totalorder %s13, 0
    %p75 = por %p73, %p74
    %p76 = scmp.ne.s32.totalorder %s68, %s70
    %p77 = scmp.eq.s32.totalorder %s18, 1
    %p78 = por %p76, %p77
    %p79 = scmp.ne.s32.totalorder %s70, %s71
    %p80 = scmp.eq.s32.totalorder %s18, 0
    %p81 = por %p79, %p80
    %p82 = scmp.ne.s32.totalorder %s70, %s71
    %p83 = scmp.eq.s32.totalorder %s19, 1
    %p84 = por %p82, %p83
    %p86 = scmp.ne.s32.totalorder %s71, %s85
    %p87 = scmp.eq.s32.totalorder %s19, 0
    %p88 = por %p86, %p87
    %s90 = sadd.s32 %s89, 1
    %p93 = scmp.eq.s32.totalorder %s13, 1
    %p94 = scmp.ne.s32.totalorder %s89, %s91
    %p95 = scmp.eq.s32.totalorder %s13, 0
    %p96 = por %p94, %p95
    %p97 = scmp.ne.s32.totalorder %s89, %s91
    %p98 = scmp.eq.s32.totalorder %s18, 1
    %p99 = por %p97, %p98
    %p100 = scmp.ne.s32.totalorder %s91, %s92
    %p101 = scmp.eq.s32.totalorder %s18, 0
    %p102 = por %p100, %p101
    %p103 = scmp.ne.s32.totalorder %s91, %s92
    %p104 = scmp.eq.s32.totalorder %s19, 1
    %p105 = por %p103, %p104
    %p107 = scmp.ne.s32.totalorder %s92, %s106
    %p108 = scmp.eq.s32.totalorder %s19, 0
    %p109 = por %p107, %p108
    %s111 = sadd.s32 %s110, 1
    %p114 = scmp.eq.s32.totalorder %s13, 1
    %p115 = scmp.ne.s32.totalorder %s110, %s112
    %p116 = scmp.eq.s32.totalorder %s13, 0
    %p117 = por %p115, %p116
    %p118 = scmp.ne.s32.totalorder %s110, %s112
    %p119 = scmp.eq.s32.totalorder %s18, 1
    %p120 = por %p118, %p119
    %p121 = scmp.ne.s32.totalorder %s112, %s113
    %p122 = scmp.eq.s32.totalorder %s18, 0
    %p123 = por %p121, %p122
    %p124 = scmp.ne.s32.totalorder %s112, %s113
    %p125 = scmp.eq.s32.totalorder %s19, 1
    %p126 = por %p124, %p125
    %p128 = scmp.ne.s32.totalorder %s113, %s127
    %p129 = scmp.eq.s32.totalorder %s19, 0
    %p130 = por %p128, %p129
    %s132 = sadd.s32 %s131, 1
    %p135 = scmp.eq.s32.totalorder %s13, 1
    %p136 = scmp.ne.s32.totalorder %s131, %s133
    %p137 = scmp.eq.s32.totalorder %s13, 0
    %p138 = por %p136, %p137
    %p139 = scmp.ne.s32.totalorder %s131, %s133
    %p140 = scmp.eq.s32.totalorder %s18, 1
    %p141 = por %p139, %p140
    %p142 = scmp.ne.s32.totalorder %s133, %s134
    %p143 = scmp.eq.s32.totalorder %s18, 0
    %p144 = por %p142, %p143
    %p145 = scmp.ne.s32.totalorder %s133, %s134
    %p146 = scmp.eq.s32.totalorder %s19, 1
    %p147 = por %p145, %p146
    %p149 = scmp.ne.s32.totalorder %s134, %s148
    %p150 = scmp.eq.s32.totalorder %s19, 0
    %p151 = por %p149, %p150
    %s153 = sadd.s32 %s152, 1
    %p156 = scmp.eq.s32.totalorder %s13, 1
    %p157 = scmp.ne.s32.totalorder %s152, %s154
    %p158 = scmp.eq.s32.totalorder %s13, 0
    %p159 = por %p157, %p158
    %p160 = scmp.ne.s32.totalorder %s152, %s154
    %p161 = scmp.eq.s32.totalorder %s18, 1
    %p162 = por %p160, %p161
    %p163 = scmp.ne.s32.totalorder %s154, %s155
    %p164 = scmp.eq.s32.totalorder %s18, 0
    %p165 = por %p163, %p164
    %p166 = scmp.ne.s32.totalorder %s154, %s155
    %p167 = scmp.eq.s32.totalorder %s19, 1
    %p168 = por %p166, %p167
    %p170 = scmp.ne.s32.totalorder %s155, %s169
    %p171 = scmp.eq.s32.totalorder %s19, 0
    %p172 = por %p170, %p171
    %s173 = ssub.s32 %s13, %s20
    %p174 = scmp.eq.s32.totalorder %s173, 0
    %s176 = sadd.s32 %s175, 1
    %s177 = scalar_select %p174, %s175, %s176
    %p180 = pneg %p174
    %p181 = scmp.eq.s32.totalorder %s13, 1
    %p182 = por %p180, %p181
    %p183 = scmp.ne.s32.totalorder %s175, %s178
    %p184 = scmp.eq.s32.totalorder %s13, 0
    %p185 = por %p183, %p184
    %p186 = scmp.ne.s32.totalorder %s175, %s178
    %p187 = scmp.eq.s32.totalorder %s18, 1
    %p188 = por %p186, %p187
    %p189 = scmp.ne.s32.totalorder %s178, %s179
    %p190 = scmp.eq.s32.totalorder %s18, 0
    %p191 = por %p189, %p190
    %p192 = scmp.ne.s32.totalorder %s178, %s179
    %p193 = scmp.eq.s32.totalorder %s19, 1
    %p194 = por %p192, %p193
    %p196 = scmp.ne.s32.totalorder %s179, %s195
    %p197 = scmp.eq.s32.totalorder %s19, 0
    %p198 = por %p196, %p197
    %p199 = scmp.le.s32.totalorder 1, %s13
    %p200 = scmp.lt.s32.totalorder %s13, 3
    %p201 = pnand %p199, %p200
    %p202 = pneg %p201
    // Predicated region
    $region9: #{tpu_custom_call.1} parent=5 // pred_check
      _
    $region10: #{tpu_custom_call.1} parent=5 // pred_check_branch
      %204 = sbr.rel (%p201) target = $region12
    $region11: #{tpu_custom_call.1} parent=5 // pred_region
      %s205 = ssub.s32 %s13, 1
      // Predicated region
      $region13: #{tpu_custom_call.1} parent=11 // pred_check
        %p206 = pneg %p60
      $region14: #{tpu_custom_call.1} parent=11 // pred_check_branch
        %208 = sbr.rel (%p206) target = $region16
      $region15: #{tpu_custom_call.1} parent=11 // pred_region
        _
      $region16: #{tpu_custom_call.1} parent=11 // pred_fallthru
        _
      // Predicated region
      $region17: #{tpu_custom_call.1} parent=11 // pred_check
        %p209 = pneg %p81
      $region18: #{tpu_custom_call.1} parent=11 // pred_check_branch
        %211 = sbr.rel (%p209) target = $region20
      $region19: #{tpu_custom_call.1} parent=11 // pred_region
        _
      $region20: #{tpu_custom_call.1} parent=11 // pred_fallthru
        _
      // Predicated region
      $region21: #{tpu_custom_call.1} parent=11 // pred_check
        %p212 = pneg %p102
      $region22: #{tpu_custom_call.1} parent=11 // pred_check_branch
        %214 = sbr.rel (%p212) target = $region24
      $region23: #{tpu_custom_call.1} parent=11 // pred_region
        _
      $region24: #{tpu_custom_call.1} parent=11 // pred_fallthru
        _
      // Predicated region
      $region25: #{tpu_custom_call.1} parent=11 // pred_check
        %p215 = pneg %p123
      $region26: #{tpu_custom_call.1} parent=11 // pred_check_branch
        %217 = sbr.rel (%p215) target = $region28
      $region27: #{tpu_custom_call.1} parent=11 // pred_region
        _
      $region28: #{tpu_custom_call.1} parent=11 // pred_fallthru
        _
      // Predicated region
      $region29: #{tpu_custom_call.1} parent=11 // pred_check
        %p218 = pneg %p144
      $region30: #{tpu_custom_call.1} parent=11 // pred_check_branch
        %220 = sbr.rel (%p218) target = $region32
      $region31: #{tpu_custom_call.1} parent=11 // pred_region
        _
      $region32: #{tpu_custom_call.1} parent=11 // pred_fallthru
        _
      // Predicated region
      $region33: #{tpu_custom_call.1} parent=11 // pred_check
        %p221 = pneg %p165
      $region34: #{tpu_custom_call.1} parent=11 // pred_check_branch
        %223 = sbr.rel (%p221) target = $region36
      $region35: #{tpu_custom_call.1} parent=11 // pred_region
        _
      $region36: #{tpu_custom_call.1} parent=11 // pred_fallthru
        _
    $region12: #{tpu_custom_call.1} parent=5 // pred_fallthru
      _
    %p224 = scmp.lt.s32.totalorder %s13, 2
    // Predicated region
    $region37: #{tpu_custom_call.1} parent=5 // pred_check
      %p225 = pneg %p224
    $region38: #{tpu_custom_call.1} parent=5 // pred_check_branch
      %227 = sbr.rel (%p225) target = $region40
    $region39: #{tpu_custom_call.1} parent=5 // pred_region
      // Predicated region
      $region41: #{tpu_custom_call.1} parent=39 // pred_check
        %p228 = pneg %p33
      $region42: #{tpu_custom_call.1} parent=39 // pred_check_branch
        %230 = sbr.rel (%p228) target = $region44
      $region43: #{tpu_custom_call.1} parent=39 // pred_region
        %p231 = scmp.lt.s32.totalorder %s13, 1
        %s232 = scalar_select %p231, %s13, 1
        %s233 = smul.addr %s232, 32
        %s234 = smul.addr %s233, 8
        %s235 = scalar_lea.vmem %s0, %s234
      $region44: #{tpu_custom_call.1} parent=39 // pred_fallthru
        _
    $region40: #{tpu_custom_call.1} parent=5 // pred_fallthru
      _
    %p236 = scmp.le.s32.totalorder 1, %s13
    %p237 = scmp.lt.s32.totalorder %s13, 3
    %p238 = pnand %p236, %p237
    %p239 = pneg %p238
    // Predicated region
    $region45: #{tpu_custom_call.1} parent=5 // pred_check
      _
    $region46: #{tpu_custom_call.1} parent=5 // pred_check_branch
      %241 = sbr.rel (%p238) target = $region48
    $region47: #{tpu_custom_call.1} parent=5 // pred_region
      %s242 = ssub.s32 %s13, 1
      %p243 = scmp.lt.s32.totalorder %s18, 1
      %s244 = scalar_select %p243, %s18, 1
      %s245 = smul.addr %s244, 32
      %s246 = smul.addr %s245, 8
      %s247 = scalar_lea.vmem %s0, %s246
      %p248 = pneg %p39
      %p249 = pneg %p36
      %p250 = pneg %p60
      %p251 = pneg %p57
      %p252 = pneg %p81
      %p253 = pneg %p78
      %p254 = pneg %p102
      %p255 = pneg %p99
      %p256 = pneg %p123
      %p257 = pneg %p120
      %p258 = pneg %p144
      %p259 = pneg %p141
      %p260 = pneg %p165
      %p261 = pneg %p162
      %p262 = pneg %p191
      %p263 = pneg %p188
      %p264 = scmp.lt.s32.totalorder %s18, 1
      %s265 = scalar_select %p264, %s18, 1
      %s266 = smul.addr %s265, 32
      %s267 = smul.addr %s266, 8
      %s268 = scalar_lea.vmem %s7, %s267
      %p269 = scmp.lt.s32.totalorder %s18, 1
      %s270 = scalar_select %p269, %s18, 1
      %s271 = smul.addr %s270, 32
      %s272 = smul.addr %s271, 8
      %s273 = scalar_lea.vmem %s0, %s272
      %p274 = scmp.lt.s32.totalorder %s18, 1
      %s275 = scalar_select %p274, %s18, 1
      %s276 = smul.addr %s275, 32
      %s277 = smul.addr %s276, 8
      %s278 = scalar_lea.vmem %s7, %s277
      %vm279 = vcmask 64512
      %280 = vst.msk [vmem:[#allocation2] sm:$0xff] %vm279, 0.0
      %281 = vst.msk [vmem:[#allocation2 + $0x8] sm:$0xff] %vm279, 0.0
      %282 = vst.msk [vmem:[#allocation2 + $0x10] sm:$0xff] %vm279, 0.0
      %283 = vst.msk [vmem:[#allocation2 + $0x18] sm:$0xff] %vm279, 0.0
      %284 = vst.msk [vmem:[#allocation2 + $0x20] sm:$0xff] %vm279, 0.0
      %285 = vst.msk [vmem:[#allocation2 + $0x28] sm:$0xff] %vm279, 0.0
      %vm286 = vcmask 60416
      %287 = vst.msk [vmem:[#allocation2 + $0x30] sm:$0xf] %vm286, 0.0
      %288 = vst.msk [vmem:[#allocation2 + $0x38] sm:$0xff] %vm279, 0.0
      %289 = vst.msk [vmem:[#allocation2 + $0x40] sm:$0xff] %vm279, 0.0
      %290 = vst.msk [vmem:[#allocation2 + $0x48] sm:$0xff] %vm279, 0.0
      %291 = vst.msk [vmem:[#allocation2 + $0x50] sm:$0xff] %vm279, 0.0
      %292 = vst.msk [vmem:[#allocation2 + $0x58] sm:$0xff] %vm279, 0.0
      %293 = vst.msk [vmem:[#allocation2 + $0x60] sm:$0xff] %vm279, 0.0
      %294 = vst.msk [vmem:[#allocation2 + $0x68] sm:$0xf] %vm286, 0.0
      %295 = vst.msk [vmem:[#allocation2 + $0x70] sm:$0xff] %vm279, 0.0
      %296 = vst.msk [vmem:[#allocation2 + $0x78] sm:$0xff] %vm279, 0.0
      %297 = vst.msk [vmem:[#allocation2 + $0x80] sm:$0xff] %vm279, 0.0
      %298 = vst.msk [vmem:[#allocation2 + $0x88] sm:$0xff] %vm279, 0.0
      %299 = vst.msk [vmem:[#allocation2 + $0x90] sm:$0xff] %vm279, 0.0
      %300 = vst.msk [vmem:[#allocation2 + $0x98] sm:$0xff] %vm279, 0.0
      %301 = vst.msk [vmem:[#allocation2 + $0xa0] sm:$0xf] %vm286, 0.0
      %302 = vst.msk [vmem:[#allocation2 + $0xa8] sm:$0xff] %vm279, 0.0
      %303 = vst.msk [vmem:[#allocation2 + $0xb0] sm:$0xff] %vm279, 0.0
      %304 = vst.msk [vmem:[#allocation2 + $0xb8] sm:$0xff] %vm279, 0.0
      %305 = vst.msk [vmem:[#allocation2 + $0xc0] sm:$0xff] %vm279, 0.0
      %306 = vst.msk [vmem:[#allocation2 + $0xc8] sm:$0xff] %vm279, 0.0
      %307 = vst.msk [vmem:[#allocation2 + $0xd0] sm:$0xff] %vm279, 0.0
      %308 = vst.msk [vmem:[#allocation2 + $0xd8] sm:$0xf] %vm286, 0.0
      %309 = vst.msk [vmem:[#allocation2 + $0xe0] sm:$0xff] %vm279, 0.0
      %310 = vst.msk [vmem:[#allocation2 + $0xe8] sm:$0xff] %vm279, 0.0
      %311 = vst.msk [vmem:[#allocation2 + $0xf0] sm:$0xff] %vm279, 0.0
      %312 = vst.msk [vmem:[#allocation2 + $0xf8] sm:$0xff] %vm279, 0.0
      %313 = vst.msk [vmem:[#allocation2 + $0x100] sm:$0xff] %vm279, 0.0
      %314 = vst.msk [vmem:[#allocation2 + $0x108] sm:$0xff] %vm279, 0.0
      %315 = vst.msk [vmem:[#allocation2 + $0x110] sm:$0xf] %vm286, 0.0
      %316 = vst.msk [vmem:[#allocation2 + $0x118] sm:$0xff] %vm279, 0.0
      %317 = vst.msk [vmem:[#allocation2 + $0x120] sm:$0xff] %vm279, 0.0
      %318 = vst.msk [vmem:[#allocation2 + $0x128] sm:$0xff] %vm279, 0.0
      %319 = vst.msk [vmem:[#allocation2 + $0x130] sm:$0xff] %vm279, 0.0
      %320 = vst.msk [vmem:[#allocation2 + $0x138] sm:$0xff] %vm279, 0.0
      %321 = vst.msk [vmem:[#allocation2 + $0x140] sm:$0xff] %vm279, 0.0
      %322 = vst.msk [vmem:[#allocation2 + $0x148] sm:$0xf] %vm286, 0.0
      %323 = vst.msk [vmem:[#allocation2 + $0x150] sm:$0xff] %vm279, 0.0
      %324 = vst.msk [vmem:[#allocation2 + $0x158] sm:$0xff] %vm279, 0.0
      %325 = vst.msk [vmem:[#allocation2 + $0x160] sm:$0xff] %vm279, 0.0
      %326 = vst.msk [vmem:[#allocation2 + $0x168] sm:$0xff] %vm279, 0.0
      %327 = vst.msk [vmem:[#allocation2 + $0x170] sm:$0xff] %vm279, 0.0
      %328 = vst.msk [vmem:[#allocation2 + $0x178] sm:$0xff] %vm279, 0.0
      %329 = vst.msk [vmem:[#allocation2 + $0x180] sm:$0xf] %vm286, 0.0
      %330 = vst.msk [vmem:[#allocation2 + $0x188] sm:$0xff] %vm279, 0.0
      %331 = vst.msk [vmem:[#allocation2 + $0x190] sm:$0xff] %vm279, 0.0
      %332 = vst.msk [vmem:[#allocation2 + $0x198] sm:$0xff] %vm279, 0.0
      %333 = vst.msk [vmem:[#allocation2 + $0x1a0] sm:$0xff] %vm279, 0.0
      %334 = vst.msk [vmem:[#allocation2 + $0x1a8] sm:$0xff] %vm279, 0.0
      %335 = vst.msk [vmem:[#allocation2 + $0x1b0] sm:$0xff] %vm279, 0.0
      %336 = vst.msk [vmem:[#allocation2 + $0x1b8] sm:$0xf] %vm286, 0.0
      %337 = vst.msk [vmem:[#allocation2 + $0x1c0] sm:$0xff] %vm279, 0.0
      %338 = vst.msk [vmem:[#allocation2 + $0x1c8] sm:$0xff] %vm279, 0.0
      %339 = vst.msk [vmem:[#allocation2 + $0x1d0] sm:$0xff] %vm279, 0.0
      %340 = vst.msk [vmem:[#allocation2 + $0x1d8] sm:$0xff] %vm279, 0.0
      %341 = vst.msk [vmem:[#allocation2 + $0x1e0] sm:$0xff] %vm279, 0.0
      %342 = vst.msk [vmem:[#allocation2 + $0x1e8] sm:$0xff] %vm279, 0.0
      %343 = vst.msk [vmem:[#allocation2 + $0x1f0] sm:$0xf] %vm286, 0.0
      %344 = vst.msk [vmem:[#allocation2 + $0x1f8] sm:$0xff] %vm279, 0.0
      %345 = vst.msk [vmem:[#allocation2 + $0x200] sm:$0xff] %vm279, 0.0
      %346 = vst.msk [vmem:[#allocation2 + $0x208] sm:$0xff] %vm279, 0.0
      %347 = vst.msk [vmem:[#allocation2 + $0x210] sm:$0xff] %vm279, 0.0
      %348 = vst.msk [vmem:[#allocation2 + $0x218] sm:$0xff] %vm279, 0.0
      %349 = vst.msk [vmem:[#allocation2 + $0x220] sm:$0xff] %vm279, 0.0
      %350 = vst.msk [vmem:[#allocation2 + $0x228] sm:$0xf] %vm286, 0.0
      %351 = vst.msk [vmem:[#allocation2 + $0x230] sm:$0xff] %vm279, 0.0
      %352 = vst.msk [vmem:[#allocation2 + $0x238] sm:$0xff] %vm279, 0.0
      %353 = vst.msk [vmem:[#allocation2 + $0x240] sm:$0xff] %vm279, 0.0
      %354 = vst.msk [vmem:[#allocation2 + $0x248] sm:$0xff] %vm279, 0.0
      %355 = vst.msk [vmem:[#allocation2 + $0x250] sm:$0xff] %vm279, 0.0
      %356 = vst.msk [vmem:[#allocation2 + $0x258] sm:$0xff] %vm279, 0.0
      %357 = vst.msk [vmem:[#allocation2 + $0x260] sm:$0xf] %vm286, 0.0
      %358 = vst.msk [vmem:[#allocation2 + $0x268] sm:$0xff] %vm279, 0.0
      %359 = vst.msk [vmem:[#allocation2 + $0x270] sm:$0xff] %vm279, 0.0
      %360 = vst.msk [vmem:[#allocation2 + $0x278] sm:$0xff] %vm279, 0.0
      %361 = vst.msk [vmem:[#allocation2 + $0x280] sm:$0xff] %vm279, 0.0
      %362 = vst.msk [vmem:[#allocation2 + $0x288] sm:$0xff] %vm279, 0.0
      %363 = vst.msk [vmem:[#allocation2 + $0x290] sm:$0xff] %vm279, 0.0
      %364 = vst.msk [vmem:[#allocation2 + $0x298] sm:$0xf] %vm286, 0.0
      %365 = vst.msk [vmem:[#allocation2 + $0x2a0] sm:$0xff] %vm279, 0.0
      %366 = vst.msk [vmem:[#allocation2 + $0x2a8] sm:$0xff] %vm279, 0.0
      %367 = vst.msk [vmem:[#allocation2 + $0x2b0] sm:$0xff] %vm279, 0.0
      %368 = vst.msk [vmem:[#allocation2 + $0x2b8] sm:$0xff] %vm279, 0.0
      %369 = vst.msk [vmem:[#allocation2 + $0x2c0] sm:$0xff] %vm279, 0.0
      %370 = vst.msk [vmem:[#allocation2 + $0x2c8] sm:$0xff] %vm279, 0.0
      %371 = vst.msk [vmem:[#allocation2 + $0x2d0] sm:$0xf] %vm286, 0.0
      %372 = vst.msk [vmem:[#allocation2 + $0x2d8] sm:$0xff] %vm279, 0.0
      %373 = vst.msk [vmem:[#allocation2 + $0x2e0] sm:$0xff] %vm279, 0.0
      %374 = vst.msk [vmem:[#allocation2 + $0x2e8] sm:$0xff] %vm279, 0.0
      %375 = vst.msk [vmem:[#allocation2 + $0x2f0] sm:$0xff] %vm279, 0.0
      %376 = vst.msk [vmem:[#allocation2 + $0x2f8] sm:$0xff] %vm279, 0.0
      %377 = vst.msk [vmem:[#allocation2 + $0x300] sm:$0xff] %vm279, 0.0
      %378 = vst.msk [vmem:[#allocation2 + $0x308] sm:$0xf] %vm286, 0.0
      %379 = vst.msk [vmem:[#allocation2 + $0x310] sm:$0xff] %vm279, 0.0
      %380 = vst.msk [vmem:[#allocation2 + $0x318] sm:$0xff] %vm279, 0.0
      %381 = vst.msk [vmem:[#allocation2 + $0x320] sm:$0xff] %vm279, 0.0
      %382 = vst.msk [vmem:[#allocation2 + $0x328] sm:$0xff] %vm279, 0.0
      %383 = vst.msk [vmem:[#allocation2 + $0x330] sm:$0xff] %vm279, 0.0
      %384 = vst.msk [vmem:[#allocation2 + $0x338] sm:$0xff] %vm279, 0.0
      %385 = vst.msk [vmem:[#allocation2 + $0x340] sm:$0xf] %vm286, 0.0
      %386 = vst.msk [vmem:[#allocation2 + $0x348] sm:$0xff] %vm279, 0.0
      %387 = vst.msk [vmem:[#allocation2 + $0x350] sm:$0xff] %vm279, 0.0
      %388 = vst.msk [vmem:[#allocation2 + $0x358] sm:$0xff] %vm279, 0.0
      %389 = vst.msk [vmem:[#allocation2 + $0x360] sm:$0xff] %vm279, 0.0
      %390 = vst.msk [vmem:[#allocation2 + $0x368] sm:$0xff] %vm279, 0.0
      %391 = vst.msk [vmem:[#allocation2 + $0x370] sm:$0xff] %vm279, 0.0
      %392 = vst.msk [vmem:[#allocation2 + $0x378] sm:$0xf] %vm286, 0.0
      %393 = vst.msk [vmem:[#allocation2 + $0x380] sm:$0xff] %vm279, 0.0
      %394 = vst.msk [vmem:[#allocation2 + $0x388] sm:$0xff] %vm279, 0.0
      %395 = vst.msk [vmem:[#allocation2 + $0x390] sm:$0xff] %vm279, 0.0
      %396 = vst.msk [vmem:[#allocation2 + $0x398] sm:$0xff] %vm279, 0.0
      %397 = vst.msk [vmem:[#allocation2 + $0x3a0] sm:$0xff] %vm279, 0.0
      %398 = vst.msk [vmem:[#allocation2 + $0x3a8] sm:$0xff] %vm279, 0.0
      %399 = vst.msk [vmem:[#allocation2 + $0x3b0] sm:$0xf] %vm286, 0.0
      %400 = vst.msk [vmem:[#allocation2 + $0x3b8] sm:$0xff] %vm279, 0.0
      %401 = vst.msk [vmem:[#allocation2 + $0x3c0] sm:$0xff] %vm279, 0.0
      %402 = vst.msk [vmem:[#allocation2 + $0x3c8] sm:$0xff] %vm279, 0.0
      %403 = vst.msk [vmem:[#allocation2 + $0x3d0] sm:$0xff] %vm279, 0.0
      %404 = vst.msk [vmem:[#allocation2 + $0x3d8] sm:$0xff] %vm279, 0.0
      %405 = vst.msk [vmem:[#allocation2 + $0x3e0] sm:$0xff] %vm279, 0.0
      %406 = vst.msk [vmem:[#allocation2 + $0x3e8] sm:$0xf] %vm286, 0.0
      %s407 = scalar_lea.vmem [#allocation2], 1904
      %408 = vst.msk [vmem:[%s407] sm:$0xff] %vm279, 0.0
      %409 = vst.msk [vmem:[%s407 + $0x8] sm:$0xff] %vm279, 0.0
      %410 = vst.msk [vmem:[%s407 + $0x10] sm:$0xff] %vm279, 0.0
      %411 = vst.msk [vmem:[%s407 + $0x18] sm:$0xff] %vm279, 0.0
      %412 = vst.msk [vmem:[%s407 + $0x20] sm:$0xff] %vm279, 0.0
      %413 = vst.msk [vmem:[%s407 + $0x28] sm:$0xff] %vm279, 0.0
      %414 = vst.msk [vmem:[%s407 + $0x30] sm:$0xf] %vm286, 0.0
      %415 = vst.msk [vmem:[%s407 + $0x38] sm:$0xff] %vm279, 0.0
      %416 = vst.msk [vmem:[%s407 + $0x40] sm:$0xff] %vm279, 0.0
      %417 = vst.msk [vmem:[%s407 + $0x48] sm:$0xff] %vm279, 0.0
      %418 = vst.msk [vmem:[%s407 + $0x50] sm:$0xff] %vm279, 0.0
      %419 = vst.msk [vmem:[%s407 + $0x58] sm:$0xff] %vm279, 0.0
      %420 = vst.msk [vmem:[%s407 + $0x60] sm:$0xff] %vm279, 0.0
      %421 = vst.msk [vmem:[%s407 + $0x68] sm:$0xf] %vm286, 0.0
      %422 = vst.msk [vmem:[%s407 + $0x70] sm:$0xff] %vm279, 0.0
      %423 = vst.msk [vmem:[%s407 + $0x78] sm:$0xff] %vm279, 0.0
      %424 = vst.msk [vmem:[%s407 + $0x80] sm:$0xff] %vm279, 0.0
      %425 = vst.msk [vmem:[%s407 + $0x88] sm:$0xff] %vm279, 0.0
      %426 = vst.msk [vmem:[%s407 + $0x90] sm:$0xff] %vm279, 0.0
      %427 = vst.msk [vmem:[%s407 + $0x98] sm:$0xff] %vm279, 0.0
      %428 = vst.msk [vmem:[%s407 + $0xa0] sm:$0xf] %vm286, 0.0
      %429 = vst.msk [vmem:[%s407 + $0xa8] sm:$0xff] %vm279, 0.0
      %430 = vst.msk [vmem:[%s407 + $0xb0] sm:$0xff] %vm279, 0.0
      %431 = vst.msk [vmem:[%s407 + $0xb8] sm:$0xff] %vm279, 0.0
      %432 = vst.msk [vmem:[%s407 + $0xc0] sm:$0xff] %vm279, 0.0
      %433 = vst.msk [vmem:[%s407 + $0xc8] sm:$0xff] %vm279, 0.0
      %434 = vst.msk [vmem:[%s407 + $0xd0] sm:$0xff] %vm279, 0.0
      %435 = vst.msk [vmem:[%s407 + $0xd8] sm:$0xf] %vm286, 0.0
      %436 = vst.msk [vmem:[%s407 + $0xe0] sm:$0xff] %vm279, 0.0
      %437 = vst.msk [vmem:[%s407 + $0xe8] sm:$0xff] %vm279, 0.0
      %438 = vst.msk [vmem:[%s407 + $0xf0] sm:$0xff] %vm279, 0.0
      %439 = vst.msk [vmem:[%s407 + $0xf8] sm:$0xff] %vm279, 0.0
      %440 = vst.msk [vmem:[%s407 + $0x100] sm:$0xff] %vm279, 0.0
      %441 = vst.msk [vmem:[%s407 + $0x108] sm:$0xff] %vm279, 0.0
      %442 = vst.msk [vmem:[%s407 + $0x110] sm:$0xf] %vm286, 0.0
      %443 = vst.msk [vmem:[%s407 + $0x118] sm:$0xff] %vm279, 0.0
      %444 = vst.msk [vmem:[%s407 + $0x120] sm:$0xff] %vm279, 0.0
      %445 = vst.msk [vmem:[%s407 + $0x128] sm:$0xff] %vm279, 0.0
      %446 = vst.msk [vmem:[%s407 + $0x130] sm:$0xff] %vm279, 0.0
      %447 = vst.msk [vmem:[%s407 + $0x138] sm:$0xff] %vm279, 0.0
      %448 = vst.msk [vmem:[%s407 + $0x140] sm:$0xff] %vm279, 0.0
      %449 = vst.msk [vmem:[%s407 + $0x148] sm:$0xf] %vm286, 0.0
      %450 = vst.msk [vmem:[%s407 + $0x150] sm:$0xff] %vm279, 0.0
      %451 = vst.msk [vmem:[%s407 + $0x158] sm:$0xff] %vm279, 0.0
      %452 = vst.msk [vmem:[%s407 + $0x160] sm:$0xff] %vm279, 0.0
      %453 = vst.msk [vmem:[%s407 + $0x168] sm:$0xff] %vm279, 0.0
      %454 = vst.msk [vmem:[%s407 + $0x170] sm:$0xff] %vm279, 0.0
      %455 = vst.msk [vmem:[%s407 + $0x178] sm:$0xff] %vm279, 0.0
      %456 = vst.msk [vmem:[%s407 + $0x180] sm:$0xf] %vm286, 0.0
      %457 = vst.msk [vmem:[%s407 + $0x188] sm:$0xff] %vm279, 0.0
      %458 = vst.msk [vmem:[%s407 + $0x190] sm:$0xff] %vm279, 0.0
      %459 = vst.msk [vmem:[%s407 + $0x198] sm:$0xff] %vm279, 0.0
      %460 = vst.msk [vmem:[%s407 + $0x1a0] sm:$0xff] %vm279, 0.0
      %461 = vst.msk [vmem:[%s407 + $0x1a8] sm:$0xff] %vm279, 0.0
      %462 = vst.msk [vmem:[%s407 + $0x1b0] sm:$0xff] %vm279, 0.0
      %463 = vst.msk [vmem:[%s407 + $0x1b8] sm:$0xf] %vm286, 0.0
      %464 = vst.msk [vmem:[%s407 + $0x1c0] sm:$0xff] %vm279, 0.0
      %465 = vst.msk [vmem:[%s407 + $0x1c8] sm:$0xff] %vm279, 0.0
      %466 = vst.msk [vmem:[%s407 + $0x1d0] sm:$0xff] %vm279, 0.0
      %467 = vst.msk [vmem:[%s407 + $0x1d8] sm:$0xff] %vm279, 0.0
      %468 = vst.msk [vmem:[%s407 + $0x1e0] sm:$0xff] %vm279, 0.0
      %469 = vst.msk [vmem:[%s407 + $0x1e8] sm:$0xff] %vm279, 0.0
      %470 = vst.msk [vmem:[%s407 + $0x1f0] sm:$0xf] %vm286, 0.0
      %471 = vst.msk [vmem:[%s407 + $0x1f8] sm:$0xff] %vm279, 0.0
      %472 = vst.msk [vmem:[%s407 + $0x200] sm:$0xff] %vm279, 0.0
      %473 = vst.msk [vmem:[%s407 + $0x208] sm:$0xff] %vm279, 0.0
      %474 = vst.msk [vmem:[%s407 + $0x210] sm:$0xff] %vm279, 0.0
      %475 = vst.msk [vmem:[%s407 + $0x218] sm:$0xff] %vm279, 0.0
      %476 = vst.msk [vmem:[%s407 + $0x220] sm:$0xff] %vm279, 0.0
      %477 = vst.msk [vmem:[%s407 + $0x228] sm:$0xf] %vm286, 0.0
      %478 = vst.msk [vmem:[%s407 + $0x230] sm:$0xff] %vm279, 0.0
      %479 = vst.msk [vmem:[%s407 + $0x238] sm:$0xff] %vm279, 0.0
      %480 = vst.msk [vmem:[%s407 + $0x240] sm:$0xff] %vm279, 0.0
      %481 = vst.msk [vmem:[%s407 + $0x248] sm:$0xff] %vm279, 0.0
      %482 = vst.msk [vmem:[%s407 + $0x250] sm:$0xff] %vm279, 0.0
      %483 = vst.msk [vmem:[%s407 + $0x258] sm:$0xff] %vm279, 0.0
      %484 = vst.msk [vmem:[%s407 + $0x260] sm:$0xf] %vm286, 0.0
      %485 = vst.msk [vmem:[%s407 + $0x268] sm:$0xff] %vm279, 0.0
      %486 = vst.msk [vmem:[%s407 + $0x270] sm:$0xff] %vm279, 0.0
      %487 = vst.msk [vmem:[%s407 + $0x278] sm:$0xff] %vm279, 0.0
      %488 = vst.msk [vmem:[%s407 + $0x280] sm:$0xff] %vm279, 0.0
      %489 = vst.msk [vmem:[%s407 + $0x288] sm:$0xff] %vm279, 0.0
      %490 = vst.msk [vmem:[%s407 + $0x290] sm:$0xff] %vm279, 0.0
      %491 = vst.msk [vmem:[%s407 + $0x298] sm:$0xf] %vm286, 0.0
      %492 = vst.msk [vmem:[%s407 + $0x2a0] sm:$0xff] %vm279, 0.0
      %493 = vst.msk [vmem:[%s407 + $0x2a8] sm:$0xff] %vm279, 0.0
      %494 = vst.msk [vmem:[%s407 + $0x2b0] sm:$0xff] %vm279, 0.0
      %495 = vst.msk [vmem:[%s407 + $0x2b8] sm:$0xff] %vm279, 0.0
      %496 = vst.msk [vmem:[%s407 + $0x2c0] sm:$0xff] %vm279, 0.0
      %497 = vst.msk [vmem:[%s407 + $0x2c8] sm:$0xff] %vm279, 0.0
      %498 = vst.msk [vmem:[%s407 + $0x2d0] sm:$0xf] %vm286, 0.0
      %499 = vst.msk [vmem:[%s407 + $0x2d8] sm:$0xff] %vm279, 0.0
      %500 = vst.msk [vmem:[%s407 + $0x2e0] sm:$0xff] %vm279, 0.0
      %501 = vst.msk [vmem:[%s407 + $0x2e8] sm:$0xff] %vm279, 0.0
      %502 = vst.msk [vmem:[%s407 + $0x2f0] sm:$0xff] %vm279, 0.0
      %503 = vst.msk [vmem:[%s407 + $0x2f8] sm:$0xff] %vm279, 0.0
      %504 = vst.msk [vmem:[%s407 + $0x300] sm:$0xff] %vm279, 0.0
      %505 = vst.msk [vmem:[%s407 + $0x308] sm:$0xf] %vm286, 0.0
      %506 = vst.msk [vmem:[%s407 + $0x310] sm:$0xff] %vm279, 0.0
      %507 = vst.msk [vmem:[%s407 + $0x318] sm:$0xff] %vm279, 0.0
      %508 = vst.msk [vmem:[%s407 + $0x320] sm:$0xff] %vm279, 0.0
      %509 = vst.msk [vmem:[%s407 + $0x328] sm:$0xff] %vm279, 0.0
      %510 = vst.msk [vmem:[%s407 + $0x330] sm:$0xff] %vm279, 0.0
      %511 = vst.msk [vmem:[%s407 + $0x338] sm:$0xff] %vm279, 0.0
      %512 = vst.msk [vmem:[%s407 + $0x340] sm:$0xf] %vm286, 0.0
      %513 = vst.msk [vmem:[%s407 + $0x348] sm:$0xff] %vm279, 0.0
      %514 = vst.msk [vmem:[%s407 + $0x350] sm:$0xff] %vm279, 0.0
      %515 = vst.msk [vmem:[%s407 + $0x358] sm:$0xff] %vm279, 0.0
      %516 = vst.msk [vmem:[%s407 + $0x360] sm:$0xff] %vm279, 0.0
      %517 = vst.msk [vmem:[%s407 + $0x368] sm:$0xff] %vm279, 0.0
      %518 = vst.msk [vmem:[%s407 + $0x370] sm:$0xff] %vm279, 0.0
      %519 = vst.msk [vmem:[%s407 + $0x378] sm:$0xf] %vm286, 0.0
      %520 = vst.msk [vmem:[%s407 + $0x380] sm:$0xff] %vm279, 0.0
      %521 = vst.msk [vmem:[%s407 + $0x388] sm:$0xff] %vm279, 0.0
      %522 = vst.msk [vmem:[%s407 + $0x390] sm:$0xff] %vm279, 0.0
      %523 = vst.msk [vmem:[%s407 + $0x398] sm:$0xff] %vm279, 0.0
      %524 = vst.msk [vmem:[%s407 + $0x3a0] sm:$0xff] %vm279, 0.0
      %525 = vst.msk [vmem:[%s407 + $0x3a8] sm:$0xff] %vm279, 0.0
      %526 = vst.msk [vmem:[%s407 + $0x3b0] sm:$0xf] %vm286, 0.0
      %527 = vst.msk [vmem:[%s407 + $0x3b8] sm:$0xff] %vm279, 0.0
      %528 = vst.msk [vmem:[%s407 + $0x3c0] sm:$0xff] %vm279, 0.0
      %529 = vst.msk [vmem:[%s407 + $0x3c8] sm:$0xff] %vm279, 0.0
      %530 = vst.msk [vmem:[%s407 + $0x3d0] sm:$0xff] %vm279, 0.0
      %531 = vst.msk [vmem:[%s407 + $0x3d8] sm:$0xff] %vm279, 0.0
      %532 = vst.msk [vmem:[%s407 + $0x3e0] sm:$0xff] %vm279, 0.0
      %533 = vst.msk [vmem:[%s407 + $0x3e8] sm:$0xf] %vm286, 0.0
      %s534 = scalar_lea.vmem [#allocation2], 1008
      %535 = vst.msk [vmem:[%s534] sm:$0xff] %vm279, 0.0
      %536 = vst.msk [vmem:[%s534 + $0x8] sm:$0xff] %vm279, 0.0
      %vm537 = vcmask 58368
      %538 = vst.msk [vmem:[%s534 + $0x10] sm:$0x3] %vm537, 0.0
      %539 = vst.msk [vmem:[%s534 + $0x38] sm:$0xff] %vm279, 0.0
      %540 = vst.msk [vmem:[%s534 + $0x40] sm:$0xff] %vm279, 0.0
      %541 = vst.msk [vmem:[%s534 + $0x48] sm:$0x3] %vm537, 0.0
      %542 = vst.msk [vmem:[%s534 + $0x70] sm:$0xff] %vm279, 0.0
      %543 = vst.msk [vmem:[%s534 + $0x78] sm:$0xff] %vm279, 0.0
      %544 = vst.msk [vmem:[%s534 + $0x80] sm:$0x3] %vm537, 0.0
      %545 = vst.msk [vmem:[%s534 + $0xa8] sm:$0xff] %vm279, 0.0
      %546 = vst.msk [vmem:[%s534 + $0xb0] sm:$0xff] %vm279, 0.0
      %547 = vst.msk [vmem:[%s534 + $0xb8] sm:$0x3] %vm537, 0.0
      %548 = vst.msk [vmem:[%s534 + $0xe0] sm:$0xff] %vm279, 0.0
      %549 = vst.msk [vmem:[%s534 + $0xe8] sm:$0xff] %vm279, 0.0
      %550 = vst.msk [vmem:[%s534 + $0xf0] sm:$0x3] %vm537, 0.0
      %551 = vst.msk [vmem:[%s534 + $0x118] sm:$0xff] %vm279, 0.0
      %552 = vst.msk [vmem:[%s534 + $0x120] sm:$0xff] %vm279, 0.0
      %553 = vst.msk [vmem:[%s534 + $0x128] sm:$0x3] %vm537, 0.0
      %554 = vst.msk [vmem:[%s534 + $0x150] sm:$0xff] %vm279, 0.0
      %555 = vst.msk [vmem:[%s534 + $0x158] sm:$0xff] %vm279, 0.0
      %556 = vst.msk [vmem:[%s534 + $0x160] sm:$0x3] %vm537, 0.0
      %557 = vst.msk [vmem:[%s534 + $0x188] sm:$0xff] %vm279, 0.0
      %558 = vst.msk [vmem:[%s534 + $0x190] sm:$0xff] %vm279, 0.0
      %559 = vst.msk [vmem:[%s534 + $0x198] sm:$0x3] %vm537, 0.0
      %560 = vst.msk [vmem:[%s534 + $0x1c0] sm:$0xff] %vm279, 0.0
      %561 = vst.msk [vmem:[%s534 + $0x1c8] sm:$0xff] %vm279, 0.0
      %562 = vst.msk [vmem:[%s534 + $0x1d0] sm:$0x3] %vm537, 0.0
      %563 = vst.msk [vmem:[%s534 + $0x1f8] sm:$0xff] %vm279, 0.0
      %564 = vst.msk [vmem:[%s534 + $0x200] sm:$0xff] %vm279, 0.0
      %565 = vst.msk [vmem:[%s534 + $0x208] sm:$0x3] %vm537, 0.0
      %566 = vst.msk [vmem:[%s534 + $0x230] sm:$0xff] %vm279, 0.0
      %567 = vst.msk [vmem:[%s534 + $0x238] sm:$0xff] %vm279, 0.0
      %568 = vst.msk [vmem:[%s534 + $0x240] sm:$0x3] %vm537, 0.0
      %569 = vst.msk [vmem:[%s534 + $0x268] sm:$0xff] %vm279, 0.0
      %570 = vst.msk [vmem:[%s534 + $0x270] sm:$0xff] %vm279, 0.0
      %571 = vst.msk [vmem:[%s534 + $0x278] sm:$0x3] %vm537, 0.0
      %572 = vst.msk [vmem:[%s534 + $0x2a0] sm:$0xff] %vm279, 0.0
      %573 = vst.msk [vmem:[%s534 + $0x2a8] sm:$0xff] %vm279, 0.0
      %574 = vst.msk [vmem:[%s534 + $0x2b0] sm:$0x3] %vm537, 0.0
      %575 = vst.msk [vmem:[%s534 + $0x2d8] sm:$0xff] %vm279, 0.0
      %576 = vst.msk [vmem:[%s534 + $0x2e0] sm:$0xff] %vm279, 0.0
      %577 = vst.msk [vmem:[%s534 + $0x2e8] sm:$0x3] %vm537, 0.0
      %578 = vst.msk [vmem:[%s534 + $0x310] sm:$0xff] %vm279, 0.0
      %579 = vst.msk [vmem:[%s534 + $0x318] sm:$0xff] %vm279, 0.0
      %580 = vst.msk [vmem:[%s534 + $0x320] sm:$0x3] %vm537, 0.0
      %581 = vst.msk [vmem:[%s534 + $0x348] sm:$0xff] %vm279, 0.0
      %582 = vst.msk [vmem:[%s534 + $0x350] sm:$0xff] %vm279, 0.0
      %583 = vst.msk [vmem:[%s534 + $0x358] sm:$0x3] %vm537, 0.0
      %584 = vst.msk [vmem:[%s534 + $0x22] sm:$0xff] %vm279, 0.0
      %585 = vst.msk [vmem:[%s534 + $0x2a] sm:$0xff] %vm279, 0.0
      %586 = vst.msk [vmem:[%s534 + $0x32] sm:$0x3] %vm537, 0.0
      %587 = vst.msk [vmem:[%s534 + $0x5a] sm:$0xff] %vm279, 0.0
      %588 = vst.msk [vmem:[%s534 + $0x62] sm:$0xff] %vm279, 0.0
      %589 = vst.msk [vmem:[%s534 + $0x6a] sm:$0x3] %vm537, 0.0
      %590 = vst.msk [vmem:[%s534 + $0x92] sm:$0xff] %vm279, 0.0
      %591 = vst.msk [vmem:[%s534 + $0x9a] sm:$0xff] %vm279, 0.0
      %592 = vst.msk [vmem:[%s534 + $0xa2] sm:$0x3] %vm537, 0.0
      %593 = vst.msk [vmem:[%s534 + $0xca] sm:$0xff] %vm279, 0.0
      %594 = vst.msk [vmem:[%s534 + $0xd2] sm:$0xff] %vm279, 0.0
      %595 = vst.msk [vmem:[%s534 + $0xda] sm:$0x3] %vm537, 0.0
      %596 = vst.msk [vmem:[%s534 + $0x102] sm:$0xff] %vm279, 0.0
      %597 = vst.msk [vmem:[%s534 + $0x10a] sm:$0xff] %vm279, 0.0
      %598 = vst.msk [vmem:[%s534 + $0x112] sm:$0x3] %vm537, 0.0
      %599 = vst.msk [vmem:[%s534 + $0x13a] sm:$0xff] %vm279, 0.0
      %600 = vst.msk [vmem:[%s534 + $0x142] sm:$0xff] %vm279, 0.0
      %601 = vst.msk [vmem:[%s534 + $0x14a] sm:$0x3] %vm537, 0.0
      %602 = vst.msk [vmem:[%s534 + $0x172] sm:$0xff] %vm279, 0.0
      %603 = vst.msk [vmem:[%s534 + $0x17a] sm:$0xff] %vm279, 0.0
      %604 = vst.msk [vmem:[%s534 + $0x182] sm:$0x3] %vm537, 0.0
      %605 = vst.msk [vmem:[%s534 + $0x1aa] sm:$0xff] %vm279, 0.0
      %606 = vst.msk [vmem:[%s534 + $0x1b2] sm:$0xff] %vm279, 0.0
      %607 = vst.msk [vmem:[%s534 + $0x1ba] sm:$0x3] %vm537, 0.0
      %608 = vst.msk [vmem:[%s534 + $0x1e2] sm:$0xff] %vm279, 0.0
      %609 = vst.msk [vmem:[%s534 + $0x1ea] sm:$0xff] %vm279, 0.0
      %610 = vst.msk [vmem:[%s534 + $0x1f2] sm:$0x3] %vm537, 0.0
      %611 = vst.msk [vmem:[%s534 + $0x21a] sm:$0xff] %vm279, 0.0
      %612 = vst.msk [vmem:[%s534 + $0x222] sm:$0xff] %vm279, 0.0
      %613 = vst.msk [vmem:[%s534 + $0x22a] sm:$0x3] %vm537, 0.0
      %614 = vst.msk [vmem:[%s534 + $0x252] sm:$0xff] %vm279, 0.0
      %615 = vst.msk [vmem:[%s534 + $0x25a] sm:$0xff] %vm279, 0.0
      %616 = vst.msk [vmem:[%s534 + $0x262] sm:$0x3] %vm537, 0.0
      %617 = vst.msk [vmem:[%s534 + $0x28a] sm:$0xff] %vm279, 0.0
      %618 = vst.msk [vmem:[%s534 + $0x292] sm:$0xff] %vm279, 0.0
      %619 = vst.msk [vmem:[%s534 + $0x29a] sm:$0x3] %vm537, 0.0
      %620 = vst.msk [vmem:[%s534 + $0x2c2] sm:$0xff] %vm279, 0.0
      %621 = vst.msk [vmem:[%s534 + $0x2ca] sm:$0xff] %vm279, 0.0
      %622 = vst.msk [vmem:[%s534 + $0x2d2] sm:$0x3] %vm537, 0.0
      %623 = vst.msk [vmem:[%s534 + $0x2fa] sm:$0xff] %vm279, 0.0
      %624 = vst.msk [vmem:[%s534 + $0x302] sm:$0xff] %vm279, 0.0
      %625 = vst.msk [vmem:[%s534 + $0x30a] sm:$0x3] %vm537, 0.0
      %626 = vst.msk [vmem:[%s534 + $0x332] sm:$0xff] %vm279, 0.0
      %627 = vst.msk [vmem:[%s534 + $0x33a] sm:$0xff] %vm279, 0.0
      %628 = vst.msk [vmem:[%s534 + $0x342] sm:$0x3] %vm537, 0.0
      %629 = vst.msk [vmem:[%s534 + $0x36a] sm:$0xff] %vm279, 0.0
      %630 = vst.msk [vmem:[%s534 + $0x372] sm:$0xff] %vm279, 0.0
      %631 = vst.msk [vmem:[%s534 + $0x37a] sm:$0x3] %vm537, 0.0
      %v632 = vld [vmem:[%s273] sm:$0xff]
      %v633 = vld [vmem:[%s273 + $0x8] sm:$0xff]
      %v634 = vld [vmem:[%s273 + $0x10] sm:$0xff]
      %v635 = vld [vmem:[%s273 + $0x18] sm:$0xff]
      %v636 = vld [vmem:[%s273 + $0x20] sm:$0xff]
      %v637 = vld [vmem:[%s273 + $0x28] sm:$0xff]
      %v638 = vld [vmem:[%s273 + $0x30] sm:$0xff]
      %v639 = vld [vmem:[%s273 + $0x38] sm:$0xff]
      %v640 = vld [vmem:[%s273 + $0x40] sm:$0xff]
      %v641 = vld [vmem:[%s273 + $0x48] sm:$0xff]
      %v642 = vld [vmem:[%s273 + $0x50] sm:$0xff]
      %v643 = vld [vmem:[%s273 + $0x58] sm:$0xff]
      %v644 = vld [vmem:[%s273 + $0x60] sm:$0xff]
      %v645 = vld [vmem:[%s273 + $0x68] sm:$0xff]
      %v646 = vld [vmem:[%s273 + $0x70] sm:$0xff]
      %v647 = vld [vmem:[%s273 + $0x78] sm:$0xff]
      %v648 = vld [vmem:[%s273 + $0x80] sm:$0xff]
      %v649 = vld [vmem:[%s273 + $0x88] sm:$0xff]
      %v650 = vld [vmem:[%s273 + $0x90] sm:$0xff]
      %v651 = vld [vmem:[%s273 + $0x98] sm:$0xff]
      %v652 = vld [vmem:[%s273 + $0xa0] sm:$0xff]
      %v653 = vld [vmem:[%s273 + $0xa8] sm:$0xff]
      %v654 = vld [vmem:[%s273 + $0xb0] sm:$0xff]
      %v655 = vld [vmem:[%s273 + $0xb8] sm:$0xff]
      %v656 = vld [vmem:[%s273 + $0xc0] sm:$0xff]
      %v657 = vld [vmem:[%s273 + $0xc8] sm:$0xff]
      %v658 = vld [vmem:[%s273 + $0xd0] sm:$0xff]
      %v659 = vld [vmem:[%s273 + $0xd8] sm:$0xff]
      %v660 = vld [vmem:[%s273 + $0xe0] sm:$0xff]
      %v661 = vld [vmem:[%s273 + $0xe8] sm:$0xff]
      %v662 = vld [vmem:[%s273 + $0xf0] sm:$0xff]
      %v663 = vld [vmem:[%s273 + $0xf8] sm:$0xff]
      %664 = vst.msk [vmem:[%s534 + $0x12] sm:$0xff] %vm279, %v632
      %665 = vst.msk [vmem:[%s534 + $0x1a] sm:$0xff] %vm279, %v633
      %666 = vst.msk [vmem:[%s534 + $0x4a] sm:$0xff] %vm279, %v634
      %667 = vst.msk [vmem:[%s534 + $0x52] sm:$0xff] %vm279, %v635
      %668 = vst.msk [vmem:[%s534 + $0x82] sm:$0xff] %vm279, %v636
      %669 = vst.msk [vmem:[%s534 + $0x8a] sm:$0xff] %vm279, %v637
      %670 = vst.msk [vmem:[%s534 + $0xba] sm:$0xff] %vm279, %v638
      %671 = vst.msk [vmem:[%s534 + $0xc2] sm:$0xff] %vm279, %v639
      %672 = vst.msk [vmem:[%s534 + $0xf2] sm:$0xff] %vm279, %v640
      %673 = vst.msk [vmem:[%s534 + $0xfa] sm:$0xff] %vm279, %v641
      %674 = vst.msk [vmem:[%s534 + $0x12a] sm:$0xff] %vm279, %v642
      %675 = vst.msk [vmem:[%s534 + $0x132] sm:$0xff] %vm279, %v643
      %676 = vst.msk [vmem:[%s534 + $0x162] sm:$0xff] %vm279, %v644
      %677 = vst.msk [vmem:[%s534 + $0x16a] sm:$0xff] %vm279, %v645
      %678 = vst.msk [vmem:[%s534 + $0x19a] sm:$0xff] %vm279, %v646
      %679 = vst.msk [vmem:[%s534 + $0x1a2] sm:$0xff] %vm279, %v647
      %680 = vst.msk [vmem:[%s534 + $0x1d2] sm:$0xff] %vm279, %v648
      %681 = vst.msk [vmem:[%s534 + $0x1da] sm:$0xff] %vm279, %v649
      %682 = vst.msk [vmem:[%s534 + $0x20a] sm:$0xff] %vm279, %v650
      %683 = vst.msk [vmem:[%s534 + $0x212] sm:$0xff] %vm279, %v651
      %684 = vst.msk [vmem:[%s534 + $0x242] sm:$0xff] %vm279, %v652
      %685 = vst.msk [vmem:[%s534 + $0x24a] sm:$0xff] %vm279, %v653
      %686 = vst.msk [vmem:[%s534 + $0x27a] sm:$0xff] %vm279, %v654
      %687 = vst.msk [vmem:[%s534 + $0x282] sm:$0xff] %vm279, %v655
      %688 = vst.msk [vmem:[%s534 + $0x2b2] sm:$0xff] %vm279, %v656
      %689 = vst.msk [vmem:[%s534 + $0x2ba] sm:$0xff] %vm279, %v657
      %690 = vst.msk [vmem:[%s534 + $0x2ea] sm:$0xff] %vm279, %v658
      %691 = vst.msk [vmem:[%s534 + $0x2f2] sm:$0xff] %vm279, %v659
      %692 = vst.msk [vmem:[%s534 + $0x322] sm:$0xff] %vm279, %v660
      %693 = vst.msk [vmem:[%s534 + $0x32a] sm:$0xff] %vm279, %v661
      %694 = vst.msk [vmem:[%s534 + $0x35a] sm:$0xff] %vm279, %v662
      %695 = vst.msk [vmem:[%s534 + $0x362] sm:$0xff] %vm279, %v663
      %696 = vmatprep.subr.mxu0 0.0
      %697 = vmatpush1.msra.mxu0 %v632
      %698 = vmatprep.subr.mxu0 0.0
      %699 = vmatpush1.msra.mxu0 %v633
      %700 = vmatprep.subr.mxu0 0.0
      %701 = vmatpush1.msra.mxu0 %v634
      %702 = vmatprep.subr.mxu0 0.0
      %703 = vmatpush1.msra.mxu0 %v635
      %704 = vmatprep.subr.mxu0 0.0
      %705 = vmatpush1.msra.mxu0 %v636
      %706 = vmatprep.subr.mxu0 0.0
      %707 = vmatpush1.msra.mxu0 %v637
      %708 = vmatprep.subr.mxu0 0.0
      %709 = vmatpush1.msra.mxu0 %v638
      %710 = vmatprep.subr.mxu0 0.0
      %711 = vmatpush1.msra.mxu0 %v639
      %712 = vmatprep.subr.mxu0 0.0
      %713 = vmatpush1.msra.mxu0 %v640
      %714 = vmatprep.subr.mxu0 0.0
      %715 = vmatpush1.msra.mxu0 %v641
      %716 = vmatprep.subr.mxu0 0.0
      %717 = vmatpush1.msra.mxu0 %v642
      %718 = vmatprep.subr.mxu0 0.0
      %719 = vmatpush1.msra.mxu0 %v643
      %720 = vmatprep.subr.mxu0 0.0
      %721 = vmatpush1.msra.mxu0 %v644
      %722 = vmatprep.subr.mxu0 0.0
      %723 = vmatpush1.msra.mxu0 %v645
      %724 = vmatprep.subr.mxu0 0.0
      %725 = vmatpush1.msra.mxu0 %v646
      %726 = vmatprep.subr.mxu0 0.0
      %727 = vmatpush1.msra.mxu0 %v647
      %728 = vmatprep.subr.mxu0 0.0
      %729 = vmatpush1.msra.mxu0 %v648
      %730 = vmatprep.subr.mxu0 0.0
      %731 = vmatpush1.msra.mxu0 %v649
      %732 = vmatprep.subr.mxu0 0.0
      %733 = vmatpush1.msra.mxu0 %v650
      %734 = vmatprep.subr.mxu0 0.0
      %735 = vmatpush1.msra.mxu0 %v651
      %736 = vmatprep.subr.mxu0 0.0
      %737 = vmatpush1.msra.mxu0 %v652
      %738 = vmatprep.subr.mxu0 0.0
      %739 = vmatpush1.msra.mxu0 %v653
      %740 = vmatprep.subr.mxu0 0.0
      %741 = vmatpush1.msra.mxu0 %v654
      %742 = vmatprep.subr.mxu0 0.0
      %743 = vmatpush1.msra.mxu0 %v655
      %744 = vmatprep.subr.mxu0 0.0
      %745 = vmatpush1.msra.mxu0 %v656
      %746 = vmatprep.subr.mxu0 0.0
      %747 = vmatpush1.msra.mxu0 %v657
      %748 = vmatprep.subr.mxu0 0.0
      %749 = vmatpush1.msra.mxu0 %v658
      %750 = vmatprep.subr.mxu0 0.0
      %751 = vmatpush1.msra.mxu0 %v659
      %752 = vmatprep.subr.mxu0 0.0
      %753 = vmatpush1.msra.mxu0 %v660
      %754 = vmatprep.subr.mxu0 0.0
      %755 = vmatpush1.msra.mxu0 %v661
      %756 = vmatprep.subr.mxu0 0.0
      %757 = vmatpush1.msra.mxu0 %v662
      %758 = vmatprep.subr.mxu0 0.0
      %759 = vmatpush1.msra.mxu0 %v663
      %760 = vmatprep.mubr.f32.mxu0 1.0
      %761 = vmatmul.mubr.f32.gmra.mrb[0].mxu0 1.0
      %v762 = vpop.f32.mrb[0].mxu0
      %v763 = vadd.f32 0.0, %v762
      %v764 = vpop.f32.mrb[0].mxu0
      %765 = vdwg.mxu0
      %v766 = vmul.f32 %v763, 0.00390625
      %v767 = vld [vmem:[%s6] sm:$0x1]
      %v768 = vld [vmem:[%s1] sm:$0xff]
      %v770 = vsel %vm279, %v766, 0
      %772 = vmatprep.subr.mxu0 0.0
      %773 = vmatpush1.msra.mxu0 %v768
      %774 = vmatprep.subr.mxu0 0.0
      %775 = vmatpush1.msra.mxu0 0.0
      %776 = vmatprep.subr.mxu0 0.0
      %777 = vmatpush1.msra.mxu0 0.0
      %778 = vmatprep.subr.mxu0 0.0
      %779 = vmatpush1.msra.mxu0 0.0
      %780 = vmatprep.subr.mxu0 0.0
      %781 = vmatpush1.msra.mxu0 0.0
      %782 = vmatprep.subr.mxu0 0.0
      %783 = vmatpush1.msra.mxu0 0.0
      %784 = vmatprep.subr.mxu0 0.0
      %785 = vmatpush1.msra.mxu0 0.0
      %786 = vmatprep.subr.mxu0 0.0
      %787 = vmatpush1.msra.mxu0 0.0
      %788 = vmatprep.subr.mxu0 0.0
      %789 = vmatpush1.msra.mxu0 0.0
      %790 = vmatprep.subr.mxu0 0.0
      %791 = vmatpush1.msra.mxu0 0.0
      %792 = vmatprep.subr.mxu0 0.0
      %793 = vmatpush1.msra.mxu0 0.0
      %794 = vmatprep.subr.mxu0 0.0
      %795 = vmatpush1.msra.mxu0 0.0
      %796 = vmatprep.subr.mxu0 0.0
      %797 = vmatpush1.msra.mxu0 0.0
      %798 = vmatprep.subr.mxu0 0.0
      %799 = vmatpush1.msra.mxu0 0.0
      %800 = vmatprep.subr.mxu0 0.0
      %801 = vmatpush1.msra.mxu0 0.0
      %802 = vmatprep.subr.mxu0 0.0
      %803 = vmatpush1.msra.mxu0 0.0
      %804 = vmatprep.subr.mxu0 0.0
      %805 = vmatpush1.msra.mxu0 0.0
      %806 = vmatprep.subr.mxu0 0.0
      %807 = vmatpush1.msra.mxu0 0.0
      %808 = vmatprep.subr.mxu0 0.0
      %809 = vmatpush1.msra.mxu0 0.0
      %810 = vmatprep.subr.mxu0 0.0
      %811 = vmatpush1.msra.mxu0 0.0
      %812 = vmatprep.subr.mxu0 0.0
      %813 = vmatpush1.msra.mxu0 0.0
      %814 = vmatprep.subr.mxu0 0.0
      %815 = vmatpush1.msra.mxu0 0.0
      %816 = vmatprep.subr.mxu0 0.0
      %817 = vmatpush1.msra.mxu0 0.0
      %818 = vmatprep.subr.mxu0 0.0
      %819 = vmatpush1.msra.mxu0 0.0
      %820 = vmatprep.subr.mxu0 0.0
      %821 = vmatpush1.msra.mxu0 0.0
      %822 = vmatprep.subr.mxu0 0.0
      %823 = vmatpush1.msra.mxu0 0.0
      %824 = vmatprep.subr.mxu0 0.0
      %825 = vmatpush1.msra.mxu0 0.0
      %826 = vmatprep.subr.mxu0 0.0
      %827 = vmatpush1.msra.mxu0 0.0
      %828 = vmatprep.subr.mxu0 0.0
      %829 = vmatpush1.msra.mxu0 0.0
      %830 = vmatprep.subr.mxu0 0.0
      %831 = vmatpush1.msra.mxu0 0.0
      %832 = vmatprep.subr.mxu0 0.0
      %833 = vmatpush1.msra.mxu0 0.0
      %834 = vmatprep.subr.mxu0 0.0
      %835 = vmatpush1.msra.mxu0 0.0
      %836 = vmatprep.mubr.f32.mxu0 0.0
      %837 = vmatmul.mubr.f32.gmra.mrb[0].mxu0 %v770
      %v838 = vpop.f32.mrb[0].mxu0
      %v839 = vadd.f32 0.0, %v838
      %v840 = vpop.f32.mrb[0].mxu0
      %841 = vdwg.mxu0
      %v842 = vadd.f32 %v767, %v839
      %v843 = vld [vmem:[%s2] sm:$0xff]
      %v844 = vld [vmem:[#allocation2 + $0x2ac] sm:$0xff]
      %v845 = vld [vmem:[#allocation2 + $0x2b4] sm:$0xff]
      %v846 = vld [vmem:[#allocation2 + $0x2e4] sm:$0xff]
      %v847 = vld [vmem:[#allocation2 + $0x2ec] sm:$0xff]
      %v848 = vld [vmem:[#allocation2 + $0x31c] sm:$0xff]
      %v849 = vld [vmem:[#allocation2 + $0x324] sm:$0xff]
      %v850 = vld [vmem:[#allocation2 + $0x354] sm:$0xff]
      %v851 = vld [vmem:[#allocation2 + $0x35c] sm:$0xff]
      %v852 = vld [vmem:[#allocation2 + $0x38c] sm:$0xff]
      %v853 = vld [vmem:[#allocation2 + $0x394] sm:$0xff]
      %v854 = vld [vmem:[#allocation2 + $0x3c4] sm:$0xff]
      %v855 = vld [vmem:[#allocation2 + $0x3cc] sm:$0xff]
      %v856 = vld [vmem:[#allocation2 + $0x3fc] sm:$0xff]
      %v857 = vld [vmem:[#allocation2 + $0x404] sm:$0xff]
      %v858 = vld [vmem:[#allocation2 + $0x434] sm:$0xff]
      %v859 = vld [vmem:[#allocation2 + $0x43c] sm:$0xff]
      %v860 = vld [vmem:[#allocation2 + $0x46c] sm:$0xff]
      %v861 = vld [vmem:[#allocation2 + $0x474] sm:$0xff]
      %v862 = vld [vmem:[#allocation2 + $0x4a4] sm:$0xff]
      %v863 = vld [vmem:[#allocation2 + $0x4ac] sm:$0xff]
      %v864 = vld [vmem:[#allocation2 + $0x4dc] sm:$0xff]
      %v865 = vld [vmem:[#allocation2 + $0x4e4] sm:$0xff]
      %v866 = vld [vmem:[#allocation2 + $0x514] sm:$0xff]
      %v867 = vld [vmem:[#allocation2 + $0x51c] sm:$0xff]
      %v868 = vld [vmem:[#allocation2 + $0x54c] sm:$0xff]
      %v869 = vld [vmem:[#allocation2 + $0x554] sm:$0xff]
      %v870 = vld [vmem:[#allocation2 + $0x584] sm:$0xff]
      %v871 = vld [vmem:[#allocation2 + $0x58c] sm:$0xff]
      %v872 = vld [vmem:[#allocation2 + $0x5bc] sm:$0xff]
      %v873 = vld [vmem:[#allocation2 + $0x5c4] sm:$0xff]
      %v874 = vld [vmem:[#allocation2 + $0x5f4] sm:$0xff]
      %v875 = vld [vmem:[#allocation2 + $0x5fc] sm:$0xff]
      %v876 = vld [vmem:[#allocation2 + $0x62c] sm:$0xff]
      %v877 = vld [vmem:[#allocation2 + $0x634] sm:$0xff]
      %v878 = vld [vmem:[#allocation2 + $0x664] sm:$0xff]
      %v879 = vld [vmem:[#allocation2 + $0x66c] sm:$0xff]
      %v880 = vld [vmem:[#allocation2 + $0x69c] sm:$0xff]
      %v881 = vld [vmem:[#allocation2 + $0x6a4] sm:$0xff]
      %v882 = vld [vmem:[#allocation2 + $0x6d4] sm:$0xff]
      %v883 = vld [vmem:[#allocation2 + $0x6dc] sm:$0xff]
      %v884 = vld [vmem:[#allocation2 + $0x70c] sm:$0xff]
      %v885 = vld [vmem:[#allocation2 + $0x714] sm:$0xff]
      %v886 = vld [vmem:[#allocation2 + $0x744] sm:$0xff]
      %v887 = vld [vmem:[#allocation2 + $0x74c] sm:$0xff]
      %v888 = vld [vmem:[#allocation2 + $0x77c] sm:$0xff]
      %v889 = vld [vmem:[#allocation2 + $0x784] sm:$0xff]
      %v890 = vld [vmem:[#allocation2 + $0x7b4] sm:$0xff]
      %v891 = vld [vmem:[#allocation2 + $0x7bc] sm:$0xff]
      %v892 = vld [vmem:[#allocation2 + $0x7ec] sm:$0xff]
      %v893 = vld [vmem:[#allocation2 + $0x7f4] sm:$0xff]
      %v894 = vld [vmem:[#allocation2 + $0x824] sm:$0xff]
      %v895 = vld [vmem:[#allocation2 + $0x82c] sm:$0xff]
      %v896 = vld [vmem:[#allocation2 + $0x85c] sm:$0xff]
      %v897 = vld [vmem:[#allocation2 + $0x864] sm:$0xff]
      %v898 = vld [vmem:[#allocation2 + $0x894] sm:$0xff]
      %v899 = vld [vmem:[#allocation2 + $0x89c] sm:$0xff]
      %v900 = vld [vmem:[%s3] sm:$0xff]
      %v902 = vsel %vm279, %v844, 0
      %v905 = vsel %vm279, %v845, 0
      %v908 = vsel %vm279, %v846, 0
      %v911 = vsel %vm279, %v847, 0
      %v914 = vsel %vm279, %v848, 0
      %v917 = vsel %vm279, %v849, 0
      %v920 = vsel %vm279, %v850, 0
      %v923 = vsel %vm279, %v851, 0
      %v926 = vsel %vm279, %v852, 0
      %v929 = vsel %vm279, %v853, 0
      %v932 = vsel %vm279, %v854, 0
      %v935 = vsel %vm279, %v855, 0
      %v938 = vsel %vm279, %v856, 0
      %v941 = vsel %vm279, %v857, 0
      %v944 = vsel %vm279, %v858, 0
      %v947 = vsel %vm279, %v859, 0
      %v950 = vsel %vm279, %v860, 0
      %v953 = vsel %vm279, %v861, 0
      %v956 = vsel %vm279, %v862, 0
      %v959 = vsel %vm279, %v863, 0
      %v962 = vsel %vm279, %v864, 0
      %v965 = vsel %vm279, %v865, 0
      %v968 = vsel %vm279, %v866, 0
      %v971 = vsel %vm279, %v867, 0
      %v974 = vsel %vm279, %v868, 0
      %v977 = vsel %vm279, %v869, 0
      %v980 = vsel %vm279, %v870, 0
      %v983 = vsel %vm279, %v871, 0
      %v986 = vsel %vm279, %v872, 0
      %v989 = vsel %vm279, %v873, 0
      %v992 = vsel %vm279, %v874, 0
      %v995 = vsel %vm279, %v875, 0
      %997 = vmatprep.subr.mxu0 0.0
      %998 = vmatpush1.msra.mxu0 %v900
      %999 = vmatprep.subr.mxu0 0.0
      %1000 = vmatpush1.msra.mxu0 0.0
      %1001 = vmatprep.subr.mxu0 0.0
      %1002 = vmatpush1.msra.mxu0 0.0
      %1003 = vmatprep.subr.mxu0 0.0
      %1004 = vmatpush1.msra.mxu0 0.0
      %1005 = vmatprep.subr.mxu0 0.0
      %1006 = vmatpush1.msra.mxu0 0.0
      %1007 = vmatprep.subr.mxu0 0.0
      %1008 = vmatpush1.msra.mxu0 0.0
      %1009 = vmatprep.subr.mxu0 0.0
      %1010 = vmatpush1.msra.mxu0 0.0
      %1011 = vmatprep.subr.mxu0 0.0
      %1012 = vmatpush1.msra.mxu0 0.0
      %1013 = vmatprep.subr.mxu0 0.0
      %1014 = vmatpush1.msra.mxu0 0.0
      %1015 = vmatprep.subr.mxu0 0.0
      %1016 = vmatpush1.msra.mxu0 0.0
      %1017 = vmatprep.subr.mxu0 0.0
      %1018 = vmatpush1.msra.mxu0 0.0
      %1019 = vmatprep.subr.mxu0 0.0
      %1020 = vmatpush1.msra.mxu0 0.0
      %1021 = vmatprep.subr.mxu0 0.0
      %1022 = vmatpush1.msra.mxu0 0.0
      %1023 = vmatprep.subr.mxu0 0.0
      %1024 = vmatpush1.msra.mxu0 0.0
      %1025 = vmatprep.subr.mxu0 0.0
      %1026 = vmatpush1.msra.mxu0 0.0
      %1027 = vmatprep.subr.mxu0 0.0
      %1028 = vmatpush1.msra.mxu0 0.0
      %1029 = vmatprep.subr.mxu0 0.0
      %1030 = vmatpush1.msra.mxu0 0.0
      %1031 = vmatprep.subr.mxu0 0.0
      %1032 = vmatpush1.msra.mxu0 0.0
      %1033 = vmatprep.subr.mxu0 0.0
      %1034 = vmatpush1.msra.mxu0 0.0
      %1035 = vmatprep.subr.mxu0 0.0
      %1036 = vmatpush1.msra.mxu0 0.0
      %1037 = vmatprep.subr.mxu0 0.0
      %1038 = vmatpush1.msra.mxu0 0.0
      %1039 = vmatprep.subr.mxu0 0.0
      %1040 = vmatpush1.msra.mxu0 0.0
      %1041 = vmatprep.subr.mxu0 0.0
      %1042 = vmatpush1.msra.mxu0 0.0
      %1043 = vmatprep.subr.mxu0 0.0
      %1044 = vmatpush1.msra.mxu0 0.0
      %1045 = vmatprep.subr.mxu0 0.0
      %1046 = vmatpush1.msra.mxu0 0.0
      %1047 = vmatprep.subr.mxu0 0.0
      %1048 = vmatpush1.msra.mxu0 0.0
      %1049 = vmatprep.subr.mxu0 0.0
      %1050 = vmatpush1.msra.mxu0 0.0
      %1051 = vmatprep.subr.mxu0 0.0
      %1052 = vmatpush1.msra.mxu0 0.0
      %1053 = vmatprep.subr.mxu0 0.0
      %1054 = vmatpush1.msra.mxu0 0.0
      %1055 = vmatprep.subr.mxu0 0.0
      %1056 = vmatpush1.msra.mxu0 0.0
      %1057 = vmatprep.subr.mxu0 0.0
      %1058 = vmatpush1.msra.mxu0 0.0
      %1059 = vmatprep.subr.mxu0 0.0
      %1060 = vmatpush1.msra.mxu0 0.0
      %1061 = vmatprep.mubr.f32.mxu0 0.0
      %1062 = vmatmul.mubr.f32.gmra.mrb[0].mxu0 %v902
      %v1063 = vpop.f32.mrb[0].mxu0
      %v1064 = vadd.f32 0.0, %v1063
      %v1065 = vpop.f32.mrb[0].mxu0
      %1066 = vmatprep.mubr.f32.mxu0 0.0
      %1067 = vmatmul.mubr.f32.gmra.mrb[0].mxu0 %v905
      %v1068 = vpop.f32.mrb[0].mxu0
      %v1069 = vadd.f32 0.0, %v1068
      %v1070 = vpop.f32.mrb[0].mxu0
      %1071 = vmatprep.mubr.f32.mxu0 0.0
      %1072 = vmatmul.mubr.f32.gmra.mrb[0].mxu0 %v908
      %v1073 = vpop.f32.mrb[0].mxu0
      %v1074 = vadd.f32 0.0, %v1073
      %v1075 = vpop.f32.mrb[0].mxu0
      %1076 = vmatprep.mubr.f32.mxu0 0.0
      %1077 = vmatmul.mubr.f32.gmra.mrb[0].mxu0 %v911
      %v1078 = vpop.f32.mrb[0].mxu0
      %v1079 = vadd.f32 0.0, %v1078
      %v1080 = vpop.f32.mrb[0].mxu0
      %1081 = vmatprep.mubr.f32.mxu0 0.0
      %1082 = vmatmul.mubr.f32.gmra.mrb[0].mxu0 %v914
      %v1083 = vpop.f32.mrb[0].mxu0
      %v1084 = vadd.f32 0.0, %v1083
      %v1085 = vpop.f32.mrb[0].mxu0
      %1086 = vmatprep.mubr.f32.mxu0 0.0
      %1087 = vmatmul.mubr.f32.gmra.mrb[0].mxu0 %v917
      %v1088 = vpop.f32.mrb[0].mxu0
      %v1089 = vadd.f32 0.0, %v1088
      %v1090 = vpop.f32.mrb[0].mxu0
      %1091 = vmatprep.mubr.f32.mxu0 0.0
      %1092 = vmatmul.mubr.f32.gmra.mrb[0].mxu0 %v920
      %v1093 = vpop.f32.mrb[0].mxu0
      %v1094 = vadd.f32 0.0, %v1093
      %v1095 = vpop.f32.mrb[0].mxu0
      %1096 = vmatprep.mubr.f32.mxu0 0.0
      %1097 = vmatmul.mubr.f32.gmra.mrb[0].mxu0 %v923
      %v1098 = vpop.f32.mrb[0].mxu0
      %v1099 = vadd.f32 0.0, %v1098
      %v1100 = vpop.f32.mrb[0].mxu0
      %1101 = vmatprep.mubr.f32.mxu0 0.0
      %1102 = vmatmul.mubr.f32.gmra.mrb[0].mxu0 %v926
      %v1103 = vpop.f32.mrb[0].mxu0
      %v1104 = vadd.f32 0.0, %v1103
      %v1105 = vpop.f32.mrb[0].mxu0
      %1106 = vmatprep.mubr.f32.mxu0 0.0
      %1107 = vmatmul.mubr.f32.gmra.mrb[0].mxu0 %v929
      %v1108 = vpop.f32.mrb[0].mxu0
      %v1109 = vadd.f32 0.0, %v1108
      %v1110 = vpop.f32.mrb[0].mxu0
      %1111 = vmatprep.mubr.f32.mxu0 0.0
      %1112 = vmatmul.mubr.f32.gmra.mrb[0].mxu0 %v932
      %v1113 = vpop.f32.mrb[0].mxu0
      %v1114 = vadd.f32 0.0, %v1113
      %v1115 = vpop.f32.mrb[0].mxu0
      %1116 = vmatprep.mubr.f32.mxu0 0.0
      %1117 = vmatmul.mubr.f32.gmra.mrb[0].mxu0 %v935
      %v1118 = vpop.f32.mrb[0].mxu0
      %v1119 = vadd.f32 0.0, %v1118
      %v1120 = vpop.f32.mrb[0].mxu0
      %1121 = vmatprep.mubr.f32.mxu0 0.0
      %1122 = vmatmul.mubr.f32.gmra.mrb[0].mxu0 %v938
      %v1123 = vpop.f32.mrb[0].mxu0
      %v1124 = vadd.f32 0.0, %v1123
      %v1125 = vpop.f32.mrb[0].mxu0
      %1126 = vmatprep.mubr.f32.mxu0 0.0
      %1127 = vmatmul.mubr.f32.gmra.mrb[0].mxu0 %v941
      %v1128 = vpop.f32.mrb[0].mxu0
      %v1129 = vadd.f32 0.0, %v1128
      %v1130 = vpop.f32.mrb[0].mxu0
      %1131 = vmatprep.mubr.f32.mxu0 0.0
      %1132 = vmatmul.mubr.f32.gmra.mrb[0].mxu0 %v944
      %v1133 = vpop.f32.mrb[0].mxu0
      %v1134 = vadd.f32 0.0, %v1133
      %v1135 = vpop.f32.mrb[0].mxu0
      %1136 = vmatprep.mubr.f32.mxu0 0.0
      %1137 = vmatmul.mubr.f32.gmra.mrb[0].mxu0 %v947
      %v1138 = vpop.f32.mrb[0].mxu0
      %v1139 = vadd.f32 0.0, %v1138
      %v1140 = vpop.f32.mrb[0].mxu0
      %1141 = vmatprep.mubr.f32.mxu0 0.0
      %1142 = vmatmul.mubr.f32.gmra.mrb[0].mxu0 %v950
      %v1143 = vpop.f32.mrb[0].mxu0
      %v1144 = vadd.f32 0.0, %v1143
      %v1145 = vpop.f32.mrb[0].mxu0
      %1146 = vmatprep.mubr.f32.mxu0 0.0
      %1147 = vmatmul.mubr.f32.gmra.mrb[0].mxu0 %v953
      %v1148 = vpop.f32.mrb[0].mxu0
      %v1149 = vadd.f32 0.0, %v1148
      %v1150 = vpop.f32.mrb[0].mxu0
      %1151 = vmatprep.mubr.f32.mxu0 0.0
      %1152 = vmatmul.mubr.f32.gmra.mrb[0].mxu0 %v956
      %v1153 = vpop.f32.mrb[0].mxu0
      %v1154 = vadd.f32 0.0, %v1153
      %v1155 = vpop.f32.mrb[0].mxu0
      %1156 = vmatprep.mubr.f32.mxu0 0.0
      %1157 = vmatmul.mubr.f32.gmra.mrb[0].mxu0 %v959
      %v1158 = vpop.f32.mrb[0].mxu0
      %v1159 = vadd.f32 0.0, %v1158
      %v1160 = vpop.f32.mrb[0].mxu0
      %1161 = vmatprep.mubr.f32.mxu0 0.0
      %1162 = vmatmul.mubr.f32.gmra.mrb[0].mxu0 %v962
      %v1163 = vpop.f32.mrb[0].mxu0
      %v1164 = vadd.f32 0.0, %v1163
      %v1165 = vpop.f32.mrb[0].mxu0
      %1166 = vmatprep.mubr.f32.mxu0 0.0
      %1167 = vmatmul.mubr.f32.gmra.mrb[0].mxu0 %v965
      %v1168 = vpop.f32.mrb[0].mxu0
      %v1169 = vadd.f32 0.0, %v1168
      %v1170 = vpop.f32.mrb[0].mxu0
      %1171 = vmatprep.mubr.f32.mxu0 0.0
      %1172 = vmatmul.mubr.f32.gmra.mrb[0].mxu0 %v968
      %v1173 = vpop.f32.mrb[0].mxu0
      %v1174 = vadd.f32 0.0, %v1173
      %v1175 = vpop.f32.mrb[0].mxu0
      %1176 = vmatprep.mubr.f32.mxu0 0.0
      %1177 = vmatmul.mubr.f32.gmra.mrb[0].mxu0 %v971
      %v1178 = vpop.f32.mrb[0].mxu0
      %v1179 = vadd.f32 0.0, %v1178
      %v1180 = vpop.f32.mrb[0].mxu0
      %1181 = vmatprep.mubr.f32.mxu0 0.0
      %1182 = vmatmul.mubr.f32.gmra.mrb[0].mxu0 %v974
      %v1183 = vpop.f32.mrb[0].mxu0
      %v1184 = vadd.f32 0.0, %v1183
      %v1185 = vpop.f32.mrb[0].mxu0
      %1186 = vmatprep.mubr.f32.mxu0 0.0
      %1187 = vmatmul.mubr.f32.gmra.mrb[0].mxu0 %v977
      %v1188 = vpop.f32.mrb[0].mxu0
      %v1189 = vadd.f32 0.0, %v1188
      %v1190 = vpop.f32.mrb[0].mxu0
      %1191 = vmatprep.mubr.f32.mxu0 0.0
      %1192 = vmatmul.mubr.f32.gmra.mrb[0].mxu0 %v980
      %v1193 = vpop.f32.mrb[0].mxu0
      %v1194 = vadd.f32 0.0, %v1193
      %v1195 = vpop.f32.mrb[0].mxu0
      %1196 = vmatprep.mubr.f32.mxu0 0.0
      %1197 = vmatmul.mubr.f32.gmra.mrb[0].mxu0 %v983
      %v1198 = vpop.f32.mrb[0].mxu0
      %v1199 = vadd.f32 0.0, %v1198
      %v1200 = vpop.f32.mrb[0].mxu0
      %1201 = vmatprep.mubr.f32.mxu0 0.0
      %1202 = vmatmul.mubr.f32.gmra.mrb[0].mxu0 %v986
      %v1203 = vpop.f32.mrb[0].mxu0
      %v1204 = vadd.f32 0.0, %v1203
      %v1205 = vpop.f32.mrb[0].mxu0
      %1206 = vmatprep.mubr.f32.mxu0 0.0
      %1207 = vmatmul.mubr.f32.gmra.mrb[0].mxu0 %v989
      %v1208 = vpop.f32.mrb[0].mxu0
      %v1209 = vadd.f32 0.0, %v1208
      %v1210 = vpop.f32.mrb[0].mxu0
      %1211 = vmatprep.mubr.f32.mxu0 0.0
      %1212 = vmatmul.mubr.f32.gmra.mrb[0].mxu0 %v992
      %v1213 = vpop.f32.mrb[0].mxu0
      %v1214 = vadd.f32 0.0, %v1213
      %v1215 = vpop.f32.mrb[0].mxu0
      %1216 = vmatprep.mubr.f32.mxu0 0.0
      %1217 = vmatmul.mubr.f32.gmra.mrb[0].mxu0 %v995
      %v1218 = vpop.f32.mrb[0].mxu0
      %v1219 = vadd.f32 0.0, %v1218
      %v1220 = vpop.f32.mrb[0].mxu0
      %1221 = vdwg.mxu0
      %v1223 = vsel %vm279, %v632, 0
      %v1226 = vsel %vm279, %v633, 0
      %v1229 = vsel %vm279, %v634, 0
      %v1232 = vsel %vm279, %v635, 0
      %v1235 = vsel %vm279, %v636, 0
      %v1238 = vsel %vm279, %v637, 0
      %v1241 = vsel %vm279, %v638, 0
      %v1244 = vsel %vm279, %v639, 0
      %v1247 = vsel %vm279, %v640, 0
      %v1250 = vsel %vm279, %v641, 0
      %v1253 = vsel %vm279, %v642, 0
      %v1256 = vsel %vm279, %v643, 0
      %v1259 = vsel %vm279, %v644, 0
      %v1262 = vsel %vm279, %v645, 0
      %v1265 = vsel %vm279, %v646, 0
      %v1268 = vsel %vm279, %v647, 0
      %v1271 = vsel %vm279, %v648, 0
      %v1274 = vsel %vm279, %v649, 0
      %v1277 = vsel %vm279, %v650, 0
      %v1280 = vsel %vm279, %v651, 0
      %v1283 = vsel %vm279, %v652, 0
      %v1286 = vsel %vm279, %v653, 0
      %v1289 = vsel %vm279, %v654, 0
      %v1292 = vsel %vm279, %v655, 0
      %v1295 = vsel %vm279, %v656, 0
      %v1298 = vsel %vm279, %v657, 0
      %v1301 = vsel %vm279, %v658, 0
      %v1304 = vsel %vm279, %v659, 0
      %v1307 = vsel %vm279, %v660, 0
      %v1310 = vsel %vm279, %v661, 0
      %v1313 = vsel %vm279, %v662, 0
      %v1316 = vsel %vm279, %v663, 0
      %1318 = vmatprep.subr.mxu0 0.0
      %1319 = vmatpush1.msra.mxu0 %v843
      %1320 = vmatprep.subr.mxu0 0.0
      %1321 = vmatpush1.msra.mxu0 0.0
      %1322 = vmatprep.subr.mxu0 0.0
      %1323 = vmatpush1.msra.mxu0 0.0
      %1324 = vmatprep.subr.mxu0 0.0
      %1325 = vmatpush1.msra.mxu0 0.0
      %1326 = vmatprep.subr.mxu0 0.0
      %1327 = vmatpush1.msra.mxu0 0.0
      %1328 = vmatprep.subr.mxu0 0.0
      %1329 = vmatpush1.msra.mxu0 0.0
      %1330 = vmatprep.subr.mxu0 0.0
      %1331 = vmatpush1.msra.mxu0 0.0
      %1332 = vmatprep.subr.mxu0 0.0
      %1333 = vmatpush1.msra.mxu0 0.0
      %1334 = vmatprep.subr.mxu0 0.0
      %1335 = vmatpush1.msra.mxu0 0.0
      %1336 = vmatprep.subr.mxu0 0.0
      %1337 = vmatpush1.msra.mxu0 0.0
      %1338 = vmatprep.subr.mxu0 0.0
      %1339 = vmatpush1.msra.mxu0 0.0
      %1340 = vmatprep.subr.mxu0 0.0
      %1341 = vmatpush1.msra.mxu0 0.0
      %1342 = vmatprep.subr.mxu0 0.0
      %1343 = vmatpush1.msra.mxu0 0.0
      %1344 = vmatprep.subr.mxu0 0.0
      %1345 = vmatpush1.msra.mxu0 0.0
      %1346 = vmatprep.subr.mxu0 0.0
      %1347 = vmatpush1.msra.mxu0 0.0
      %1348 = vmatprep.subr.mxu0 0.0
      %1349 = vmatpush1.msra.mxu0 0.0
      %1350 = vmatprep.subr.mxu0 0.0
      %1351 = vmatpush1.msra.mxu0 0.0
      %1352 = vmatprep.subr.mxu0 0.0
      %1353 = vmatpush1.msra.mxu0 0.0
      %1354 = vmatprep.subr.mxu0 0.0
      %1355 = vmatpush1.msra.mxu0 0.0
      %1356 = vmatprep.subr.mxu0 0.0
      %1357 = vmatpush1.msra.mxu0 0.0
      %1358 = vmatprep.subr.mxu0 0.0
      %1359 = vmatpush1.msra.mxu0 0.0
      %1360 = vmatprep.subr.mxu0 0.0
      %1361 = vmatpush1.msra.mxu0 0.0
      %1362 = vmatprep.subr.mxu0 0.0
      %1363 = vmatpush1.msra.mxu0 0.0
      %1364 = vmatprep.subr.mxu0 0.0
      %1365 = vmatpush1.msra.mxu0 0.0
      %1366 = vmatprep.subr.mxu0 0.0
      %1367 = vmatpush1.msra.mxu0 0.0
      %1368 = vmatprep.subr.mxu0 0.0
      %1369 = vmatpush1.msra.mxu0 0.0
      %1370 = vmatprep.subr.mxu0 0.0
      %1371 = vmatpush1.msra.mxu0 0.0
      %1372 = vmatprep.subr.mxu0 0.0
      %1373 = vmatpush1.msra.mxu0 0.0
      %1374 = vmatprep.subr.mxu0 0.0
      %1375 = vmatpush1.msra.mxu0 0.0
      %1376 = vmatprep.subr.mxu0 0.0
      %1377 = vmatpush1.msra.mxu0 0.0
      %1378 = vmatprep.subr.mxu0 0.0
      %1379 = vmatpush1.msra.mxu0 0.0
      %1380 = vmatprep.subr.mxu0 0.0
      %1381 = vmatpush1.msra.mxu0 0.0
      %1382 = vmatprep.mubr.f32.mxu0 0.0
      %1383 = vmatmul.mubr.f32.gmra.mrb[0].mxu0 %v1223
      %v1384 = vpop.f32.mrb[0].mxu0
      %v1385 = vadd.f32 %v1064, %v1384
      %v1386 = vpop.f32.mrb[0].mxu0
      %1387 = vmatprep.mubr.f32.mxu0 0.0
      %1388 = vmatmul.mubr.f32.gmra.mrb[0].mxu0 %v1226
      %v1389 = vpop.f32.mrb[0].mxu0
      %v1390 = vadd.f32 %v1069, %v1389
      %v1391 = vpop.f32.mrb[0].mxu0
      %1392 = vmatprep.mubr.f32.mxu0 0.0
      %1393 = vmatmul.mubr.f32.gmra.mrb[0].mxu0 %v1229
      %v1394 = vpop.f32.mrb[0].mxu0
      %v1395 = vadd.f32 %v1074, %v1394
      %v1396 = vpop.f32.mrb[0].mxu0
      %1397 = vmatprep.mubr.f32.mxu0 0.0
      %1398 = vmatmul.mubr.f32.gmra.mrb[0].mxu0 %v1232
      %v1399 = vpop.f32.mrb[0].mxu0
      %v1400 = vadd.f32 %v1079, %v1399
      %v1401 = vpop.f32.mrb[0].mxu0
      %1402 = vmatprep.mubr.f32.mxu0 0.0
      %1403 = vmatmul.mubr.f32.gmra.mrb[0].mxu0 %v1235
      %v1404 = vpop.f32.mrb[0].mxu0
      %v1405 = vadd.f32 %v1084, %v1404
      %v1406 = vpop.f32.mrb[0].mxu0
      %1407 = vmatprep.mubr.f32.mxu0 0.0
      %1408 = vmatmul.mubr.f32.gmra.mrb[0].mxu0 %v1238
      %v1409 = vpop.f32.mrb[0].mxu0
      %v1410 = vadd.f32 %v1089, %v1409
      %v1411 = vpop.f32.mrb[0].mxu0
      %1412 = vmatprep.mubr.f32.mxu0 0.0
      %1413 = vmatmul.mubr.f32.gmra.mrb[0].mxu0 %v1241
      %v1414 = vpop.f32.mrb[0].mxu0
      %v1415 = vadd.f32 %v1094, %v1414
      %v1416 = vpop.f32.mrb[0].mxu0
      %1417 = vmatprep.mubr.f32.mxu0 0.0
      %1418 = vmatmul.mubr.f32.gmra.mrb[0].mxu0 %v1244
      %v1419 = vpop.f32.mrb[0].mxu0
      %v1420 = vadd.f32 %v1099, %v1419
      %v1421 = vpop.f32.mrb[0].mxu0
      %1422 = vmatprep.mubr.f32.mxu0 0.0
      %1423 = vmatmul.mubr.f32.gmra.mrb[0].mxu0 %v1247
      %v1424 = vpop.f32.mrb[0].mxu0
      %v1425 = vadd.f32 %v1104, %v1424
      %v1426 = vpop.f32.mrb[0].mxu0
      %1427 = vmatprep.mubr.f32.mxu0 0.0
      %1428 = vmatmul.mubr.f32.gmra.mrb[0].mxu0 %v1250
      %v1429 = vpop.f32.mrb[0].mxu0
      %v1430 = vadd.f32 %v1109, %v1429
      %v1431 = vpop.f32.mrb[0].mxu0
      %1432 = vmatprep.mubr.f32.mxu0 0.0
      %1433 = vmatmul.mubr.f32.gmra.mrb[0].mxu0 %v1253
      %v1434 = vpop.f32.mrb[0].mxu0
      %v1435 = vadd.f32 %v1114, %v1434
      %v1436 = vpop.f32.mrb[0].mxu0
      %1437 = vmatprep.mubr.f32.mxu0 0.0
      %1438 = vmatmul.mubr.f32.gmra.mrb[0].mxu0 %v1256
      %v1439 = vpop.f32.mrb[0].mxu0
      %v1440 = vadd.f32 %v1119, %v1439
      %v1441 = vpop.f32.mrb[0].mxu0
      %1442 = vmatprep.mubr.f32.mxu0 0.0
      %1443 = vmatmul.mubr.f32.gmra.mrb[0].mxu0 %v1259
      %v1444 = vpop.f32.mrb[0].mxu0
      %v1445 = vadd.f32 %v1124, %v1444
      %v1446 = vpop.f32.mrb[0].mxu0
      %1447 = vmatprep.mubr.f32.mxu0 0.0
      %1448 = vmatmul.mubr.f32.gmra.mrb[0].mxu0 %v1262
      %v1449 = vpop.f32.mrb[0].mxu0
      %v1450 = vadd.f32 %v1129, %v1449
      %v1451 = vpop.f32.mrb[0].mxu0
      %1452 = vmatprep.mubr.f32.mxu0 0.0
      %1453 = vmatmul.mubr.f32.gmra.mrb[0].mxu0 %v1265
      %v1454 = vpop.f32.mrb[0].mxu0
      %v1455 = vadd.f32 %v1134, %v1454
      %v1456 = vpop.f32.mrb[0].mxu0
      %1457 = vmatprep.mubr.f32.mxu0 0.0
      %1458 = vmatmul.mubr.f32.gmra.mrb[0].mxu0 %v1268
      %v1459 = vpop.f32.mrb[0].mxu0
      %v1460 = vadd.f32 %v1139, %v1459
      %v1461 = vpop.f32.mrb[0].mxu0
      %1462 = vmatprep.mubr.f32.mxu0 0.0
      %1463 = vmatmul.mubr.f32.gmra.mrb[0].mxu0 %v1271
      %v1464 = vpop.f32.mrb[0].mxu0
      %v1465 = vadd.f32 %v1144, %v1464
      %v1466 = vpop.f32.mrb[0].mxu0
      %1467 = vmatprep.mubr.f32.mxu0 0.0
      %1468 = vmatmul.mubr.f32.gmra.mrb[0].mxu0 %v1274
      %v1469 = vpop.f32.mrb[0].mxu0
      %v1470 = vadd.f32 %v1149, %v1469
      %v1471 = vpop.f32.mrb[0].mxu0
      %1472 = vmatprep.mubr.f32.mxu0 0.0
      %1473 = vmatmul.mubr.f32.gmra.mrb[0].mxu0 %v1277
      %v1474 = vpop.f32.mrb[0].mxu0
      %v1475 = vadd.f32 %v1154, %v1474
      %v1476 = vpop.f32.mrb[0].mxu0
      %1477 = vmatprep.mubr.f32.mxu0 0.0
      %1478 = vmatmul.mubr.f32.gmra.mrb[0].mxu0 %v1280
      %v1479 = vpop.f32.mrb[0].mxu0
      %v1480 = vadd.f32 %v1159, %v1479
      %v1481 = vpop.f32.mrb[0].mxu0
      %1482 = vmatprep.mubr.f32.mxu0 0.0
      %1483 = vmatmul.mubr.f32.gmra.mrb[0].mxu0 %v1283
      %v1484 = vpop.f32.mrb[0].mxu0
      %v1485 = vadd.f32 %v1164, %v1484
      %v1486 = vpop.f32.mrb[0].mxu0
      %1487 = vmatprep.mubr.f32.mxu0 0.0
      %1488 = vmatmul.mubr.f32.gmra.mrb[0].mxu0 %v1286
      %v1489 = vpop.f32.mrb[0].mxu0
      %v1490 = vadd.f32 %v1169, %v1489
      %v1491 = vpop.f32.mrb[0].mxu0
      %1492 = vmatprep.mubr.f32.mxu0 0.0
      %1493 = vmatmul.mubr.f32.gmra.mrb[0].mxu0 %v1289
      %v1494 = vpop.f32.mrb[0].mxu0
      %v1495 = vadd.f32 %v1174, %v1494
      %v1496 = vpop.f32.mrb[0].mxu0
      %1497 = vmatprep.mubr.f32.mxu0 0.0
      %1498 = vmatmul.mubr.f32.gmra.mrb[0].mxu0 %v1292
      %v1499 = vpop.f32.mrb[0].mxu0
      %v1500 = vadd.f32 %v1179, %v1499
      %v1501 = vpop.f32.mrb[0].mxu0
      %1502 = vmatprep.mubr.f32.mxu0 0.0
      %1503 = vmatmul.mubr.f32.gmra.mrb[0].mxu0 %v1295
      %v1504 = vpop.f32.mrb[0].mxu0
      %v1505 = vadd.f32 %v1184, %v1504
      %v1506 = vpop.f32.mrb[0].mxu0
      %1507 = vmatprep.mubr.f32.mxu0 0.0
      %1508 = vmatmul.mubr.f32.gmra.mrb[0].mxu0 %v1298
      %v1509 = vpop.f32.mrb[0].mxu0
      %v1510 = vadd.f32 %v1189, %v1509
      %v1511 = vpop.f32.mrb[0].mxu0
      %1512 = vmatprep.mubr.f32.mxu0 0.0
      %1513 = vmatmul.mubr.f32.gmra.mrb[0].mxu0 %v1301
      %v1514 = vpop.f32.mrb[0].mxu0
      %v1515 = vadd.f32 %v1194, %v1514
      %v1516 = vpop.f32.mrb[0].mxu0
      %1517 = vmatprep.mubr.f32.mxu0 0.0
      %1518 = vmatmul.mubr.f32.gmra.mrb[0].mxu0 %v1304
      %v1519 = vpop.f32.mrb[0].mxu0
      %v1520 = vadd.f32 %v1199, %v1519
      %v1521 = vpop.f32.mrb[0].mxu0
      %1522 = vmatprep.mubr.f32.mxu0 0.0
      %1523 = vmatmul.mubr.f32.gmra.mrb[0].mxu0 %v1307
      %v1524 = vpop.f32.mrb[0].mxu0
      %v1525 = vadd.f32 %v1204, %v1524
      %v1526 = vpop.f32.mrb[0].mxu0
      %1527 = vmatprep.mubr.f32.mxu0 0.0
      %1528 = vmatmul.mubr.f32.gmra.mrb[0].mxu0 %v1310
      %v1529 = vpop.f32.mrb[0].mxu0
      %v1530 = vadd.f32 %v1209, %v1529
      %v1531 = vpop.f32.mrb[0].mxu0
      %1532 = vmatprep.mubr.f32.mxu0 0.0
      %1533 = vmatmul.mubr.f32.gmra.mrb[0].mxu0 %v1313
      %v1534 = vpop.f32.mrb[0].mxu0
      %v1535 = vadd.f32 %v1214, %v1534
      %v1536 = vpop.f32.mrb[0].mxu0
      %1537 = vmatprep.mubr.f32.mxu0 0.0
      %1538 = vmatmul.mubr.f32.gmra.mrb[0].mxu0 %v1316
      %v1539 = vpop.f32.mrb[0].mxu0
      %v1540 = vadd.f32 %v1219, %v1539
      %v1541 = vpop.f32.mrb[0].mxu0
      %1542 = vdwg.mxu0
      %s1543 = scalar_lea.vmem %s3, 24
      %v1544 = vld [vmem:[%s1543] sm:$0xff]
      %v1546 = vsel %vm279, %v876, 0
      %v1549 = vsel %vm279, %v877, 0
      %v1552 = vsel %vm279, %v878, 0
      %v1555 = vsel %vm279, %v879, 0
      %v1558 = vsel %vm279, %v880, 0
      %v1561 = vsel %vm279, %v881, 0
      %v1564 = vsel %vm279, %v882, 0
      %v1567 = vsel %vm279, %v883, 0
      %v1570 = vsel %vm279, %v884, 0
      %v1573 = vsel %vm279, %v885, 0
      %v1576 = vsel %vm279, %v886, 0
      %v1579 = vsel %vm279, %v887, 0
      %1581 = vmatprep.subr.mxu0 0.0
      %1582 = vmatpush1.msra.mxu0 %v1544
      %1583 = vmatprep.subr.mxu0 0.0
      %1584 = vmatpush1.msra.mxu0 0.0
      %1585 = vmatprep.subr.mxu0 0.0
      %1586 = vmatpush1.msra.mxu0 0.0
      %1587 = vmatprep.subr.mxu0 0.0
      %1588 = vmatpush1.msra.mxu0 0.0
      %1589 = vmatprep.subr.mxu0 0.0
      %1590 = vmatpush1.msra.mxu0 0.0
      %1591 = vmatprep.subr.mxu0 0.0
      %1592 = vmatpush1.msra.mxu0 0.0
      %1593 = vmatprep.subr.mxu0 0.0
      %1594 = vmatpush1.msra.mxu0 0.0
      %1595 = vmatprep.subr.mxu0 0.0
      %1596 = vmatpush1.msra.mxu0 0.0
      %1597 = vmatprep.subr.mxu0 0.0
      %1598 = vmatpush1.msra.mxu0 0.0
      %1599 = vmatprep.subr.mxu0 0.0
      %1600 = vmatpush1.msra.mxu0 0.0
      %1601 = vmatprep.subr.mxu0 0.0
      %1602 = vmatpush1.msra.mxu0 0.0
      %1603 = vmatprep.subr.mxu0 0.0
      %1604 = vmatpush1.msra.mxu0 0.0
      %1605 = vmatprep.subr.mxu0 0.0
      %1606 = vmatpush1.msra.mxu0 0.0
      %1607 = vmatprep.subr.mxu0 0.0
      %1608 = vmatpush1.msra.mxu0 0.0
      %1609 = vmatprep.subr.mxu0 0.0
      %1610 = vmatpush1.msra.mxu0 0.0
      %1611 = vmatprep.subr.mxu0 0.0
      %1612 = vmatpush1.msra.mxu0 0.0
      %1613 = vmatprep.subr.mxu0 0.0
      %1614 = vmatpush1.msra.mxu0 0.0
      %1615 = vmatprep.subr.mxu0 0.0
      %1616 = vmatpush1.msra.mxu0 0.0
      %1617 = vmatprep.subr.mxu0 0.0
      %1618 = vmatpush1.msra.mxu0 0.0
      %1619 = vmatprep.subr.mxu0 0.0
      %1620 = vmatpush1.msra.mxu0 0.0
      %1621 = vmatprep.subr.mxu0 0.0
      %1622 = vmatpush1.msra.mxu0 0.0
      %1623 = vmatprep.subr.mxu0 0.0
      %1624 = vmatpush1.msra.mxu0 0.0
      %1625 = vmatprep.subr.mxu0 0.0
      %1626 = vmatpush1.msra.mxu0 0.0
      %1627 = vmatprep.subr.mxu0 0.0
      %1628 = vmatpush1.msra.mxu0 0.0
      %1629 = vmatprep.subr.mxu0 0.0
      %1630 = vmatpush1.msra.mxu0 0.0
      %1631 = vmatprep.subr.mxu0 0.0
      %1632 = vmatpush1.msra.mxu0 0.0
      %1633 = vmatprep.subr.mxu0 0.0
      %1634 = vmatpush1.msra.mxu0 0.0
      %1635 = vmatprep.subr.mxu0 0.0
      %1636 = vmatpush1.msra.mxu0 0.0
      %1637 = vmatprep.subr.mxu0 0.0
      %1638 = vmatpush1.msra.mxu0 0.0
      %1639 = vmatprep.subr.mxu0 0.0
      %1640 = vmatpush1.msra.mxu0 0.0
      %1641 = vmatprep.subr.mxu0 0.0
      %1642 = vmatpush1.msra.mxu0 0.0
      %1643 = vmatprep.subr.mxu0 0.0
      %1644 = vmatpush1.msra.mxu0 0.0
      %1645 = vmatprep.mubr.f32.mxu0 0.0
      %1646 = vmatmul.mubr.f32.gmra.mrb[0].mxu0 %v938
      %v1647 = vpop.f32.mrb[0].mxu0
      %v1648 = vadd.f32 0.0, %v1647
      %v1649 = vpop.f32.mrb[0].mxu0
      %1650 = vmatprep.mubr.f32.mxu0 0.0
      %1651 = vmatmul.mubr.f32.gmra.mrb[0].mxu0 %v941
      %v1652 = vpop.f32.mrb[0].mxu0
      %v1653 = vadd.f32 0.0, %v1652
      %v1654 = vpop.f32.mrb[0].mxu0
      %1655 = vmatprep.mubr.f32.mxu0 0.0
      %1656 = vmatmul.mubr.f32.gmra.mrb[0].mxu0 %v944
      %v1657 = vpop.f32.mrb[0].mxu0
      %v1658 = vadd.f32 0.0, %v1657
      %v1659 = vpop.f32.mrb[0].mxu0
      %1660 = vmatprep.mubr.f32.mxu0 0.0
      %1661 = vmatmul.mubr.f32.gmra.mrb[0].mxu0 %v947
      %v1662 = vpop.f32.mrb[0].mxu0
      %v1663 = vadd.f32 0.0, %v1662
      %v1664 = vpop.f32.mrb[0].mxu0
      %1665 = vmatprep.mubr.f32.mxu0 0.0
      %1666 = vmatmul.mubr.f32.gmra.mrb[0].mxu0 %v950
      %v1667 = vpop.f32.mrb[0].mxu0
      %v1668 = vadd.f32 0.0, %v1667
      %v1669 = vpop.f32.mrb[0].mxu0
      %1670 = vmatprep.mubr.f32.mxu0 0.0
      %1671 = vmatmul.mubr.f32.gmra.mrb[0].mxu0 %v953
      %v1672 = vpop.f32.mrb[0].mxu0
      %v1673 = vadd.f32 0.0, %v1672
      %v1674 = vpop.f32.mrb[0].mxu0
      %1675 = vmatprep.mubr.f32.mxu0 0.0
      %1676 = vmatmul.mubr.f32.gmra.mrb[0].mxu0 %v956
      %v1677 = vpop.f32.mrb[0].mxu0
      %v1678 = vadd.f32 0.0, %v1677
      %v1679 = vpop.f32.mrb[0].mxu0
      %1680 = vmatprep.mubr.f32.mxu0 0.0
      %1681 = vmatmul.mubr.f32.gmra.mrb[0].mxu0 %v959
      %v1682 = vpop.f32.mrb[0].mxu0
      %v1683 = vadd.f32 0.0, %v1682
      %v1684 = vpop.f32.mrb[0].mxu0
      %1685 = vmatprep.mubr.f32.mxu0 0.0
      %1686 = vmatmul.mubr.f32.gmra.mrb[0].mxu0 %v962
      %v1687 = vpop.f32.mrb[0].mxu0
      %v1688 = vadd.f32 0.0, %v1687
      %v1689 = vpop.f32.mrb[0].mxu0
      %1690 = vmatprep.mubr.f32.mxu0 0.0
      %1691 = vmatmul.mubr.f32.gmra.mrb[0].mxu0 %v965
      %v1692 = vpop.f32.mrb[0].mxu0
      %v1693 = vadd.f32 0.0, %v1692
      %v1694 = vpop.f32.mrb[0].mxu0
      %1695 = vmatprep.mubr.f32.mxu0 0.0
      %1696 = vmatmul.mubr.f32.gmra.mrb[0].mxu0 %v968
      %v1697 = vpop.f32.mrb[0].mxu0
      %v1698 = vadd.f32 0.0, %v1697
      %v1699 = vpop.f32.mrb[0].mxu0
      %1700 = vmatprep.mubr.f32.mxu0 0.0
      %1701 = vmatmul.mubr.f32.gmra.mrb[0].mxu0 %v971
      %v1702 = vpop.f32.mrb[0].mxu0
      %v1703 = vadd.f32 0.0, %v1702
      %v1704 = vpop.f32.mrb[0].mxu0
      %1705 = vmatprep.mubr.f32.mxu0 0.0
      %1706 = vmatmul.mubr.f32.gmra.mrb[0].mxu0 %v974
      %v1707 = vpop.f32.mrb[0].mxu0
      %v1708 = vadd.f32 0.0, %v1707
      %v1709 = vpop.f32.mrb[0].mxu0
      %1710 = vmatprep.mubr.f32.mxu0 0.0
      %1711 = vmatmul.mubr.f32.gmra.mrb[0].mxu0 %v977
      %v1712 = vpop.f32.mrb[0].mxu0
      %v1713 = vadd.f32 0.0, %v1712
      %v1714 = vpop.f32.mrb[0].mxu0
      %1715 = vmatprep.mubr.f32.mxu0 0.0
      %1716 = vmatmul.mubr.f32.gmra.mrb[0].mxu0 %v980
      %v1717 = vpop.f32.mrb[0].mxu0
      %v1718 = vadd.f32 0.0, %v1717
      %v1719 = vpop.f32.mrb[0].mxu0
      %1720 = vmatprep.mubr.f32.mxu0 0.0
      %1721 = vmatmul.mubr.f32.gmra.mrb[0].mxu0 %v983
      %v1722 = vpop.f32.mrb[0].mxu0
      %v1723 = vadd.f32 0.0, %v1722
      %v1724 = vpop.f32.mrb[0].mxu0
      %1725 = vmatprep.mubr.f32.mxu0 0.0
      %1726 = vmatmul.mubr.f32.gmra.mrb[0].mxu0 %v986
      %v1727 = vpop.f32.mrb[0].mxu0
      %v1728 = vadd.f32 0.0, %v1727
      %v1729 = vpop.f32.mrb[0].mxu0
      %1730 = vmatprep.mubr.f32.mxu0 0.0
      %1731 = vmatmul.mubr.f32.gmra.mrb[0].mxu0 %v989
      %v1732 = vpop.f32.mrb[0].mxu0
      %v1733 = vadd.f32 0.0, %v1732
      %v1734 = vpop.f32.mrb[0].mxu0
      %1735 = vmatprep.mubr.f32.mxu0 0.0
      %1736 = vmatmul.mubr.f32.gmra.mrb[0].mxu0 %v992
      %v1737 = vpop.f32.mrb[0].mxu0
      %v1738 = vadd.f32 0.0, %v1737
      %v1739 = vpop.f32.mrb[0].mxu0
      %1740 = vmatprep.mubr.f32.mxu0 0.0
      %1741 = vmatmul.mubr.f32.gmra.mrb[0].mxu0 %v995
      %v1742 = vpop.f32.mrb[0].mxu0
      %v1743 = vadd.f32 0.0, %v1742
      %v1744 = vpop.f32.mrb[0].mxu0
      %1745 = vmatprep.mubr.f32.mxu0 0.0
      %1746 = vmatmul.mubr.f32.gmra.mrb[0].mxu0 %v1546
      %v1747 = vpop.f32.mrb[0].mxu0
      %v1748 = vadd.f32 0.0, %v1747
      %v1749 = vpop.f32.mrb[0].mxu0
      %1750 = vmatprep.mubr.f32.mxu0 0.0
      %1751 = vmatmul.mubr.f32.gmra.mrb[0].mxu0 %v1549
      %v1752 = vpop.f32.mrb[0].mxu0
      %v1753 = vadd.f32 0.0, %v1752
      %v1754 = vpop.f32.mrb[0].mxu0
      %1755 = vmatprep.mubr.f32.mxu0 0.0
      %1756 = vmatmul.mubr.f32.gmra.mrb[0].mxu0 %v1552
      %v1757 = vpop.f32.mrb[0].mxu0
      %v1758 = vadd.f32 0.0, %v1757
      %v1759 = vpop.f32.mrb[0].mxu0
      %1760 = vmatprep.mubr.f32.mxu0 0.0
      %1761 = vmatmul.mubr.f32.gmra.mrb[0].mxu0 %v1555
      %v1762 = vpop.f32.mrb[0].mxu0
      %v1763 = vadd.f32 0.0, %v1762
      %v1764 = vpop.f32.mrb[0].mxu0
      %1765 = vmatprep.mubr.f32.mxu0 0.0
      %1766 = vmatmul.mubr.f32.gmra.mrb[0].mxu0 %v1558
      %v1767 = vpop.f32.mrb[0].mxu0
      %v1768 = vadd.f32 0.0, %v1767
      %v1769 = vpop.f32.mrb[0].mxu0
      %1770 = vmatprep.mubr.f32.mxu0 0.0
      %1771 = vmatmul.mubr.f32.gmra.mrb[0].mxu0 %v1561
      %v1772 = vpop.f32.mrb[0].mxu0
      %v1773 = vadd.f32 0.0, %v1772
      %v1774 = vpop.f32.mrb[0].mxu0
      %1775 = vmatprep.mubr.f32.mxu0 0.0
      %1776 = vmatmul.mubr.f32.gmra.mrb[0].mxu0 %v1564
      %v1777 = vpop.f32.mrb[0].mxu0
      %v1778 = vadd.f32 0.0, %v1777
      %v1779 = vpop.f32.mrb[0].mxu0
      %1780 = vmatprep.mubr.f32.mxu0 0.0
      %1781 = vmatmul.mubr.f32.gmra.mrb[0].mxu0 %v1567
      %v1782 = vpop.f32.mrb[0].mxu0
      %v1783 = vadd.f32 0.0, %v1782
      %v1784 = vpop.f32.mrb[0].mxu0
      %1785 = vmatprep.mubr.f32.mxu0 0.0
      %1786 = vmatmul.mubr.f32.gmra.mrb[0].mxu0 %v1570
      %v1787 = vpop.f32.mrb[0].mxu0
      %v1788 = vadd.f32 0.0, %v1787
      %v1789 = vpop.f32.mrb[0].mxu0
      %1790 = vmatprep.mubr.f32.mxu0 0.0
      %1791 = vmatmul.mubr.f32.gmra.mrb[0].mxu0 %v1573
      %v1792 = vpop.f32.mrb[0].mxu0
      %v1793 = vadd.f32 0.0, %v1792
      %v1794 = vpop.f32.mrb[0].mxu0
      %1795 = vmatprep.mubr.f32.mxu0 0.0
      %1796 = vmatmul.mubr.f32.gmra.mrb[0].mxu0 %v1576
      %v1797 = vpop.f32.mrb[0].mxu0
      %v1798 = vadd.f32 0.0, %v1797
      %v1799 = vpop.f32.mrb[0].mxu0
      %1800 = vmatprep.mubr.f32.mxu0 0.0
      %1801 = vmatmul.mubr.f32.gmra.mrb[0].mxu0 %v1579
      %v1802 = vpop.f32.mrb[0].mxu0
      %v1803 = vadd.f32 0.0, %v1802
      %v1804 = vpop.f32.mrb[0].mxu0
      %1805 = vdwg.mxu0
      %v1806 = vadd.f32 %v1385, %v1648
      %v1807 = vadd.f32 %v1390, %v1653
      %v1808 = vadd.f32 %v1395, %v1658
      %v1809 = vadd.f32 %v1400, %v1663
      %v1810 = vadd.f32 %v1405, %v1668
      %v1811 = vadd.f32 %v1410, %v1673
      %v1812 = vadd.f32 %v1415, %v1678
      %v1813 = vadd.f32 %v1420, %v1683
      %v1814 = vadd.f32 %v1425, %v1688
      %v1815 = vadd.f32 %v1430, %v1693
      %v1816 = vadd.f32 %v1435, %v1698
      %v1817 = vadd.f32 %v1440, %v1703
      %v1818 = vadd.f32 %v1445, %v1708
      %v1819 = vadd.f32 %v1450, %v1713
      %v1820 = vadd.f32 %v1455, %v1718
      %v1821 = vadd.f32 %v1460, %v1723
      %v1822 = vadd.f32 %v1465, %v1728
      %v1823 = vadd.f32 %v1470, %v1733
      %v1824 = vadd.f32 %v1475, %v1738
      %v1825 = vadd.f32 %v1480, %v1743
      %v1826 = vadd.f32 %v1485, %v1748
      %v1827 = vadd.f32 %v1490, %v1753
      %v1828 = vadd.f32 %v1495, %v1758
      %v1829 = vadd.f32 %v1500, %v1763
      %v1830 = vadd.f32 %v1505, %v1768
      %v1831 = vadd.f32 %v1510, %v1773
      %v1832 = vadd.f32 %v1515, %v1778
      %v1833 = vadd.f32 %v1520, %v1783
      %v1834 = vadd.f32 %v1525, %v1788
      %v1835 = vadd.f32 %v1530, %v1793
      %v1836 = vadd.f32 %v1535, %v1798
      %v1837 = vadd.f32 %v1540, %v1803
      %s1838 = scalar_lea.vmem %s3, 48
      %v1839 = vld [vmem:[%s1838] sm:$0xff]
      %v1841 = vsel %vm279, %v888, 0
      %v1844 = vsel %vm279, %v889, 0
      %v1847 = vsel %vm279, %v890, 0
      %v1850 = vsel %vm279, %v891, 0
      %v1853 = vsel %vm279, %v892, 0
      %v1856 = vsel %vm279, %v893, 0
      %v1859 = vsel %vm279, %v894, 0
      %v1862 = vsel %vm279, %v895, 0
      %v1865 = vsel %vm279, %v896, 0
      %v1868 = vsel %vm279, %v897, 0
      %v1871 = vsel %vm279, %v898, 0
      %v1874 = vsel %vm279, %v899, 0
      %1876 = vmatprep.subr.mxu0 0.0
      %1877 = vmatpush1.msra.mxu0 %v1839
      %1878 = vmatprep.subr.mxu0 0.0
      %1879 = vmatpush1.msra.mxu0 0.0
      %1880 = vmatprep.subr.mxu0 0.0
      %1881 = vmatpush1.msra.mxu0 0.0
      %1882 = vmatprep.subr.mxu0 0.0
      %1883 = vmatpush1.msra.mxu0 0.0
      %1884 = vmatprep.subr.mxu0 0.0
      %1885 = vmatpush1.msra.mxu0 0.0
      %1886 = vmatprep.subr.mxu0 0.0
      %1887 = vmatpush1.msra.mxu0 0.0
      %1888 = vmatprep.subr.mxu0 0.0
      %1889 = vmatpush1.msra.mxu0 0.0
      %1890 = vmatprep.subr.mxu0 0.0
      %1891 = vmatpush1.msra.mxu0 0.0
      %1892 = vmatprep.subr.mxu0 0.0
      %1893 = vmatpush1.msra.mxu0 0.0
      %1894 = vmatprep.subr.mxu0 0.0
      %1895 = vmatpush1.msra.mxu0 0.0
      %1896 = vmatprep.subr.mxu0 0.0
      %1897 = vmatpush1.msra.mxu0 0.0
      %1898 = vmatprep.subr.mxu0 0.0
      %1899 = vmatpush1.msra.mxu0 0.0
      %1900 = vmatprep.subr.mxu0 0.0
      %1901 = vmatpush1.msra.mxu0 0.0
      %1902 = vmatprep.subr.mxu0 0.0
      %1903 = vmatpush1.msra.mxu0 0.0
      %1904 = vmatprep.subr.mxu0 0.0
      %1905 = vmatpush1.msra.mxu0 0.0
      %1906 = vmatprep.subr.mxu0 0.0
      %1907 = vmatpush1.msra.mxu0 0.0
      %1908 = vmatprep.subr.mxu0 0.0
      %1909 = vmatpush1.msra.mxu0 0.0
      %1910 = vmatprep.subr.mxu0 0.0
      %1911 = vmatpush1.msra.mxu0 0.0
      %1912 = vmatprep.subr.mxu0 0.0
      %1913 = vmatpush1.msra.mxu0 0.0
      %1914 = vmatprep.subr.mxu0 0.0
      %1915 = vmatpush1.msra.mxu0 0.0
      %1916 = vmatprep.subr.mxu0 0.0
      %1917 = vmatpush1.msra.mxu0 0.0
      %1918 = vmatprep.subr.mxu0 0.0
      %1919 = vmatpush1.msra.mxu0 0.0
      %1920 = vmatprep.subr.mxu0 0.0
      %1921 = vmatpush1.msra.mxu0 0.0
      %1922 = vmatprep.subr.mxu0 0.0
      %1923 = vmatpush1.msra.mxu0 0.0
      %1924 = vmatprep.subr.mxu0 0.0
      %1925 = vmatpush1.msra.mxu0 0.0
      %1926 = vmatprep.subr.mxu0 0.0
      %1927 = vmatpush1.msra.mxu0 0.0
      %1928 = vmatprep.subr.mxu0 0.0
      %1929 = vmatpush1.msra.mxu0 0.0
      %1930 = vmatprep.subr.mxu0 0.0
      %1931 = vmatpush1.msra.mxu0 0.0
      %1932 = vmatprep.subr.mxu0 0.0
      %1933 = vmatpush1.msra.mxu0 0.0
      %1934 = vmatprep.subr.mxu0 0.0
      %1935 = vmatpush1.msra.mxu0 0.0
      %1936 = vmatprep.subr.mxu0 0.0
      %1937 = vmatpush1.msra.mxu0 0.0
      %1938 = vmatprep.subr.mxu0 0.0
      %1939 = vmatpush1.msra.mxu0 0.0
      %1940 = vmatprep.mubr.f32.mxu0 0.0
      %1941 = vmatmul.mubr.f32.gmra.mrb[0].mxu0 %v974
      %v1942 = vpop.f32.mrb[0].mxu0
      %v1943 = vadd.f32 0.0, %v1942
      %v1944 = vpop.f32.mrb[0].mxu0
      %1945 = vmatprep.mubr.f32.mxu0 0.0
      %1946 = vmatmul.mubr.f32.gmra.mrb[0].mxu0 %v977
      %v1947 = vpop.f32.mrb[0].mxu0
      %v1948 = vadd.f32 0.0, %v1947
      %v1949 = vpop.f32.mrb[0].mxu0
      %1950 = vmatprep.mubr.f32.mxu0 0.0
      %1951 = vmatmul.mubr.f32.gmra.mrb[0].mxu0 %v980
      %v1952 = vpop.f32.mrb[0].mxu0
      %v1953 = vadd.f32 0.0, %v1952
      %v1954 = vpop.f32.mrb[0].mxu0
      %1955 = vmatprep.mubr.f32.mxu0 0.0
      %1956 = vmatmul.mubr.f32.gmra.mrb[0].mxu0 %v983
      %v1957 = vpop.f32.mrb[0].mxu0
      %v1958 = vadd.f32 0.0, %v1957
      %v1959 = vpop.f32.mrb[0].mxu0
      %1960 = vmatprep.mubr.f32.mxu0 0.0
      %1961 = vmatmul.mubr.f32.gmra.mrb[0].mxu0 %v986
      %v1962 = vpop.f32.mrb[0].mxu0
      %v1963 = vadd.f32 0.0, %v1962
      %v1964 = vpop.f32.mrb[0].mxu0
      %1965 = vmatprep.mubr.f32.mxu0 0.0
      %1966 = vmatmul.mubr.f32.gmra.mrb[0].mxu0 %v989
      %v1967 = vpop.f32.mrb[0].mxu0
      %v1968 = vadd.f32 0.0, %v1967
      %v1969 = vpop.f32.mrb[0].mxu0
      %1970 = vmatprep.mubr.f32.mxu0 0.0
      %1971 = vmatmul.mubr.f32.gmra.mrb[0].mxu0 %v992
      %v1972 = vpop.f32.mrb[0].mxu0
      %v1973 = vadd.f32 0.0, %v1972
      %v1974 = vpop.f32.mrb[0].mxu0
      %1975 = vmatprep.mubr.f32.mxu0 0.0
      %1976 = vmatmul.mubr.f32.gmra.mrb[0].mxu0 %v995
      %v1977 = vpop.f32.mrb[0].mxu0
      %v1978 = vadd.f32 0.0, %v1977
      %v1979 = vpop.f32.mrb[0].mxu0
      %1980 = vmatprep.mubr.f32.mxu0 0.0
      %1981 = vmatmul.mubr.f32.gmra.mrb[0].mxu0 %v1546
      %v1982 = vpop.f32.mrb[0].mxu0
      %v1983 = vadd.f32 0.0, %v1982
      %v1984 = vpop.f32.mrb[0].mxu0
      %1985 = vmatprep.mubr.f32.mxu0 0.0
      %1986 = vmatmul.mubr.f32.gmra.mrb[0].mxu0 %v1549
      %v1987 = vpop.f32.mrb[0].mxu0
      %v1988 = vadd.f32 0.0, %v1987
      %v1989 = vpop.f32.mrb[0].mxu0
      %1990 = vmatprep.mubr.f32.mxu0 0.0
      %1991 = vmatmul.mubr.f32.gmra.mrb[0].mxu0 %v1552
      %v1992 = vpop.f32.mrb[0].mxu0
      %v1993 = vadd.f32 0.0, %v1992
      %v1994 = vpop.f32.mrb[0].mxu0
      %1995 = vmatprep.mubr.f32.mxu0 0.0
      %1996 = vmatmul.mubr.f32.gmra.mrb[0].mxu0 %v1555
      %v1997 = vpop.f32.mrb[0].mxu0
      %v1998 = vadd.f32 0.0, %v1997
      %v1999 = vpop.f32.mrb[0].mxu0
      %2000 = vmatprep.mubr.f32.mxu0 0.0
      %2001 = vmatmul.mubr.f32.gmra.mrb[0].mxu0 %v1558
      %v2002 = vpop.f32.mrb[0].mxu0
      %v2003 = vadd.f32 0.0, %v2002
      %v2004 = vpop.f32.mrb[0].mxu0
      %2005 = vmatprep.mubr.f32.mxu0 0.0
      %2006 = vmatmul.mubr.f32.gmra.mrb[0].mxu0 %v1561
      %v2007 = vpop.f32.mrb[0].mxu0
      %v2008 = vadd.f32 0.0, %v2007
      %v2009 = vpop.f32.mrb[0].mxu0
      %2010 = vmatprep.mubr.f32.mxu0 0.0
      %2011 = vmatmul.mubr.f32.gmra.mrb[0].mxu0 %v1564
      %v2012 = vpop.f32.mrb[0].mxu0
      %v2013 = vadd.f32 0.0, %v2012
      %v2014 = vpop.f32.mrb[0].mxu0
      %2015 = vmatprep.mubr.f32.mxu0 0.0
      %2016 = vmatmul.mubr.f32.gmra.mrb[0].mxu0 %v1567
      %v2017 = vpop.f32.mrb[0].mxu0
      %v2018 = vadd.f32 0.0, %v2017
      %v2019 = vpop.f32.mrb[0].mxu0
      %2020 = vmatprep.mubr.f32.mxu0 0.0
      %2021 = vmatmul.mubr.f32.gmra.mrb[0].mxu0 %v1570
      %v2022 = vpop.f32.mrb[0].mxu0
      %v2023 = vadd.f32 0.0, %v2022
      %v2024 = vpop.f32.mrb[0].mxu0
      %2025 = vmatprep.mubr.f32.mxu0 0.0
      %2026 = vmatmul.mubr.f32.gmra.mrb[0].mxu0 %v1573
      %v2027 = vpop.f32.mrb[0].mxu0
      %v2028 = vadd.f32 0.0, %v2027
      %v2029 = vpop.f32.mrb[0].mxu0
      %2030 = vmatprep.mubr.f32.mxu0 0.0
      %2031 = vmatmul.mubr.f32.gmra.mrb[0].mxu0 %v1576
      %v2032 = vpop.f32.mrb[0].mxu0
      %v2033 = vadd.f32 0.0, %v2032
      %v2034 = vpop.f32.mrb[0].mxu0
      %2035 = vmatprep.mubr.f32.mxu0 0.0
      %2036 = vmatmul.mubr.f32.gmra.mrb[0].mxu0 %v1579
      %v2037 = vpop.f32.mrb[0].mxu0
      %v2038 = vadd.f32 0.0, %v2037
      %v2039 = vpop.f32.mrb[0].mxu0
      %2040 = vmatprep.mubr.f32.mxu0 0.0
      %2041 = vmatmul.mubr.f32.gmra.mrb[0].mxu0 %v1841
      %v2042 = vpop.f32.mrb[0].mxu0
      %v2043 = vadd.f32 0.0, %v2042
      %v2044 = vpop.f32.mrb[0].mxu0
      %2045 = vmatprep.mubr.f32.mxu0 0.0
      %2046 = vmatmul.mubr.f32.gmra.mrb[0].mxu0 %v1844
      %v2047 = vpop.f32.mrb[0].mxu0
      %v2048 = vadd.f32 0.0, %v2047
      %v2049 = vpop.f32.mrb[0].mxu0
      %2050 = vmatprep.mubr.f32.mxu0 0.0
      %2051 = vmatmul.mubr.f32.gmra.mrb[0].mxu0 %v1847
      %v2052 = vpop.f32.mrb[0].mxu0
      %v2053 = vadd.f32 0.0, %v2052
      %v2054 = vpop.f32.mrb[0].mxu0
      %2055 = vmatprep.mubr.f32.mxu0 0.0
      %2056 = vmatmul.mubr.f32.gmra.mrb[0].mxu0 %v1850
      %v2057 = vpop.f32.mrb[0].mxu0
      %v2058 = vadd.f32 0.0, %v2057
      %v2059 = vpop.f32.mrb[0].mxu0
      %2060 = vmatprep.mubr.f32.mxu0 0.0
      %2061 = vmatmul.mubr.f32.gmra.mrb[0].mxu0 %v1853
      %v2062 = vpop.f32.mrb[0].mxu0
      %v2063 = vadd.f32 0.0, %v2062
      %v2064 = vpop.f32.mrb[0].mxu0
      %2065 = vmatprep.mubr.f32.mxu0 0.0
      %2066 = vmatmul.mubr.f32.gmra.mrb[0].mxu0 %v1856
      %v2067 = vpop.f32.mrb[0].mxu0
      %v2068 = vadd.f32 0.0, %v2067
      %v2069 = vpop.f32.mrb[0].mxu0
      %2070 = vmatprep.mubr.f32.mxu0 0.0
      %2071 = vmatmul.mubr.f32.gmra.mrb[0].mxu0 %v1859
      %v2072 = vpop.f32.mrb[0].mxu0
      %v2073 = vadd.f32 0.0, %v2072
      %v2074 = vpop.f32.mrb[0].mxu0
      %2075 = vmatprep.mubr.f32.mxu0 0.0
      %2076 = vmatmul.mubr.f32.gmra.mrb[0].mxu0 %v1862
      %v2077 = vpop.f32.mrb[0].mxu0
      %v2078 = vadd.f32 0.0, %v2077
      %v2079 = vpop.f32.mrb[0].mxu0
      %2080 = vmatprep.mubr.f32.mxu0 0.0
      %2081 = vmatmul.mubr.f32.gmra.mrb[0].mxu0 %v1865
      %v2082 = vpop.f32.mrb[0].mxu0
      %v2083 = vadd.f32 0.0, %v2082
      %v2084 = vpop.f32.mrb[0].mxu0
      %2085 = vmatprep.mubr.f32.mxu0 0.0
      %2086 = vmatmul.mubr.f32.gmra.mrb[0].mxu0 %v1868
      %v2087 = vpop.f32.mrb[0].mxu0
      %v2088 = vadd.f32 0.0, %v2087
      %v2089 = vpop.f32.mrb[0].mxu0
      %2090 = vmatprep.mubr.f32.mxu0 0.0
      %2091 = vmatmul.mubr.f32.gmra.mrb[0].mxu0 %v1871
      %v2092 = vpop.f32.mrb[0].mxu0
      %v2093 = vadd.f32 0.0, %v2092
      %v2094 = vpop.f32.mrb[0].mxu0
      %2095 = vmatprep.mubr.f32.mxu0 0.0
      %2096 = vmatmul.mubr.f32.gmra.mrb[0].mxu0 %v1874
      %v2097 = vpop.f32.mrb[0].mxu0
      %v2098 = vadd.f32 0.0, %v2097
      %v2099 = vpop.f32.mrb[0].mxu0
      %2100 = vdwg.mxu0
      %v2101 = vadd.f32 %v1806, %v1943
      %v2102 = vadd.f32 %v1807, %v1948
      %v2103 = vadd.f32 %v1808, %v1953
      %v2104 = vadd.f32 %v1809, %v1958
      %v2105 = vadd.f32 %v1810, %v1963
      %v2106 = vadd.f32 %v1811, %v1968
      %v2107 = vadd.f32 %v1812, %v1973
      %v2108 = vadd.f32 %v1813, %v1978
      %v2109 = vadd.f32 %v1814, %v1983
      %v2110 = vadd.f32 %v1815, %v1988
      %v2111 = vadd.f32 %v1816, %v1993
      %v2112 = vadd.f32 %v1817, %v1998
      %v2113 = vadd.f32 %v1818, %v2003
      %v2114 = vadd.f32 %v1819, %v2008
      %v2115 = vadd.f32 %v1820, %v2013
      %v2116 = vadd.f32 %v1821, %v2018
      %v2117 = vadd.f32 %v1822, %v2023
      %v2118 = vadd.f32 %v1823, %v2028
      %v2119 = vadd.f32 %v1824, %v2033
      %v2120 = vadd.f32 %v1825, %v2038
      %v2121 = vadd.f32 %v1826, %v2043
      %v2122 = vadd.f32 %v1827, %v2048
      %v2123 = vadd.f32 %v1828, %v2053
      %v2124 = vadd.f32 %v1829, %v2058
      %v2125 = vadd.f32 %v1830, %v2063
      %v2126 = vadd.f32 %v1831, %v2068
      %v2127 = vadd.f32 %v1832, %v2073
      %v2128 = vadd.f32 %v1833, %v2078
      %v2129 = vadd.f32 %v1834, %v2083
      %v2130 = vadd.f32 %v1835, %v2088
      %v2131 = vadd.f32 %v1836, %v2093
      %v2132 = vadd.f32 %v1837, %v2098
      %v2133 = vld [vmem:[#allocation2 + $0x12] sm:$0xff]
      %v2134 = vld [vmem:[#allocation2 + $0x1a] sm:$0xff]
      %v2135 = vld [vmem:[#allocation2 + $0x4a] sm:$0xff]
      %v2136 = vld [vmem:[#allocation2 + $0x52] sm:$0xff]
      %v2137 = vld [vmem:[#allocation2 + $0x82] sm:$0xff]
      %v2138 = vld [vmem:[#allocation2 + $0x8a] sm:$0xff]
      %v2139 = vld [vmem:[#allocation2 + $0xba] sm:$0xff]
      %v2140 = vld [vmem:[#allocation2 + $0xc2] sm:$0xff]
      %v2141 = vld [vmem:[#allocation2 + $0xf2] sm:$0xff]
      %v2142 = vld [vmem:[#allocation2 + $0xfa] sm:$0xff]
      %v2143 = vld [vmem:[#allocation2 + $0x12a] sm:$0xff]
      %v2144 = vld [vmem:[#allocation2 + $0x132] sm:$0xff]
      %v2145 = vld [vmem:[#allocation2 + $0x162] sm:$0xff]
      %v2146 = vld [vmem:[#allocation2 + $0x16a] sm:$0xff]
      %v2147 = vld [vmem:[#allocation2 + $0x19a] sm:$0xff]
      %v2148 = vld [vmem:[#allocation2 + $0x1a2] sm:$0xff]
      %v2149 = vld [vmem:[#allocation2 + $0x1d2] sm:$0xff]
      %v2150 = vld [vmem:[#allocation2 + $0x1da] sm:$0xff]
      %v2151 = vld [vmem:[#allocation2 + $0x20a] sm:$0xff]
      %v2152 = vld [vmem:[#allocation2 + $0x212] sm:$0xff]
      %v2153 = vld [vmem:[#allocation2 + $0x242] sm:$0xff]
      %v2154 = vld [vmem:[#allocation2 + $0x24a] sm:$0xff]
      %v2155 = vld [vmem:[#allocation2 + $0x27a] sm:$0xff]
      %v2156 = vld [vmem:[#allocation2 + $0x282] sm:$0xff]
      %v2157 = vld [vmem:[#allocation2 + $0x2b2] sm:$0xff]
      %v2158 = vld [vmem:[#allocation2 + $0x2ba] sm:$0xff]
      %v2159 = vld [vmem:[#allocation2 + $0x2ea] sm:$0xff]
      %v2160 = vld [vmem:[#allocation2 + $0x2f2] sm:$0xff]
      %v2161 = vld [vmem:[#allocation2 + $0x322] sm:$0xff]
      %v2162 = vld [vmem:[#allocation2 + $0x32a] sm:$0xff]
      %v2163 = vld [vmem:[#allocation2 + $0x35a] sm:$0xff]
      %v2164 = vld [vmem:[#allocation2 + $0x362] sm:$0xff]
      %v2165 = vld [vmem:[#allocation2 + $0x392] sm:$0xff]
      %v2166 = vld [vmem:[#allocation2 + $0x39a] sm:$0xff]
      %v2167 = vld [vmem:[#allocation2 + $0x3ca] sm:$0xff]
      %v2168 = vld [vmem:[#allocation2 + $0x3d2] sm:$0xff]
      %v2169 = vld [vmem:[#allocation2 + $0x402] sm:$0xff]
      %v2170 = vld [vmem:[#allocation2 + $0x40a] sm:$0xff]
      %v2171 = vld [vmem:[#allocation2 + $0x43a] sm:$0xff]
      %v2172 = vld [vmem:[#allocation2 + $0x442] sm:$0xff]
      %v2173 = vld [vmem:[#allocation2 + $0x472] sm:$0xff]
      %v2174 = vld [vmem:[#allocation2 + $0x47a] sm:$0xff]
      %v2175 = vld [vmem:[#allocation2 + $0x4aa] sm:$0xff]
      %v2176 = vld [vmem:[#allocation2 + $0x4b2] sm:$0xff]
      %v2177 = vld [vmem:[#allocation2 + $0x4e2] sm:$0xff]
      %v2178 = vld [vmem:[#allocation2 + $0x4ea] sm:$0xff]
      %v2179 = vld [vmem:[#allocation2 + $0x51a] sm:$0xff]
      %v2180 = vld [vmem:[#allocation2 + $0x522] sm:$0xff]
      %v2181 = vld [vmem:[#allocation2 + $0x552] sm:$0xff]
      %v2182 = vld [vmem:[#allocation2 + $0x55a] sm:$0xff]
      %v2183 = vld [vmem:[#allocation2 + $0x58a] sm:$0xff]
      %v2184 = vld [vmem:[#allocation2 + $0x592] sm:$0xff]
      %v2185 = vld [vmem:[#allocation2 + $0x5c2] sm:$0xff]
      %v2186 = vld [vmem:[#allocation2 + $0x5ca] sm:$0xff]
      %v2187 = vld [vmem:[#allocation2 + $0x5fa] sm:$0xff]
      %v2188 = vld [vmem:[#allocation2 + $0x602] sm:$0xff]
      %v2189 = vld [vmem:[#allocation2 + $0x632] sm:$0xff]
      %v2190 = vld [vmem:[#allocation2 + $0x63a] sm:$0xff]
      %v2191 = vld [vmem:[#allocation2 + $0x66a] sm:$0xff]
      %v2192 = vld [vmem:[#allocation2 + $0x672] sm:$0xff]
      %v2193 = vld [vmem:[#allocation2 + $0x6a2] sm:$0xff]
      %v2194 = vld [vmem:[#allocation2 + $0x6aa] sm:$0xff]
      %v2195 = vld [vmem:[#allocation2 + $0x6da] sm:$0xff]
      %v2196 = vld [vmem:[#allocation2 + $0x6e2] sm:$0xff]
      %v2197 = vld [vmem:[#allocation2 + $0x712] sm:$0xff]
      %v2198 = vld [vmem:[#allocation2 + $0x71a] sm:$0xff]
      %v2199 = vld [vmem:[#allocation2 + $0x74a] sm:$0xff]
      %v2200 = vld [vmem:[#allocation2 + $0x752] sm:$0xff]
      %v2201 = vld [vmem:[#allocation2 + $0x782] sm:$0xff]
      %v2202 = vld [vmem:[#allocation2 + $0x78a] sm:$0xff]
      %v2203 = vld [vmem:[#allocation2 + $0x7ba] sm:$0xff]
      %v2204 = vld [vmem:[#allocation2 + $0x7c2] sm:$0xff]
      %v2205 = vld [vmem:[#allocation2 + $0x7f2] sm:$0xff]
      %v2206 = vld [vmem:[#allocation2 + $0x7fa] sm:$0xff]
      %v2207 = vld [vmem:[#allocation2 + $0x82a] sm:$0xff]
      %v2208 = vld [vmem:[#allocation2 + $0x832] sm:$0xff]
      %v2209 = vld [vmem:[#allocation2 + $0x862] sm:$0xff]
      %v2210 = vld [vmem:[#allocation2 + $0x86a] sm:$0xff]
      %v2211 = vld [vmem:[#allocation2 + $0x89a] sm:$0xff]
      %v2212 = vld [vmem:[#allocation2 + $0x8a2] sm:$0xff]
      %v2213 = vld [vmem:[#allocation2 + $0x8d2] sm:$0xff]
      %v2214 = vld [vmem:[#allocation2 + $0x8da] sm:$0xff]
      %v2215 = vld [vmem:[#allocation2 + $0x90a] sm:$0xff]
      %v2216 = vld [vmem:[#allocation2 + $0x912] sm:$0xff]
      %v2217 = vld [vmem:[#allocation2 + $0x942] sm:$0xff]
      %v2218 = vld [vmem:[#allocation2 + $0x94a] sm:$0xff]
      %v2219 = vld [vmem:[#allocation2 + $0x97a] sm:$0xff]
      %v2220 = vld [vmem:[#allocation2 + $0x982] sm:$0xff]
      %v2221 = vld [vmem:[#allocation2 + $0x9b2] sm:$0xff]
      %v2222 = vld [vmem:[#allocation2 + $0x9ba] sm:$0xff]
      %v2223 = vld [vmem:[#allocation2 + $0x9ea] sm:$0xff]
      %v2224 = vld [vmem:[#allocation2 + $0x9f2] sm:$0xff]
      %v2225 = vld [vmem:[#allocation2 + $0xa22] sm:$0xff]
      %v2226 = vld [vmem:[#allocation2 + $0xa2a] sm:$0xff]
      %v2227 = vld [vmem:[#allocation2 + $0xa5a] sm:$0xff]
      %v2228 = vld [vmem:[#allocation2 + $0xa62] sm:$0xff]
      %v2229 = vld [vmem:[#allocation2 + $0xa92] sm:$0xff]
      %v2230 = vld [vmem:[#allocation2 + $0xa9a] sm:$0xff]
      %v2231 = vld [vmem:[#allocation2 + $0xaca] sm:$0xff]
      %v2232 = vld [vmem:[#allocation2 + $0xad2] sm:$0xff]
      %v2233 = vld [vmem:[#allocation2 + $0xb02] sm:$0xff]
      %v2234 = vld [vmem:[#allocation2 + $0xb0a] sm:$0xff]
      %v2235 = vld [vmem:[#allocation2 + $0xb3a] sm:$0xff]
      %v2236 = vld [vmem:[#allocation2 + $0xb42] sm:$0xff]
      %s2237 = scalar_lea.vmem %s3, 8
      %v2238 = vld [vmem:[%s2237] sm:$0xff]
      %v2240 = vsel %vm279, %v2157, 0
      %v2243 = vsel %vm279, %v2158, 0
      %v2246 = vsel %vm279, %v2159, 0
      %v2249 = vsel %vm279, %v2160, 0
      %v2252 = vsel %vm279, %v2161, 0
      %v2255 = vsel %vm279, %v2162, 0
      %v2258 = vsel %vm279, %v2163, 0
      %v2261 = vsel %vm279, %v2164, 0
      %v2264 = vsel %vm279, %v2165, 0
      %v2267 = vsel %vm279, %v2166, 0
      %v2270 = vsel %vm279, %v2167, 0
      %v2273 = vsel %vm279, %v2168, 0
      %v2276 = vsel %vm279, %v2169, 0
      %v2279 = vsel %vm279, %v2170, 0
      %v2282 = vsel %vm279, %v2171, 0
      %v2285 = vsel %vm279, %v2172, 0
      %v2288 = vsel %vm279, %v2173, 0
      %v2291 = vsel %vm279, %v2174, 0
      %v2294 = vsel %vm279, %v2175, 0
      %v2297 = vsel %vm279, %v2176, 0
      %v2300 = vsel %vm279, %v2177, 0
      %v2303 = vsel %vm279, %v2178, 0
      %v2306 = vsel %vm279, %v2179, 0
      %v2309 = vsel %vm279, %v2180, 0
      %v2312 = vsel %vm279, %v2181, 0
      %v2315 = vsel %vm279, %v2182, 0
      %v2318 = vsel %vm279, %v2183, 0
      %v2321 = vsel %vm279, %v2184, 0
      %v2324 = vsel %vm279, %v2185, 0
      %v2327 = vsel %vm279, %v2186, 0
      %v2330 = vsel %vm279, %v2187, 0
      %v2333 = vsel %vm279, %v2188, 0
      %2335 = vmatprep.subr.mxu0 0.0
      %2336 = vmatpush1.msra.mxu0 %v2238
      %2337 = vmatprep.subr.mxu0 0.0
      %2338 = vmatpush1.msra.mxu0 0.0
      %2339 = vmatprep.subr.mxu0 0.0
      %2340 = vmatpush1.msra.mxu0 0.0
      %2341 = vmatprep.subr.mxu0 0.0
      %2342 = vmatpush1.msra.mxu0 0.0
      %2343 = vmatprep.subr.mxu0 0.0
      %2344 = vmatpush1.msra.mxu0 0.0
      %2345 = vmatprep.subr.mxu0 0.0
      %2346 = vmatpush1.msra.mxu0 0.0
      %2347 = vmatprep.subr.mxu0 0.0
      %2348 = vmatpush1.msra.mxu0 0.0
      %2349 = vmatprep.subr.mxu0 0.0
      %2350 = vmatpush1.msra.mxu0 0.0
      %2351 = vmatprep.subr.mxu0 0.0
      %2352 = vmatpush1.msra.mxu0 0.0
      %2353 = vmatprep.subr.mxu0 0.0
      %2354 = vmatpush1.msra.mxu0 0.0
      %2355 = vmatprep.subr.mxu0 0.0
      %2356 = vmatpush1.msra.mxu0 0.0
      %2357 = vmatprep.subr.mxu0 0.0
      %2358 = vmatpush1.msra.mxu0 0.0
      %2359 = vmatprep.subr.mxu0 0.0
      %2360 = vmatpush1.msra.mxu0 0.0
      %2361 = vmatprep.subr.mxu0 0.0
      %2362 = vmatpush1.msra.mxu0 0.0
      %2363 = vmatprep.subr.mxu0 0.0
      %2364 = vmatpush1.msra.mxu0 0.0
      %2365 = vmatprep.subr.mxu0 0.0
      %2366 = vmatpush1.msra.mxu0 0.0
      %2367 = vmatprep.subr.mxu0 0.0
      %2368 = vmatpush1.msra.mxu0 0.0
      %2369 = vmatprep.subr.mxu0 0.0
      %2370 = vmatpush1.msra.mxu0 0.0
      %2371 = vmatprep.subr.mxu0 0.0
      %2372 = vmatpush1.msra.mxu0 0.0
      %2373 = vmatprep.subr.mxu0 0.0
      %2374 = vmatpush1.msra.mxu0 0.0
      %2375 = vmatprep.subr.mxu0 0.0
      %2376 = vmatpush1.msra.mxu0 0.0
      %2377 = vmatprep.subr.mxu0 0.0
      %2378 = vmatpush1.msra.mxu0 0.0
      %2379 = vmatprep.subr.mxu0 0.0
      %2380 = vmatpush1.msra.mxu0 0.0
      %2381 = vmatprep.subr.mxu0 0.0
      %2382 = vmatpush1.msra.mxu0 0.0
      %2383 = vmatprep.subr.mxu0 0.0
      %2384 = vmatpush1.msra.mxu0 0.0
      %2385 = vmatprep.subr.mxu0 0.0
      %2386 = vmatpush1.msra.mxu0 0.0
      %2387 = vmatprep.subr.mxu0 0.0
      %2388 = vmatpush1.msra.mxu0 0.0
      %2389 = vmatprep.subr.mxu0 0.0
      %2390 = vmatpush1.msra.mxu0 0.0
      %2391 = vmatprep.subr.mxu0 0.0
      %2392 = vmatpush1.msra.mxu0 0.0
      %2393 = vmatprep.subr.mxu0 0.0
      %2394 = vmatpush1.msra.mxu0 0.0
      %2395 = vmatprep.subr.mxu0 0.0
      %2396 = vmatpush1.msra.mxu0 0.0
      %2397 = vmatprep.subr.mxu0 0.0
      %2398 = vmatpush1.msra.mxu0 0.0
      %2399 = vmatprep.mubr.f32.mxu0 0.0
      %2400 = vmatmul.mubr.f32.gmra.mrb[0].mxu0 %v2240
      %v2401 = vpop.f32.mrb[0].mxu0
      %v2402 = vadd.f32 0.0, %v2401
      %v2403 = vpop.f32.mrb[0].mxu0
      %2404 = vmatprep.mubr.f32.mxu0 0.0
      %2405 = vmatmul.mubr.f32.gmra.mrb[0].mxu0 %v2243
      %v2406 = vpop.f32.mrb[0].mxu0
      %v2407 = vadd.f32 0.0, %v2406
      %v2408 = vpop.f32.mrb[0].mxu0
      %2409 = vmatprep.mubr.f32.mxu0 0.0
      %2410 = vmatmul.mubr.f32.gmra.mrb[0].mxu0 %v2246
      %v2411 = vpop.f32.mrb[0].mxu0
      %v2412 = vadd.f32 0.0, %v2411
      %v2413 = vpop.f32.mrb[0].mxu0
      %2414 = vmatprep.mubr.f32.mxu0 0.0
      %2415 = vmatmul.mubr.f32.gmra.mrb[0].mxu0 %v2249
      %v2416 = vpop.f32.mrb[0].mxu0
      %v2417 = vadd.f32 0.0, %v2416
      %v2418 = vpop.f32.mrb[0].mxu0
      %2419 = vmatprep.mubr.f32.mxu0 0.0
      %2420 = vmatmul.mubr.f32.gmra.mrb[0].mxu0 %v2252
      %v2421 = vpop.f32.mrb[0].mxu0
      %v2422 = vadd.f32 0.0, %v2421
      %v2423 = vpop.f32.mrb[0].mxu0
      %2424 = vmatprep.mubr.f32.mxu0 0.0
      %2425 = vmatmul.mubr.f32.gmra.mrb[0].mxu0 %v2255
      %v2426 = vpop.f32.mrb[0].mxu0
      %v2427 = vadd.f32 0.0, %v2426
      %v2428 = vpop.f32.mrb[0].mxu0
      %2429 = vmatprep.mubr.f32.mxu0 0.0
      %2430 = vmatmul.mubr.f32.gmra.mrb[0].mxu0 %v2258
      %v2431 = vpop.f32.mrb[0].mxu0
      %v2432 = vadd.f32 0.0, %v2431
      %v2433 = vpop.f32.mrb[0].mxu0
      %2434 = vmatprep.mubr.f32.mxu0 0.0
      %2435 = vmatmul.mubr.f32.gmra.mrb[0].mxu0 %v2261
      %v2436 = vpop.f32.mrb[0].mxu0
      %v2437 = vadd.f32 0.0, %v2436
      %v2438 = vpop.f32.mrb[0].mxu0
      %2439 = vmatprep.mubr.f32.mxu0 0.0
      %2440 = vmatmul.mubr.f32.gmra.mrb[0].mxu0 %v2264
      %v2441 = vpop.f32.mrb[0].mxu0
      %v2442 = vadd.f32 0.0, %v2441
      %v2443 = vpop.f32.mrb[0].mxu0
      %2444 = vmatprep.mubr.f32.mxu0 0.0
      %2445 = vmatmul.mubr.f32.gmra.mrb[0].mxu0 %v2267
      %v2446 = vpop.f32.mrb[0].mxu0
      %v2447 = vadd.f32 0.0, %v2446
      %v2448 = vpop.f32.mrb[0].mxu0
      %2449 = vmatprep.mubr.f32.mxu0 0.0
      %2450 = vmatmul.mubr.f32.gmra.mrb[0].mxu0 %v2270
      %v2451 = vpop.f32.mrb[0].mxu0
      %v2452 = vadd.f32 0.0, %v2451
      %v2453 = vpop.f32.mrb[0].mxu0
      %2454 = vmatprep.mubr.f32.mxu0 0.0
      %2455 = vmatmul.mubr.f32.gmra.mrb[0].mxu0 %v2273
      %v2456 = vpop.f32.mrb[0].mxu0
      %v2457 = vadd.f32 0.0, %v2456
      %v2458 = vpop.f32.mrb[0].mxu0
      %2459 = vmatprep.mubr.f32.mxu0 0.0
      %2460 = vmatmul.mubr.f32.gmra.mrb[0].mxu0 %v2276
      %v2461 = vpop.f32.mrb[0].mxu0
      %v2462 = vadd.f32 0.0, %v2461
      %v2463 = vpop.f32.mrb[0].mxu0
      %2464 = vmatprep.mubr.f32.mxu0 0.0
      %2465 = vmatmul.mubr.f32.gmra.mrb[0].mxu0 %v2279
      %v2466 = vpop.f32.mrb[0].mxu0
      %v2467 = vadd.f32 0.0, %v2466
      %v2468 = vpop.f32.mrb[0].mxu0
      %2469 = vmatprep.mubr.f32.mxu0 0.0
      %2470 = vmatmul.mubr.f32.gmra.mrb[0].mxu0 %v2282
      %v2471 = vpop.f32.mrb[0].mxu0
      %v2472 = vadd.f32 0.0, %v2471
      %v2473 = vpop.f32.mrb[0].mxu0
      %2474 = vmatprep.mubr.f32.mxu0 0.0
      %2475 = vmatmul.mubr.f32.gmra.mrb[0].mxu0 %v2285
      %v2476 = vpop.f32.mrb[0].mxu0
      %v2477 = vadd.f32 0.0, %v2476
      %v2478 = vpop.f32.mrb[0].mxu0
      %2479 = vmatprep.mubr.f32.mxu0 0.0
      %2480 = vmatmul.mubr.f32.gmra.mrb[0].mxu0 %v2288
      %v2481 = vpop.f32.mrb[0].mxu0
      %v2482 = vadd.f32 0.0, %v2481
      %v2483 = vpop.f32.mrb[0].mxu0
      %2484 = vmatprep.mubr.f32.mxu0 0.0
      %2485 = vmatmul.mubr.f32.gmra.mrb[0].mxu0 %v2291
      %v2486 = vpop.f32.mrb[0].mxu0
      %v2487 = vadd.f32 0.0, %v2486
      %v2488 = vpop.f32.mrb[0].mxu0
      %2489 = vmatprep.mubr.f32.mxu0 0.0
      %2490 = vmatmul.mubr.f32.gmra.mrb[0].mxu0 %v2294
      %v2491 = vpop.f32.mrb[0].mxu0
      %v2492 = vadd.f32 0.0, %v2491
      %v2493 = vpop.f32.mrb[0].mxu0
      %2494 = vmatprep.mubr.f32.mxu0 0.0
      %2495 = vmatmul.mubr.f32.gmra.mrb[0].mxu0 %v2297
      %v2496 = vpop.f32.mrb[0].mxu0
      %v2497 = vadd.f32 0.0, %v2496
      %v2498 = vpop.f32.mrb[0].mxu0
      %2499 = vmatprep.mubr.f32.mxu0 0.0
      %2500 = vmatmul.mubr.f32.gmra.mrb[0].mxu0 %v2300
      %v2501 = vpop.f32.mrb[0].mxu0
      %v2502 = vadd.f32 0.0, %v2501
      %v2503 = vpop.f32.mrb[0].mxu0
      %2504 = vmatprep.mubr.f32.mxu0 0.0
      %2505 = vmatmul.mubr.f32.gmra.mrb[0].mxu0 %v2303
      %v2506 = vpop.f32.mrb[0].mxu0
      %v2507 = vadd.f32 0.0, %v2506
      %v2508 = vpop.f32.mrb[0].mxu0
      %2509 = vmatprep.mubr.f32.mxu0 0.0
      %2510 = vmatmul.mubr.f32.gmra.mrb[0].mxu0 %v2306
      %v2511 = vpop.f32.mrb[0].mxu0
      %v2512 = vadd.f32 0.0, %v2511
      %v2513 = vpop.f32.mrb[0].mxu0
      %2514 = vmatprep.mubr.f32.mxu0 0.0
      %2515 = vmatmul.mubr.f32.gmra.mrb[0].mxu0 %v2309
      %v2516 = vpop.f32.mrb[0].mxu0
      %v2517 = vadd.f32 0.0, %v2516
      %v2518 = vpop.f32.mrb[0].mxu0
      %2519 = vmatprep.mubr.f32.mxu0 0.0
      %2520 = vmatmul.mubr.f32.gmra.mrb[0].mxu0 %v2312
      %v2521 = vpop.f32.mrb[0].mxu0
      %v2522 = vadd.f32 0.0, %v2521
      %v2523 = vpop.f32.mrb[0].mxu0
      %2524 = vmatprep.mubr.f32.mxu0 0.0
      %2525 = vmatmul.mubr.f32.gmra.mrb[0].mxu0 %v2315
      %v2526 = vpop.f32.mrb[0].mxu0
      %v2527 = vadd.f32 0.0, %v2526
      %v2528 = vpop.f32.mrb[0].mxu0
      %2529 = vmatprep.mubr.f32.mxu0 0.0
      %2530 = vmatmul.mubr.f32.gmra.mrb[0].mxu0 %v2318
      %v2531 = vpop.f32.mrb[0].mxu0
      %v2532 = vadd.f32 0.0, %v2531
      %v2533 = vpop.f32.mrb[0].mxu0
      %2534 = vmatprep.mubr.f32.mxu0 0.0
      %2535 = vmatmul.mubr.f32.gmra.mrb[0].mxu0 %v2321
      %v2536 = vpop.f32.mrb[0].mxu0
      %v2537 = vadd.f32 0.0, %v2536
      %v2538 = vpop.f32.mrb[0].mxu0
      %2539 = vmatprep.mubr.f32.mxu0 0.0
      %2540 = vmatmul.mubr.f32.gmra.mrb[0].mxu0 %v2324
      %v2541 = vpop.f32.mrb[0].mxu0
      %v2542 = vadd.f32 0.0, %v2541
      %v2543 = vpop.f32.mrb[0].mxu0
      %2544 = vmatprep.mubr.f32.mxu0 0.0
      %2545 = vmatmul.mubr.f32.gmra.mrb[0].mxu0 %v2327
      %v2546 = vpop.f32.mrb[0].mxu0
      %v2547 = vadd.f32 0.0, %v2546
      %v2548 = vpop.f32.mrb[0].mxu0
      %2549 = vmatprep.mubr.f32.mxu0 0.0
      %2550 = vmatmul.mubr.f32.gmra.mrb[0].mxu0 %v2330
      %v2551 = vpop.f32.mrb[0].mxu0
      %v2552 = vadd.f32 0.0, %v2551
      %v2553 = vpop.f32.mrb[0].mxu0
      %2554 = vmatprep.mubr.f32.mxu0 0.0
      %2555 = vmatmul.mubr.f32.gmra.mrb[0].mxu0 %v2333
      %v2556 = vpop.f32.mrb[0].mxu0
      %v2557 = vadd.f32 0.0, %v2556
      %v2558 = vpop.f32.mrb[0].mxu0
      %2559 = vdwg.mxu0
      %v2560 = vadd.f32 %v2101, %v2402
      %v2561 = vadd.f32 %v2102, %v2407
      %v2562 = vadd.f32 %v2103, %v2412
      %v2563 = vadd.f32 %v2104, %v2417
      %v2564 = vadd.f32 %v2105, %v2422
      %v2565 = vadd.f32 %v2106, %v2427
      %v2566 = vadd.f32 %v2107, %v2432
      %v2567 = vadd.f32 %v2108, %v2437
      %v2568 = vadd.f32 %v2109, %v2442
      %v2569 = vadd.f32 %v2110, %v2447
      %v2570 = vadd.f32 %v2111, %v2452
      %v2571 = vadd.f32 %v2112, %v2457
      %v2572 = vadd.f32 %v2113, %v2462
      %v2573 = vadd.f32 %v2114, %v2467
      %v2574 = vadd.f32 %v2115, %v2472
      %v2575 = vadd.f32 %v2116, %v2477
      %v2576 = vadd.f32 %v2117, %v2482
      %v2577 = vadd.f32 %v2118, %v2487
      %v2578 = vadd.f32 %v2119, %v2492
      %v2579 = vadd.f32 %v2120, %v2497
      %v2580 = vadd.f32 %v2121, %v2502
      %v2581 = vadd.f32 %v2122, %v2507
      %v2582 = vadd.f32 %v2123, %v2512
      %v2583 = vadd.f32 %v2124, %v2517
      %v2584 = vadd.f32 %v2125, %v2522
      %v2585 = vadd.f32 %v2126, %v2527
      %v2586 = vadd.f32 %v2127, %v2532
      %v2587 = vadd.f32 %v2128, %v2537
      %v2588 = vadd.f32 %v2129, %v2542
      %v2589 = vadd.f32 %v2130, %v2547
      %v2590 = vadd.f32 %v2131, %v2552
      %v2591 = vadd.f32 %v2132, %v2557
      %s2592 = scalar_lea.vmem %s3, 32
      %v2593 = vld [vmem:[%s2592] sm:$0xff]
      %v2595 = vsel %vm279, %v2189, 0
      %v2598 = vsel %vm279, %v2190, 0
      %v2601 = vsel %vm279, %v2191, 0
      %v2604 = vsel %vm279, %v2192, 0
      %v2607 = vsel %vm279, %v2193, 0
      %v2610 = vsel %vm279, %v2194, 0
      %v2613 = vsel %vm279, %v2195, 0
      %v2616 = vsel %vm279, %v2196, 0
      %v2619 = vsel %vm279, %v2197, 0
      %v2622 = vsel %vm279, %v2198, 0
      %v2625 = vsel %vm279, %v2199, 0
      %v2628 = vsel %vm279, %v2200, 0
      %2630 = vmatprep.subr.mxu0 0.0
      %2631 = vmatpush1.msra.mxu0 %v2593
      %2632 = vmatprep.subr.mxu0 0.0
      %2633 = vmatpush1.msra.mxu0 0.0
      %2634 = vmatprep.subr.mxu0 0.0
      %2635 = vmatpush1.msra.mxu0 0.0
      %2636 = vmatprep.subr.mxu0 0.0
      %2637 = vmatpush1.msra.mxu0 0.0
      %2638 = vmatprep.subr.mxu0 0.0
      %2639 = vmatpush1.msra.mxu0 0.0
      %2640 = vmatprep.subr.mxu0 0.0
      %2641 = vmatpush1.msra.mxu0 0.0
      %2642 = vmatprep.subr.mxu0 0.0
      %2643 = vmatpush1.msra.mxu0 0.0
      %2644 = vmatprep.subr.mxu0 0.0
      %2645 = vmatpush1.msra.mxu0 0.0
      %2646 = vmatprep.subr.mxu0 0.0
      %2647 = vmatpush1.msra.mxu0 0.0
      %2648 = vmatprep.subr.mxu0 0.0
      %2649 = vmatpush1.msra.mxu0 0.0
      %2650 = vmatprep.subr.mxu0 0.0
      %2651 = vmatpush1.msra.mxu0 0.0
      %2652 = vmatprep.subr.mxu0 0.0
      %2653 = vmatpush1.msra.mxu0 0.0
      %2654 = vmatprep.subr.mxu0 0.0
      %2655 = vmatpush1.msra.mxu0 0.0
      %2656 = vmatprep.subr.mxu0 0.0
      %2657 = vmatpush1.msra.mxu0 0.0
      %2658 = vmatprep.subr.mxu0 0.0
      %2659 = vmatpush1.msra.mxu0 0.0
      %2660 = vmatprep.subr.mxu0 0.0
      %2661 = vmatpush1.msra.mxu0 0.0
      %2662 = vmatprep.subr.mxu0 0.0
      %2663 = vmatpush1.msra.mxu0 0.0
      %2664 = vmatprep.subr.mxu0 0.0
      %2665 = vmatpush1.msra.mxu0 0.0
      %2666 = vmatprep.subr.mxu0 0.0
      %2667 = vmatpush1.msra.mxu0 0.0
      %2668 = vmatprep.subr.mxu0 0.0
      %2669 = vmatpush1.msra.mxu0 0.0
      %2670 = vmatprep.subr.mxu0 0.0
      %2671 = vmatpush1.msra.mxu0 0.0
      %2672 = vmatprep.subr.mxu0 0.0
      %2673 = vmatpush1.msra.mxu0 0.0
      %2674 = vmatprep.subr.mxu0 0.0
      %2675 = vmatpush1.msra.mxu0 0.0
      %2676 = vmatprep.subr.mxu0 0.0
      %2677 = vmatpush1.msra.mxu0 0.0
      %2678 = vmatprep.subr.mxu0 0.0
      %2679 = vmatpush1.msra.mxu0 0.0
      %2680 = vmatprep.subr.mxu0 0.0
      %2681 = vmatpush1.msra.mxu0 0.0
      %2682 = vmatprep.subr.mxu0 0.0
      %2683 = vmatpush1.msra.mxu0 0.0
      %2684 = vmatprep.subr.mxu0 0.0
      %2685 = vmatpush1.msra.mxu0 0.0
      %2686 = vmatprep.subr.mxu0 0.0
      %2687 = vmatpush1.msra.mxu0 0.0
      %2688 = vmatprep.subr.mxu0 0.0
      %2689 = vmatpush1.msra.mxu0 0.0
      %2690 = vmatprep.subr.mxu0 0.0
      %2691 = vmatpush1.msra.mxu0 0.0
      %2692 = vmatprep.subr.mxu0 0.0
      %2693 = vmatpush1.msra.mxu0 0.0
      %2694 = vmatprep.mubr.f32.mxu0 0.0
      %2695 = vmatmul.mubr.f32.gmra.mrb[0].mxu0 %v2276
      %v2696 = vpop.f32.mrb[0].mxu0
      %v2697 = vadd.f32 0.0, %v2696
      %v2698 = vpop.f32.mrb[0].mxu0
      %2699 = vmatprep.mubr.f32.mxu0 0.0
      %2700 = vmatmul.mubr.f32.gmra.mrb[0].mxu0 %v2279
      %v2701 = vpop.f32.mrb[0].mxu0
      %v2702 = vadd.f32 0.0, %v2701
      %v2703 = vpop.f32.mrb[0].mxu0
      %2704 = vmatprep.mubr.f32.mxu0 0.0
      %2705 = vmatmul.mubr.f32.gmra.mrb[0].mxu0 %v2282
      %v2706 = vpop.f32.mrb[0].mxu0
      %v2707 = vadd.f32 0.0, %v2706
      %v2708 = vpop.f32.mrb[0].mxu0
      %2709 = vmatprep.mubr.f32.mxu0 0.0
      %2710 = vmatmul.mubr.f32.gmra.mrb[0].mxu0 %v2285
      %v2711 = vpop.f32.mrb[0].mxu0
      %v2712 = vadd.f32 0.0, %v2711
      %v2713 = vpop.f32.mrb[0].mxu0
      %2714 = vmatprep.mubr.f32.mxu0 0.0
      %2715 = vmatmul.mubr.f32.gmra.mrb[0].mxu0 %v2288
      %v2716 = vpop.f32.mrb[0].mxu0
      %v2717 = vadd.f32 0.0, %v2716
      %v2718 = vpop.f32.mrb[0].mxu0
      %2719 = vmatprep.mubr.f32.mxu0 0.0
      %2720 = vmatmul.mubr.f32.gmra.mrb[0].mxu0 %v2291
      %v2721 = vpop.f32.mrb[0].mxu0
      %v2722 = vadd.f32 0.0, %v2721
      %v2723 = vpop.f32.mrb[0].mxu0
      %2724 = vmatprep.mubr.f32.mxu0 0.0
      %2725 = vmatmul.mubr.f32.gmra.mrb[0].mxu0 %v2294
      %v2726 = vpop.f32.mrb[0].mxu0
      %v2727 = vadd.f32 0.0, %v2726
      %v2728 = vpop.f32.mrb[0].mxu0
      %2729 = vmatprep.mubr.f32.mxu0 0.0
      %2730 = vmatmul.mubr.f32.gmra.mrb[0].mxu0 %v2297
      %v2731 = vpop.f32.mrb[0].mxu0
      %v2732 = vadd.f32 0.0, %v2731
      %v2733 = vpop.f32.mrb[0].mxu0
      %2734 = vmatprep.mubr.f32.mxu0 0.0
      %2735 = vmatmul.mubr.f32.gmra.mrb[0].mxu0 %v2300
      %v2736 = vpop.f32.mrb[0].mxu0
      %v2737 = vadd.f32 0.0, %v2736
      %v2738 = vpop.f32.mrb[0].mxu0
      %2739 = vmatprep.mubr.f32.mxu0 0.0
      %2740 = vmatmul.mubr.f32.gmra.mrb[0].mxu0 %v2303
      %v2741 = vpop.f32.mrb[0].mxu0
      %v2742 = vadd.f32 0.0, %v2741
      %v2743 = vpop.f32.mrb[0].mxu0
      %2744 = vmatprep.mubr.f32.mxu0 0.0
      %2745 = vmatmul.mubr.f32.gmra.mrb[0].mxu0 %v2306
      %v2746 = vpop.f32.mrb[0].mxu0
      %v2747 = vadd.f32 0.0, %v2746
      %v2748 = vpop.f32.mrb[0].mxu0
      %2749 = vmatprep.mubr.f32.mxu0 0.0
      %2750 = vmatmul.mubr.f32.gmra.mrb[0].mxu0 %v2309
      %v2751 = vpop.f32.mrb[0].mxu0
      %v2752 = vadd.f32 0.0, %v2751
      %v2753 = vpop.f32.mrb[0].mxu0
      %2754 = vmatprep.mubr.f32.mxu0 0.0
      %2755 = vmatmul.mubr.f32.gmra.mrb[0].mxu0 %v2312
      %v2756 = vpop.f32.mrb[0].mxu0
      %v2757 = vadd.f32 0.0, %v2756
      %v2758 = vpop.f32.mrb[0].mxu0
      %2759 = vmatprep.mubr.f32.mxu0 0.0
      %2760 = vmatmul.mubr.f32.gmra.mrb[0].mxu0 %v2315
      %v2761 = vpop.f32.mrb[0].mxu0
      %v2762 = vadd.f32 0.0, %v2761
      %v2763 = vpop.f32.mrb[0].mxu0
      %2764 = vmatprep.mubr.f32.mxu0 0.0
      %2765 = vmatmul.mubr.f32.gmra.mrb[0].mxu0 %v2318
      %v2766 = vpop.f32.mrb[0].mxu0
      %v2767 = vadd.f32 0.0, %v2766
      %v2768 = vpop.f32.mrb[0].mxu0
      %2769 = vmatprep.mubr.f32.mxu0 0.0
      %2770 = vmatmul.mubr.f32.gmra.mrb[0].mxu0 %v2321
      %v2771 = vpop.f32.mrb[0].mxu0
      %v2772 = vadd.f32 0.0, %v2771
      %v2773 = vpop.f32.mrb[0].mxu0
      %2774 = vmatprep.mubr.f32.mxu0 0.0
      %2775 = vmatmul.mubr.f32.gmra.mrb[0].mxu0 %v2324
      %v2776 = vpop.f32.mrb[0].mxu0
      %v2777 = vadd.f32 0.0, %v2776
      %v2778 = vpop.f32.mrb[0].mxu0
      %2779 = vmatprep.mubr.f32.mxu0 0.0
      %2780 = vmatmul.mubr.f32.gmra.mrb[0].mxu0 %v2327
      %v2781 = vpop.f32.mrb[0].mxu0
      %v2782 = vadd.f32 0.0, %v2781
      %v2783 = vpop.f32.mrb[0].mxu0
      %2784 = vmatprep.mubr.f32.mxu0 0.0
      %2785 = vmatmul.mubr.f32.gmra.mrb[0].mxu0 %v2330
      %v2786 = vpop.f32.mrb[0].mxu0
      %v2787 = vadd.f32 0.0, %v2786
      %v2788 = vpop.f32.mrb[0].mxu0
      %2789 = vmatprep.mubr.f32.mxu0 0.0
      %2790 = vmatmul.mubr.f32.gmra.mrb[0].mxu0 %v2333
      %v2791 = vpop.f32.mrb[0].mxu0
      %v2792 = vadd.f32 0.0, %v2791
      %v2793 = vpop.f32.mrb[0].mxu0
      %2794 = vmatprep.mubr.f32.mxu0 0.0
      %2795 = vmatmul.mubr.f32.gmra.mrb[0].mxu0 %v2595
      %v2796 = vpop.f32.mrb[0].mxu0
      %v2797 = vadd.f32 0.0, %v2796
      %v2798 = vpop.f32.mrb[0].mxu0
      %2799 = vmatprep.mubr.f32.mxu0 0.0
      %2800 = vmatmul.mubr.f32.gmra.mrb[0].mxu0 %v2598
      %v2801 = vpop.f32.mrb[0].mxu0
      %v2802 = vadd.f32 0.0, %v2801
      %v2803 = vpop.f32.mrb[0].mxu0
      %2804 = vmatprep.mubr.f32.mxu0 0.0
      %2805 = vmatmul.mubr.f32.gmra.mrb[0].mxu0 %v2601
      %v2806 = vpop.f32.mrb[0].mxu0
      %v2807 = vadd.f32 0.0, %v2806
      %v2808 = vpop.f32.mrb[0].mxu0
      %2809 = vmatprep.mubr.f32.mxu0 0.0
      %2810 = vmatmul.mubr.f32.gmra.mrb[0].mxu0 %v2604
      %v2811 = vpop.f32.mrb[0].mxu0
      %v2812 = vadd.f32 0.0, %v2811
      %v2813 = vpop.f32.mrb[0].mxu0
      %2814 = vmatprep.mubr.f32.mxu0 0.0
      %2815 = vmatmul.mubr.f32.gmra.mrb[0].mxu0 %v2607
      %v2816 = vpop.f32.mrb[0].mxu0
      %v2817 = vadd.f32 0.0, %v2816
      %v2818 = vpop.f32.mrb[0].mxu0
      %2819 = vmatprep.mubr.f32.mxu0 0.0
      %2820 = vmatmul.mubr.f32.gmra.mrb[0].mxu0 %v2610
      %v2821 = vpop.f32.mrb[0].mxu0
      %v2822 = vadd.f32 0.0, %v2821
      %v2823 = vpop.f32.mrb[0].mxu0
      %2824 = vmatprep.mubr.f32.mxu0 0.0
      %2825 = vmatmul.mubr.f32.gmra.mrb[0].mxu0 %v2613
      %v2826 = vpop.f32.mrb[0].mxu0
      %v2827 = vadd.f32 0.0, %v2826
      %v2828 = vpop.f32.mrb[0].mxu0
      %2829 = vmatprep.mubr.f32.mxu0 0.0
      %2830 = vmatmul.mubr.f32.gmra.mrb[0].mxu0 %v2616
      %v2831 = vpop.f32.mrb[0].mxu0
      %v2832 = vadd.f32 0.0, %v2831
      %v2833 = vpop.f32.mrb[0].mxu0
      %2834 = vmatprep.mubr.f32.mxu0 0.0
      %2835 = vmatmul.mubr.f32.gmra.mrb[0].mxu0 %v2619
      %v2836 = vpop.f32.mrb[0].mxu0
      %v2837 = vadd.f32 0.0, %v2836
      %v2838 = vpop.f32.mrb[0].mxu0
      %2839 = vmatprep.mubr.f32.mxu0 0.0
      %2840 = vmatmul.mubr.f32.gmra.mrb[0].mxu0 %v2622
      %v2841 = vpop.f32.mrb[0].mxu0
      %v2842 = vadd.f32 0.0, %v2841
      %v2843 = vpop.f32.mrb[0].mxu0
      %2844 = vmatprep.mubr.f32.mxu0 0.0
      %2845 = vmatmul.mubr.f32.gmra.mrb[0].mxu0 %v2625
      %v2846 = vpop.f32.mrb[0].mxu0
      %v2847 = vadd.f32 0.0, %v2846
      %v2848 = vpop.f32.mrb[0].mxu0
      %2849 = vmatprep.mubr.f32.mxu0 0.0
      %2850 = vmatmul.mubr.f32.gmra.mrb[0].mxu0 %v2628
      %v2851 = vpop.f32.mrb[0].mxu0
      %v2852 = vadd.f32 0.0, %v2851
      %v2853 = vpop.f32.mrb[0].mxu0
      %2854 = vdwg.mxu0
      %v2855 = vadd.f32 %v2560, %v2697
      %v2856 = vadd.f32 %v2561, %v2702
      %v2857 = vadd.f32 %v2562, %v2707
      %v2858 = vadd.f32 %v2563, %v2712
      %v2859 = vadd.f32 %v2564, %v2717
      %v2860 = vadd.f32 %v2565, %v2722
      %v2861 = vadd.f32 %v2566, %v2727
      %v2862 = vadd.f32 %v2567, %v2732
      %v2863 = vadd.f32 %v2568, %v2737
      %v2864 = vadd.f32 %v2569, %v2742
      %v2865 = vadd.f32 %v2570, %v2747
      %v2866 = vadd.f32 %v2571, %v2752
      %v2867 = vadd.f32 %v2572, %v2757
      %v2868 = vadd.f32 %v2573, %v2762
      %v2869 = vadd.f32 %v2574, %v2767
      %v2870 = vadd.f32 %v2575, %v2772
      %v2871 = vadd.f32 %v2576, %v2777
      %v2872 = vadd.f32 %v2577, %v2782
      %v2873 = vadd.f32 %v2578, %v2787
      %v2874 = vadd.f32 %v2579, %v2792
      %v2875 = vadd.f32 %v2580, %v2797
      %v2876 = vadd.f32 %v2581, %v2802
      %v2877 = vadd.f32 %v2582, %v2807
      %v2878 = vadd.f32 %v2583, %v2812
      %v2879 = vadd.f32 %v2584, %v2817
      %v2880 = vadd.f32 %v2585, %v2822
      %v2881 = vadd.f32 %v2586, %v2827
      %v2882 = vadd.f32 %v2587, %v2832
      %v2883 = vadd.f32 %v2588, %v2837
      %v2884 = vadd.f32 %v2589, %v2842
      %v2885 = vadd.f32 %v2590, %v2847
      %v2886 = vadd.f32 %v2591, %v2852
      %s2887 = scalar_lea.vmem %s3, 56
      %v2888 = vld [vmem:[%s2887] sm:$0xff]
      %v2890 = vsel %vm279, %v2201, 0
      %v2893 = vsel %vm279, %v2202, 0
      %v2896 = vsel %vm279, %v2203, 0
      %v2899 = vsel %vm279, %v2204, 0
      %v2902 = vsel %vm279, %v2205, 0
      %v2905 = vsel %vm279, %v2206, 0
      %v2908 = vsel %vm279, %v2207, 0
      %v2911 = vsel %vm279, %v2208, 0
      %v2914 = vsel %vm279, %v2209, 0
      %v2917 = vsel %vm279, %v2210, 0
      %v2920 = vsel %vm279, %v2211, 0
      %v2923 = vsel %vm279, %v2212, 0
      %2925 = vmatprep.subr.mxu0 0.0
      %2926 = vmatpush1.msra.mxu0 %v2888
      %2927 = vmatprep.subr.mxu0 0.0
      %2928 = vmatpush1.msra.mxu0 0.0
      %2929 = vmatprep.subr.mxu0 0.0
      %2930 = vmatpush1.msra.mxu0 0.0
      %2931 = vmatprep.subr.mxu0 0.0
      %2932 = vmatpush1.msra.mxu0 0.0
      %2933 = vmatprep.subr.mxu0 0.0
      %2934 = vmatpush1.msra.mxu0 0.0
      %2935 = vmatprep.subr.mxu0 0.0
      %2936 = vmatpush1.msra.mxu0 0.0
      %2937 = vmatprep.subr.mxu0 0.0
      %2938 = vmatpush1.msra.mxu0 0.0
      %2939 = vmatprep.subr.mxu0 0.0
      %2940 = vmatpush1.msra.mxu0 0.0
      %2941 = vmatprep.subr.mxu0 0.0
      %2942 = vmatpush1.msra.mxu0 0.0
      %2943 = vmatprep.subr.mxu0 0.0
      %2944 = vmatpush1.msra.mxu0 0.0
      %2945 = vmatprep.subr.mxu0 0.0
      %2946 = vmatpush1.msra.mxu0 0.0
      %2947 = vmatprep.subr.mxu0 0.0
      %2948 = vmatpush1.msra.mxu0 0.0
      %2949 = vmatprep.subr.mxu0 0.0
      %2950 = vmatpush1.msra.mxu0 0.0
      %2951 = vmatprep.subr.mxu0 0.0
      %2952 = vmatpush1.msra.mxu0 0.0
      %2953 = vmatprep.subr.mxu0 0.0
      %2954 = vmatpush1.msra.mxu0 0.0
      %2955 = vmatprep.subr.mxu0 0.0
      %2956 = vmatpush1.msra.mxu0 0.0
      %2957 = vmatprep.subr.mxu0 0.0
      %2958 = vmatpush1.msra.mxu0 0.0
      %2959 = vmatprep.subr.mxu0 0.0
      %2960 = vmatpush1.msra.mxu0 0.0
      %2961 = vmatprep.subr.mxu0 0.0
      %2962 = vmatpush1.msra.mxu0 0.0
      %2963 = vmatprep.subr.mxu0 0.0
      %2964 = vmatpush1.msra.mxu0 0.0
      %2965 = vmatprep.subr.mxu0 0.0
      %2966 = vmatpush1.msra.mxu0 0.0
      %2967 = vmatprep.subr.mxu0 0.0
      %2968 = vmatpush1.msra.mxu0 0.0
      %2969 = vmatprep.subr.mxu0 0.0
      %2970 = vmatpush1.msra.mxu0 0.0
      %2971 = vmatprep.subr.mxu0 0.0
      %2972 = vmatpush1.msra.mxu0 0.0
      %2973 = vmatprep.subr.mxu0 0.0
      %2974 = vmatpush1.msra.mxu0 0.0
      %2975 = vmatprep.subr.mxu0 0.0
      %2976 = vmatpush1.msra.mxu0 0.0
      %2977 = vmatprep.subr.mxu0 0.0
      %2978 = vmatpush1.msra.mxu0 0.0
      %2979 = vmatprep.subr.mxu0 0.0
      %2980 = vmatpush1.msra.mxu0 0.0
      %2981 = vmatprep.subr.mxu0 0.0
      %2982 = vmatpush1.msra.mxu0 0.0
      %2983 = vmatprep.subr.mxu0 0.0
      %2984 = vmatpush1.msra.mxu0 0.0
      %2985 = vmatprep.subr.mxu0 0.0
      %2986 = vmatpush1.msra.mxu0 0.0
      %2987 = vmatprep.subr.mxu0 0.0
      %2988 = vmatpush1.msra.mxu0 0.0
      %2989 = vmatprep.mubr.f32.mxu0 0.0
      %2990 = vmatmul.mubr.f32.gmra.mrb[0].mxu0 %v2312
      %v2991 = vpop.f32.mrb[0].mxu0
      %v2992 = vadd.f32 0.0, %v2991
      %v2993 = vpop.f32.mrb[0].mxu0
      %2994 = vmatprep.mubr.f32.mxu0 0.0
      %2995 = vmatmul.mubr.f32.gmra.mrb[0].mxu0 %v2315
      %v2996 = vpop.f32.mrb[0].mxu0
      %v2997 = vadd.f32 0.0, %v2996
      %v2998 = vpop.f32.mrb[0].mxu0
      %2999 = vmatprep.mubr.f32.mxu0 0.0
      %3000 = vmatmul.mubr.f32.gmra.mrb[0].mxu0 %v2318
      %v3001 = vpop.f32.mrb[0].mxu0
      %v3002 = vadd.f32 0.0, %v3001
      %v3003 = vpop.f32.mrb[0].mxu0
      %3004 = vmatprep.mubr.f32.mxu0 0.0
      %3005 = vmatmul.mubr.f32.gmra.mrb[0].mxu0 %v2321
      %v3006 = vpop.f32.mrb[0].mxu0
      %v3007 = vadd.f32 0.0, %v3006
      %v3008 = vpop.f32.mrb[0].mxu0
      %3009 = vmatprep.mubr.f32.mxu0 0.0
      %3010 = vmatmul.mubr.f32.gmra.mrb[0].mxu0 %v2324
      %v3011 = vpop.f32.mrb[0].mxu0
      %v3012 = vadd.f32 0.0, %v3011
      %v3013 = vpop.f32.mrb[0].mxu0
      %3014 = vmatprep.mubr.f32.mxu0 0.0
      %3015 = vmatmul.mubr.f32.gmra.mrb[0].mxu0 %v2327
      %v3016 = vpop.f32.mrb[0].mxu0
      %v3017 = vadd.f32 0.0, %v3016
      %v3018 = vpop.f32.mrb[0].mxu0
      %3019 = vmatprep.mubr.f32.mxu0 0.0
      %3020 = vmatmul.mubr.f32.gmra.mrb[0].mxu0 %v2330
      %v3021 = vpop.f32.mrb[0].mxu0
      %v3022 = vadd.f32 0.0, %v3021
      %v3023 = vpop.f32.mrb[0].mxu0
      %3024 = vmatprep.mubr.f32.mxu0 0.0
      %3025 = vmatmul.mubr.f32.gmra.mrb[0].mxu0 %v2333
      %v3026 = vpop.f32.mrb[0].mxu0
      %v3027 = vadd.f32 0.0, %v3026
      %v3028 = vpop.f32.mrb[0].mxu0
      %3029 = vmatprep.mubr.f32.mxu0 0.0
      %3030 = vmatmul.mubr.f32.gmra.mrb[0].mxu0 %v2595
      %v3031 = vpop.f32.mrb[0].mxu0
      %v3032 = vadd.f32 0.0, %v3031
      %v3033 = vpop.f32.mrb[0].mxu0
      %3034 = vmatprep.mubr.f32.mxu0 0.0
      %3035 = vmatmul.mubr.f32.gmra.mrb[0].mxu0 %v2598
      %v3036 = vpop.f32.mrb[0].mxu0
      %v3037 = vadd.f32 0.0, %v3036
      %v3038 = vpop.f32.mrb[0].mxu0
      %3039 = vmatprep.mubr.f32.mxu0 0.0
      %3040 = vmatmul.mubr.f32.gmra.mrb[0].mxu0 %v2601
      %v3041 = vpop.f32.mrb[0].mxu0
      %v3042 = vadd.f32 0.0, %v3041
      %v3043 = vpop.f32.mrb[0].mxu0
      %3044 = vmatprep.mubr.f32.mxu0 0.0
      %3045 = vmatmul.mubr.f32.gmra.mrb[0].mxu0 %v2604
      %v3046 = vpop.f32.mrb[0].mxu0
      %v3047 = vadd.f32 0.0, %v3046
      %v3048 = vpop.f32.mrb[0].mxu0
      %3049 = vmatprep.mubr.f32.mxu0 0.0
      %3050 = vmatmul.mubr.f32.gmra.mrb[0].mxu0 %v2607
      %v3051 = vpop.f32.mrb[0].mxu0
      %v3052 = vadd.f32 0.0, %v3051
      %v3053 = vpop.f32.mrb[0].mxu0
      %3054 = vmatprep.mubr.f32.mxu0 0.0
      %3055 = vmatmul.mubr.f32.gmra.mrb[0].mxu0 %v2610
      %v3056 = vpop.f32.mrb[0].mxu0
      %v3057 = vadd.f32 0.0, %v3056
      %v3058 = vpop.f32.mrb[0].mxu0
      %3059 = vmatprep.mubr.f32.mxu0 0.0
      %3060 = vmatmul.mubr.f32.gmra.mrb[0].mxu0 %v2613
      %v3061 = vpop.f32.mrb[0].mxu0
      %v3062 = vadd.f32 0.0, %v3061
      %v3063 = vpop.f32.mrb[0].mxu0
      %3064 = vmatprep.mubr.f32.mxu0 0.0
      %3065 = vmatmul.mubr.f32.gmra.mrb[0].mxu0 %v2616
      %v3066 = vpop.f32.mrb[0].mxu0
      %v3067 = vadd.f32 0.0, %v3066
      %v3068 = vpop.f32.mrb[0].mxu0
      %3069 = vmatprep.mubr.f32.mxu0 0.0
      %3070 = vmatmul.mubr.f32.gmra.mrb[0].mxu0 %v2619
      %v3071 = vpop.f32.mrb[0].mxu0
      %v3072 = vadd.f32 0.0, %v3071
      %v3073 = vpop.f32.mrb[0].mxu0
      %3074 = vmatprep.mubr.f32.mxu0 0.0
      %3075 = vmatmul.mubr.f32.gmra.mrb[0].mxu0 %v2622
      %v3076 = vpop.f32.mrb[0].mxu0
      %v3077 = vadd.f32 0.0, %v3076
      %v3078 = vpop.f32.mrb[0].mxu0
      %3079 = vmatprep.mubr.f32.mxu0 0.0
      %3080 = vmatmul.mubr.f32.gmra.mrb[0].mxu0 %v2625
      %v3081 = vpop.f32.mrb[0].mxu0
      %v3082 = vadd.f32 0.0, %v3081
      %v3083 = vpop.f32.mrb[0].mxu0
      %3084 = vmatprep.mubr.f32.mxu0 0.0
      %3085 = vmatmul.mubr.f32.gmra.mrb[0].mxu0 %v2628
      %v3086 = vpop.f32.mrb[0].mxu0
      %v3087 = vadd.f32 0.0, %v3086
      %v3088 = vpop.f32.mrb[0].mxu0
      %3089 = vmatprep.mubr.f32.mxu0 0.0
      %3090 = vmatmul.mubr.f32.gmra.mrb[0].mxu0 %v2890
      %v3091 = vpop.f32.mrb[0].mxu0
      %v3092 = vadd.f32 0.0, %v3091
      %v3093 = vpop.f32.mrb[0].mxu0
      %3094 = vmatprep.mubr.f32.mxu0 0.0
      %3095 = vmatmul.mubr.f32.gmra.mrb[0].mxu0 %v2893
      %v3096 = vpop.f32.mrb[0].mxu0
      %v3097 = vadd.f32 0.0, %v3096
      %v3098 = vpop.f32.mrb[0].mxu0
      %3099 = vmatprep.mubr.f32.mxu0 0.0
      %3100 = vmatmul.mubr.f32.gmra.mrb[0].mxu0 %v2896
      %v3101 = vpop.f32.mrb[0].mxu0
      %v3102 = vadd.f32 0.0, %v3101
      %v3103 = vpop.f32.mrb[0].mxu0
      %3104 = vmatprep.mubr.f32.mxu0 0.0
      %3105 = vmatmul.mubr.f32.gmra.mrb[0].mxu0 %v2899
      %v3106 = vpop.f32.mrb[0].mxu0
      %v3107 = vadd.f32 0.0, %v3106
      %v3108 = vpop.f32.mrb[0].mxu0
      %3109 = vmatprep.mubr.f32.mxu0 0.0
      %3110 = vmatmul.mubr.f32.gmra.mrb[0].mxu0 %v2902
      %v3111 = vpop.f32.mrb[0].mxu0
      %v3112 = vadd.f32 0.0, %v3111
      %v3113 = vpop.f32.mrb[0].mxu0
      %3114 = vmatprep.mubr.f32.mxu0 0.0
      %3115 = vmatmul.mubr.f32.gmra.mrb[0].mxu0 %v2905
      %v3116 = vpop.f32.mrb[0].mxu0
      %v3117 = vadd.f32 0.0, %v3116
      %v3118 = vpop.f32.mrb[0].mxu0
      %3119 = vmatprep.mubr.f32.mxu0 0.0
      %3120 = vmatmul.mubr.f32.gmra.mrb[0].mxu0 %v2908
      %v3121 = vpop.f32.mrb[0].mxu0
      %v3122 = vadd.f32 0.0, %v3121
      %v3123 = vpop.f32.mrb[0].mxu0
      %3124 = vmatprep.mubr.f32.mxu0 0.0
      %3125 = vmatmul.mubr.f32.gmra.mrb[0].mxu0 %v2911
      %v3126 = vpop.f32.mrb[0].mxu0
      %v3127 = vadd.f32 0.0, %v3126
      %v3128 = vpop.f32.mrb[0].mxu0
      %3129 = vmatprep.mubr.f32.mxu0 0.0
      %3130 = vmatmul.mubr.f32.gmra.mrb[0].mxu0 %v2914
      %v3131 = vpop.f32.mrb[0].mxu0
      %v3132 = vadd.f32 0.0, %v3131
      %v3133 = vpop.f32.mrb[0].mxu0
      %3134 = vmatprep.mubr.f32.mxu0 0.0
      %3135 = vmatmul.mubr.f32.gmra.mrb[0].mxu0 %v2917
      %v3136 = vpop.f32.mrb[0].mxu0
      %v3137 = vadd.f32 0.0, %v3136
      %v3138 = vpop.f32.mrb[0].mxu0
      %3139 = vmatprep.mubr.f32.mxu0 0.0
      %3140 = vmatmul.mubr.f32.gmra.mrb[0].mxu0 %v2920
      %v3141 = vpop.f32.mrb[0].mxu0
      %v3142 = vadd.f32 0.0, %v3141
      %v3143 = vpop.f32.mrb[0].mxu0
      %3144 = vmatprep.mubr.f32.mxu0 0.0
      %3145 = vmatmul.mubr.f32.gmra.mrb[0].mxu0 %v2923
      %v3146 = vpop.f32.mrb[0].mxu0
      %v3147 = vadd.f32 0.0, %v3146
      %v3148 = vpop.f32.mrb[0].mxu0
      %3149 = vdwg.mxu0
      %v3150 = vadd.f32 %v2855, %v2992
      %v3151 = vadd.f32 %v2856, %v2997
      %v3152 = vadd.f32 %v2857, %v3002
      %v3153 = vadd.f32 %v2858, %v3007
      %v3154 = vadd.f32 %v2859, %v3012
      %v3155 = vadd.f32 %v2860, %v3017
      %v3156 = vadd.f32 %v2861, %v3022
      %v3157 = vadd.f32 %v2862, %v3027
      %v3158 = vadd.f32 %v2863, %v3032
      %v3159 = vadd.f32 %v2864, %v3037
      %v3160 = vadd.f32 %v2865, %v3042
      %v3161 = vadd.f32 %v2866, %v3047
      %v3162 = vadd.f32 %v2867, %v3052
      %v3163 = vadd.f32 %v2868, %v3057
      %v3164 = vadd.f32 %v2869, %v3062
      %v3165 = vadd.f32 %v2870, %v3067
      %v3166 = vadd.f32 %v2871, %v3072
      %v3167 = vadd.f32 %v2872, %v3077
      %v3168 = vadd.f32 %v2873, %v3082
      %v3169 = vadd.f32 %v2874, %v3087
      %v3170 = vadd.f32 %v2875, %v3092
      %v3171 = vadd.f32 %v2876, %v3097
      %v3172 = vadd.f32 %v2877, %v3102
      %v3173 = vadd.f32 %v2878, %v3107
      %v3174 = vadd.f32 %v2879, %v3112
      %v3175 = vadd.f32 %v2880, %v3117
      %v3176 = vadd.f32 %v2881, %v3122
      %v3177 = vadd.f32 %v2882, %v3127
      %v3178 = vadd.f32 %v2883, %v3132
      %v3179 = vadd.f32 %v2884, %v3137
      %v3180 = vadd.f32 %v2885, %v3142
      %v3181 = vadd.f32 %v2886, %v3147
      %v3182 = vld [vmem:[#allocation2 + $0x2b8] sm:$0xff]
      %v3183 = vld [vmem:[#allocation2 + $0x2c0] sm:$0xff]
      %v3184 = vld [vmem:[#allocation2 + $0x2f0] sm:$0xff]
      %v3185 = vld [vmem:[#allocation2 + $0x2f8] sm:$0xff]
      %v3186 = vld [vmem:[#allocation2 + $0x328] sm:$0xff]
      %v3187 = vld [vmem:[#allocation2 + $0x330] sm:$0xff]
      %v3188 = vld [vmem:[#allocation2 + $0x360] sm:$0xff]
      %v3189 = vld [vmem:[#allocation2 + $0x368] sm:$0xff]
      %v3190 = vld [vmem:[#allocation2 + $0x398] sm:$0xff]
      %v3191 = vld [vmem:[#allocation2 + $0x3a0] sm:$0xff]
      %v3192 = vld [vmem:[#allocation2 + $0x3d0] sm:$0xff]
      %v3193 = vld [vmem:[#allocation2 + $0x3d8] sm:$0xff]
      %v3194 = vld [vmem:[#allocation2 + $0x408] sm:$0xff]
      %v3195 = vld [vmem:[#allocation2 + $0x410] sm:$0xff]
      %v3196 = vld [vmem:[#allocation2 + $0x440] sm:$0xff]
      %v3197 = vld [vmem:[#allocation2 + $0x448] sm:$0xff]
      %v3198 = vld [vmem:[#allocation2 + $0x478] sm:$0xff]
      %v3199 = vld [vmem:[#allocation2 + $0x480] sm:$0xff]
      %v3200 = vld [vmem:[#allocation2 + $0x4b0] sm:$0xff]
      %v3201 = vld [vmem:[#allocation2 + $0x4b8] sm:$0xff]
      %v3202 = vld [vmem:[#allocation2 + $0x4e8] sm:$0xff]
      %v3203 = vld [vmem:[#allocation2 + $0x4f0] sm:$0xff]
      %v3204 = vld [vmem:[#allocation2 + $0x520] sm:$0xff]
      %v3205 = vld [vmem:[#allocation2 + $0x528] sm:$0xff]
      %v3206 = vld [vmem:[#allocation2 + $0x558] sm:$0xff]
      %v3207 = vld [vmem:[#allocation2 + $0x560] sm:$0xff]
      %v3208 = vld [vmem:[#allocation2 + $0x590] sm:$0xff]
      %v3209 = vld [vmem:[#allocation2 + $0x598] sm:$0xff]
      %v3210 = vld [vmem:[#allocation2 + $0x5c8] sm:$0xff]
      %v3211 = vld [vmem:[#allocation2 + $0x5d0] sm:$0xff]
      %v3212 = vld [vmem:[#allocation2 + $0x600] sm:$0xff]
      %v3213 = vld [vmem:[#allocation2 + $0x608] sm:$0xff]
      %v3214 = vld [vmem:[#allocation2 + $0x638] sm:$0xff]
      %v3215 = vld [vmem:[#allocation2 + $0x640] sm:$0xff]
      %v3216 = vld [vmem:[#allocation2 + $0x670] sm:$0xff]
      %v3217 = vld [vmem:[#allocation2 + $0x678] sm:$0xff]
      %v3218 = vld [vmem:[#allocation2 + $0x6a8] sm:$0xff]
      %v3219 = vld [vmem:[#allocation2 + $0x6b0] sm:$0xff]
      %v3220 = vld [vmem:[#allocation2 + $0x6e0] sm:$0xff]
      %v3221 = vld [vmem:[#allocation2 + $0x6e8] sm:$0xff]
      %v3222 = vld [vmem:[#allocation2 + $0x718] sm:$0xff]
      %v3223 = vld [vmem:[#allocation2 + $0x720] sm:$0xff]
      %v3224 = vld [vmem:[#allocation2 + $0x750] sm:$0xff]
      %v3225 = vld [vmem:[#allocation2 + $0x758] sm:$0xff]
      %v3226 = vld [vmem:[#allocation2 + $0x788] sm:$0xff]
      %v3227 = vld [vmem:[#allocation2 + $0x790] sm:$0xff]
      %v3228 = vld [vmem:[#allocation2 + $0x7c0] sm:$0xff]
      %v3229 = vld [vmem:[#allocation2 + $0x7c8] sm:$0xff]
      %v3230 = vld [vmem:[#allocation2 + $0x7f8] sm:$0xff]
      %v3231 = vld [vmem:[#allocation2 + $0x800] sm:$0xff]
      %v3232 = vld [vmem:[#allocation2 + $0x830] sm:$0xff]
      %v3233 = vld [vmem:[#allocation2 + $0x838] sm:$0xff]
      %v3234 = vld [vmem:[#allocation2 + $0x868] sm:$0xff]
      %v3235 = vld [vmem:[#allocation2 + $0x870] sm:$0xff]
      %v3236 = vld [vmem:[#allocation2 + $0x8a0] sm:$0xff]
      %v3237 = vld [vmem:[#allocation2 + $0x8a8] sm:$0xff]
      %s3238 = scalar_lea.vmem %s3, 16
      %v3239 = vld [vmem:[%s3238] sm:$0xff]
      %v3241 = vsel %vm279, %v3182, 0
      %v3244 = vsel %vm279, %v3183, 0
      %v3247 = vsel %vm279, %v3184, 0
      %v3250 = vsel %vm279, %v3185, 0
      %v3253 = vsel %vm279, %v3186, 0
      %v3256 = vsel %vm279, %v3187, 0
      %v3259 = vsel %vm279, %v3188, 0
      %v3262 = vsel %vm279, %v3189, 0
      %v3265 = vsel %vm279, %v3190, 0
      %v3268 = vsel %vm279, %v3191, 0
      %v3271 = vsel %vm279, %v3192, 0
      %v3274 = vsel %vm279, %v3193, 0
      %v3277 = vsel %vm279, %v3194, 0
      %v3280 = vsel %vm279, %v3195, 0
      %v3283 = vsel %vm279, %v3196, 0
      %v3286 = vsel %vm279, %v3197, 0
      %v3289 = vsel %vm279, %v3198, 0
      %v3292 = vsel %vm279, %v3199, 0
      %v3295 = vsel %vm279, %v3200, 0
      %v3298 = vsel %vm279, %v3201, 0
      %v3301 = vsel %vm279, %v3202, 0
      %v3304 = vsel %vm279, %v3203, 0
      %v3307 = vsel %vm279, %v3204, 0
      %v3310 = vsel %vm279, %v3205, 0
      %v3313 = vsel %vm279, %v3206, 0
      %v3316 = vsel %vm279, %v3207, 0
      %v3319 = vsel %vm279, %v3208, 0
      %v3322 = vsel %vm279, %v3209, 0
      %v3325 = vsel %vm279, %v3210, 0
      %v3328 = vsel %vm279, %v3211, 0
      %v3331 = vsel %vm279, %v3212, 0
      %v3334 = vsel %vm279, %v3213, 0
      %3336 = vmatprep.subr.mxu0 0.0
      %3337 = vmatpush1.msra.mxu0 %v3239
      %3338 = vmatprep.subr.mxu0 0.0
      %3339 = vmatpush1.msra.mxu0 0.0
      %3340 = vmatprep.subr.mxu0 0.0
      %3341 = vmatpush1.msra.mxu0 0.0
      %3342 = vmatprep.subr.mxu0 0.0
      %3343 = vmatpush1.msra.mxu0 0.0
      %3344 = vmatprep.subr.mxu0 0.0
      %3345 = vmatpush1.msra.mxu0 0.0
      %3346 = vmatprep.subr.mxu0 0.0
      %3347 = vmatpush1.msra.mxu0 0.0
      %3348 = vmatprep.subr.mxu0 0.0
      %3349 = vmatpush1.msra.mxu0 0.0
      %3350 = vmatprep.subr.mxu0 0.0
      %3351 = vmatpush1.msra.mxu0 0.0
      %3352 = vmatprep.subr.mxu0 0.0
      %3353 = vmatpush1.msra.mxu0 0.0
      %3354 = vmatprep.subr.mxu0 0.0
      %3355 = vmatpush1.msra.mxu0 0.0
      %3356 = vmatprep.subr.mxu0 0.0
      %3357 = vmatpush1.msra.mxu0 0.0
      %3358 = vmatprep.subr.mxu0 0.0
      %3359 = vmatpush1.msra.mxu0 0.0
      %3360 = vmatprep.subr.mxu0 0.0
      %3361 = vmatpush1.msra.mxu0 0.0
      %3362 = vmatprep.subr.mxu0 0.0
      %3363 = vmatpush1.msra.mxu0 0.0
      %3364 = vmatprep.subr.mxu0 0.0
      %3365 = vmatpush1.msra.mxu0 0.0
      %3366 = vmatprep.subr.mxu0 0.0
      %3367 = vmatpush1.msra.mxu0 0.0
      %3368 = vmatprep.subr.mxu0 0.0
      %3369 = vmatpush1.msra.mxu0 0.0
      %3370 = vmatprep.subr.mxu0 0.0
      %3371 = vmatpush1.msra.mxu0 0.0
      %3372 = vmatprep.subr.mxu0 0.0
      %3373 = vmatpush1.msra.mxu0 0.0
      %3374 = vmatprep.subr.mxu0 0.0
      %3375 = vmatpush1.msra.mxu0 0.0
      %3376 = vmatprep.subr.mxu0 0.0
      %3377 = vmatpush1.msra.mxu0 0.0
      %3378 = vmatprep.subr.mxu0 0.0
      %3379 = vmatpush1.msra.mxu0 0.0
      %3380 = vmatprep.subr.mxu0 0.0
      %3381 = vmatpush1.msra.mxu0 0.0
      %3382 = vmatprep.subr.mxu0 0.0
      %3383 = vmatpush1.msra.mxu0 0.0
      %3384 = vmatprep.subr.mxu0 0.0
      %3385 = vmatpush1.msra.mxu0 0.0
      %3386 = vmatprep.subr.mxu0 0.0
      %3387 = vmatpush1.msra.mxu0 0.0
      %3388 = vmatprep.subr.mxu0 0.0
      %3389 = vmatpush1.msra.mxu0 0.0
      %3390 = vmatprep.subr.mxu0 0.0
      %3391 = vmatpush1.msra.mxu0 0.0
      %3392 = vmatprep.subr.mxu0 0.0
      %3393 = vmatpush1.msra.mxu0 0.0
      %3394 = vmatprep.subr.mxu0 0.0
      %3395 = vmatpush1.msra.mxu0 0.0
      %3396 = vmatprep.subr.mxu0 0.0
      %3397 = vmatpush1.msra.mxu0 0.0
      %3398 = vmatprep.subr.mxu0 0.0
      %3399 = vmatpush1.msra.mxu0 0.0
      %3400 = vmatprep.mubr.f32.mxu0 0.0
      %3401 = vmatmul.mubr.f32.gmra.mrb[0].mxu0 %v3241
      %v3402 = vpop.f32.mrb[0].mxu0
      %v3403 = vadd.f32 0.0, %v3402
      %v3404 = vpop.f32.mrb[0].mxu0
      %3405 = vmatprep.mubr.f32.mxu0 0.0
      %3406 = vmatmul.mubr.f32.gmra.mrb[0].mxu0 %v3244
      %v3407 = vpop.f32.mrb[0].mxu0
      %v3408 = vadd.f32 0.0, %v3407
      %v3409 = vpop.f32.mrb[0].mxu0
      %3410 = vmatprep.mubr.f32.mxu0 0.0
      %3411 = vmatmul.mubr.f32.gmra.mrb[0].mxu0 %v3247
      %v3412 = vpop.f32.mrb[0].mxu0
      %v3413 = vadd.f32 0.0, %v3412
      %v3414 = vpop.f32.mrb[0].mxu0
      %3415 = vmatprep.mubr.f32.mxu0 0.0
      %3416 = vmatmul.mubr.f32.gmra.mrb[0].mxu0 %v3250
      %v3417 = vpop.f32.mrb[0].mxu0
      %v3418 = vadd.f32 0.0, %v3417
      %v3419 = vpop.f32.mrb[0].mxu0
      %3420 = vmatprep.mubr.f32.mxu0 0.0
      %3421 = vmatmul.mubr.f32.gmra.mrb[0].mxu0 %v3253
      %v3422 = vpop.f32.mrb[0].mxu0
      %v3423 = vadd.f32 0.0, %v3422
      %v3424 = vpop.f32.mrb[0].mxu0
      %3425 = vmatprep.mubr.f32.mxu0 0.0
      %3426 = vmatmul.mubr.f32.gmra.mrb[0].mxu0 %v3256
      %v3427 = vpop.f32.mrb[0].mxu0
      %v3428 = vadd.f32 0.0, %v3427
      %v3429 = vpop.f32.mrb[0].mxu0
      %3430 = vmatprep.mubr.f32.mxu0 0.0
      %3431 = vmatmul.mubr.f32.gmra.mrb[0].mxu0 %v3259
      %v3432 = vpop.f32.mrb[0].mxu0
      %v3433 = vadd.f32 0.0, %v3432
      %v3434 = vpop.f32.mrb[0].mxu0
      %3435 = vmatprep.mubr.f32.mxu0 0.0
      %3436 = vmatmul.mubr.f32.gmra.mrb[0].mxu0 %v3262
      %v3437 = vpop.f32.mrb[0].mxu0
      %v3438 = vadd.f32 0.0, %v3437
      %v3439 = vpop.f32.mrb[0].mxu0
      %3440 = vmatprep.mubr.f32.mxu0 0.0
      %3441 = vmatmul.mubr.f32.gmra.mrb[0].mxu0 %v3265
      %v3442 = vpop.f32.mrb[0].mxu0
      %v3443 = vadd.f32 0.0, %v3442
      %v3444 = vpop.f32.mrb[0].mxu0
      %3445 = vmatprep.mubr.f32.mxu0 0.0
      %3446 = vmatmul.mubr.f32.gmra.mrb[0].mxu0 %v3268
      %v3447 = vpop.f32.mrb[0].mxu0
      %v3448 = vadd.f32 0.0, %v3447
      %v3449 = vpop.f32.mrb[0].mxu0
      %3450 = vmatprep.mubr.f32.mxu0 0.0
      %3451 = vmatmul.mubr.f32.gmra.mrb[0].mxu0 %v3271
      %v3452 = vpop.f32.mrb[0].mxu0
      %v3453 = vadd.f32 0.0, %v3452
      %v3454 = vpop.f32.mrb[0].mxu0
      %3455 = vmatprep.mubr.f32.mxu0 0.0
      %3456 = vmatmul.mubr.f32.gmra.mrb[0].mxu0 %v3274
      %v3457 = vpop.f32.mrb[0].mxu0
      %v3458 = vadd.f32 0.0, %v3457
      %v3459 = vpop.f32.mrb[0].mxu0
      %3460 = vmatprep.mubr.f32.mxu0 0.0
      %3461 = vmatmul.mubr.f32.gmra.mrb[0].mxu0 %v3277
      %v3462 = vpop.f32.mrb[0].mxu0
      %v3463 = vadd.f32 0.0, %v3462
      %v3464 = vpop.f32.mrb[0].mxu0
      %3465 = vmatprep.mubr.f32.mxu0 0.0
      %3466 = vmatmul.mubr.f32.gmra.mrb[0].mxu0 %v3280
      %v3467 = vpop.f32.mrb[0].mxu0
      %v3468 = vadd.f32 0.0, %v3467
      %v3469 = vpop.f32.mrb[0].mxu0
      %3470 = vmatprep.mubr.f32.mxu0 0.0
      %3471 = vmatmul.mubr.f32.gmra.mrb[0].mxu0 %v3283
      %v3472 = vpop.f32.mrb[0].mxu0
      %v3473 = vadd.f32 0.0, %v3472
      %v3474 = vpop.f32.mrb[0].mxu0
      %3475 = vmatprep.mubr.f32.mxu0 0.0
      %3476 = vmatmul.mubr.f32.gmra.mrb[0].mxu0 %v3286
      %v3477 = vpop.f32.mrb[0].mxu0
      %v3478 = vadd.f32 0.0, %v3477
      %v3479 = vpop.f32.mrb[0].mxu0
      %3480 = vmatprep.mubr.f32.mxu0 0.0
      %3481 = vmatmul.mubr.f32.gmra.mrb[0].mxu0 %v3289
      %v3482 = vpop.f32.mrb[0].mxu0
      %v3483 = vadd.f32 0.0, %v3482
      %v3484 = vpop.f32.mrb[0].mxu0
      %3485 = vmatprep.mubr.f32.mxu0 0.0
      %3486 = vmatmul.mubr.f32.gmra.mrb[0].mxu0 %v3292
      %v3487 = vpop.f32.mrb[0].mxu0
      %v3488 = vadd.f32 0.0, %v3487
      %v3489 = vpop.f32.mrb[0].mxu0
      %3490 = vmatprep.mubr.f32.mxu0 0.0
      %3491 = vmatmul.mubr.f32.gmra.mrb[0].mxu0 %v3295
      %v3492 = vpop.f32.mrb[0].mxu0
      %v3493 = vadd.f32 0.0, %v3492
      %v3494 = vpop.f32.mrb[0].mxu0
      %3495 = vmatprep.mubr.f32.mxu0 0.0
      %3496 = vmatmul.mubr.f32.gmra.mrb[0].mxu0 %v3298
      %v3497 = vpop.f32.mrb[0].mxu0
      %v3498 = vadd.f32 0.0, %v3497
      %v3499 = vpop.f32.mrb[0].mxu0
      %3500 = vmatprep.mubr.f32.mxu0 0.0
      %3501 = vmatmul.mubr.f32.gmra.mrb[0].mxu0 %v3301
      %v3502 = vpop.f32.mrb[0].mxu0
      %v3503 = vadd.f32 0.0, %v3502
      %v3504 = vpop.f32.mrb[0].mxu0
      %3505 = vmatprep.mubr.f32.mxu0 0.0
      %3506 = vmatmul.mubr.f32.gmra.mrb[0].mxu0 %v3304
      %v3507 = vpop.f32.mrb[0].mxu0
      %v3508 = vadd.f32 0.0, %v3507
      %v3509 = vpop.f32.mrb[0].mxu0
      %3510 = vmatprep.mubr.f32.mxu0 0.0
      %3511 = vmatmul.mubr.f32.gmra.mrb[0].mxu0 %v3307
      %v3512 = vpop.f32.mrb[0].mxu0
      %v3513 = vadd.f32 0.0, %v3512
      %v3514 = vpop.f32.mrb[0].mxu0
      %3515 = vmatprep.mubr.f32.mxu0 0.0
      %3516 = vmatmul.mubr.f32.gmra.mrb[0].mxu0 %v3310
      %v3517 = vpop.f32.mrb[0].mxu0
      %v3518 = vadd.f32 0.0, %v3517
      %v3519 = vpop.f32.mrb[0].mxu0
      %3520 = vmatprep.mubr.f32.mxu0 0.0
      %3521 = vmatmul.mubr.f32.gmra.mrb[0].mxu0 %v3313
      %v3522 = vpop.f32.mrb[0].mxu0
      %v3523 = vadd.f32 0.0, %v3522
      %v3524 = vpop.f32.mrb[0].mxu0
      %3525 = vmatprep.mubr.f32.mxu0 0.0
      %3526 = vmatmul.mubr.f32.gmra.mrb[0].mxu0 %v3316
      %v3527 = vpop.f32.mrb[0].mxu0
      %v3528 = vadd.f32 0.0, %v3527
      %v3529 = vpop.f32.mrb[0].mxu0
      %3530 = vmatprep.mubr.f32.mxu0 0.0
      %3531 = vmatmul.mubr.f32.gmra.mrb[0].mxu0 %v3319
      %v3532 = vpop.f32.mrb[0].mxu0
      %v3533 = vadd.f32 0.0, %v3532
      %v3534 = vpop.f32.mrb[0].mxu0
      %3535 = vmatprep.mubr.f32.mxu0 0.0
      %3536 = vmatmul.mubr.f32.gmra.mrb[0].mxu0 %v3322
      %v3537 = vpop.f32.mrb[0].mxu0
      %v3538 = vadd.f32 0.0, %v3537
      %v3539 = vpop.f32.mrb[0].mxu0
      %3540 = vmatprep.mubr.f32.mxu0 0.0
      %3541 = vmatmul.mubr.f32.gmra.mrb[0].mxu0 %v3325
      %v3542 = vpop.f32.mrb[0].mxu0
      %v3543 = vadd.f32 0.0, %v3542
      %v3544 = vpop.f32.mrb[0].mxu0
      %3545 = vmatprep.mubr.f32.mxu0 0.0
      %3546 = vmatmul.mubr.f32.gmra.mrb[0].mxu0 %v3328
      %v3547 = vpop.f32.mrb[0].mxu0
      %v3548 = vadd.f32 0.0, %v3547
      %v3549 = vpop.f32.mrb[0].mxu0
      %3550 = vmatprep.mubr.f32.mxu0 0.0
      %3551 = vmatmul.mubr.f32.gmra.mrb[0].mxu0 %v3331
      %v3552 = vpop.f32.mrb[0].mxu0
      %v3553 = vadd.f32 0.0, %v3552
      %v3554 = vpop.f32.mrb[0].mxu0
      %3555 = vmatprep.mubr.f32.mxu0 0.0
      %3556 = vmatmul.mubr.f32.gmra.mrb[0].mxu0 %v3334
      %v3557 = vpop.f32.mrb[0].mxu0
      %v3558 = vadd.f32 0.0, %v3557
      %v3559 = vpop.f32.mrb[0].mxu0
      %3560 = vdwg.mxu0
      %v3561 = vadd.f32 %v3150, %v3403
      %v3562 = vadd.f32 %v3151, %v3408
      %v3563 = vadd.f32 %v3152, %v3413
      %v3564 = vadd.f32 %v3153, %v3418
      %v3565 = vadd.f32 %v3154, %v3423
      %v3566 = vadd.f32 %v3155, %v3428
      %v3567 = vadd.f32 %v3156, %v3433
      %v3568 = vadd.f32 %v3157, %v3438
      %v3569 = vadd.f32 %v3158, %v3443
      %v3570 = vadd.f32 %v3159, %v3448
      %v3571 = vadd.f32 %v3160, %v3453
      %v3572 = vadd.f32 %v3161, %v3458
      %v3573 = vadd.f32 %v3162, %v3463
      %v3574 = vadd.f32 %v3163, %v3468
      %v3575 = vadd.f32 %v3164, %v3473
      %v3576 = vadd.f32 %v3165, %v3478
      %v3577 = vadd.f32 %v3166, %v3483
      %v3578 = vadd.f32 %v3167, %v3488
      %v3579 = vadd.f32 %v3168, %v3493
      %v3580 = vadd.f32 %v3169, %v3498
      %v3581 = vadd.f32 %v3170, %v3503
      %v3582 = vadd.f32 %v3171, %v3508
      %v3583 = vadd.f32 %v3172, %v3513
      %v3584 = vadd.f32 %v3173, %v3518
      %v3585 = vadd.f32 %v3174, %v3523
      %v3586 = vadd.f32 %v3175, %v3528
      %v3587 = vadd.f32 %v3176, %v3533
      %v3588 = vadd.f32 %v3177, %v3538
      %v3589 = vadd.f32 %v3178, %v3543
      %v3590 = vadd.f32 %v3179, %v3548
      %v3591 = vadd.f32 %v3180, %v3553
      %v3592 = vadd.f32 %v3181, %v3558
      %s3593 = scalar_lea.vmem %s3, 40
      %v3594 = vld [vmem:[%s3593] sm:$0xff]
      %v3596 = vsel %vm279, %v3214, 0
      %v3599 = vsel %vm279, %v3215, 0
      %v3602 = vsel %vm279, %v3216, 0
      %v3605 = vsel %vm279, %v3217, 0
      %v3608 = vsel %vm279, %v3218, 0
      %v3611 = vsel %vm279, %v3219, 0
      %v3614 = vsel %vm279, %v3220, 0
      %v3617 = vsel %vm279, %v3221, 0
      %v3620 = vsel %vm279, %v3222, 0
      %v3623 = vsel %vm279, %v3223, 0
      %v3626 = vsel %vm279, %v3224, 0
      %v3629 = vsel %vm279, %v3225, 0
      %3631 = vmatprep.subr.mxu0 0.0
      %3632 = vmatpush1.msra.mxu0 %v3594
      %3633 = vmatprep.subr.mxu0 0.0
      %3634 = vmatpush1.msra.mxu0 0.0
      %3635 = vmatprep.subr.mxu0 0.0
      %3636 = vmatpush1.msra.mxu0 0.0
      %3637 = vmatprep.subr.mxu0 0.0
      %3638 = vmatpush1.msra.mxu0 0.0
      %3639 = vmatprep.subr.mxu0 0.0
      %3640 = vmatpush1.msra.mxu0 0.0
      %3641 = vmatprep.subr.mxu0 0.0
      %3642 = vmatpush1.msra.mxu0 0.0
      %3643 = vmatprep.subr.mxu0 0.0
      %3644 = vmatpush1.msra.mxu0 0.0
      %3645 = vmatprep.subr.mxu0 0.0
      %3646 = vmatpush1.msra.mxu0 0.0
      %3647 = vmatprep.subr.mxu0 0.0
      %3648 = vmatpush1.msra.mxu0 0.0
      %3649 = vmatprep.subr.mxu0 0.0
      %3650 = vmatpush1.msra.mxu0 0.0
      %3651 = vmatprep.subr.mxu0 0.0
      %3652 = vmatpush1.msra.mxu0 0.0
      %3653 = vmatprep.subr.mxu0 0.0
      %3654 = vmatpush1.msra.mxu0 0.0
      %3655 = vmatprep.subr.mxu0 0.0
      %3656 = vmatpush1.msra.mxu0 0.0
      %3657 = vmatprep.subr.mxu0 0.0
      %3658 = vmatpush1.msra.mxu0 0.0
      %3659 = vmatprep.subr.mxu0 0.0
      %3660 = vmatpush1.msra.mxu0 0.0
      %3661 = vmatprep.subr.mxu0 0.0
      %3662 = vmatpush1.msra.mxu0 0.0
      %3663 = vmatprep.subr.mxu0 0.0
      %3664 = vmatpush1.msra.mxu0 0.0
      %3665 = vmatprep.subr.mxu0 0.0
      %3666 = vmatpush1.msra.mxu0 0.0
      %3667 = vmatprep.subr.mxu0 0.0
      %3668 = vmatpush1.msra.mxu0 0.0
      %3669 = vmatprep.subr.mxu0 0.0
      %3670 = vmatpush1.msra.mxu0 0.0
      %3671 = vmatprep.subr.mxu0 0.0
      %3672 = vmatpush1.msra.mxu0 0.0
      %3673 = vmatprep.subr.mxu0 0.0
      %3674 = vmatpush1.msra.mxu0 0.0
      %3675 = vmatprep.subr.mxu0 0.0
      %3676 = vmatpush1.msra.mxu0 0.0
      %3677 = vmatprep.subr.mxu0 0.0
      %3678 = vmatpush1.msra.mxu0 0.0
      %3679 = vmatprep.subr.mxu0 0.0
      %3680 = vmatpush1.msra.mxu0 0.0
      %3681 = vmatprep.subr.mxu0 0.0
      %3682 = vmatpush1.msra.mxu0 0.0
      %3683 = vmatprep.subr.mxu0 0.0
      %3684 = vmatpush1.msra.mxu0 0.0
      %3685 = vmatprep.subr.mxu0 0.0
      %3686 = vmatpush1.msra.mxu0 0.0
      %3687 = vmatprep.subr.mxu0 0.0
      %3688 = vmatpush1.msra.mxu0 0.0
      %3689 = vmatprep.subr.mxu0 0.0
      %3690 = vmatpush1.msra.mxu0 0.0
      %3691 = vmatprep.subr.mxu0 0.0
      %3692 = vmatpush1.msra.mxu0 0.0
      %3693 = vmatprep.subr.mxu0 0.0
      %3694 = vmatpush1.msra.mxu0 0.0
      %3695 = vmatprep.mubr.f32.mxu0 0.0
      %3696 = vmatmul.mubr.f32.gmra.mrb[0].mxu0 %v3277
      %v3697 = vpop.f32.mrb[0].mxu0
      %v3698 = vadd.f32 0.0, %v3697
      %v3699 = vpop.f32.mrb[0].mxu0
      %3700 = vmatprep.mubr.f32.mxu0 0.0
      %3701 = vmatmul.mubr.f32.gmra.mrb[0].mxu0 %v3280
      %v3702 = vpop.f32.mrb[0].mxu0
      %v3703 = vadd.f32 0.0, %v3702
      %v3704 = vpop.f32.mrb[0].mxu0
      %3705 = vmatprep.mubr.f32.mxu0 0.0
      %3706 = vmatmul.mubr.f32.gmra.mrb[0].mxu0 %v3283
      %v3707 = vpop.f32.mrb[0].mxu0
      %v3708 = vadd.f32 0.0, %v3707
      %v3709 = vpop.f32.mrb[0].mxu0
      %3710 = vmatprep.mubr.f32.mxu0 0.0
      %3711 = vmatmul.mubr.f32.gmra.mrb[0].mxu0 %v3286
      %v3712 = vpop.f32.mrb[0].mxu0
      %v3713 = vadd.f32 0.0, %v3712
      %v3714 = vpop.f32.mrb[0].mxu0
      %3715 = vmatprep.mubr.f32.mxu0 0.0
      %3716 = vmatmul.mubr.f32.gmra.mrb[0].mxu0 %v3289
      %v3717 = vpop.f32.mrb[0].mxu0
      %v3718 = vadd.f32 0.0, %v3717
      %v3719 = vpop.f32.mrb[0].mxu0
      %3720 = vmatprep.mubr.f32.mxu0 0.0
      %3721 = vmatmul.mubr.f32.gmra.mrb[0].mxu0 %v3292
      %v3722 = vpop.f32.mrb[0].mxu0
      %v3723 = vadd.f32 0.0, %v3722
      %v3724 = vpop.f32.mrb[0].mxu0
      %3725 = vmatprep.mubr.f32.mxu0 0.0
      %3726 = vmatmul.mubr.f32.gmra.mrb[0].mxu0 %v3295
      %v3727 = vpop.f32.mrb[0].mxu0
      %v3728 = vadd.f32 0.0, %v3727
      %v3729 = vpop.f32.mrb[0].mxu0
      %3730 = vmatprep.mubr.f32.mxu0 0.0
      %3731 = vmatmul.mubr.f32.gmra.mrb[0].mxu0 %v3298
      %v3732 = vpop.f32.mrb[0].mxu0
      %v3733 = vadd.f32 0.0, %v3732
      %v3734 = vpop.f32.mrb[0].mxu0
      %3735 = vmatprep.mubr.f32.mxu0 0.0
      %3736 = vmatmul.mubr.f32.gmra.mrb[0].mxu0 %v3301
      %v3737 = vpop.f32.mrb[0].mxu0
      %v3738 = vadd.f32 0.0, %v3737
      %v3739 = vpop.f32.mrb[0].mxu0
      %3740 = vmatprep.mubr.f32.mxu0 0.0
      %3741 = vmatmul.mubr.f32.gmra.mrb[0].mxu0 %v3304
      %v3742 = vpop.f32.mrb[0].mxu0
      %v3743 = vadd.f32 0.0, %v3742
      %v3744 = vpop.f32.mrb[0].mxu0
      %3745 = vmatprep.mubr.f32.mxu0 0.0
      %3746 = vmatmul.mubr.f32.gmra.mrb[0].mxu0 %v3307
      %v3747 = vpop.f32.mrb[0].mxu0
      %v3748 = vadd.f32 0.0, %v3747
      %v3749 = vpop.f32.mrb[0].mxu0
      %3750 = vmatprep.mubr.f32.mxu0 0.0
      %3751 = vmatmul.mubr.f32.gmra.mrb[0].mxu0 %v3310
      %v3752 = vpop.f32.mrb[0].mxu0
      %v3753 = vadd.f32 0.0, %v3752
      %v3754 = vpop.f32.mrb[0].mxu0
      %3755 = vmatprep.mubr.f32.mxu0 0.0
      %3756 = vmatmul.mubr.f32.gmra.mrb[0].mxu0 %v3313
      %v3757 = vpop.f32.mrb[0].mxu0
      %v3758 = vadd.f32 0.0, %v3757
      %v3759 = vpop.f32.mrb[0].mxu0
      %3760 = vmatprep.mubr.f32.mxu0 0.0
      %3761 = vmatmul.mubr.f32.gmra.mrb[0].mxu0 %v3316
      %v3762 = vpop.f32.mrb[0].mxu0
      %v3763 = vadd.f32 0.0, %v3762
      %v3764 = vpop.f32.mrb[0].mxu0
      %3765 = vmatprep.mubr.f32.mxu0 0.0
      %3766 = vmatmul.mubr.f32.gmra.mrb[0].mxu0 %v3319
      %v3767 = vpop.f32.mrb[0].mxu0
      %v3768 = vadd.f32 0.0, %v3767
      %v3769 = vpop.f32.mrb[0].mxu0
      %3770 = vmatprep.mubr.f32.mxu0 0.0
      %3771 = vmatmul.mubr.f32.gmra.mrb[0].mxu0 %v3322
      %v3772 = vpop.f32.mrb[0].mxu0
      %v3773 = vadd.f32 0.0, %v3772
      %v3774 = vpop.f32.mrb[0].mxu0
      %3775 = vmatprep.mubr.f32.mxu0 0.0
      %3776 = vmatmul.mubr.f32.gmra.mrb[0].mxu0 %v3325
      %v3777 = vpop.f32.mrb[0].mxu0
      %v3778 = vadd.f32 0.0, %v3777
      %v3779 = vpop.f32.mrb[0].mxu0
      %3780 = vmatprep.mubr.f32.mxu0 0.0
      %3781 = vmatmul.mubr.f32.gmra.mrb[0].mxu0 %v3328
      %v3782 = vpop.f32.mrb[0].mxu0
      %v3783 = vadd.f32 0.0, %v3782
      %v3784 = vpop.f32.mrb[0].mxu0
      %3785 = vmatprep.mubr.f32.mxu0 0.0
      %3786 = vmatmul.mubr.f32.gmra.mrb[0].mxu0 %v3331
      %v3787 = vpop.f32.mrb[0].mxu0
      %v3788 = vadd.f32 0.0, %v3787
      %v3789 = vpop.f32.mrb[0].mxu0
      %3790 = vmatprep.mubr.f32.mxu0 0.0
      %3791 = vmatmul.mubr.f32.gmra.mrb[0].mxu0 %v3334
      %v3792 = vpop.f32.mrb[0].mxu0
      %v3793 = vadd.f32 0.0, %v3792
      %v3794 = vpop.f32.mrb[0].mxu0
      %3795 = vmatprep.mubr.f32.mxu0 0.0
      %3796 = vmatmul.mubr.f32.gmra.mrb[0].mxu0 %v3596
      %v3797 = vpop.f32.mrb[0].mxu0
      %v3798 = vadd.f32 0.0, %v3797
      %v3799 = vpop.f32.mrb[0].mxu0
      %3800 = vmatprep.mubr.f32.mxu0 0.0
      %3801 = vmatmul.mubr.f32.gmra.mrb[0].mxu0 %v3599
      %v3802 = vpop.f32.mrb[0].mxu0
      %v3803 = vadd.f32 0.0, %v3802
      %v3804 = vpop.f32.mrb[0].mxu0
      %3805 = vmatprep.mubr.f32.mxu0 0.0
      %3806 = vmatmul.mubr.f32.gmra.mrb[0].mxu0 %v3602
      %v3807 = vpop.f32.mrb[0].mxu0
      %v3808 = vadd.f32 0.0, %v3807
      %v3809 = vpop.f32.mrb[0].mxu0
      %3810 = vmatprep.mubr.f32.mxu0 0.0
      %3811 = vmatmul.mubr.f32.gmra.mrb[0].mxu0 %v3605
      %v3812 = vpop.f32.mrb[0].mxu0
      %v3813 = vadd.f32 0.0, %v3812
      %v3814 = vpop.f32.mrb[0].mxu0
      %3815 = vmatprep.mubr.f32.mxu0 0.0
      %3816 = vmatmul.mubr.f32.gmra.mrb[0].mxu0 %v3608
      %v3817 = vpop.f32.mrb[0].mxu0
      %v3818 = vadd.f32 0.0, %v3817
      %v3819 = vpop.f32.mrb[0].mxu0
      %3820 = vmatprep.mubr.f32.mxu0 0.0
      %3821 = vmatmul.mubr.f32.gmra.mrb[0].mxu0 %v3611
      %v3822 = vpop.f32.mrb[0].mxu0
      %v3823 = vadd.f32 0.0, %v3822
      %v3824 = vpop.f32.mrb[0].mxu0
      %3825 = vmatprep.mubr.f32.mxu0 0.0
      %3826 = vmatmul.mubr.f32.gmra.mrb[0].mxu0 %v3614
      %v3827 = vpop.f32.mrb[0].mxu0
      %v3828 = vadd.f32 0.0, %v3827
      %v3829 = vpop.f32.mrb[0].mxu0
      %3830 = vmatprep.mubr.f32.mxu0 0.0
      %3831 = vmatmul.mubr.f32.gmra.mrb[0].mxu0 %v3617
      %v3832 = vpop.f32.mrb[0].mxu0
      %v3833 = vadd.f32 0.0, %v3832
      %v3834 = vpop.f32.mrb[0].mxu0
      %3835 = vmatprep.mubr.f32.mxu0 0.0
      %3836 = vmatmul.mubr.f32.gmra.mrb[0].mxu0 %v3620
      %v3837 = vpop.f32.mrb[0].mxu0
      %v3838 = vadd.f32 0.0, %v3837
      %v3839 = vpop.f32.mrb[0].mxu0
      %3840 = vmatprep.mubr.f32.mxu0 0.0
      %3841 = vmatmul.mubr.f32.gmra.mrb[0].mxu0 %v3623
      %v3842 = vpop.f32.mrb[0].mxu0
      %v3843 = vadd.f32 0.0, %v3842
      %v3844 = vpop.f32.mrb[0].mxu0
      %3845 = vmatprep.mubr.f32.mxu0 0.0
      %3846 = vmatmul.mubr.f32.gmra.mrb[0].mxu0 %v3626
      %v3847 = vpop.f32.mrb[0].mxu0
      %v3848 = vadd.f32 0.0, %v3847
      %v3849 = vpop.f32.mrb[0].mxu0
      %3850 = vmatprep.mubr.f32.mxu0 0.0
      %3851 = vmatmul.mubr.f32.gmra.mrb[0].mxu0 %v3629
      %v3852 = vpop.f32.mrb[0].mxu0
      %v3853 = vadd.f32 0.0, %v3852
      %v3854 = vpop.f32.mrb[0].mxu0
      %3855 = vdwg.mxu0
      %v3856 = vadd.f32 %v3561, %v3698
      %v3857 = vadd.f32 %v3562, %v3703
      %v3858 = vadd.f32 %v3563, %v3708
      %v3859 = vadd.f32 %v3564, %v3713
      %v3860 = vadd.f32 %v3565, %v3718
      %v3861 = vadd.f32 %v3566, %v3723
      %v3862 = vadd.f32 %v3567, %v3728
      %v3863 = vadd.f32 %v3568, %v3733
      %v3864 = vadd.f32 %v3569, %v3738
      %v3865 = vadd.f32 %v3570, %v3743
      %v3866 = vadd.f32 %v3571, %v3748
      %v3867 = vadd.f32 %v3572, %v3753
      %v3868 = vadd.f32 %v3573, %v3758
      %v3869 = vadd.f32 %v3574, %v3763
      %v3870 = vadd.f32 %v3575, %v3768
      %v3871 = vadd.f32 %v3576, %v3773
      %v3872 = vadd.f32 %v3577, %v3778
      %v3873 = vadd.f32 %v3578, %v3783
      %v3874 = vadd.f32 %v3579, %v3788
      %v3875 = vadd.f32 %v3580, %v3793
      %v3876 = vadd.f32 %v3581, %v3798
      %v3877 = vadd.f32 %v3582, %v3803
      %v3878 = vadd.f32 %v3583, %v3808
      %v3879 = vadd.f32 %v3584, %v3813
      %v3880 = vadd.f32 %v3585, %v3818
      %v3881 = vadd.f32 %v3586, %v3823
      %v3882 = vadd.f32 %v3587, %v3828
      %v3883 = vadd.f32 %v3588, %v3833
      %v3884 = vadd.f32 %v3589, %v3838
      %v3885 = vadd.f32 %v3590, %v3843
      %v3886 = vadd.f32 %v3591, %v3848
      %v3887 = vadd.f32 %v3592, %v3853
      %s3888 = scalar_lea.vmem %s3, 64
      %v3889 = vld [vmem:[%s3888] sm:$0xff]
      %v3891 = vsel %vm279, %v3226, 0
      %v3894 = vsel %vm279, %v3227, 0
      %v3897 = vsel %vm279, %v3228, 0
      %v3900 = vsel %vm279, %v3229, 0
      %v3903 = vsel %vm279, %v3230, 0
      %v3906 = vsel %vm279, %v3231, 0
      %v3909 = vsel %vm279, %v3232, 0
      %v3912 = vsel %vm279, %v3233, 0
      %v3915 = vsel %vm279, %v3234, 0
      %v3918 = vsel %vm279, %v3235, 0
      %v3921 = vsel %vm279, %v3236, 0
      %v3924 = vsel %vm279, %v3237, 0
      %3926 = vmatprep.subr.mxu0 0.0
      %3927 = vmatpush1.msra.mxu0 %v3889
      %3928 = vmatprep.subr.mxu0 0.0
      %3929 = vmatpush1.msra.mxu0 0.0
      %3930 = vmatprep.subr.mxu0 0.0
      %3931 = vmatpush1.msra.mxu0 0.0
      %3932 = vmatprep.subr.mxu0 0.0
      %3933 = vmatpush1.msra.mxu0 0.0
      %3934 = vmatprep.subr.mxu0 0.0
      %3935 = vmatpush1.msra.mxu0 0.0
      %3936 = vmatprep.subr.mxu0 0.0
      %3937 = vmatpush1.msra.mxu0 0.0
      %3938 = vmatprep.subr.mxu0 0.0
      %3939 = vmatpush1.msra.mxu0 0.0
      %3940 = vmatprep.subr.mxu0 0.0
      %3941 = vmatpush1.msra.mxu0 0.0
      %3942 = vmatprep.subr.mxu0 0.0
      %3943 = vmatpush1.msra.mxu0 0.0
      %3944 = vmatprep.subr.mxu0 0.0
      %3945 = vmatpush1.msra.mxu0 0.0
      %3946 = vmatprep.subr.mxu0 0.0
      %3947 = vmatpush1.msra.mxu0 0.0
      %3948 = vmatprep.subr.mxu0 0.0
      %3949 = vmatpush1.msra.mxu0 0.0
      %3950 = vmatprep.subr.mxu0 0.0
      %3951 = vmatpush1.msra.mxu0 0.0
      %3952 = vmatprep.subr.mxu0 0.0
      %3953 = vmatpush1.msra.mxu0 0.0
      %3954 = vmatprep.subr.mxu0 0.0
      %3955 = vmatpush1.msra.mxu0 0.0
      %3956 = vmatprep.subr.mxu0 0.0
      %3957 = vmatpush1.msra.mxu0 0.0
      %3958 = vmatprep.subr.mxu0 0.0
      %3959 = vmatpush1.msra.mxu0 0.0
      %3960 = vmatprep.subr.mxu0 0.0
      %3961 = vmatpush1.msra.mxu0 0.0
      %3962 = vmatprep.subr.mxu0 0.0
      %3963 = vmatpush1.msra.mxu0 0.0
      %3964 = vmatprep.subr.mxu0 0.0
      %3965 = vmatpush1.msra.mxu0 0.0
      %3966 = vmatprep.subr.mxu0 0.0
      %3967 = vmatpush1.msra.mxu0 0.0
      %3968 = vmatprep.subr.mxu0 0.0
      %3969 = vmatpush1.msra.mxu0 0.0
      %3970 = vmatprep.subr.mxu0 0.0
      %3971 = vmatpush1.msra.mxu0 0.0
      %3972 = vmatprep.subr.mxu0 0.0
      %3973 = vmatpush1.msra.mxu0 0.0
      %3974 = vmatprep.subr.mxu0 0.0
      %3975 = vmatpush1.msra.mxu0 0.0
      %3976 = vmatprep.subr.mxu0 0.0
      %3977 = vmatpush1.msra.mxu0 0.0
      %3978 = vmatprep.subr.mxu0 0.0
      %3979 = vmatpush1.msra.mxu0 0.0
      %3980 = vmatprep.subr.mxu0 0.0
      %3981 = vmatpush1.msra.mxu0 0.0
      %3982 = vmatprep.subr.mxu0 0.0
      %3983 = vmatpush1.msra.mxu0 0.0
      %3984 = vmatprep.subr.mxu0 0.0
      %3985 = vmatpush1.msra.mxu0 0.0
      %3986 = vmatprep.subr.mxu0 0.0
      %3987 = vmatpush1.msra.mxu0 0.0
      %3988 = vmatprep.subr.mxu0 0.0
      %3989 = vmatpush1.msra.mxu0 0.0
      %3990 = vmatprep.mubr.f32.mxu0 0.0
      %3991 = vmatmul.mubr.f32.gmra.mrb[0].mxu0 %v3313
      %v3992 = vpop.f32.mrb[0].mxu0
      %v3993 = vadd.f32 0.0, %v3992
      %v3994 = vpop.f32.mrb[0].mxu0
      %3995 = vmatprep.mubr.f32.mxu0 0.0
      %3996 = vmatmul.mubr.f32.gmra.mrb[0].mxu0 %v3316
      %v3997 = vpop.f32.mrb[0].mxu0
      %v3998 = vadd.f32 0.0, %v3997
      %v3999 = vpop.f32.mrb[0].mxu0
      %4000 = vmatprep.mubr.f32.mxu0 0.0
      %4001 = vmatmul.mubr.f32.gmra.mrb[0].mxu0 %v3319
      %v4002 = vpop.f32.mrb[0].mxu0
      %v4003 = vadd.f32 0.0, %v4002
      %v4004 = vpop.f32.mrb[0].mxu0
      %4005 = vmatprep.mubr.f32.mxu0 0.0
      %4006 = vmatmul.mubr.f32.gmra.mrb[0].mxu0 %v3322
      %v4007 = vpop.f32.mrb[0].mxu0
      %v4008 = vadd.f32 0.0, %v4007
      %v4009 = vpop.f32.mrb[0].mxu0
      %4010 = vmatprep.mubr.f32.mxu0 0.0
      %4011 = vmatmul.mubr.f32.gmra.mrb[0].mxu0 %v3325
      %v4012 = vpop.f32.mrb[0].mxu0
      %v4013 = vadd.f32 0.0, %v4012
      %v4014 = vpop.f32.mrb[0].mxu0
      %4015 = vmatprep.mubr.f32.mxu0 0.0
      %4016 = vmatmul.mubr.f32.gmra.mrb[0].mxu0 %v3328
      %v4017 = vpop.f32.mrb[0].mxu0
      %v4018 = vadd.f32 0.0, %v4017
      %v4019 = vpop.f32.mrb[0].mxu0
      %4020 = vmatprep.mubr.f32.mxu0 0.0
      %4021 = vmatmul.mubr.f32.gmra.mrb[0].mxu0 %v3331
      %v4022 = vpop.f32.mrb[0].mxu0
      %v4023 = vadd.f32 0.0, %v4022
      %v4024 = vpop.f32.mrb[0].mxu0
      %4025 = vmatprep.mubr.f32.mxu0 0.0
      %4026 = vmatmul.mubr.f32.gmra.mrb[0].mxu0 %v3334
      %v4027 = vpop.f32.mrb[0].mxu0
      %v4028 = vadd.f32 0.0, %v4027
      %v4029 = vpop.f32.mrb[0].mxu0
      %4030 = vmatprep.mubr.f32.mxu0 0.0
      %4031 = vmatmul.mubr.f32.gmra.mrb[0].mxu0 %v3596
      %v4032 = vpop.f32.mrb[0].mxu0
      %v4033 = vadd.f32 0.0, %v4032
      %v4034 = vpop.f32.mrb[0].mxu0
      %4035 = vmatprep.mubr.f32.mxu0 0.0
      %4036 = vmatmul.mubr.f32.gmra.mrb[0].mxu0 %v3599
      %v4037 = vpop.f32.mrb[0].mxu0
      %v4038 = vadd.f32 0.0, %v4037
      %v4039 = vpop.f32.mrb[0].mxu0
      %4040 = vmatprep.mubr.f32.mxu0 0.0
      %4041 = vmatmul.mubr.f32.gmra.mrb[0].mxu0 %v3602
      %v4042 = vpop.f32.mrb[0].mxu0
      %v4043 = vadd.f32 0.0, %v4042
      %v4044 = vpop.f32.mrb[0].mxu0
      %4045 = vmatprep.mubr.f32.mxu0 0.0
      %4046 = vmatmul.mubr.f32.gmra.mrb[0].mxu0 %v3605
      %v4047 = vpop.f32.mrb[0].mxu0
      %v4048 = vadd.f32 0.0, %v4047
      %v4049 = vpop.f32.mrb[0].mxu0
      %4050 = vmatprep.mubr.f32.mxu0 0.0
      %4051 = vmatmul.mubr.f32.gmra.mrb[0].mxu0 %v3608
      %v4052 = vpop.f32.mrb[0].mxu0
      %v4053 = vadd.f32 0.0, %v4052
      %v4054 = vpop.f32.mrb[0].mxu0
      %4055 = vmatprep.mubr.f32.mxu0 0.0
      %4056 = vmatmul.mubr.f32.gmra.mrb[0].mxu0 %v3611
      %v4057 = vpop.f32.mrb[0].mxu0
      %v4058 = vadd.f32 0.0, %v4057
      %v4059 = vpop.f32.mrb[0].mxu0
      %4060 = vmatprep.mubr.f32.mxu0 0.0
      %4061 = vmatmul.mubr.f32.gmra.mrb[0].mxu0 %v3614
      %v4062 = vpop.f32.mrb[0].mxu0
      %v4063 = vadd.f32 0.0, %v4062
      %v4064 = vpop.f32.mrb[0].mxu0
      %4065 = vmatprep.mubr.f32.mxu0 0.0
      %4066 = vmatmul.mubr.f32.gmra.mrb[0].mxu0 %v3617
      %v4067 = vpop.f32.mrb[0].mxu0
      %v4068 = vadd.f32 0.0, %v4067
      %v4069 = vpop.f32.mrb[0].mxu0
      %4070 = vmatprep.mubr.f32.mxu0 0.0
      %4071 = vmatmul.mubr.f32.gmra.mrb[0].mxu0 %v3620
      %v4072 = vpop.f32.mrb[0].mxu0
      %v4073 = vadd.f32 0.0, %v4072
      %v4074 = vpop.f32.mrb[0].mxu0
      %4075 = vmatprep.mubr.f32.mxu0 0.0
      %4076 = vmatmul.mubr.f32.gmra.mrb[0].mxu0 %v3623
      %v4077 = vpop.f32.mrb[0].mxu0
      %v4078 = vadd.f32 0.0, %v4077
      %v4079 = vpop.f32.mrb[0].mxu0
      %4080 = vmatprep.mubr.f32.mxu0 0.0
      %4081 = vmatmul.mubr.f32.gmra.mrb[0].mxu0 %v3626
      %v4082 = vpop.f32.mrb[0].mxu0
      %v4083 = vadd.f32 0.0, %v4082
      %v4084 = vpop.f32.mrb[0].mxu0
      %4085 = vmatprep.mubr.f32.mxu0 0.0
      %4086 = vmatmul.mubr.f32.gmra.mrb[0].mxu0 %v3629
      %v4087 = vpop.f32.mrb[0].mxu0
      %v4088 = vadd.f32 0.0, %v4087
      %v4089 = vpop.f32.mrb[0].mxu0
      %4090 = vmatprep.mubr.f32.mxu0 0.0
      %4091 = vmatmul.mubr.f32.gmra.mrb[0].mxu0 %v3891
      %v4092 = vpop.f32.mrb[0].mxu0
      %v4093 = vadd.f32 0.0, %v4092
      %v4094 = vpop.f32.mrb[0].mxu0
      %4095 = vmatprep.mubr.f32.mxu0 0.0
      %4096 = vmatmul.mubr.f32.gmra.mrb[0].mxu0 %v3894
      %v4097 = vpop.f32.mrb[0].mxu0
      %v4098 = vadd.f32 0.0, %v4097
      %v4099 = vpop.f32.mrb[0].mxu0
      %4100 = vmatprep.mubr.f32.mxu0 0.0
      %4101 = vmatmul.mubr.f32.gmra.mrb[0].mxu0 %v3897
      %v4102 = vpop.f32.mrb[0].mxu0
      %v4103 = vadd.f32 0.0, %v4102
      %v4104 = vpop.f32.mrb[0].mxu0
      %4105 = vmatprep.mubr.f32.mxu0 0.0
      %4106 = vmatmul.mubr.f32.gmra.mrb[0].mxu0 %v3900
      %v4107 = vpop.f32.mrb[0].mxu0
      %v4108 = vadd.f32 0.0, %v4107
      %v4109 = vpop.f32.mrb[0].mxu0
      %4110 = vmatprep.mubr.f32.mxu0 0.0
      %4111 = vmatmul.mubr.f32.gmra.mrb[0].mxu0 %v3903
      %v4112 = vpop.f32.mrb[0].mxu0
      %v4113 = vadd.f32 0.0, %v4112
      %v4114 = vpop.f32.mrb[0].mxu0
      %4115 = vmatprep.mubr.f32.mxu0 0.0
      %4116 = vmatmul.mubr.f32.gmra.mrb[0].mxu0 %v3906
      %v4117 = vpop.f32.mrb[0].mxu0
      %v4118 = vadd.f32 0.0, %v4117
      %v4119 = vpop.f32.mrb[0].mxu0
      %4120 = vmatprep.mubr.f32.mxu0 0.0
      %4121 = vmatmul.mubr.f32.gmra.mrb[0].mxu0 %v3909
      %v4122 = vpop.f32.mrb[0].mxu0
      %v4123 = vadd.f32 0.0, %v4122
      %v4124 = vpop.f32.mrb[0].mxu0
      %4125 = vmatprep.mubr.f32.mxu0 0.0
      %4126 = vmatmul.mubr.f32.gmra.mrb[0].mxu0 %v3912
      %v4127 = vpop.f32.mrb[0].mxu0
      %v4128 = vadd.f32 0.0, %v4127
      %v4129 = vpop.f32.mrb[0].mxu0
      %4130 = vmatprep.mubr.f32.mxu0 0.0
      %4131 = vmatmul.mubr.f32.gmra.mrb[0].mxu0 %v3915
      %v4132 = vpop.f32.mrb[0].mxu0
      %v4133 = vadd.f32 0.0, %v4132
      %v4134 = vpop.f32.mrb[0].mxu0
      %4135 = vmatprep.mubr.f32.mxu0 0.0
      %4136 = vmatmul.mubr.f32.gmra.mrb[0].mxu0 %v3918
      %v4137 = vpop.f32.mrb[0].mxu0
      %v4138 = vadd.f32 0.0, %v4137
      %v4139 = vpop.f32.mrb[0].mxu0
      %4140 = vmatprep.mubr.f32.mxu0 0.0
      %4141 = vmatmul.mubr.f32.gmra.mrb[0].mxu0 %v3921
      %v4142 = vpop.f32.mrb[0].mxu0
      %v4143 = vadd.f32 0.0, %v4142
      %v4144 = vpop.f32.mrb[0].mxu0
      %4145 = vmatprep.mubr.f32.mxu0 0.0
      %4146 = vmatmul.mubr.f32.gmra.mrb[0].mxu0 %v3924
      %v4147 = vpop.f32.mrb[0].mxu0
      %v4148 = vadd.f32 0.0, %v4147
      %v4149 = vpop.f32.mrb[0].mxu0
      %4150 = vdwg.mxu0
      %v4151 = vadd.f32 %v3856, %v3993
      %v4152 = vadd.f32 %v3857, %v3998
      %v4153 = vadd.f32 %v3858, %v4003
      %v4154 = vadd.f32 %v3859, %v4008
      %v4155 = vadd.f32 %v3860, %v4013
      %v4156 = vadd.f32 %v3861, %v4018
      %v4157 = vadd.f32 %v3862, %v4023
      %v4158 = vadd.f32 %v3863, %v4028
      %v4159 = vadd.f32 %v3864, %v4033
      %v4160 = vadd.f32 %v3865, %v4038
      %v4161 = vadd.f32 %v3866, %v4043
      %v4162 = vadd.f32 %v3867, %v4048
      %v4163 = vadd.f32 %v3868, %v4053
      %v4164 = vadd.f32 %v3869, %v4058
      %v4165 = vadd.f32 %v3870, %v4063
      %v4166 = vadd.f32 %v3871, %v4068
      %v4167 = vadd.f32 %v3872, %v4073
      %v4168 = vadd.f32 %v3873, %v4078
      %v4169 = vadd.f32 %v3874, %v4083
      %v4170 = vadd.f32 %v3875, %v4088
      %v4171 = vadd.f32 %v3876, %v4093
      %v4172 = vadd.f32 %v3877, %v4098
      %v4173 = vadd.f32 %v3878, %v4103
      %v4174 = vadd.f32 %v3879, %v4108
      %v4175 = vadd.f32 %v3880, %v4113
      %v4176 = vadd.f32 %v3881, %v4118
      %v4177 = vadd.f32 %v3882, %v4123
      %v4178 = vadd.f32 %v3883, %v4128
      %v4179 = vadd.f32 %v3884, %v4133
      %v4180 = vadd.f32 %v3885, %v4138
      %v4181 = vadd.f32 %v3886, %v4143
      %v4182 = vadd.f32 %v3887, %v4148
      %v4183 = vld [vmem:[#allocation2 + $0x156] sm:$0xff]
      %v4184 = vld [vmem:[#allocation2 + $0x15e] sm:$0xff]
      %v4185 = vld [vmem:[#allocation2 + $0x18e] sm:$0xff]
      %v4186 = vld [vmem:[#allocation2 + $0x196] sm:$0xff]
      %v4187 = vld [vmem:[#allocation2 + $0x1c6] sm:$0xff]
      %v4188 = vld [vmem:[#allocation2 + $0x1ce] sm:$0xff]
      %v4189 = vld [vmem:[#allocation2 + $0x1fe] sm:$0xff]
      %v4190 = vld [vmem:[#allocation2 + $0x206] sm:$0xff]
      %v4191 = vld [vmem:[#allocation2 + $0x236] sm:$0xff]
      %v4192 = vld [vmem:[#allocation2 + $0x23e] sm:$0xff]
      %v4193 = vld [vmem:[#allocation2 + $0x26e] sm:$0xff]
      %v4194 = vld [vmem:[#allocation2 + $0x276] sm:$0xff]
      %v4195 = vld [vmem:[#allocation2 + $0x2a6] sm:$0xff]
      %v4196 = vld [vmem:[#allocation2 + $0x2ae] sm:$0xff]
      %v4197 = vld [vmem:[#allocation2 + $0x2de] sm:$0xff]
      %v4198 = vld [vmem:[#allocation2 + $0x2e6] sm:$0xff]
      %v4199 = vld [vmem:[#allocation2 + $0x316] sm:$0xff]
      %v4200 = vld [vmem:[#allocation2 + $0x31e] sm:$0xff]
      %v4201 = vld [vmem:[#allocation2 + $0x34e] sm:$0xff]
      %v4202 = vld [vmem:[#allocation2 + $0x356] sm:$0xff]
      %v4203 = vld [vmem:[#allocation2 + $0x386] sm:$0xff]
      %v4204 = vld [vmem:[#allocation2 + $0x38e] sm:$0xff]
      %v4205 = vld [vmem:[#allocation2 + $0x3be] sm:$0xff]
      %v4206 = vld [vmem:[#allocation2 + $0x3c6] sm:$0xff]
      %v4207 = vld [vmem:[#allocation2 + $0x3f6] sm:$0xff]
      %v4208 = vld [vmem:[#allocation2 + $0x3fe] sm:$0xff]
      %v4209 = vld [vmem:[#allocation2 + $0x42e] sm:$0xff]
      %v4210 = vld [vmem:[#allocation2 + $0x436] sm:$0xff]
      %v4211 = vld [vmem:[#allocation2 + $0x466] sm:$0xff]
      %v4212 = vld [vmem:[#allocation2 + $0x46e] sm:$0xff]
      %v4213 = vld [vmem:[#allocation2 + $0x49e] sm:$0xff]
      %v4214 = vld [vmem:[#allocation2 + $0x4a6] sm:$0xff]
      %v4215 = vld [vmem:[#allocation2 + $0x4d6] sm:$0xff]
      %v4216 = vld [vmem:[#allocation2 + $0x4de] sm:$0xff]
      %v4217 = vld [vmem:[#allocation2 + $0x50e] sm:$0xff]
      %v4218 = vld [vmem:[#allocation2 + $0x516] sm:$0xff]
      %v4219 = vld [vmem:[#allocation2 + $0x546] sm:$0xff]
      %v4220 = vld [vmem:[#allocation2 + $0x54e] sm:$0xff]
      %v4221 = vld [vmem:[#allocation2 + $0x57e] sm:$0xff]
      %v4222 = vld [vmem:[#allocation2 + $0x586] sm:$0xff]
      %v4223 = vld [vmem:[#allocation2 + $0x5b6] sm:$0xff]
      %v4224 = vld [vmem:[#allocation2 + $0x5be] sm:$0xff]
      %v4225 = vld [vmem:[#allocation2 + $0x5ee] sm:$0xff]
      %v4226 = vld [vmem:[#allocation2 + $0x5f6] sm:$0xff]
      %v4227 = vld [vmem:[#allocation2 + $0x626] sm:$0xff]
      %v4228 = vld [vmem:[#allocation2 + $0x62e] sm:$0xff]
      %v4229 = vld [vmem:[#allocation2 + $0x65e] sm:$0xff]
      %v4230 = vld [vmem:[#allocation2 + $0x666] sm:$0xff]
      %v4231 = vld [vmem:[#allocation2 + $0x696] sm:$0xff]
      %v4232 = vld [vmem:[#allocation2 + $0x69e] sm:$0xff]
      %v4233 = vld [vmem:[#allocation2 + $0x6ce] sm:$0xff]
      %v4234 = vld [vmem:[#allocation2 + $0x6d6] sm:$0xff]
      %v4235 = vld [vmem:[#allocation2 + $0x706] sm:$0xff]
      %v4236 = vld [vmem:[#allocation2 + $0x70e] sm:$0xff]
      %v4237 = vld [vmem:[#allocation2 + $0x73e] sm:$0xff]
      %v4238 = vld [vmem:[#allocation2 + $0x746] sm:$0xff]
      %v4239 = vld [vmem:[#allocation2 + $0x776] sm:$0xff]
      %v4240 = vld [vmem:[#allocation2 + $0x77e] sm:$0xff]
      %v4241 = vld [vmem:[#allocation2 + $0x7ae] sm:$0xff]
      %v4242 = vld [vmem:[#allocation2 + $0x7b6] sm:$0xff]
      %v4243 = vld [vmem:[#allocation2 + $0x7e6] sm:$0xff]
      %v4244 = vld [vmem:[#allocation2 + $0x7ee] sm:$0xff]
      %v4245 = vld [vmem:[#allocation2 + $0x81e] sm:$0xff]
      %v4246 = vld [vmem:[#allocation2 + $0x826] sm:$0xff]
      %v4247 = vld [vmem:[#allocation2 + $0x856] sm:$0xff]
      %v4248 = vld [vmem:[#allocation2 + $0x85e] sm:$0xff]
      %v4249 = vld [vmem:[#allocation2 + $0x88e] sm:$0xff]
      %v4250 = vld [vmem:[#allocation2 + $0x896] sm:$0xff]
      %v4251 = vld [vmem:[#allocation2 + $0x8c6] sm:$0xff]
      %v4252 = vld [vmem:[#allocation2 + $0x8ce] sm:$0xff]
      %v4253 = vld [vmem:[#allocation2 + $0x8fe] sm:$0xff]
      %v4254 = vld [vmem:[#allocation2 + $0x906] sm:$0xff]
      %v4255 = vld [vmem:[#allocation2 + $0x936] sm:$0xff]
      %v4256 = vld [vmem:[#allocation2 + $0x93e] sm:$0xff]
      %v4257 = vld [vmem:[#allocation2 + $0x96e] sm:$0xff]
      %v4258 = vld [vmem:[#allocation2 + $0x976] sm:$0xff]
      %v4259 = vld [vmem:[#allocation2 + $0x9a6] sm:$0xff]
      %v4260 = vld [vmem:[#allocation2 + $0x9ae] sm:$0xff]
      %v4261 = vld [vmem:[#allocation2 + $0x9de] sm:$0xff]
      %v4262 = vld [vmem:[#allocation2 + $0x9e6] sm:$0xff]
      %v4263 = vld [vmem:[%s4] sm:$0xff]
      %v4265 = vsel %vm279, %v4183, 0
      %v4268 = vsel %vm279, %v4184, 0
      %v4271 = vsel %vm279, %v4185, 0
      %v4274 = vsel %vm279, %v4186, 0
      %v4277 = vsel %vm279, %v4187, 0
      %v4280 = vsel %vm279, %v4188, 0
      %v4283 = vsel %vm279, %v4189, 0
      %v4286 = vsel %vm279, %v4190, 0
      %v4289 = vsel %vm279, %v4191, 0
      %v4292 = vsel %vm279, %v4192, 0
      %v4295 = vsel %vm279, %v4193, 0
      %v4298 = vsel %vm279, %v4194, 0
      %v4301 = vsel %vm279, %v4195, 0
      %v4304 = vsel %vm279, %v4196, 0
      %v4307 = vsel %vm279, %v4197, 0
      %v4310 = vsel %vm279, %v4198, 0
      %v4313 = vsel %vm279, %v4199, 0
      %v4316 = vsel %vm279, %v4200, 0
      %v4319 = vsel %vm279, %v4201, 0
      %v4322 = vsel %vm279, %v4202, 0
      %v4325 = vsel %vm279, %v4203, 0
      %v4328 = vsel %vm279, %v4204, 0
      %v4331 = vsel %vm279, %v4205, 0
      %v4334 = vsel %vm279, %v4206, 0
      %v4337 = vsel %vm279, %v4207, 0
      %v4340 = vsel %vm279, %v4208, 0
      %v4343 = vsel %vm279, %v4209, 0
      %v4346 = vsel %vm279, %v4210, 0
      %v4349 = vsel %vm279, %v4211, 0
      %v4352 = vsel %vm279, %v4212, 0
      %v4355 = vsel %vm279, %v4213, 0
      %v4358 = vsel %vm279, %v4214, 0
      %4360 = vmatprep.subr.mxu0 0.0
      %4361 = vmatpush1.msra.mxu0 %v4263
      %4362 = vmatprep.subr.mxu0 0.0
      %4363 = vmatpush1.msra.mxu0 0.0
      %4364 = vmatprep.subr.mxu0 0.0
      %4365 = vmatpush1.msra.mxu0 0.0
      %4366 = vmatprep.subr.mxu0 0.0
      %4367 = vmatpush1.msra.mxu0 0.0
      %4368 = vmatprep.subr.mxu0 0.0
      %4369 = vmatpush1.msra.mxu0 0.0
      %4370 = vmatprep.subr.mxu0 0.0
      %4371 = vmatpush1.msra.mxu0 0.0
      %4372 = vmatprep.subr.mxu0 0.0
      %4373 = vmatpush1.msra.mxu0 0.0
      %4374 = vmatprep.subr.mxu0 0.0
      %4375 = vmatpush1.msra.mxu0 0.0
      %4376 = vmatprep.subr.mxu0 0.0
      %4377 = vmatpush1.msra.mxu0 0.0
      %4378 = vmatprep.subr.mxu0 0.0
      %4379 = vmatpush1.msra.mxu0 0.0
      %4380 = vmatprep.subr.mxu0 0.0
      %4381 = vmatpush1.msra.mxu0 0.0
      %4382 = vmatprep.subr.mxu0 0.0
      %4383 = vmatpush1.msra.mxu0 0.0
      %4384 = vmatprep.subr.mxu0 0.0
      %4385 = vmatpush1.msra.mxu0 0.0
      %4386 = vmatprep.subr.mxu0 0.0
      %4387 = vmatpush1.msra.mxu0 0.0
      %4388 = vmatprep.subr.mxu0 0.0
      %4389 = vmatpush1.msra.mxu0 0.0
      %4390 = vmatprep.subr.mxu0 0.0
      %4391 = vmatpush1.msra.mxu0 0.0
      %4392 = vmatprep.subr.mxu0 0.0
      %4393 = vmatpush1.msra.mxu0 0.0
      %4394 = vmatprep.subr.mxu0 0.0
      %4395 = vmatpush1.msra.mxu0 0.0
      %4396 = vmatprep.subr.mxu0 0.0
      %4397 = vmatpush1.msra.mxu0 0.0
      %4398 = vmatprep.subr.mxu0 0.0
      %4399 = vmatpush1.msra.mxu0 0.0
      %4400 = vmatprep.subr.mxu0 0.0
      %4401 = vmatpush1.msra.mxu0 0.0
      %4402 = vmatprep.subr.mxu0 0.0
      %4403 = vmatpush1.msra.mxu0 0.0
      %4404 = vmatprep.subr.mxu0 0.0
      %4405 = vmatpush1.msra.mxu0 0.0
      %4406 = vmatprep.subr.mxu0 0.0
      %4407 = vmatpush1.msra.mxu0 0.0
      %4408 = vmatprep.subr.mxu0 0.0
      %4409 = vmatpush1.msra.mxu0 0.0
      %4410 = vmatprep.subr.mxu0 0.0
      %4411 = vmatpush1.msra.mxu0 0.0
      %4412 = vmatprep.subr.mxu0 0.0
      %4413 = vmatpush1.msra.mxu0 0.0
      %4414 = vmatprep.subr.mxu0 0.0
      %4415 = vmatpush1.msra.mxu0 0.0
      %4416 = vmatprep.subr.mxu0 0.0
      %4417 = vmatpush1.msra.mxu0 0.0
      %4418 = vmatprep.subr.mxu0 0.0
      %4419 = vmatpush1.msra.mxu0 0.0
      %4420 = vmatprep.subr.mxu0 0.0
      %4421 = vmatpush1.msra.mxu0 0.0
      %4422 = vmatprep.subr.mxu0 0.0
      %4423 = vmatpush1.msra.mxu0 0.0
      %4424 = vmatprep.mubr.f32.mxu0 0.0
      %4425 = vmatmul.mubr.f32.gmra.mrb[0].mxu0 %v4265
      %v4426 = vpop.f32.mrb[0].mxu0
      %v4427 = vadd.f32 0.0, %v4426
      %v4428 = vpop.f32.mrb[0].mxu0
      %4429 = vmatprep.mubr.f32.mxu0 0.0
      %4430 = vmatmul.mubr.f32.gmra.mrb[0].mxu0 %v4268
      %v4431 = vpop.f32.mrb[0].mxu0
      %v4432 = vadd.f32 0.0, %v4431
      %v4433 = vpop.f32.mrb[0].mxu0
      %4434 = vmatprep.mubr.f32.mxu0 0.0
      %4435 = vmatmul.mubr.f32.gmra.mrb[0].mxu0 %v4271
      %v4436 = vpop.f32.mrb[0].mxu0
      %v4437 = vadd.f32 0.0, %v4436
      %v4438 = vpop.f32.mrb[0].mxu0
      %4439 = vmatprep.mubr.f32.mxu0 0.0
      %4440 = vmatmul.mubr.f32.gmra.mrb[0].mxu0 %v4274
      %v4441 = vpop.f32.mrb[0].mxu0
      %v4442 = vadd.f32 0.0, %v4441
      %v4443 = vpop.f32.mrb[0].mxu0
      %4444 = vmatprep.mubr.f32.mxu0 0.0
      %4445 = vmatmul.mubr.f32.gmra.mrb[0].mxu0 %v4277
      %v4446 = vpop.f32.mrb[0].mxu0
      %v4447 = vadd.f32 0.0, %v4446
      %v4448 = vpop.f32.mrb[0].mxu0
      %4449 = vmatprep.mubr.f32.mxu0 0.0
      %4450 = vmatmul.mubr.f32.gmra.mrb[0].mxu0 %v4280
      %v4451 = vpop.f32.mrb[0].mxu0
      %v4452 = vadd.f32 0.0, %v4451
      %v4453 = vpop.f32.mrb[0].mxu0
      %4454 = vmatprep.mubr.f32.mxu0 0.0
      %4455 = vmatmul.mubr.f32.gmra.mrb[0].mxu0 %v4283
      %v4456 = vpop.f32.mrb[0].mxu0
      %v4457 = vadd.f32 0.0, %v4456
      %v4458 = vpop.f32.mrb[0].mxu0
      %4459 = vmatprep.mubr.f32.mxu0 0.0
      %4460 = vmatmul.mubr.f32.gmra.mrb[0].mxu0 %v4286
      %v4461 = vpop.f32.mrb[0].mxu0
      %v4462 = vadd.f32 0.0, %v4461
      %v4463 = vpop.f32.mrb[0].mxu0
      %4464 = vmatprep.mubr.f32.mxu0 0.0
      %4465 = vmatmul.mubr.f32.gmra.mrb[0].mxu0 %v4289
      %v4466 = vpop.f32.mrb[0].mxu0
      %v4467 = vadd.f32 0.0, %v4466
      %v4468 = vpop.f32.mrb[0].mxu0
      %4469 = vmatprep.mubr.f32.mxu0 0.0
      %4470 = vmatmul.mubr.f32.gmra.mrb[0].mxu0 %v4292
      %v4471 = vpop.f32.mrb[0].mxu0
      %v4472 = vadd.f32 0.0, %v4471
      %v4473 = vpop.f32.mrb[0].mxu0
      %4474 = vmatprep.mubr.f32.mxu0 0.0
      %4475 = vmatmul.mubr.f32.gmra.mrb[0].mxu0 %v4295
      %v4476 = vpop.f32.mrb[0].mxu0
      %v4477 = vadd.f32 0.0, %v4476
      %v4478 = vpop.f32.mrb[0].mxu0
      %4479 = vmatprep.mubr.f32.mxu0 0.0
      %4480 = vmatmul.mubr.f32.gmra.mrb[0].mxu0 %v4298
      %v4481 = vpop.f32.mrb[0].mxu0
      %v4482 = vadd.f32 0.0, %v4481
      %v4483 = vpop.f32.mrb[0].mxu0
      %4484 = vmatprep.mubr.f32.mxu0 0.0
      %4485 = vmatmul.mubr.f32.gmra.mrb[0].mxu0 %v4301
      %v4486 = vpop.f32.mrb[0].mxu0
      %v4487 = vadd.f32 0.0, %v4486
      %v4488 = vpop.f32.mrb[0].mxu0
      %4489 = vmatprep.mubr.f32.mxu0 0.0
      %4490 = vmatmul.mubr.f32.gmra.mrb[0].mxu0 %v4304
      %v4491 = vpop.f32.mrb[0].mxu0
      %v4492 = vadd.f32 0.0, %v4491
      %v4493 = vpop.f32.mrb[0].mxu0
      %4494 = vmatprep.mubr.f32.mxu0 0.0
      %4495 = vmatmul.mubr.f32.gmra.mrb[0].mxu0 %v4307
      %v4496 = vpop.f32.mrb[0].mxu0
      %v4497 = vadd.f32 0.0, %v4496
      %v4498 = vpop.f32.mrb[0].mxu0
      %4499 = vmatprep.mubr.f32.mxu0 0.0
      %4500 = vmatmul.mubr.f32.gmra.mrb[0].mxu0 %v4310
      %v4501 = vpop.f32.mrb[0].mxu0
      %v4502 = vadd.f32 0.0, %v4501
      %v4503 = vpop.f32.mrb[0].mxu0
      %4504 = vmatprep.mubr.f32.mxu0 0.0
      %4505 = vmatmul.mubr.f32.gmra.mrb[0].mxu0 %v4313
      %v4506 = vpop.f32.mrb[0].mxu0
      %v4507 = vadd.f32 0.0, %v4506
      %v4508 = vpop.f32.mrb[0].mxu0
      %4509 = vmatprep.mubr.f32.mxu0 0.0
      %4510 = vmatmul.mubr.f32.gmra.mrb[0].mxu0 %v4316
      %v4511 = vpop.f32.mrb[0].mxu0
      %v4512 = vadd.f32 0.0, %v4511
      %v4513 = vpop.f32.mrb[0].mxu0
      %4514 = vmatprep.mubr.f32.mxu0 0.0
      %4515 = vmatmul.mubr.f32.gmra.mrb[0].mxu0 %v4319
      %v4516 = vpop.f32.mrb[0].mxu0
      %v4517 = vadd.f32 0.0, %v4516
      %v4518 = vpop.f32.mrb[0].mxu0
      %4519 = vmatprep.mubr.f32.mxu0 0.0
      %4520 = vmatmul.mubr.f32.gmra.mrb[0].mxu0 %v4322
      %v4521 = vpop.f32.mrb[0].mxu0
      %v4522 = vadd.f32 0.0, %v4521
      %v4523 = vpop.f32.mrb[0].mxu0
      %4524 = vmatprep.mubr.f32.mxu0 0.0
      %4525 = vmatmul.mubr.f32.gmra.mrb[0].mxu0 %v4325
      %v4526 = vpop.f32.mrb[0].mxu0
      %v4527 = vadd.f32 0.0, %v4526
      %v4528 = vpop.f32.mrb[0].mxu0
      %4529 = vmatprep.mubr.f32.mxu0 0.0
      %4530 = vmatmul.mubr.f32.gmra.mrb[0].mxu0 %v4328
      %v4531 = vpop.f32.mrb[0].mxu0
      %v4532 = vadd.f32 0.0, %v4531
      %v4533 = vpop.f32.mrb[0].mxu0
      %4534 = vmatprep.mubr.f32.mxu0 0.0
      %4535 = vmatmul.mubr.f32.gmra.mrb[0].mxu0 %v4331
      %v4536 = vpop.f32.mrb[0].mxu0
      %v4537 = vadd.f32 0.0, %v4536
      %v4538 = vpop.f32.mrb[0].mxu0
      %4539 = vmatprep.mubr.f32.mxu0 0.0
      %4540 = vmatmul.mubr.f32.gmra.mrb[0].mxu0 %v4334
      %v4541 = vpop.f32.mrb[0].mxu0
      %v4542 = vadd.f32 0.0, %v4541
      %v4543 = vpop.f32.mrb[0].mxu0
      %4544 = vmatprep.mubr.f32.mxu0 0.0
      %4545 = vmatmul.mubr.f32.gmra.mrb[0].mxu0 %v4337
      %v4546 = vpop.f32.mrb[0].mxu0
      %v4547 = vadd.f32 0.0, %v4546
      %v4548 = vpop.f32.mrb[0].mxu0
      %4549 = vmatprep.mubr.f32.mxu0 0.0
      %4550 = vmatmul.mubr.f32.gmra.mrb[0].mxu0 %v4340
      %v4551 = vpop.f32.mrb[0].mxu0
      %v4552 = vadd.f32 0.0, %v4551
      %v4553 = vpop.f32.mrb[0].mxu0
      %4554 = vmatprep.mubr.f32.mxu0 0.0
      %4555 = vmatmul.mubr.f32.gmra.mrb[0].mxu0 %v4343
      %v4556 = vpop.f32.mrb[0].mxu0
      %v4557 = vadd.f32 0.0, %v4556
      %v4558 = vpop.f32.mrb[0].mxu0
      %4559 = vmatprep.mubr.f32.mxu0 0.0
      %4560 = vmatmul.mubr.f32.gmra.mrb[0].mxu0 %v4346
      %v4561 = vpop.f32.mrb[0].mxu0
      %v4562 = vadd.f32 0.0, %v4561
      %v4563 = vpop.f32.mrb[0].mxu0
      %4564 = vmatprep.mubr.f32.mxu0 0.0
      %4565 = vmatmul.mubr.f32.gmra.mrb[0].mxu0 %v4349
      %v4566 = vpop.f32.mrb[0].mxu0
      %v4567 = vadd.f32 0.0, %v4566
      %v4568 = vpop.f32.mrb[0].mxu0
      %4569 = vmatprep.mubr.f32.mxu0 0.0
      %4570 = vmatmul.mubr.f32.gmra.mrb[0].mxu0 %v4352
      %v4571 = vpop.f32.mrb[0].mxu0
      %v4572 = vadd.f32 0.0, %v4571
      %v4573 = vpop.f32.mrb[0].mxu0
      %4574 = vmatprep.mubr.f32.mxu0 0.0
      %4575 = vmatmul.mubr.f32.gmra.mrb[0].mxu0 %v4355
      %v4576 = vpop.f32.mrb[0].mxu0
      %v4577 = vadd.f32 0.0, %v4576
      %v4578 = vpop.f32.mrb[0].mxu0
      %4579 = vmatprep.mubr.f32.mxu0 0.0
      %4580 = vmatmul.mubr.f32.gmra.mrb[0].mxu0 %v4358
      %v4581 = vpop.f32.mrb[0].mxu0
      %v4582 = vadd.f32 0.0, %v4581
      %v4583 = vpop.f32.mrb[0].mxu0
      %4584 = vdwg.mxu0
      %v4585 = vadd.f32 %v4151, %v4427
      %v4586 = vadd.f32 %v4152, %v4432
      %v4587 = vadd.f32 %v4153, %v4437
      %v4588 = vadd.f32 %v4154, %v4442
      %v4589 = vadd.f32 %v4155, %v4447
      %v4590 = vadd.f32 %v4156, %v4452
      %v4591 = vadd.f32 %v4157, %v4457
      %v4592 = vadd.f32 %v4158, %v4462
      %v4593 = vadd.f32 %v4159, %v4467
      %v4594 = vadd.f32 %v4160, %v4472
      %v4595 = vadd.f32 %v4161, %v4477
      %v4596 = vadd.f32 %v4162, %v4482
      %v4597 = vadd.f32 %v4163, %v4487
      %v4598 = vadd.f32 %v4164, %v4492
      %v4599 = vadd.f32 %v4165, %v4497
      %v4600 = vadd.f32 %v4166, %v4502
      %v4601 = vadd.f32 %v4167, %v4507
      %v4602 = vadd.f32 %v4168, %v4512
      %v4603 = vadd.f32 %v4169, %v4517
      %v4604 = vadd.f32 %v4170, %v4522
      %v4605 = vadd.f32 %v4171, %v4527
      %v4606 = vadd.f32 %v4172, %v4532
      %v4607 = vadd.f32 %v4173, %v4537
      %v4608 = vadd.f32 %v4174, %v4542
      %v4609 = vadd.f32 %v4175, %v4547
      %v4610 = vadd.f32 %v4176, %v4552
      %v4611 = vadd.f32 %v4177, %v4557
      %v4612 = vadd.f32 %v4178, %v4562
      %v4613 = vadd.f32 %v4179, %v4567
      %v4614 = vadd.f32 %v4180, %v4572
      %v4615 = vadd.f32 %v4181, %v4577
      %v4616 = vadd.f32 %v4182, %v4582
      %s4617 = scalar_lea.vmem %s4, 24
      %v4618 = vld [vmem:[%s4617] sm:$0xff]
      %v4620 = vsel %vm279, %v4215, 0
      %v4623 = vsel %vm279, %v4216, 0
      %v4626 = vsel %vm279, %v4217, 0
      %v4629 = vsel %vm279, %v4218, 0
      %v4632 = vsel %vm279, %v4219, 0
      %v4635 = vsel %vm279, %v4220, 0
      %v4638 = vsel %vm279, %v4221, 0
      %v4641 = vsel %vm279, %v4222, 0
      %v4644 = vsel %vm279, %v4223, 0
      %v4647 = vsel %vm279, %v4224, 0
      %v4650 = vsel %vm279, %v4225, 0
      %v4653 = vsel %vm279, %v4226, 0
      %v4656 = vsel %vm279, %v4227, 0
      %v4659 = vsel %vm279, %v4228, 0
      %v4662 = vsel %vm279, %v4229, 0
      %v4665 = vsel %vm279, %v4230, 0
      %v4668 = vsel %vm279, %v4231, 0
      %v4671 = vsel %vm279, %v4232, 0
      %v4674 = vsel %vm279, %v4233, 0
      %v4677 = vsel %vm279, %v4234, 0
      %v4680 = vsel %vm279, %v4235, 0
      %v4683 = vsel %vm279, %v4236, 0
      %v4686 = vsel %vm279, %v4237, 0
      %v4689 = vsel %vm279, %v4238, 0
      %4691 = vmatprep.subr.mxu0 0.0
      %4692 = vmatpush1.msra.mxu0 %v4618
      %4693 = vmatprep.subr.mxu0 0.0
      %4694 = vmatpush1.msra.mxu0 0.0
      %4695 = vmatprep.subr.mxu0 0.0
      %4696 = vmatpush1.msra.mxu0 0.0
      %4697 = vmatprep.subr.mxu0 0.0
      %4698 = vmatpush1.msra.mxu0 0.0
      %4699 = vmatprep.subr.mxu0 0.0
      %4700 = vmatpush1.msra.mxu0 0.0
      %4701 = vmatprep.subr.mxu0 0.0
      %4702 = vmatpush1.msra.mxu0 0.0
      %4703 = vmatprep.subr.mxu0 0.0
      %4704 = vmatpush1.msra.mxu0 0.0
      %4705 = vmatprep.subr.mxu0 0.0
      %4706 = vmatpush1.msra.mxu0 0.0
      %4707 = vmatprep.subr.mxu0 0.0
      %4708 = vmatpush1.msra.mxu0 0.0
      %4709 = vmatprep.subr.mxu0 0.0
      %4710 = vmatpush1.msra.mxu0 0.0
      %4711 = vmatprep.subr.mxu0 0.0
      %4712 = vmatpush1.msra.mxu0 0.0
      %4713 = vmatprep.subr.mxu0 0.0
      %4714 = vmatpush1.msra.mxu0 0.0
      %4715 = vmatprep.subr.mxu0 0.0
      %4716 = vmatpush1.msra.mxu0 0.0
      %4717 = vmatprep.subr.mxu0 0.0
      %4718 = vmatpush1.msra.mxu0 0.0
      %4719 = vmatprep.subr.mxu0 0.0
      %4720 = vmatpush1.msra.mxu0 0.0
      %4721 = vmatprep.subr.mxu0 0.0
      %4722 = vmatpush1.msra.mxu0 0.0
      %4723 = vmatprep.subr.mxu0 0.0
      %4724 = vmatpush1.msra.mxu0 0.0
      %4725 = vmatprep.subr.mxu0 0.0
      %4726 = vmatpush1.msra.mxu0 0.0
      %4727 = vmatprep.subr.mxu0 0.0
      %4728 = vmatpush1.msra.mxu0 0.0
      %4729 = vmatprep.subr.mxu0 0.0
      %4730 = vmatpush1.msra.mxu0 0.0
      %4731 = vmatprep.subr.mxu0 0.0
      %4732 = vmatpush1.msra.mxu0 0.0
      %4733 = vmatprep.subr.mxu0 0.0
      %4734 = vmatpush1.msra.mxu0 0.0
      %4735 = vmatprep.subr.mxu0 0.0
      %4736 = vmatpush1.msra.mxu0 0.0
      %4737 = vmatprep.subr.mxu0 0.0
      %4738 = vmatpush1.msra.mxu0 0.0
      %4739 = vmatprep.subr.mxu0 0.0
      %4740 = vmatpush1.msra.mxu0 0.0
      %4741 = vmatprep.subr.mxu0 0.0
      %4742 = vmatpush1.msra.mxu0 0.0
      %4743 = vmatprep.subr.mxu0 0.0
      %4744 = vmatpush1.msra.mxu0 0.0
      %4745 = vmatprep.subr.mxu0 0.0
      %4746 = vmatpush1.msra.mxu0 0.0
      %4747 = vmatprep.subr.mxu0 0.0
      %4748 = vmatpush1.msra.mxu0 0.0
      %4749 = vmatprep.subr.mxu0 0.0
      %4750 = vmatpush1.msra.mxu0 0.0
      %4751 = vmatprep.subr.mxu0 0.0
      %4752 = vmatpush1.msra.mxu0 0.0
      %4753 = vmatprep.subr.mxu0 0.0
      %4754 = vmatpush1.msra.mxu0 0.0
      %4755 = vmatprep.mubr.f32.mxu0 0.0
      %4756 = vmatmul.mubr.f32.gmra.mrb[0].mxu0 %v4337
      %v4757 = vpop.f32.mrb[0].mxu0
      %v4758 = vadd.f32 0.0, %v4757
      %v4759 = vpop.f32.mrb[0].mxu0
      %4760 = vmatprep.mubr.f32.mxu0 0.0
      %4761 = vmatmul.mubr.f32.gmra.mrb[0].mxu0 %v4340
      %v4762 = vpop.f32.mrb[0].mxu0
      %v4763 = vadd.f32 0.0, %v4762
      %v4764 = vpop.f32.mrb[0].mxu0
      %4765 = vmatprep.mubr.f32.mxu0 0.0
      %4766 = vmatmul.mubr.f32.gmra.mrb[0].mxu0 %v4343
      %v4767 = vpop.f32.mrb[0].mxu0
      %v4768 = vadd.f32 0.0, %v4767
      %v4769 = vpop.f32.mrb[0].mxu0
      %4770 = vmatprep.mubr.f32.mxu0 0.0
      %4771 = vmatmul.mubr.f32.gmra.mrb[0].mxu0 %v4346
      %v4772 = vpop.f32.mrb[0].mxu0
      %v4773 = vadd.f32 0.0, %v4772
      %v4774 = vpop.f32.mrb[0].mxu0
      %4775 = vmatprep.mubr.f32.mxu0 0.0
      %4776 = vmatmul.mubr.f32.gmra.mrb[0].mxu0 %v4349
      %v4777 = vpop.f32.mrb[0].mxu0
      %v4778 = vadd.f32 0.0, %v4777
      %v4779 = vpop.f32.mrb[0].mxu0
      %4780 = vmatprep.mubr.f32.mxu0 0.0
      %4781 = vmatmul.mubr.f32.gmra.mrb[0].mxu0 %v4352
      %v4782 = vpop.f32.mrb[0].mxu0
      %v4783 = vadd.f32 0.0, %v4782
      %v4784 = vpop.f32.mrb[0].mxu0
      %4785 = vmatprep.mubr.f32.mxu0 0.0
      %4786 = vmatmul.mubr.f32.gmra.mrb[0].mxu0 %v4355
      %v4787 = vpop.f32.mrb[0].mxu0
      %v4788 = vadd.f32 0.0, %v4787
      %v4789 = vpop.f32.mrb[0].mxu0
      %4790 = vmatprep.mubr.f32.mxu0 0.0
      %4791 = vmatmul.mubr.f32.gmra.mrb[0].mxu0 %v4358
      %v4792 = vpop.f32.mrb[0].mxu0
      %v4793 = vadd.f32 0.0, %v4792
      %v4794 = vpop.f32.mrb[0].mxu0
      %4795 = vmatprep.mubr.f32.mxu0 0.0
      %4796 = vmatmul.mubr.f32.gmra.mrb[0].mxu0 %v4620
      %v4797 = vpop.f32.mrb[0].mxu0
      %v4798 = vadd.f32 0.0, %v4797
      %v4799 = vpop.f32.mrb[0].mxu0
      %4800 = vmatprep.mubr.f32.mxu0 0.0
      %4801 = vmatmul.mubr.f32.gmra.mrb[0].mxu0 %v4623
      %v4802 = vpop.f32.mrb[0].mxu0
      %v4803 = vadd.f32 0.0, %v4802
      %v4804 = vpop.f32.mrb[0].mxu0
      %4805 = vmatprep.mubr.f32.mxu0 0.0
      %4806 = vmatmul.mubr.f32.gmra.mrb[0].mxu0 %v4626
      %v4807 = vpop.f32.mrb[0].mxu0
      %v4808 = vadd.f32 0.0, %v4807
      %v4809 = vpop.f32.mrb[0].mxu0
      %4810 = vmatprep.mubr.f32.mxu0 0.0
      %4811 = vmatmul.mubr.f32.gmra.mrb[0].mxu0 %v4629
      %v4812 = vpop.f32.mrb[0].mxu0
      %v4813 = vadd.f32 0.0, %v4812
      %v4814 = vpop.f32.mrb[0].mxu0
      %4815 = vmatprep.mubr.f32.mxu0 0.0
      %4816 = vmatmul.mubr.f32.gmra.mrb[0].mxu0 %v4632
      %v4817 = vpop.f32.mrb[0].mxu0
      %v4818 = vadd.f32 0.0, %v4817
      %v4819 = vpop.f32.mrb[0].mxu0
      %4820 = vmatprep.mubr.f32.mxu0 0.0
      %4821 = vmatmul.mubr.f32.gmra.mrb[0].mxu0 %v4635
      %v4822 = vpop.f32.mrb[0].mxu0
      %v4823 = vadd.f32 0.0, %v4822
      %v4824 = vpop.f32.mrb[0].mxu0
      %4825 = vmatprep.mubr.f32.mxu0 0.0
      %4826 = vmatmul.mubr.f32.gmra.mrb[0].mxu0 %v4638
      %v4827 = vpop.f32.mrb[0].mxu0
      %v4828 = vadd.f32 0.0, %v4827
      %v4829 = vpop.f32.mrb[0].mxu0
      %4830 = vmatprep.mubr.f32.mxu0 0.0
      %4831 = vmatmul.mubr.f32.gmra.mrb[0].mxu0 %v4641
      %v4832 = vpop.f32.mrb[0].mxu0
      %v4833 = vadd.f32 0.0, %v4832
      %v4834 = vpop.f32.mrb[0].mxu0
      %4835 = vmatprep.mubr.f32.mxu0 0.0
      %4836 = vmatmul.mubr.f32.gmra.mrb[0].mxu0 %v4644
      %v4837 = vpop.f32.mrb[0].mxu0
      %v4838 = vadd.f32 0.0, %v4837
      %v4839 = vpop.f32.mrb[0].mxu0
      %4840 = vmatprep.mubr.f32.mxu0 0.0
      %4841 = vmatmul.mubr.f32.gmra.mrb[0].mxu0 %v4647
      %v4842 = vpop.f32.mrb[0].mxu0
      %v4843 = vadd.f32 0.0, %v4842
      %v4844 = vpop.f32.mrb[0].mxu0
      %4845 = vmatprep.mubr.f32.mxu0 0.0
      %4846 = vmatmul.mubr.f32.gmra.mrb[0].mxu0 %v4650
      %v4847 = vpop.f32.mrb[0].mxu0
      %v4848 = vadd.f32 0.0, %v4847
      %v4849 = vpop.f32.mrb[0].mxu0
      %4850 = vmatprep.mubr.f32.mxu0 0.0
      %4851 = vmatmul.mubr.f32.gmra.mrb[0].mxu0 %v4653
      %v4852 = vpop.f32.mrb[0].mxu0
      %v4853 = vadd.f32 0.0, %v4852
      %v4854 = vpop.f32.mrb[0].mxu0
      %4855 = vmatprep.mubr.f32.mxu0 0.0
      %4856 = vmatmul.mubr.f32.gmra.mrb[0].mxu0 %v4656
      %v4857 = vpop.f32.mrb[0].mxu0
      %v4858 = vadd.f32 0.0, %v4857
      %v4859 = vpop.f32.mrb[0].mxu0
      %4860 = vmatprep.mubr.f32.mxu0 0.0
      %4861 = vmatmul.mubr.f32.gmra.mrb[0].mxu0 %v4659
      %v4862 = vpop.f32.mrb[0].mxu0
      %v4863 = vadd.f32 0.0, %v4862
      %v4864 = vpop.f32.mrb[0].mxu0
      %4865 = vmatprep.mubr.f32.mxu0 0.0
      %4866 = vmatmul.mubr.f32.gmra.mrb[0].mxu0 %v4662
      %v4867 = vpop.f32.mrb[0].mxu0
      %v4868 = vadd.f32 0.0, %v4867
      %v4869 = vpop.f32.mrb[0].mxu0
      %4870 = vmatprep.mubr.f32.mxu0 0.0
      %4871 = vmatmul.mubr.f32.gmra.mrb[0].mxu0 %v4665
      %v4872 = vpop.f32.mrb[0].mxu0
      %v4873 = vadd.f32 0.0, %v4872
      %v4874 = vpop.f32.mrb[0].mxu0
      %4875 = vmatprep.mubr.f32.mxu0 0.0
      %4876 = vmatmul.mubr.f32.gmra.mrb[0].mxu0 %v4668
      %v4877 = vpop.f32.mrb[0].mxu0
      %v4878 = vadd.f32 0.0, %v4877
      %v4879 = vpop.f32.mrb[0].mxu0
      %4880 = vmatprep.mubr.f32.mxu0 0.0
      %4881 = vmatmul.mubr.f32.gmra.mrb[0].mxu0 %v4671
      %v4882 = vpop.f32.mrb[0].mxu0
      %v4883 = vadd.f32 0.0, %v4882
      %v4884 = vpop.f32.mrb[0].mxu0
      %4885 = vmatprep.mubr.f32.mxu0 0.0
      %4886 = vmatmul.mubr.f32.gmra.mrb[0].mxu0 %v4674
      %v4887 = vpop.f32.mrb[0].mxu0
      %v4888 = vadd.f32 0.0, %v4887
      %v4889 = vpop.f32.mrb[0].mxu0
      %4890 = vmatprep.mubr.f32.mxu0 0.0
      %4891 = vmatmul.mubr.f32.gmra.mrb[0].mxu0 %v4677
      %v4892 = vpop.f32.mrb[0].mxu0
      %v4893 = vadd.f32 0.0, %v4892
      %v4894 = vpop.f32.mrb[0].mxu0
      %4895 = vmatprep.mubr.f32.mxu0 0.0
      %4896 = vmatmul.mubr.f32.gmra.mrb[0].mxu0 %v4680
      %v4897 = vpop.f32.mrb[0].mxu0
      %v4898 = vadd.f32 0.0, %v4897
      %v4899 = vpop.f32.mrb[0].mxu0
      %4900 = vmatprep.mubr.f32.mxu0 0.0
      %4901 = vmatmul.mubr.f32.gmra.mrb[0].mxu0 %v4683
      %v4902 = vpop.f32.mrb[0].mxu0
      %v4903 = vadd.f32 0.0, %v4902
      %v4904 = vpop.f32.mrb[0].mxu0
      %4905 = vmatprep.mubr.f32.mxu0 0.0
      %4906 = vmatmul.mubr.f32.gmra.mrb[0].mxu0 %v4686
      %v4907 = vpop.f32.mrb[0].mxu0
      %v4908 = vadd.f32 0.0, %v4907
      %v4909 = vpop.f32.mrb[0].mxu0
      %4910 = vmatprep.mubr.f32.mxu0 0.0
      %4911 = vmatmul.mubr.f32.gmra.mrb[0].mxu0 %v4689
      %v4912 = vpop.f32.mrb[0].mxu0
      %v4913 = vadd.f32 0.0, %v4912
      %v4914 = vpop.f32.mrb[0].mxu0
      %4915 = vdwg.mxu0
      %v4916 = vadd.f32 %v4585, %v4758
      %v4917 = vadd.f32 %v4586, %v4763
      %v4918 = vadd.f32 %v4587, %v4768
      %v4919 = vadd.f32 %v4588, %v4773
      %v4920 = vadd.f32 %v4589, %v4778
      %v4921 = vadd.f32 %v4590, %v4783
      %v4922 = vadd.f32 %v4591, %v4788
      %v4923 = vadd.f32 %v4592, %v4793
      %v4924 = vadd.f32 %v4593, %v4798
      %v4925 = vadd.f32 %v4594, %v4803
      %v4926 = vadd.f32 %v4595, %v4808
      %v4927 = vadd.f32 %v4596, %v4813
      %v4928 = vadd.f32 %v4597, %v4818
      %v4929 = vadd.f32 %v4598, %v4823
      %v4930 = vadd.f32 %v4599, %v4828
      %v4931 = vadd.f32 %v4600, %v4833
      %v4932 = vadd.f32 %v4601, %v4838
      %v4933 = vadd.f32 %v4602, %v4843
      %v4934 = vadd.f32 %v4603, %v4848
      %v4935 = vadd.f32 %v4604, %v4853
      %v4936 = vadd.f32 %v4605, %v4858
      %v4937 = vadd.f32 %v4606, %v4863
      %v4938 = vadd.f32 %v4607, %v4868
      %v4939 = vadd.f32 %v4608, %v4873
      %v4940 = vadd.f32 %v4609, %v4878
      %v4941 = vadd.f32 %v4610, %v4883
      %v4942 = vadd.f32 %v4611, %v4888
      %v4943 = vadd.f32 %v4612, %v4893
      %v4944 = vadd.f32 %v4613, %v4898
      %v4945 = vadd.f32 %v4614, %v4903
      %v4946 = vadd.f32 %v4615, %v4908
      %v4947 = vadd.f32 %v4616, %v4913
      %s4948 = scalar_lea.vmem %s4, 48
      %v4949 = vld [vmem:[%s4948] sm:$0xff]
      %v4951 = vsel %vm279, %v4239, 0
      %v4954 = vsel %vm279, %v4240, 0
      %v4957 = vsel %vm279, %v4241, 0
      %v4960 = vsel %vm279, %v4242, 0
      %v4963 = vsel %vm279, %v4243, 0
      %v4966 = vsel %vm279, %v4244, 0
      %v4969 = vsel %vm279, %v4245, 0
      %v4972 = vsel %vm279, %v4246, 0
      %v4975 = vsel %vm279, %v4247, 0
      %v4978 = vsel %vm279, %v4248, 0
      %v4981 = vsel %vm279, %v4249, 0
      %v4984 = vsel %vm279, %v4250, 0
      %v4987 = vsel %vm279, %v4251, 0
      %v4990 = vsel %vm279, %v4252, 0
      %v4993 = vsel %vm279, %v4253, 0
      %v4996 = vsel %vm279, %v4254, 0
      %v4999 = vsel %vm279, %v4255, 0
      %v5002 = vsel %vm279, %v4256, 0
      %v5005 = vsel %vm279, %v4257, 0
      %v5008 = vsel %vm279, %v4258, 0
      %v5011 = vsel %vm279, %v4259, 0
      %v5014 = vsel %vm279, %v4260, 0
      %v5017 = vsel %vm279, %v4261, 0
      %v5020 = vsel %vm279, %v4262, 0
      %5022 = vmatprep.subr.mxu0 0.0
      %5023 = vmatpush1.msra.mxu0 %v4949
      %5024 = vmatprep.subr.mxu0 0.0
      %5025 = vmatpush1.msra.mxu0 0.0
      %5026 = vmatprep.subr.mxu0 0.0
      %5027 = vmatpush1.msra.mxu0 0.0
      %5028 = vmatprep.subr.mxu0 0.0
      %5029 = vmatpush1.msra.mxu0 0.0
      %5030 = vmatprep.subr.mxu0 0.0
      %5031 = vmatpush1.msra.mxu0 0.0
      %5032 = vmatprep.subr.mxu0 0.0
      %5033 = vmatpush1.msra.mxu0 0.0
      %5034 = vmatprep.subr.mxu0 0.0
      %5035 = vmatpush1.msra.mxu0 0.0
      %5036 = vmatprep.subr.mxu0 0.0
      %5037 = vmatpush1.msra.mxu0 0.0
      %5038 = vmatprep.subr.mxu0 0.0
      %5039 = vmatpush1.msra.mxu0 0.0
      %5040 = vmatprep.subr.mxu0 0.0
      %5041 = vmatpush1.msra.mxu0 0.0
      %5042 = vmatprep.subr.mxu0 0.0
      %5043 = vmatpush1.msra.mxu0 0.0
      %5044 = vmatprep.subr.mxu0 0.0
      %5045 = vmatpush1.msra.mxu0 0.0
      %5046 = vmatprep.subr.mxu0 0.0
      %5047 = vmatpush1.msra.mxu0 0.0
      %5048 = vmatprep.subr.mxu0 0.0
      %5049 = vmatpush1.msra.mxu0 0.0
      %5050 = vmatprep.subr.mxu0 0.0
      %5051 = vmatpush1.msra.mxu0 0.0
      %5052 = vmatprep.subr.mxu0 0.0
      %5053 = vmatpush1.msra.mxu0 0.0
      %5054 = vmatprep.subr.mxu0 0.0
      %5055 = vmatpush1.msra.mxu0 0.0
      %5056 = vmatprep.subr.mxu0 0.0
      %5057 = vmatpush1.msra.mxu0 0.0
      %5058 = vmatprep.subr.mxu0 0.0
      %5059 = vmatpush1.msra.mxu0 0.0
      %5060 = vmatprep.subr.mxu0 0.0
      %5061 = vmatpush1.msra.mxu0 0.0
      %5062 = vmatprep.subr.mxu0 0.0
      %5063 = vmatpush1.msra.mxu0 0.0
      %5064 = vmatprep.subr.mxu0 0.0
      %5065 = vmatpush1.msra.mxu0 0.0
      %5066 = vmatprep.subr.mxu0 0.0
      %5067 = vmatpush1.msra.mxu0 0.0
      %5068 = vmatprep.subr.mxu0 0.0
      %5069 = vmatpush1.msra.mxu0 0.0
      %5070 = vmatprep.subr.mxu0 0.0
      %5071 = vmatpush1.msra.mxu0 0.0
      %5072 = vmatprep.subr.mxu0 0.0
      %5073 = vmatpush1.msra.mxu0 0.0
      %5074 = vmatprep.subr.mxu0 0.0
      %5075 = vmatpush1.msra.mxu0 0.0
      %5076 = vmatprep.subr.mxu0 0.0
      %5077 = vmatpush1.msra.mxu0 0.0
      %5078 = vmatprep.subr.mxu0 0.0
      %5079 = vmatpush1.msra.mxu0 0.0
      %5080 = vmatprep.subr.mxu0 0.0
      %5081 = vmatpush1.msra.mxu0 0.0
      %5082 = vmatprep.subr.mxu0 0.0
      %5083 = vmatpush1.msra.mxu0 0.0
      %5084 = vmatprep.subr.mxu0 0.0
      %5085 = vmatpush1.msra.mxu0 0.0
      %5086 = vmatprep.mubr.f32.mxu0 0.0
      %5087 = vmatmul.mubr.f32.gmra.mrb[0].mxu0 %v4668
      %v5088 = vpop.f32.mrb[0].mxu0
      %v5089 = vadd.f32 0.0, %v5088
      %v5090 = vpop.f32.mrb[0].mxu0
      %5091 = vmatprep.mubr.f32.mxu0 0.0
      %5092 = vmatmul.mubr.f32.gmra.mrb[0].mxu0 %v4671
      %v5093 = vpop.f32.mrb[0].mxu0
      %v5094 = vadd.f32 0.0, %v5093
      %v5095 = vpop.f32.mrb[0].mxu0
      %5096 = vmatprep.mubr.f32.mxu0 0.0
      %5097 = vmatmul.mubr.f32.gmra.mrb[0].mxu0 %v4674
      %v5098 = vpop.f32.mrb[0].mxu0
      %v5099 = vadd.f32 0.0, %v5098
      %v5100 = vpop.f32.mrb[0].mxu0
      %5101 = vmatprep.mubr.f32.mxu0 0.0
      %5102 = vmatmul.mubr.f32.gmra.mrb[0].mxu0 %v4677
      %v5103 = vpop.f32.mrb[0].mxu0
      %v5104 = vadd.f32 0.0, %v5103
      %v5105 = vpop.f32.mrb[0].mxu0
      %5106 = vmatprep.mubr.f32.mxu0 0.0
      %5107 = vmatmul.mubr.f32.gmra.mrb[0].mxu0 %v4680
      %v5108 = vpop.f32.mrb[0].mxu0
      %v5109 = vadd.f32 0.0, %v5108
      %v5110 = vpop.f32.mrb[0].mxu0
      %5111 = vmatprep.mubr.f32.mxu0 0.0
      %5112 = vmatmul.mubr.f32.gmra.mrb[0].mxu0 %v4683
      %v5113 = vpop.f32.mrb[0].mxu0
      %v5114 = vadd.f32 0.0, %v5113
      %v5115 = vpop.f32.mrb[0].mxu0
      %5116 = vmatprep.mubr.f32.mxu0 0.0
      %5117 = vmatmul.mubr.f32.gmra.mrb[0].mxu0 %v4686
      %v5118 = vpop.f32.mrb[0].mxu0
      %v5119 = vadd.f32 0.0, %v5118
      %v5120 = vpop.f32.mrb[0].mxu0
      %5121 = vmatprep.mubr.f32.mxu0 0.0
      %5122 = vmatmul.mubr.f32.gmra.mrb[0].mxu0 %v4689
      %v5123 = vpop.f32.mrb[0].mxu0
      %v5124 = vadd.f32 0.0, %v5123
      %v5125 = vpop.f32.mrb[0].mxu0
      %5126 = vmatprep.mubr.f32.mxu0 0.0
      %5127 = vmatmul.mubr.f32.gmra.mrb[0].mxu0 %v4951
      %v5128 = vpop.f32.mrb[0].mxu0
      %v5129 = vadd.f32 0.0, %v5128
      %v5130 = vpop.f32.mrb[0].mxu0
      %5131 = vmatprep.mubr.f32.mxu0 0.0
      %5132 = vmatmul.mubr.f32.gmra.mrb[0].mxu0 %v4954
      %v5133 = vpop.f32.mrb[0].mxu0
      %v5134 = vadd.f32 0.0, %v5133
      %v5135 = vpop.f32.mrb[0].mxu0
      %5136 = vmatprep.mubr.f32.mxu0 0.0
      %5137 = vmatmul.mubr.f32.gmra.mrb[0].mxu0 %v4957
      %v5138 = vpop.f32.mrb[0].mxu0
      %v5139 = vadd.f32 0.0, %v5138
      %v5140 = vpop.f32.mrb[0].mxu0
      %5141 = vmatprep.mubr.f32.mxu0 0.0
      %5142 = vmatmul.mubr.f32.gmra.mrb[0].mxu0 %v4960
      %v5143 = vpop.f32.mrb[0].mxu0
      %v5144 = vadd.f32 0.0, %v5143
      %v5145 = vpop.f32.mrb[0].mxu0
      %5146 = vmatprep.mubr.f32.mxu0 0.0
      %5147 = vmatmul.mubr.f32.gmra.mrb[0].mxu0 %v4963
      %v5148 = vpop.f32.mrb[0].mxu0
      %v5149 = vadd.f32 0.0, %v5148
      %v5150 = vpop.f32.mrb[0].mxu0
      %5151 = vmatprep.mubr.f32.mxu0 0.0
      %5152 = vmatmul.mubr.f32.gmra.mrb[0].mxu0 %v4966
      %v5153 = vpop.f32.mrb[0].mxu0
      %v5154 = vadd.f32 0.0, %v5153
      %v5155 = vpop.f32.mrb[0].mxu0
      %5156 = vmatprep.mubr.f32.mxu0 0.0
      %5157 = vmatmul.mubr.f32.gmra.mrb[0].mxu0 %v4969
      %v5158 = vpop.f32.mrb[0].mxu0
      %v5159 = vadd.f32 0.0, %v5158
      %v5160 = vpop.f32.mrb[0].mxu0
      %5161 = vmatprep.mubr.f32.mxu0 0.0
      %5162 = vmatmul.mubr.f32.gmra.mrb[0].mxu0 %v4972
      %v5163 = vpop.f32.mrb[0].mxu0
      %v5164 = vadd.f32 0.0, %v5163
      %v5165 = vpop.f32.mrb[0].mxu0
      %5166 = vmatprep.mubr.f32.mxu0 0.0
      %5167 = vmatmul.mubr.f32.gmra.mrb[0].mxu0 %v4975
      %v5168 = vpop.f32.mrb[0].mxu0
      %v5169 = vadd.f32 0.0, %v5168
      %v5170 = vpop.f32.mrb[0].mxu0
      %5171 = vmatprep.mubr.f32.mxu0 0.0
      %5172 = vmatmul.mubr.f32.gmra.mrb[0].mxu0 %v4978
      %v5173 = vpop.f32.mrb[0].mxu0
      %v5174 = vadd.f32 0.0, %v5173
      %v5175 = vpop.f32.mrb[0].mxu0
      %5176 = vmatprep.mubr.f32.mxu0 0.0
      %5177 = vmatmul.mubr.f32.gmra.mrb[0].mxu0 %v4981
      %v5178 = vpop.f32.mrb[0].mxu0
      %v5179 = vadd.f32 0.0, %v5178
      %v5180 = vpop.f32.mrb[0].mxu0
      %5181 = vmatprep.mubr.f32.mxu0 0.0
      %5182 = vmatmul.mubr.f32.gmra.mrb[0].mxu0 %v4984
      %v5183 = vpop.f32.mrb[0].mxu0
      %v5184 = vadd.f32 0.0, %v5183
      %v5185 = vpop.f32.mrb[0].mxu0
      %5186 = vmatprep.mubr.f32.mxu0 0.0
      %5187 = vmatmul.mubr.f32.gmra.mrb[0].mxu0 %v4987
      %v5188 = vpop.f32.mrb[0].mxu0
      %v5189 = vadd.f32 0.0, %v5188
      %v5190 = vpop.f32.mrb[0].mxu0
      %5191 = vmatprep.mubr.f32.mxu0 0.0
      %5192 = vmatmul.mubr.f32.gmra.mrb[0].mxu0 %v4990
      %v5193 = vpop.f32.mrb[0].mxu0
      %v5194 = vadd.f32 0.0, %v5193
      %v5195 = vpop.f32.mrb[0].mxu0
      %5196 = vmatprep.mubr.f32.mxu0 0.0
      %5197 = vmatmul.mubr.f32.gmra.mrb[0].mxu0 %v4993
      %v5198 = vpop.f32.mrb[0].mxu0
      %v5199 = vadd.f32 0.0, %v5198
      %v5200 = vpop.f32.mrb[0].mxu0
      %5201 = vmatprep.mubr.f32.mxu0 0.0
      %5202 = vmatmul.mubr.f32.gmra.mrb[0].mxu0 %v4996
      %v5203 = vpop.f32.mrb[0].mxu0
      %v5204 = vadd.f32 0.0, %v5203
      %v5205 = vpop.f32.mrb[0].mxu0
      %5206 = vmatprep.mubr.f32.mxu0 0.0
      %5207 = vmatmul.mubr.f32.gmra.mrb[0].mxu0 %v4999
      %v5208 = vpop.f32.mrb[0].mxu0
      %v5209 = vadd.f32 0.0, %v5208
      %v5210 = vpop.f32.mrb[0].mxu0
      %5211 = vmatprep.mubr.f32.mxu0 0.0
      %5212 = vmatmul.mubr.f32.gmra.mrb[0].mxu0 %v5002
      %v5213 = vpop.f32.mrb[0].mxu0
      %v5214 = vadd.f32 0.0, %v5213
      %v5215 = vpop.f32.mrb[0].mxu0
      %5216 = vmatprep.mubr.f32.mxu0 0.0
      %5217 = vmatmul.mubr.f32.gmra.mrb[0].mxu0 %v5005
      %v5218 = vpop.f32.mrb[0].mxu0
      %v5219 = vadd.f32 0.0, %v5218
      %v5220 = vpop.f32.mrb[0].mxu0
      %5221 = vmatprep.mubr.f32.mxu0 0.0
      %5222 = vmatmul.mubr.f32.gmra.mrb[0].mxu0 %v5008
      %v5223 = vpop.f32.mrb[0].mxu0
      %v5224 = vadd.f32 0.0, %v5223
      %v5225 = vpop.f32.mrb[0].mxu0
      %5226 = vmatprep.mubr.f32.mxu0 0.0
      %5227 = vmatmul.mubr.f32.gmra.mrb[0].mxu0 %v5011
      %v5228 = vpop.f32.mrb[0].mxu0
      %v5229 = vadd.f32 0.0, %v5228
      %v5230 = vpop.f32.mrb[0].mxu0
      %5231 = vmatprep.mubr.f32.mxu0 0.0
      %5232 = vmatmul.mubr.f32.gmra.mrb[0].mxu0 %v5014
      %v5233 = vpop.f32.mrb[0].mxu0
      %v5234 = vadd.f32 0.0, %v5233
      %v5235 = vpop.f32.mrb[0].mxu0
      %5236 = vmatprep.mubr.f32.mxu0 0.0
      %5237 = vmatmul.mubr.f32.gmra.mrb[0].mxu0 %v5017
      %v5238 = vpop.f32.mrb[0].mxu0
      %v5239 = vadd.f32 0.0, %v5238
      %v5240 = vpop.f32.mrb[0].mxu0
      %5241 = vmatprep.mubr.f32.mxu0 0.0
      %5242 = vmatmul.mubr.f32.gmra.mrb[0].mxu0 %v5020
      %v5243 = vpop.f32.mrb[0].mxu0
      %v5244 = vadd.f32 0.0, %v5243
      %v5245 = vpop.f32.mrb[0].mxu0
      %5246 = vdwg.mxu0
      %v5247 = vadd.f32 %v4916, %v5089
      %v5248 = vadd.f32 %v4917, %v5094
      %v5249 = vadd.f32 %v4918, %v5099
      %v5250 = vadd.f32 %v4919, %v5104
      %v5251 = vadd.f32 %v4920, %v5109
      %v5252 = vadd.f32 %v4921, %v5114
      %v5253 = vadd.f32 %v4922, %v5119
      %v5254 = vadd.f32 %v4923, %v5124
      %v5255 = vadd.f32 %v4924, %v5129
      %v5256 = vadd.f32 %v4925, %v5134
      %v5257 = vadd.f32 %v4926, %v5139
      %v5258 = vadd.f32 %v4927, %v5144
      %v5259 = vadd.f32 %v4928, %v5149
      %v5260 = vadd.f32 %v4929, %v5154
      %v5261 = vadd.f32 %v4930, %v5159
      %v5262 = vadd.f32 %v4931, %v5164
      %v5263 = vadd.f32 %v4932, %v5169
      %v5264 = vadd.f32 %v4933, %v5174
      %v5265 = vadd.f32 %v4934, %v5179
      %v5266 = vadd.f32 %v4935, %v5184
      %v5267 = vadd.f32 %v4936, %v5189
      %v5268 = vadd.f32 %v4937, %v5194
      %v5269 = vadd.f32 %v4938, %v5199
      %v5270 = vadd.f32 %v4939, %v5204
      %v5271 = vadd.f32 %v4940, %v5209
      %v5272 = vadd.f32 %v4941, %v5214
      %v5273 = vadd.f32 %v4942, %v5219
      %v5274 = vadd.f32 %v4943, %v5224
      %v5275 = vadd.f32 %v4944, %v5229
      %v5276 = vadd.f32 %v4945, %v5234
      %v5277 = vadd.f32 %v4946, %v5239
      %v5278 = vadd.f32 %v4947, %v5244
      %s5279 = scalar_lea.vmem %s4, 8
      %v5280 = vld [vmem:[%s5279] sm:$0xff]
      %v5282 = vsel %vm279, %v2145, 0
      %v5285 = vsel %vm279, %v2146, 0
      %v5288 = vsel %vm279, %v2147, 0
      %v5291 = vsel %vm279, %v2148, 0
      %v5294 = vsel %vm279, %v2149, 0
      %v5297 = vsel %vm279, %v2150, 0
      %v5300 = vsel %vm279, %v2151, 0
      %v5303 = vsel %vm279, %v2152, 0
      %v5306 = vsel %vm279, %v2153, 0
      %v5309 = vsel %vm279, %v2154, 0
      %v5312 = vsel %vm279, %v2155, 0
      %v5315 = vsel %vm279, %v2156, 0
      %5317 = vmatprep.subr.mxu0 0.0
      %5318 = vmatpush1.msra.mxu0 %v5280
      %5319 = vmatprep.subr.mxu0 0.0
      %5320 = vmatpush1.msra.mxu0 0.0
      %5321 = vmatprep.subr.mxu0 0.0
      %5322 = vmatpush1.msra.mxu0 0.0
      %5323 = vmatprep.subr.mxu0 0.0
      %5324 = vmatpush1.msra.mxu0 0.0
      %5325 = vmatprep.subr.mxu0 0.0
      %5326 = vmatpush1.msra.mxu0 0.0
      %5327 = vmatprep.subr.mxu0 0.0
      %5328 = vmatpush1.msra.mxu0 0.0
      %5329 = vmatprep.subr.mxu0 0.0
      %5330 = vmatpush1.msra.mxu0 0.0
      %5331 = vmatprep.subr.mxu0 0.0
      %5332 = vmatpush1.msra.mxu0 0.0
      %5333 = vmatprep.subr.mxu0 0.0
      %5334 = vmatpush1.msra.mxu0 0.0
      %5335 = vmatprep.subr.mxu0 0.0
      %5336 = vmatpush1.msra.mxu0 0.0
      %5337 = vmatprep.subr.mxu0 0.0
      %5338 = vmatpush1.msra.mxu0 0.0
      %5339 = vmatprep.subr.mxu0 0.0
      %5340 = vmatpush1.msra.mxu0 0.0
      %5341 = vmatprep.subr.mxu0 0.0
      %5342 = vmatpush1.msra.mxu0 0.0
      %5343 = vmatprep.subr.mxu0 0.0
      %5344 = vmatpush1.msra.mxu0 0.0
      %5345 = vmatprep.subr.mxu0 0.0
      %5346 = vmatpush1.msra.mxu0 0.0
      %5347 = vmatprep.subr.mxu0 0.0
      %5348 = vmatpush1.msra.mxu0 0.0
      %5349 = vmatprep.subr.mxu0 0.0
      %5350 = vmatpush1.msra.mxu0 0.0
      %5351 = vmatprep.subr.mxu0 0.0
      %5352 = vmatpush1.msra.mxu0 0.0
      %5353 = vmatprep.subr.mxu0 0.0
      %5354 = vmatpush1.msra.mxu0 0.0
      %5355 = vmatprep.subr.mxu0 0.0
      %5356 = vmatpush1.msra.mxu0 0.0
      %5357 = vmatprep.subr.mxu0 0.0
      %5358 = vmatpush1.msra.mxu0 0.0
      %5359 = vmatprep.subr.mxu0 0.0
      %5360 = vmatpush1.msra.mxu0 0.0
      %5361 = vmatprep.subr.mxu0 0.0
      %5362 = vmatpush1.msra.mxu0 0.0
      %5363 = vmatprep.subr.mxu0 0.0
      %5364 = vmatpush1.msra.mxu0 0.0
      %5365 = vmatprep.subr.mxu0 0.0
      %5366 = vmatpush1.msra.mxu0 0.0
      %5367 = vmatprep.subr.mxu0 0.0
      %5368 = vmatpush1.msra.mxu0 0.0
      %5369 = vmatprep.subr.mxu0 0.0
      %5370 = vmatpush1.msra.mxu0 0.0
      %5371 = vmatprep.subr.mxu0 0.0
      %5372 = vmatpush1.msra.mxu0 0.0
      %5373 = vmatprep.subr.mxu0 0.0
      %5374 = vmatpush1.msra.mxu0 0.0
      %5375 = vmatprep.subr.mxu0 0.0
      %5376 = vmatpush1.msra.mxu0 0.0
      %5377 = vmatprep.subr.mxu0 0.0
      %5378 = vmatpush1.msra.mxu0 0.0
      %5379 = vmatprep.subr.mxu0 0.0
      %5380 = vmatpush1.msra.mxu0 0.0
      %5381 = vmatprep.mubr.f32.mxu0 0.0
      %5382 = vmatmul.mubr.f32.gmra.mrb[0].mxu0 %v5282
      %v5383 = vpop.f32.mrb[0].mxu0
      %v5384 = vadd.f32 0.0, %v5383
      %v5385 = vpop.f32.mrb[0].mxu0
      %5386 = vmatprep.mubr.f32.mxu0 0.0
      %5387 = vmatmul.mubr.f32.gmra.mrb[0].mxu0 %v5285
      %v5388 = vpop.f32.mrb[0].mxu0
      %v5389 = vadd.f32 0.0, %v5388
      %v5390 = vpop.f32.mrb[0].mxu0
      %5391 = vmatprep.mubr.f32.mxu0 0.0
      %5392 = vmatmul.mubr.f32.gmra.mrb[0].mxu0 %v5288
      %v5393 = vpop.f32.mrb[0].mxu0
      %v5394 = vadd.f32 0.0, %v5393
      %v5395 = vpop.f32.mrb[0].mxu0
      %5396 = vmatprep.mubr.f32.mxu0 0.0
      %5397 = vmatmul.mubr.f32.gmra.mrb[0].mxu0 %v5291
      %v5398 = vpop.f32.mrb[0].mxu0
      %v5399 = vadd.f32 0.0, %v5398
      %v5400 = vpop.f32.mrb[0].mxu0
      %5401 = vmatprep.mubr.f32.mxu0 0.0
      %5402 = vmatmul.mubr.f32.gmra.mrb[0].mxu0 %v5294
      %v5403 = vpop.f32.mrb[0].mxu0
      %v5404 = vadd.f32 0.0, %v5403
      %v5405 = vpop.f32.mrb[0].mxu0
      %5406 = vmatprep.mubr.f32.mxu0 0.0
      %5407 = vmatmul.mubr.f32.gmra.mrb[0].mxu0 %v5297
      %v5408 = vpop.f32.mrb[0].mxu0
      %v5409 = vadd.f32 0.0, %v5408
      %v5410 = vpop.f32.mrb[0].mxu0
      %5411 = vmatprep.mubr.f32.mxu0 0.0
      %5412 = vmatmul.mubr.f32.gmra.mrb[0].mxu0 %v5300
      %v5413 = vpop.f32.mrb[0].mxu0
      %v5414 = vadd.f32 0.0, %v5413
      %v5415 = vpop.f32.mrb[0].mxu0
      %5416 = vmatprep.mubr.f32.mxu0 0.0
      %5417 = vmatmul.mubr.f32.gmra.mrb[0].mxu0 %v5303
      %v5418 = vpop.f32.mrb[0].mxu0
      %v5419 = vadd.f32 0.0, %v5418
      %v5420 = vpop.f32.mrb[0].mxu0
      %5421 = vmatprep.mubr.f32.mxu0 0.0
      %5422 = vmatmul.mubr.f32.gmra.mrb[0].mxu0 %v5306
      %v5423 = vpop.f32.mrb[0].mxu0
      %v5424 = vadd.f32 0.0, %v5423
      %v5425 = vpop.f32.mrb[0].mxu0
      %5426 = vmatprep.mubr.f32.mxu0 0.0
      %5427 = vmatmul.mubr.f32.gmra.mrb[0].mxu0 %v5309
      %v5428 = vpop.f32.mrb[0].mxu0
      %v5429 = vadd.f32 0.0, %v5428
      %v5430 = vpop.f32.mrb[0].mxu0
      %5431 = vmatprep.mubr.f32.mxu0 0.0
      %5432 = vmatmul.mubr.f32.gmra.mrb[0].mxu0 %v5312
      %v5433 = vpop.f32.mrb[0].mxu0
      %v5434 = vadd.f32 0.0, %v5433
      %v5435 = vpop.f32.mrb[0].mxu0
      %5436 = vmatprep.mubr.f32.mxu0 0.0
      %5437 = vmatmul.mubr.f32.gmra.mrb[0].mxu0 %v5315
      %v5438 = vpop.f32.mrb[0].mxu0
      %v5439 = vadd.f32 0.0, %v5438
      %v5440 = vpop.f32.mrb[0].mxu0
      %5441 = vmatprep.mubr.f32.mxu0 0.0
      %5442 = vmatmul.mubr.f32.gmra.mrb[0].mxu0 %v2240
      %v5443 = vpop.f32.mrb[0].mxu0
      %v5444 = vadd.f32 0.0, %v5443
      %v5445 = vpop.f32.mrb[0].mxu0
      %5446 = vmatprep.mubr.f32.mxu0 0.0
      %5447 = vmatmul.mubr.f32.gmra.mrb[0].mxu0 %v2243
      %v5448 = vpop.f32.mrb[0].mxu0
      %v5449 = vadd.f32 0.0, %v5448
      %v5450 = vpop.f32.mrb[0].mxu0
      %5451 = vmatprep.mubr.f32.mxu0 0.0
      %5452 = vmatmul.mubr.f32.gmra.mrb[0].mxu0 %v2246
      %v5453 = vpop.f32.mrb[0].mxu0
      %v5454 = vadd.f32 0.0, %v5453
      %v5455 = vpop.f32.mrb[0].mxu0
      %5456 = vmatprep.mubr.f32.mxu0 0.0
      %5457 = vmatmul.mubr.f32.gmra.mrb[0].mxu0 %v2249
      %v5458 = vpop.f32.mrb[0].mxu0
      %v5459 = vadd.f32 0.0, %v5458
      %v5460 = vpop.f32.mrb[0].mxu0
      %5461 = vmatprep.mubr.f32.mxu0 0.0
      %5462 = vmatmul.mubr.f32.gmra.mrb[0].mxu0 %v2252
      %v5463 = vpop.f32.mrb[0].mxu0
      %v5464 = vadd.f32 0.0, %v5463
      %v5465 = vpop.f32.mrb[0].mxu0
      %5466 = vmatprep.mubr.f32.mxu0 0.0
      %5467 = vmatmul.mubr.f32.gmra.mrb[0].mxu0 %v2255
      %v5468 = vpop.f32.mrb[0].mxu0
      %v5469 = vadd.f32 0.0, %v5468
      %v5470 = vpop.f32.mrb[0].mxu0
      %5471 = vmatprep.mubr.f32.mxu0 0.0
      %5472 = vmatmul.mubr.f32.gmra.mrb[0].mxu0 %v2258
      %v5473 = vpop.f32.mrb[0].mxu0
      %v5474 = vadd.f32 0.0, %v5473
      %v5475 = vpop.f32.mrb[0].mxu0
      %5476 = vmatprep.mubr.f32.mxu0 0.0
      %5477 = vmatmul.mubr.f32.gmra.mrb[0].mxu0 %v2261
      %v5478 = vpop.f32.mrb[0].mxu0
      %v5479 = vadd.f32 0.0, %v5478
      %v5480 = vpop.f32.mrb[0].mxu0
      %5481 = vmatprep.mubr.f32.mxu0 0.0
      %5482 = vmatmul.mubr.f32.gmra.mrb[0].mxu0 %v2264
      %v5483 = vpop.f32.mrb[0].mxu0
      %v5484 = vadd.f32 0.0, %v5483
      %v5485 = vpop.f32.mrb[0].mxu0
      %5486 = vmatprep.mubr.f32.mxu0 0.0
      %5487 = vmatmul.mubr.f32.gmra.mrb[0].mxu0 %v2267
      %v5488 = vpop.f32.mrb[0].mxu0
      %v5489 = vadd.f32 0.0, %v5488
      %v5490 = vpop.f32.mrb[0].mxu0
      %5491 = vmatprep.mubr.f32.mxu0 0.0
      %5492 = vmatmul.mubr.f32.gmra.mrb[0].mxu0 %v2270
      %v5493 = vpop.f32.mrb[0].mxu0
      %v5494 = vadd.f32 0.0, %v5493
      %v5495 = vpop.f32.mrb[0].mxu0
      %5496 = vmatprep.mubr.f32.mxu0 0.0
      %5497 = vmatmul.mubr.f32.gmra.mrb[0].mxu0 %v2273
      %v5498 = vpop.f32.mrb[0].mxu0
      %v5499 = vadd.f32 0.0, %v5498
      %v5500 = vpop.f32.mrb[0].mxu0
      %5501 = vmatprep.mubr.f32.mxu0 0.0
      %5502 = vmatmul.mubr.f32.gmra.mrb[0].mxu0 %v2276
      %v5503 = vpop.f32.mrb[0].mxu0
      %v5504 = vadd.f32 0.0, %v5503
      %v5505 = vpop.f32.mrb[0].mxu0
      %5506 = vmatprep.mubr.f32.mxu0 0.0
      %5507 = vmatmul.mubr.f32.gmra.mrb[0].mxu0 %v2279
      %v5508 = vpop.f32.mrb[0].mxu0
      %v5509 = vadd.f32 0.0, %v5508
      %v5510 = vpop.f32.mrb[0].mxu0
      %5511 = vmatprep.mubr.f32.mxu0 0.0
      %5512 = vmatmul.mubr.f32.gmra.mrb[0].mxu0 %v2282
      %v5513 = vpop.f32.mrb[0].mxu0
      %v5514 = vadd.f32 0.0, %v5513
      %v5515 = vpop.f32.mrb[0].mxu0
      %5516 = vmatprep.mubr.f32.mxu0 0.0
      %5517 = vmatmul.mubr.f32.gmra.mrb[0].mxu0 %v2285
      %v5518 = vpop.f32.mrb[0].mxu0
      %v5519 = vadd.f32 0.0, %v5518
      %v5520 = vpop.f32.mrb[0].mxu0
      %5521 = vmatprep.mubr.f32.mxu0 0.0
      %5522 = vmatmul.mubr.f32.gmra.mrb[0].mxu0 %v2288
      %v5523 = vpop.f32.mrb[0].mxu0
      %v5524 = vadd.f32 0.0, %v5523
      %v5525 = vpop.f32.mrb[0].mxu0
      %5526 = vmatprep.mubr.f32.mxu0 0.0
      %5527 = vmatmul.mubr.f32.gmra.mrb[0].mxu0 %v2291
      %v5528 = vpop.f32.mrb[0].mxu0
      %v5529 = vadd.f32 0.0, %v5528
      %v5530 = vpop.f32.mrb[0].mxu0
      %5531 = vmatprep.mubr.f32.mxu0 0.0
      %5532 = vmatmul.mubr.f32.gmra.mrb[0].mxu0 %v2294
      %v5533 = vpop.f32.mrb[0].mxu0
      %v5534 = vadd.f32 0.0, %v5533
      %v5535 = vpop.f32.mrb[0].mxu0
      %5536 = vmatprep.mubr.f32.mxu0 0.0
      %5537 = vmatmul.mubr.f32.gmra.mrb[0].mxu0 %v2297
      %v5538 = vpop.f32.mrb[0].mxu0
      %v5539 = vadd.f32 0.0, %v5538
      %v5540 = vpop.f32.mrb[0].mxu0
      %5541 = vdwg.mxu0
      %v5542 = vadd.f32 %v5247, %v5384
      %v5543 = vadd.f32 %v5248, %v5389
      %v5544 = vadd.f32 %v5249, %v5394
      %v5545 = vadd.f32 %v5250, %v5399
      %v5546 = vadd.f32 %v5251, %v5404
      %v5547 = vadd.f32 %v5252, %v5409
      %v5548 = vadd.f32 %v5253, %v5414
      %v5549 = vadd.f32 %v5254, %v5419
      %v5550 = vadd.f32 %v5255, %v5424
      %v5551 = vadd.f32 %v5256, %v5429
      %v5552 = vadd.f32 %v5257, %v5434
      %v5553 = vadd.f32 %v5258, %v5439
      %v5554 = vadd.f32 %v5259, %v5444
      %v5555 = vadd.f32 %v5260, %v5449
      %v5556 = vadd.f32 %v5261, %v5454
      %v5557 = vadd.f32 %v5262, %v5459
      %v5558 = vadd.f32 %v5263, %v5464
      %v5559 = vadd.f32 %v5264, %v5469
      %v5560 = vadd.f32 %v5265, %v5474
      %v5561 = vadd.f32 %v5266, %v5479
      %v5562 = vadd.f32 %v5267, %v5484
      %v5563 = vadd.f32 %v5268, %v5489
      %v5564 = vadd.f32 %v5269, %v5494
      %v5565 = vadd.f32 %v5270, %v5499
      %v5566 = vadd.f32 %v5271, %v5504
      %v5567 = vadd.f32 %v5272, %v5509
      %v5568 = vadd.f32 %v5273, %v5514
      %v5569 = vadd.f32 %v5274, %v5519
      %v5570 = vadd.f32 %v5275, %v5524
      %v5571 = vadd.f32 %v5276, %v5529
      %v5572 = vadd.f32 %v5277, %v5534
      %v5573 = vadd.f32 %v5278, %v5539
      %s5574 = scalar_lea.vmem %s4, 32
      %v5575 = vld [vmem:[%s5574] sm:$0xff]
      %5576 = vmatprep.subr.mxu0 0.0
      %5577 = vmatpush1.msra.mxu0 %v5575
      %5578 = vmatprep.subr.mxu0 0.0
      %5579 = vmatpush1.msra.mxu0 0.0
      %5580 = vmatprep.subr.mxu0 0.0
      %5581 = vmatpush1.msra.mxu0 0.0
      %5582 = vmatprep.subr.mxu0 0.0
      %5583 = vmatpush1.msra.mxu0 0.0
      %5584 = vmatprep.subr.mxu0 0.0
      %5585 = vmatpush1.msra.mxu0 0.0
      %5586 = vmatprep.subr.mxu0 0.0
      %5587 = vmatpush1.msra.mxu0 0.0
      %5588 = vmatprep.subr.mxu0 0.0
      %5589 = vmatpush1.msra.mxu0 0.0
      %5590 = vmatprep.subr.mxu0 0.0
      %5591 = vmatpush1.msra.mxu0 0.0
      %5592 = vmatprep.subr.mxu0 0.0
      %5593 = vmatpush1.msra.mxu0 0.0
      %5594 = vmatprep.subr.mxu0 0.0
      %5595 = vmatpush1.msra.mxu0 0.0
      %5596 = vmatprep.subr.mxu0 0.0
      %5597 = vmatpush1.msra.mxu0 0.0
      %5598 = vmatprep.subr.mxu0 0.0
      %5599 = vmatpush1.msra.mxu0 0.0
      %5600 = vmatprep.subr.mxu0 0.0
      %5601 = vmatpush1.msra.mxu0 0.0
      %5602 = vmatprep.subr.mxu0 0.0
      %5603 = vmatpush1.msra.mxu0 0.0
      %5604 = vmatprep.subr.mxu0 0.0
      %5605 = vmatpush1.msra.mxu0 0.0
      %5606 = vmatprep.subr.mxu0 0.0
      %5607 = vmatpush1.msra.mxu0 0.0
      %5608 = vmatprep.subr.mxu0 0.0
      %5609 = vmatpush1.msra.mxu0 0.0
      %5610 = vmatprep.subr.mxu0 0.0
      %5611 = vmatpush1.msra.mxu0 0.0
      %5612 = vmatprep.subr.mxu0 0.0
      %5613 = vmatpush1.msra.mxu0 0.0
      %5614 = vmatprep.subr.mxu0 0.0
      %5615 = vmatpush1.msra.mxu0 0.0
      %5616 = vmatprep.subr.mxu0 0.0
      %5617 = vmatpush1.msra.mxu0 0.0
      %5618 = vmatprep.subr.mxu0 0.0
      %5619 = vmatpush1.msra.mxu0 0.0
      %5620 = vmatprep.subr.mxu0 0.0
      %5621 = vmatpush1.msra.mxu0 0.0
      %5622 = vmatprep.subr.mxu0 0.0
      %5623 = vmatpush1.msra.mxu0 0.0
      %5624 = vmatprep.subr.mxu0 0.0
      %5625 = vmatpush1.msra.mxu0 0.0
      %5626 = vmatprep.subr.mxu0 0.0
      %5627 = vmatpush1.msra.mxu0 0.0
      %5628 = vmatprep.subr.mxu0 0.0
      %5629 = vmatpush1.msra.mxu0 0.0
      %5630 = vmatprep.subr.mxu0 0.0
      %5631 = vmatpush1.msra.mxu0 0.0
      %5632 = vmatprep.subr.mxu0 0.0
      %5633 = vmatpush1.msra.mxu0 0.0
      %5634 = vmatprep.subr.mxu0 0.0
      %5635 = vmatpush1.msra.mxu0 0.0
      %5636 = vmatprep.subr.mxu0 0.0
      %5637 = vmatpush1.msra.mxu0 0.0
      %5638 = vmatprep.subr.mxu0 0.0
      %5639 = vmatpush1.msra.mxu0 0.0
      %5640 = vmatprep.mubr.f32.mxu0 0.0
      %5641 = vmatmul.mubr.f32.gmra.mrb[0].mxu0 %v2276
      %v5642 = vpop.f32.mrb[0].mxu0
      %v5643 = vadd.f32 0.0, %v5642
      %v5644 = vpop.f32.mrb[0].mxu0
      %5645 = vmatprep.mubr.f32.mxu0 0.0
      %5646 = vmatmul.mubr.f32.gmra.mrb[0].mxu0 %v2279
      %v5647 = vpop.f32.mrb[0].mxu0
      %v5648 = vadd.f32 0.0, %v5647
      %v5649 = vpop.f32.mrb[0].mxu0
      %5650 = vmatprep.mubr.f32.mxu0 0.0
      %5651 = vmatmul.mubr.f32.gmra.mrb[0].mxu0 %v2282
      %v5652 = vpop.f32.mrb[0].mxu0
      %v5653 = vadd.f32 0.0, %v5652
      %v5654 = vpop.f32.mrb[0].mxu0
      %5655 = vmatprep.mubr.f32.mxu0 0.0
      %5656 = vmatmul.mubr.f32.gmra.mrb[0].mxu0 %v2285
      %v5657 = vpop.f32.mrb[0].mxu0
      %v5658 = vadd.f32 0.0, %v5657
      %v5659 = vpop.f32.mrb[0].mxu0
      %5660 = vmatprep.mubr.f32.mxu0 0.0
      %5661 = vmatmul.mubr.f32.gmra.mrb[0].mxu0 %v2288
      %v5662 = vpop.f32.mrb[0].mxu0
      %v5663 = vadd.f32 0.0, %v5662
      %v5664 = vpop.f32.mrb[0].mxu0
      %5665 = vmatprep.mubr.f32.mxu0 0.0
      %5666 = vmatmul.mubr.f32.gmra.mrb[0].mxu0 %v2291
      %v5667 = vpop.f32.mrb[0].mxu0
      %v5668 = vadd.f32 0.0, %v5667
      %v5669 = vpop.f32.mrb[0].mxu0
      %5670 = vmatprep.mubr.f32.mxu0 0.0
      %5671 = vmatmul.mubr.f32.gmra.mrb[0].mxu0 %v2294
      %v5672 = vpop.f32.mrb[0].mxu0
      %v5673 = vadd.f32 0.0, %v5672
      %v5674 = vpop.f32.mrb[0].mxu0
      %5675 = vmatprep.mubr.f32.mxu0 0.0
      %5676 = vmatmul.mubr.f32.gmra.mrb[0].mxu0 %v2297
      %v5677 = vpop.f32.mrb[0].mxu0
      %v5678 = vadd.f32 0.0, %v5677
      %v5679 = vpop.f32.mrb[0].mxu0
      %5680 = vmatprep.mubr.f32.mxu0 0.0
      %5681 = vmatmul.mubr.f32.gmra.mrb[0].mxu0 %v2300
      %v5682 = vpop.f32.mrb[0].mxu0
      %v5683 = vadd.f32 0.0, %v5682
      %v5684 = vpop.f32.mrb[0].mxu0
      %5685 = vmatprep.mubr.f32.mxu0 0.0
      %5686 = vmatmul.mubr.f32.gmra.mrb[0].mxu0 %v2303
      %v5687 = vpop.f32.mrb[0].mxu0
      %v5688 = vadd.f32 0.0, %v5687
      %v5689 = vpop.f32.mrb[0].mxu0
      %5690 = vmatprep.mubr.f32.mxu0 0.0
      %5691 = vmatmul.mubr.f32.gmra.mrb[0].mxu0 %v2306
      %v5692 = vpop.f32.mrb[0].mxu0
      %v5693 = vadd.f32 0.0, %v5692
      %v5694 = vpop.f32.mrb[0].mxu0
      %5695 = vmatprep.mubr.f32.mxu0 0.0
      %5696 = vmatmul.mubr.f32.gmra.mrb[0].mxu0 %v2309
      %v5697 = vpop.f32.mrb[0].mxu0
      %v5698 = vadd.f32 0.0, %v5697
      %v5699 = vpop.f32.mrb[0].mxu0
      %5700 = vmatprep.mubr.f32.mxu0 0.0
      %5701 = vmatmul.mubr.f32.gmra.mrb[0].mxu0 %v2312
      %v5702 = vpop.f32.mrb[0].mxu0
      %v5703 = vadd.f32 0.0, %v5702
      %v5704 = vpop.f32.mrb[0].mxu0
      %5705 = vmatprep.mubr.f32.mxu0 0.0
      %5706 = vmatmul.mubr.f32.gmra.mrb[0].mxu0 %v2315
      %v5707 = vpop.f32.mrb[0].mxu0
      %v5708 = vadd.f32 0.0, %v5707
      %v5709 = vpop.f32.mrb[0].mxu0
      %5710 = vmatprep.mubr.f32.mxu0 0.0
      %5711 = vmatmul.mubr.f32.gmra.mrb[0].mxu0 %v2318
      %v5712 = vpop.f32.mrb[0].mxu0
      %v5713 = vadd.f32 0.0, %v5712
      %v5714 = vpop.f32.mrb[0].mxu0
      %5715 = vmatprep.mubr.f32.mxu0 0.0
      %5716 = vmatmul.mubr.f32.gmra.mrb[0].mxu0 %v2321
      %v5717 = vpop.f32.mrb[0].mxu0
      %v5718 = vadd.f32 0.0, %v5717
      %v5719 = vpop.f32.mrb[0].mxu0
      %5720 = vmatprep.mubr.f32.mxu0 0.0
      %5721 = vmatmul.mubr.f32.gmra.mrb[0].mxu0 %v2324
      %v5722 = vpop.f32.mrb[0].mxu0
      %v5723 = vadd.f32 0.0, %v5722
      %v5724 = vpop.f32.mrb[0].mxu0
      %5725 = vmatprep.mubr.f32.mxu0 0.0
      %5726 = vmatmul.mubr.f32.gmra.mrb[0].mxu0 %v2327
      %v5727 = vpop.f32.mrb[0].mxu0
      %v5728 = vadd.f32 0.0, %v5727
      %v5729 = vpop.f32.mrb[0].mxu0
      %5730 = vmatprep.mubr.f32.mxu0 0.0
      %5731 = vmatmul.mubr.f32.gmra.mrb[0].mxu0 %v2330
      %v5732 = vpop.f32.mrb[0].mxu0
      %v5733 = vadd.f32 0.0, %v5732
      %v5734 = vpop.f32.mrb[0].mxu0
      %5735 = vmatprep.mubr.f32.mxu0 0.0
      %5736 = vmatmul.mubr.f32.gmra.mrb[0].mxu0 %v2333
      %v5737 = vpop.f32.mrb[0].mxu0
      %v5738 = vadd.f32 0.0, %v5737
      %v5739 = vpop.f32.mrb[0].mxu0
      %5740 = vmatprep.mubr.f32.mxu0 0.0
      %5741 = vmatmul.mubr.f32.gmra.mrb[0].mxu0 %v2595
      %v5742 = vpop.f32.mrb[0].mxu0
      %v5743 = vadd.f32 0.0, %v5742
      %v5744 = vpop.f32.mrb[0].mxu0
      %5745 = vmatprep.mubr.f32.mxu0 0.0
      %5746 = vmatmul.mubr.f32.gmra.mrb[0].mxu0 %v2598
      %v5747 = vpop.f32.mrb[0].mxu0
      %v5748 = vadd.f32 0.0, %v5747
      %v5749 = vpop.f32.mrb[0].mxu0
      %5750 = vmatprep.mubr.f32.mxu0 0.0
      %5751 = vmatmul.mubr.f32.gmra.mrb[0].mxu0 %v2601
      %v5752 = vpop.f32.mrb[0].mxu0
      %v5753 = vadd.f32 0.0, %v5752
      %v5754 = vpop.f32.mrb[0].mxu0
      %5755 = vmatprep.mubr.f32.mxu0 0.0
      %5756 = vmatmul.mubr.f32.gmra.mrb[0].mxu0 %v2604
      %v5757 = vpop.f32.mrb[0].mxu0
      %v5758 = vadd.f32 0.0, %v5757
      %v5759 = vpop.f32.mrb[0].mxu0
      %5760 = vmatprep.mubr.f32.mxu0 0.0
      %5761 = vmatmul.mubr.f32.gmra.mrb[0].mxu0 %v2607
      %v5762 = vpop.f32.mrb[0].mxu0
      %v5763 = vadd.f32 0.0, %v5762
      %v5764 = vpop.f32.mrb[0].mxu0
      %5765 = vmatprep.mubr.f32.mxu0 0.0
      %5766 = vmatmul.mubr.f32.gmra.mrb[0].mxu0 %v2610
      %v5767 = vpop.f32.mrb[0].mxu0
      %v5768 = vadd.f32 0.0, %v5767
      %v5769 = vpop.f32.mrb[0].mxu0
      %5770 = vmatprep.mubr.f32.mxu0 0.0
      %5771 = vmatmul.mubr.f32.gmra.mrb[0].mxu0 %v2613
      %v5772 = vpop.f32.mrb[0].mxu0
      %v5773 = vadd.f32 0.0, %v5772
      %v5774 = vpop.f32.mrb[0].mxu0
      %5775 = vmatprep.mubr.f32.mxu0 0.0
      %5776 = vmatmul.mubr.f32.gmra.mrb[0].mxu0 %v2616
      %v5777 = vpop.f32.mrb[0].mxu0
      %v5778 = vadd.f32 0.0, %v5777
      %v5779 = vpop.f32.mrb[0].mxu0
      %5780 = vmatprep.mubr.f32.mxu0 0.0
      %5781 = vmatmul.mubr.f32.gmra.mrb[0].mxu0 %v2619
      %v5782 = vpop.f32.mrb[0].mxu0
      %v5783 = vadd.f32 0.0, %v5782
      %v5784 = vpop.f32.mrb[0].mxu0
      %5785 = vmatprep.mubr.f32.mxu0 0.0
      %5786 = vmatmul.mubr.f32.gmra.mrb[0].mxu0 %v2622
      %v5787 = vpop.f32.mrb[0].mxu0
      %v5788 = vadd.f32 0.0, %v5787
      %v5789 = vpop.f32.mrb[0].mxu0
      %5790 = vmatprep.mubr.f32.mxu0 0.0
      %5791 = vmatmul.mubr.f32.gmra.mrb[0].mxu0 %v2625
      %v5792 = vpop.f32.mrb[0].mxu0
      %v5793 = vadd.f32 0.0, %v5792
      %v5794 = vpop.f32.mrb[0].mxu0
      %5795 = vmatprep.mubr.f32.mxu0 0.0
      %5796 = vmatmul.mubr.f32.gmra.mrb[0].mxu0 %v2628
      %v5797 = vpop.f32.mrb[0].mxu0
      %v5798 = vadd.f32 0.0, %v5797
      %v5799 = vpop.f32.mrb[0].mxu0
      %5800 = vdwg.mxu0
      %v5801 = vadd.f32 %v5542, %v5643
      %v5802 = vadd.f32 %v5543, %v5648
      %v5803 = vadd.f32 %v5544, %v5653
      %v5804 = vadd.f32 %v5545, %v5658
      %v5805 = vadd.f32 %v5546, %v5663
      %v5806 = vadd.f32 %v5547, %v5668
      %v5807 = vadd.f32 %v5548, %v5673
      %v5808 = vadd.f32 %v5549, %v5678
      %v5809 = vadd.f32 %v5550, %v5683
      %v5810 = vadd.f32 %v5551, %v5688
      %v5811 = vadd.f32 %v5552, %v5693
      %v5812 = vadd.f32 %v5553, %v5698
      %v5813 = vadd.f32 %v5554, %v5703
      %v5814 = vadd.f32 %v5555, %v5708
      %v5815 = vadd.f32 %v5556, %v5713
      %v5816 = vadd.f32 %v5557, %v5718
      %v5817 = vadd.f32 %v5558, %v5723
      %v5818 = vadd.f32 %v5559, %v5728
      %v5819 = vadd.f32 %v5560, %v5733
      %v5820 = vadd.f32 %v5561, %v5738
      %v5821 = vadd.f32 %v5562, %v5743
      %v5822 = vadd.f32 %v5563, %v5748
      %v5823 = vadd.f32 %v5564, %v5753
      %v5824 = vadd.f32 %v5565, %v5758
      %v5825 = vadd.f32 %v5566, %v5763
      %v5826 = vadd.f32 %v5567, %v5768
      %v5827 = vadd.f32 %v5568, %v5773
      %v5828 = vadd.f32 %v5569, %v5778
      %v5829 = vadd.f32 %v5570, %v5783
      %v5830 = vadd.f32 %v5571, %v5788
      %v5831 = vadd.f32 %v5572, %v5793
      %v5832 = vadd.f32 %v5573, %v5798
      %s5833 = scalar_lea.vmem %s4, 56
      %v5834 = vld [vmem:[%s5833] sm:$0xff]
      %v5836 = vsel %vm279, %v2213, 0
      %v5839 = vsel %vm279, %v2214, 0
      %v5842 = vsel %vm279, %v2215, 0
      %v5845 = vsel %vm279, %v2216, 0
      %v5848 = vsel %vm279, %v2217, 0
      %v5851 = vsel %vm279, %v2218, 0
      %v5854 = vsel %vm279, %v2219, 0
      %v5857 = vsel %vm279, %v2220, 0
      %v5860 = vsel %vm279, %v2221, 0
      %v5863 = vsel %vm279, %v2222, 0
      %v5866 = vsel %vm279, %v2223, 0
      %v5869 = vsel %vm279, %v2224, 0
      %5871 = vmatprep.subr.mxu0 0.0
      %5872 = vmatpush1.msra.mxu0 %v5834
      %5873 = vmatprep.subr.mxu0 0.0
      %5874 = vmatpush1.msra.mxu0 0.0
      %5875 = vmatprep.subr.mxu0 0.0
      %5876 = vmatpush1.msra.mxu0 0.0
      %5877 = vmatprep.subr.mxu0 0.0
      %5878 = vmatpush1.msra.mxu0 0.0
      %5879 = vmatprep.subr.mxu0 0.0
      %5880 = vmatpush1.msra.mxu0 0.0
      %5881 = vmatprep.subr.mxu0 0.0
      %5882 = vmatpush1.msra.mxu0 0.0
      %5883 = vmatprep.subr.mxu0 0.0
      %5884 = vmatpush1.msra.mxu0 0.0
      %5885 = vmatprep.subr.mxu0 0.0
      %5886 = vmatpush1.msra.mxu0 0.0
      %5887 = vmatprep.subr.mxu0 0.0
      %5888 = vmatpush1.msra.mxu0 0.0
      %5889 = vmatprep.subr.mxu0 0.0
      %5890 = vmatpush1.msra.mxu0 0.0
      %5891 = vmatprep.subr.mxu0 0.0
      %5892 = vmatpush1.msra.mxu0 0.0
      %5893 = vmatprep.subr.mxu0 0.0
      %5894 = vmatpush1.msra.mxu0 0.0
      %5895 = vmatprep.subr.mxu0 0.0
      %5896 = vmatpush1.msra.mxu0 0.0
      %5897 = vmatprep.subr.mxu0 0.0
      %5898 = vmatpush1.msra.mxu0 0.0
      %5899 = vmatprep.subr.mxu0 0.0
      %5900 = vmatpush1.msra.mxu0 0.0
      %5901 = vmatprep.subr.mxu0 0.0
      %5902 = vmatpush1.msra.mxu0 0.0
      %5903 = vmatprep.subr.mxu0 0.0
      %5904 = vmatpush1.msra.mxu0 0.0
      %5905 = vmatprep.subr.mxu0 0.0
      %5906 = vmatpush1.msra.mxu0 0.0
      %5907 = vmatprep.subr.mxu0 0.0
      %5908 = vmatpush1.msra.mxu0 0.0
      %5909 = vmatprep.subr.mxu0 0.0
      %5910 = vmatpush1.msra.mxu0 0.0
      %5911 = vmatprep.subr.mxu0 0.0
      %5912 = vmatpush1.msra.mxu0 0.0
      %5913 = vmatprep.subr.mxu0 0.0
      %5914 = vmatpush1.msra.mxu0 0.0
      %5915 = vmatprep.subr.mxu0 0.0
      %5916 = vmatpush1.msra.mxu0 0.0
      %5917 = vmatprep.subr.mxu0 0.0
      %5918 = vmatpush1.msra.mxu0 0.0
      %5919 = vmatprep.subr.mxu0 0.0
      %5920 = vmatpush1.msra.mxu0 0.0
      %5921 = vmatprep.subr.mxu0 0.0
      %5922 = vmatpush1.msra.mxu0 0.0
      %5923 = vmatprep.subr.mxu0 0.0
      %5924 = vmatpush1.msra.mxu0 0.0
      %5925 = vmatprep.subr.mxu0 0.0
      %5926 = vmatpush1.msra.mxu0 0.0
      %5927 = vmatprep.subr.mxu0 0.0
      %5928 = vmatpush1.msra.mxu0 0.0
      %5929 = vmatprep.subr.mxu0 0.0
      %5930 = vmatpush1.msra.mxu0 0.0
      %5931 = vmatprep.subr.mxu0 0.0
      %5932 = vmatpush1.msra.mxu0 0.0
      %5933 = vmatprep.subr.mxu0 0.0
      %5934 = vmatpush1.msra.mxu0 0.0
      %5935 = vmatprep.mubr.f32.mxu0 0.0
      %5936 = vmatmul.mubr.f32.gmra.mrb[0].mxu0 %v2607
      %v5937 = vpop.f32.mrb[0].mxu0
      %v5938 = vadd.f32 0.0, %v5937
      %v5939 = vpop.f32.mrb[0].mxu0
      %5940 = vmatprep.mubr.f32.mxu0 0.0
      %5941 = vmatmul.mubr.f32.gmra.mrb[0].mxu0 %v2610
      %v5942 = vpop.f32.mrb[0].mxu0
      %v5943 = vadd.f32 0.0, %v5942
      %v5944 = vpop.f32.mrb[0].mxu0
      %5945 = vmatprep.mubr.f32.mxu0 0.0
      %5946 = vmatmul.mubr.f32.gmra.mrb[0].mxu0 %v2613
      %v5947 = vpop.f32.mrb[0].mxu0
      %v5948 = vadd.f32 0.0, %v5947
      %v5949 = vpop.f32.mrb[0].mxu0
      %5950 = vmatprep.mubr.f32.mxu0 0.0
      %5951 = vmatmul.mubr.f32.gmra.mrb[0].mxu0 %v2616
      %v5952 = vpop.f32.mrb[0].mxu0
      %v5953 = vadd.f32 0.0, %v5952
      %v5954 = vpop.f32.mrb[0].mxu0
      %5955 = vmatprep.mubr.f32.mxu0 0.0
      %5956 = vmatmul.mubr.f32.gmra.mrb[0].mxu0 %v2619
      %v5957 = vpop.f32.mrb[0].mxu0
      %v5958 = vadd.f32 0.0, %v5957
      %v5959 = vpop.f32.mrb[0].mxu0
      %5960 = vmatprep.mubr.f32.mxu0 0.0
      %5961 = vmatmul.mubr.f32.gmra.mrb[0].mxu0 %v2622
      %v5962 = vpop.f32.mrb[0].mxu0
      %v5963 = vadd.f32 0.0, %v5962
      %v5964 = vpop.f32.mrb[0].mxu0
      %5965 = vmatprep.mubr.f32.mxu0 0.0
      %5966 = vmatmul.mubr.f32.gmra.mrb[0].mxu0 %v2625
      %v5967 = vpop.f32.mrb[0].mxu0
      %v5968 = vadd.f32 0.0, %v5967
      %v5969 = vpop.f32.mrb[0].mxu0
      %5970 = vmatprep.mubr.f32.mxu0 0.0
      %5971 = vmatmul.mubr.f32.gmra.mrb[0].mxu0 %v2628
      %v5972 = vpop.f32.mrb[0].mxu0
      %v5973 = vadd.f32 0.0, %v5972
      %v5974 = vpop.f32.mrb[0].mxu0
      %5975 = vmatprep.mubr.f32.mxu0 0.0
      %5976 = vmatmul.mubr.f32.gmra.mrb[0].mxu0 %v2890
      %v5977 = vpop.f32.mrb[0].mxu0
      %v5978 = vadd.f32 0.0, %v5977
      %v5979 = vpop.f32.mrb[0].mxu0
      %5980 = vmatprep.mubr.f32.mxu0 0.0
      %5981 = vmatmul.mubr.f32.gmra.mrb[0].mxu0 %v2893
      %v5982 = vpop.f32.mrb[0].mxu0
      %v5983 = vadd.f32 0.0, %v5982
      %v5984 = vpop.f32.mrb[0].mxu0
      %5985 = vmatprep.mubr.f32.mxu0 0.0
      %5986 = vmatmul.mubr.f32.gmra.mrb[0].mxu0 %v2896
      %v5987 = vpop.f32.mrb[0].mxu0
      %v5988 = vadd.f32 0.0, %v5987
      %v5989 = vpop.f32.mrb[0].mxu0
      %5990 = vmatprep.mubr.f32.mxu0 0.0
      %5991 = vmatmul.mubr.f32.gmra.mrb[0].mxu0 %v2899
      %v5992 = vpop.f32.mrb[0].mxu0
      %v5993 = vadd.f32 0.0, %v5992
      %v5994 = vpop.f32.mrb[0].mxu0
      %5995 = vmatprep.mubr.f32.mxu0 0.0
      %5996 = vmatmul.mubr.f32.gmra.mrb[0].mxu0 %v2902
      %v5997 = vpop.f32.mrb[0].mxu0
      %v5998 = vadd.f32 0.0, %v5997
      %v5999 = vpop.f32.mrb[0].mxu0
      %6000 = vmatprep.mubr.f32.mxu0 0.0
      %6001 = vmatmul.mubr.f32.gmra.mrb[0].mxu0 %v2905
      %v6002 = vpop.f32.mrb[0].mxu0
      %v6003 = vadd.f32 0.0, %v6002
      %v6004 = vpop.f32.mrb[0].mxu0
      %6005 = vmatprep.mubr.f32.mxu0 0.0
      %6006 = vmatmul.mubr.f32.gmra.mrb[0].mxu0 %v2908
      %v6007 = vpop.f32.mrb[0].mxu0
      %v6008 = vadd.f32 0.0, %v6007
      %v6009 = vpop.f32.mrb[0].mxu0
      %6010 = vmatprep.mubr.f32.mxu0 0.0
      %6011 = vmatmul.mubr.f32.gmra.mrb[0].mxu0 %v2911
      %v6012 = vpop.f32.mrb[0].mxu0
      %v6013 = vadd.f32 0.0, %v6012
      %v6014 = vpop.f32.mrb[0].mxu0
      %6015 = vmatprep.mubr.f32.mxu0 0.0
      %6016 = vmatmul.mubr.f32.gmra.mrb[0].mxu0 %v2914
      %v6017 = vpop.f32.mrb[0].mxu0
      %v6018 = vadd.f32 0.0, %v6017
      %v6019 = vpop.f32.mrb[0].mxu0
      %6020 = vmatprep.mubr.f32.mxu0 0.0
      %6021 = vmatmul.mubr.f32.gmra.mrb[0].mxu0 %v2917
      %v6022 = vpop.f32.mrb[0].mxu0
      %v6023 = vadd.f32 0.0, %v6022
      %v6024 = vpop.f32.mrb[0].mxu0
      %6025 = vmatprep.mubr.f32.mxu0 0.0
      %6026 = vmatmul.mubr.f32.gmra.mrb[0].mxu0 %v2920
      %v6027 = vpop.f32.mrb[0].mxu0
      %v6028 = vadd.f32 0.0, %v6027
      %v6029 = vpop.f32.mrb[0].mxu0
      %6030 = vmatprep.mubr.f32.mxu0 0.0
      %6031 = vmatmul.mubr.f32.gmra.mrb[0].mxu0 %v2923
      %v6032 = vpop.f32.mrb[0].mxu0
      %v6033 = vadd.f32 0.0, %v6032
      %v6034 = vpop.f32.mrb[0].mxu0
      %6035 = vmatprep.mubr.f32.mxu0 0.0
      %6036 = vmatmul.mubr.f32.gmra.mrb[0].mxu0 %v5836
      %v6037 = vpop.f32.mrb[0].mxu0
      %v6038 = vadd.f32 0.0, %v6037
      %v6039 = vpop.f32.mrb[0].mxu0
      %6040 = vmatprep.mubr.f32.mxu0 0.0
      %6041 = vmatmul.mubr.f32.gmra.mrb[0].mxu0 %v5839
      %v6042 = vpop.f32.mrb[0].mxu0
      %v6043 = vadd.f32 0.0, %v6042
      %v6044 = vpop.f32.mrb[0].mxu0
      %6045 = vmatprep.mubr.f32.mxu0 0.0
      %6046 = vmatmul.mubr.f32.gmra.mrb[0].mxu0 %v5842
      %v6047 = vpop.f32.mrb[0].mxu0
      %v6048 = vadd.f32 0.0, %v6047
      %v6049 = vpop.f32.mrb[0].mxu0
      %6050 = vmatprep.mubr.f32.mxu0 0.0
      %6051 = vmatmul.mubr.f32.gmra.mrb[0].mxu0 %v5845
      %v6052 = vpop.f32.mrb[0].mxu0
      %v6053 = vadd.f32 0.0, %v6052
      %v6054 = vpop.f32.mrb[0].mxu0
      %6055 = vmatprep.mubr.f32.mxu0 0.0
      %6056 = vmatmul.mubr.f32.gmra.mrb[0].mxu0 %v5848
      %v6057 = vpop.f32.mrb[0].mxu0
      %v6058 = vadd.f32 0.0, %v6057
      %v6059 = vpop.f32.mrb[0].mxu0
      %6060 = vmatprep.mubr.f32.mxu0 0.0
      %6061 = vmatmul.mubr.f32.gmra.mrb[0].mxu0 %v5851
      %v6062 = vpop.f32.mrb[0].mxu0
      %v6063 = vadd.f32 0.0, %v6062
      %v6064 = vpop.f32.mrb[0].mxu0
      %6065 = vmatprep.mubr.f32.mxu0 0.0
      %6066 = vmatmul.mubr.f32.gmra.mrb[0].mxu0 %v5854
      %v6067 = vpop.f32.mrb[0].mxu0
      %v6068 = vadd.f32 0.0, %v6067
      %v6069 = vpop.f32.mrb[0].mxu0
      %6070 = vmatprep.mubr.f32.mxu0 0.0
      %6071 = vmatmul.mubr.f32.gmra.mrb[0].mxu0 %v5857
      %v6072 = vpop.f32.mrb[0].mxu0
      %v6073 = vadd.f32 0.0, %v6072
      %v6074 = vpop.f32.mrb[0].mxu0
      %6075 = vmatprep.mubr.f32.mxu0 0.0
      %6076 = vmatmul.mubr.f32.gmra.mrb[0].mxu0 %v5860
      %v6077 = vpop.f32.mrb[0].mxu0
      %v6078 = vadd.f32 0.0, %v6077
      %v6079 = vpop.f32.mrb[0].mxu0
      %6080 = vmatprep.mubr.f32.mxu0 0.0
      %6081 = vmatmul.mubr.f32.gmra.mrb[0].mxu0 %v5863
      %v6082 = vpop.f32.mrb[0].mxu0
      %v6083 = vadd.f32 0.0, %v6082
      %v6084 = vpop.f32.mrb[0].mxu0
      %6085 = vmatprep.mubr.f32.mxu0 0.0
      %6086 = vmatmul.mubr.f32.gmra.mrb[0].mxu0 %v5866
      %v6087 = vpop.f32.mrb[0].mxu0
      %v6088 = vadd.f32 0.0, %v6087
      %v6089 = vpop.f32.mrb[0].mxu0
      %6090 = vmatprep.mubr.f32.mxu0 0.0
      %6091 = vmatmul.mubr.f32.gmra.mrb[0].mxu0 %v5869
      %v6092 = vpop.f32.mrb[0].mxu0
      %v6093 = vadd.f32 0.0, %v6092
      %v6094 = vpop.f32.mrb[0].mxu0
      %6095 = vdwg.mxu0
      %v6096 = vadd.f32 %v5801, %v5938
      %v6097 = vadd.f32 %v5802, %v5943
      %v6098 = vadd.f32 %v5803, %v5948
      %v6099 = vadd.f32 %v5804, %v5953
      %v6100 = vadd.f32 %v5805, %v5958
      %v6101 = vadd.f32 %v5806, %v5963
      %v6102 = vadd.f32 %v5807, %v5968
      %v6103 = vadd.f32 %v5808, %v5973
      %v6104 = vadd.f32 %v5809, %v5978
      %v6105 = vadd.f32 %v5810, %v5983
      %v6106 = vadd.f32 %v5811, %v5988
      %v6107 = vadd.f32 %v5812, %v5993
      %v6108 = vadd.f32 %v5813, %v5998
      %v6109 = vadd.f32 %v5814, %v6003
      %v6110 = vadd.f32 %v5815, %v6008
      %v6111 = vadd.f32 %v5816, %v6013
      %v6112 = vadd.f32 %v5817, %v6018
      %v6113 = vadd.f32 %v5818, %v6023
      %v6114 = vadd.f32 %v5819, %v6028
      %v6115 = vadd.f32 %v5820, %v6033
      %v6116 = vadd.f32 %v5821, %v6038
      %v6117 = vadd.f32 %v5822, %v6043
      %v6118 = vadd.f32 %v5823, %v6048
      %v6119 = vadd.f32 %v5824, %v6053
      %v6120 = vadd.f32 %v5825, %v6058
      %v6121 = vadd.f32 %v5826, %v6063
      %v6122 = vadd.f32 %v5827, %v6068
      %v6123 = vadd.f32 %v5828, %v6073
      %v6124 = vadd.f32 %v5829, %v6078
      %v6125 = vadd.f32 %v5830, %v6083
      %v6126 = vadd.f32 %v5831, %v6088
      %v6127 = vadd.f32 %v5832, %v6093
      %v6128 = vld [vmem:[#allocation2 + $0x16e] sm:$0xff]
      %v6129 = vld [vmem:[#allocation2 + $0x176] sm:$0xff]
      %v6130 = vld [vmem:[#allocation2 + $0x1a6] sm:$0xff]
      %v6131 = vld [vmem:[#allocation2 + $0x1ae] sm:$0xff]
      %v6132 = vld [vmem:[#allocation2 + $0x1de] sm:$0xff]
      %v6133 = vld [vmem:[#allocation2 + $0x1e6] sm:$0xff]
      %v6134 = vld [vmem:[#allocation2 + $0x216] sm:$0xff]
      %v6135 = vld [vmem:[#allocation2 + $0x21e] sm:$0xff]
      %v6136 = vld [vmem:[#allocation2 + $0x24e] sm:$0xff]
      %v6137 = vld [vmem:[#allocation2 + $0x256] sm:$0xff]
      %v6138 = vld [vmem:[#allocation2 + $0x286] sm:$0xff]
      %v6139 = vld [vmem:[#allocation2 + $0x28e] sm:$0xff]
      %v6140 = vld [vmem:[#allocation2 + $0x2be] sm:$0xff]
      %v6141 = vld [vmem:[#allocation2 + $0x2c6] sm:$0xff]
      %v6142 = vld [vmem:[#allocation2 + $0x2f6] sm:$0xff]
      %v6143 = vld [vmem:[#allocation2 + $0x2fe] sm:$0xff]
      %v6144 = vld [vmem:[#allocation2 + $0x32e] sm:$0xff]
      %v6145 = vld [vmem:[#allocation2 + $0x336] sm:$0xff]
      %v6146 = vld [vmem:[#allocation2 + $0x366] sm:$0xff]
      %v6147 = vld [vmem:[#allocation2 + $0x36e] sm:$0xff]
      %v6148 = vld [vmem:[#allocation2 + $0x39e] sm:$0xff]
      %v6149 = vld [vmem:[#allocation2 + $0x3a6] sm:$0xff]
      %v6150 = vld [vmem:[#allocation2 + $0x3d6] sm:$0xff]
      %v6151 = vld [vmem:[#allocation2 + $0x3de] sm:$0xff]
      %v6152 = vld [vmem:[#allocation2 + $0x40e] sm:$0xff]
      %v6153 = vld [vmem:[#allocation2 + $0x416] sm:$0xff]
      %v6154 = vld [vmem:[#allocation2 + $0x446] sm:$0xff]
      %v6155 = vld [vmem:[#allocation2 + $0x44e] sm:$0xff]
      %v6156 = vld [vmem:[#allocation2 + $0x47e] sm:$0xff]
      %v6157 = vld [vmem:[#allocation2 + $0x486] sm:$0xff]
      %v6158 = vld [vmem:[#allocation2 + $0x4b6] sm:$0xff]
      %v6159 = vld [vmem:[#allocation2 + $0x4be] sm:$0xff]
      %v6160 = vld [vmem:[#allocation2 + $0x4ee] sm:$0xff]
      %v6161 = vld [vmem:[#allocation2 + $0x4f6] sm:$0xff]
      %v6162 = vld [vmem:[#allocation2 + $0x526] sm:$0xff]
      %v6163 = vld [vmem:[#allocation2 + $0x52e] sm:$0xff]
      %v6164 = vld [vmem:[#allocation2 + $0x55e] sm:$0xff]
      %v6165 = vld [vmem:[#allocation2 + $0x566] sm:$0xff]
      %v6166 = vld [vmem:[#allocation2 + $0x596] sm:$0xff]
      %v6167 = vld [vmem:[#allocation2 + $0x59e] sm:$0xff]
      %v6168 = vld [vmem:[#allocation2 + $0x5ce] sm:$0xff]
      %v6169 = vld [vmem:[#allocation2 + $0x5d6] sm:$0xff]
      %v6170 = vld [vmem:[#allocation2 + $0x606] sm:$0xff]
      %v6171 = vld [vmem:[#allocation2 + $0x60e] sm:$0xff]
      %v6172 = vld [vmem:[#allocation2 + $0x63e] sm:$0xff]
      %v6173 = vld [vmem:[#allocation2 + $0x646] sm:$0xff]
      %v6174 = vld [vmem:[#allocation2 + $0x676] sm:$0xff]
      %v6175 = vld [vmem:[#allocation2 + $0x67e] sm:$0xff]
      %v6176 = vld [vmem:[#allocation2 + $0x6ae] sm:$0xff]
      %v6177 = vld [vmem:[#allocation2 + $0x6b6] sm:$0xff]
      %v6178 = vld [vmem:[#allocation2 + $0x6e6] sm:$0xff]
      %v6179 = vld [vmem:[#allocation2 + $0x6ee] sm:$0xff]
      %v6180 = vld [vmem:[#allocation2 + $0x71e] sm:$0xff]
      %v6181 = vld [vmem:[#allocation2 + $0x726] sm:$0xff]
      %v6182 = vld [vmem:[#allocation2 + $0x756] sm:$0xff]
      %v6183 = vld [vmem:[#allocation2 + $0x75e] sm:$0xff]
      %v6184 = vld [vmem:[#allocation2 + $0x78e] sm:$0xff]
      %v6185 = vld [vmem:[#allocation2 + $0x796] sm:$0xff]
      %v6186 = vld [vmem:[#allocation2 + $0x7c6] sm:$0xff]
      %v6187 = vld [vmem:[#allocation2 + $0x7ce] sm:$0xff]
      %v6188 = vld [vmem:[#allocation2 + $0x7fe] sm:$0xff]
      %v6189 = vld [vmem:[#allocation2 + $0x806] sm:$0xff]
      %v6190 = vld [vmem:[#allocation2 + $0x836] sm:$0xff]
      %v6191 = vld [vmem:[#allocation2 + $0x83e] sm:$0xff]
      %v6192 = vld [vmem:[#allocation2 + $0x86e] sm:$0xff]
      %v6193 = vld [vmem:[#allocation2 + $0x876] sm:$0xff]
      %v6194 = vld [vmem:[#allocation2 + $0x8a6] sm:$0xff]
      %v6195 = vld [vmem:[#allocation2 + $0x8ae] sm:$0xff]
      %v6196 = vld [vmem:[#allocation2 + $0x8de] sm:$0xff]
      %v6197 = vld [vmem:[#allocation2 + $0x8e6] sm:$0xff]
      %v6198 = vld [vmem:[#allocation2 + $0x916] sm:$0xff]
      %v6199 = vld [vmem:[#allocation2 + $0x91e] sm:$0xff]
      %v6200 = vld [vmem:[#allocation2 + $0x94e] sm:$0xff]
      %v6201 = vld [vmem:[#allocation2 + $0x956] sm:$0xff]
      %v6202 = vld [vmem:[#allocation2 + $0x986] sm:$0xff]
      %v6203 = vld [vmem:[#allocation2 + $0x98e] sm:$0xff]
      %v6204 = vld [vmem:[#allocation2 + $0x9be] sm:$0xff]
      %v6205 = vld [vmem:[#allocation2 + $0x9c6] sm:$0xff]
      %v6206 = vld [vmem:[#allocation2 + $0x9f6] sm:$0xff]
      %v6207 = vld [vmem:[#allocation2 + $0x9fe] sm:$0xff]
      %s6208 = scalar_lea.vmem %s4, 16
      %v6209 = vld [vmem:[%s6208] sm:$0xff]
      %v6211 = vsel %vm279, %v6128, 0
      %v6214 = vsel %vm279, %v6129, 0
      %v6217 = vsel %vm279, %v6130, 0
      %v6220 = vsel %vm279, %v6131, 0
      %v6223 = vsel %vm279, %v6132, 0
      %v6226 = vsel %vm279, %v6133, 0
      %v6229 = vsel %vm279, %v6134, 0
      %v6232 = vsel %vm279, %v6135, 0
      %v6235 = vsel %vm279, %v6136, 0
      %v6238 = vsel %vm279, %v6137, 0
      %v6241 = vsel %vm279, %v6138, 0
      %v6244 = vsel %vm279, %v6139, 0
      %v6247 = vsel %vm279, %v6140, 0
      %v6250 = vsel %vm279, %v6141, 0
      %v6253 = vsel %vm279, %v6142, 0
      %v6256 = vsel %vm279, %v6143, 0
      %v6259 = vsel %vm279, %v6144, 0
      %v6262 = vsel %vm279, %v6145, 0
      %v6265 = vsel %vm279, %v6146, 0
      %v6268 = vsel %vm279, %v6147, 0
      %v6271 = vsel %vm279, %v6148, 0
      %v6274 = vsel %vm279, %v6149, 0
      %v6277 = vsel %vm279, %v6150, 0
      %v6280 = vsel %vm279, %v6151, 0
      %v6283 = vsel %vm279, %v6152, 0
      %v6286 = vsel %vm279, %v6153, 0
      %v6289 = vsel %vm279, %v6154, 0
      %v6292 = vsel %vm279, %v6155, 0
      %v6295 = vsel %vm279, %v6156, 0
      %v6298 = vsel %vm279, %v6157, 0
      %v6301 = vsel %vm279, %v6158, 0
      %v6304 = vsel %vm279, %v6159, 0
      %6306 = vmatprep.subr.mxu0 0.0
      %6307 = vmatpush1.msra.mxu0 %v6209
      %6308 = vmatprep.subr.mxu0 0.0
      %6309 = vmatpush1.msra.mxu0 0.0
      %6310 = vmatprep.subr.mxu0 0.0
      %6311 = vmatpush1.msra.mxu0 0.0
      %6312 = vmatprep.subr.mxu0 0.0
      %6313 = vmatpush1.msra.mxu0 0.0
      %6314 = vmatprep.subr.mxu0 0.0
      %6315 = vmatpush1.msra.mxu0 0.0
      %6316 = vmatprep.subr.mxu0 0.0
      %6317 = vmatpush1.msra.mxu0 0.0
      %6318 = vmatprep.subr.mxu0 0.0
      %6319 = vmatpush1.msra.mxu0 0.0
      %6320 = vmatprep.subr.mxu0 0.0
      %6321 = vmatpush1.msra.mxu0 0.0
      %6322 = vmatprep.subr.mxu0 0.0
      %6323 = vmatpush1.msra.mxu0 0.0
      %6324 = vmatprep.subr.mxu0 0.0
      %6325 = vmatpush1.msra.mxu0 0.0
      %6326 = vmatprep.subr.mxu0 0.0
      %6327 = vmatpush1.msra.mxu0 0.0
      %6328 = vmatprep.subr.mxu0 0.0
      %6329 = vmatpush1.msra.mxu0 0.0
      %6330 = vmatprep.subr.mxu0 0.0
      %6331 = vmatpush1.msra.mxu0 0.0
      %6332 = vmatprep.subr.mxu0 0.0
      %6333 = vmatpush1.msra.mxu0 0.0
      %6334 = vmatprep.subr.mxu0 0.0
      %6335 = vmatpush1.msra.mxu0 0.0
      %6336 = vmatprep.subr.mxu0 0.0
      %6337 = vmatpush1.msra.mxu0 0.0
      %6338 = vmatprep.subr.mxu0 0.0
      %6339 = vmatpush1.msra.mxu0 0.0
      %6340 = vmatprep.subr.mxu0 0.0
      %6341 = vmatpush1.msra.mxu0 0.0
      %6342 = vmatprep.subr.mxu0 0.0
      %6343 = vmatpush1.msra.mxu0 0.0
      %6344 = vmatprep.subr.mxu0 0.0
      %6345 = vmatpush1.msra.mxu0 0.0
      %6346 = vmatprep.subr.mxu0 0.0
      %6347 = vmatpush1.msra.mxu0 0.0
      %6348 = vmatprep.subr.mxu0 0.0
      %6349 = vmatpush1.msra.mxu0 0.0
      %6350 = vmatprep.subr.mxu0 0.0
      %6351 = vmatpush1.msra.mxu0 0.0
      %6352 = vmatprep.subr.mxu0 0.0
      %6353 = vmatpush1.msra.mxu0 0.0
      %6354 = vmatprep.subr.mxu0 0.0
      %6355 = vmatpush1.msra.mxu0 0.0
      %6356 = vmatprep.subr.mxu0 0.0
      %6357 = vmatpush1.msra.mxu0 0.0
      %6358 = vmatprep.subr.mxu0 0.0
      %6359 = vmatpush1.msra.mxu0 0.0
      %6360 = vmatprep.subr.mxu0 0.0
      %6361 = vmatpush1.msra.mxu0 0.0
      %6362 = vmatprep.subr.mxu0 0.0
      %6363 = vmatpush1.msra.mxu0 0.0
      %6364 = vmatprep.subr.mxu0 0.0
      %6365 = vmatpush1.msra.mxu0 0.0
      %6366 = vmatprep.subr.mxu0 0.0
      %6367 = vmatpush1.msra.mxu0 0.0
      %6368 = vmatprep.subr.mxu0 0.0
      %6369 = vmatpush1.msra.mxu0 0.0
      %6370 = vmatprep.mubr.f32.mxu0 0.0
      %6371 = vmatmul.mubr.f32.gmra.mrb[0].mxu0 %v6211
      %v6372 = vpop.f32.mrb[0].mxu0
      %v6373 = vadd.f32 0.0, %v6372
      %v6374 = vpop.f32.mrb[0].mxu0
      %6375 = vmatprep.mubr.f32.mxu0 0.0
      %6376 = vmatmul.mubr.f32.gmra.mrb[0].mxu0 %v6214
      %v6377 = vpop.f32.mrb[0].mxu0
      %v6378 = vadd.f32 0.0, %v6377
      %v6379 = vpop.f32.mrb[0].mxu0
      %6380 = vmatprep.mubr.f32.mxu0 0.0
      %6381 = vmatmul.mubr.f32.gmra.mrb[0].mxu0 %v6217
      %v6382 = vpop.f32.mrb[0].mxu0
      %v6383 = vadd.f32 0.0, %v6382
      %v6384 = vpop.f32.mrb[0].mxu0
      %6385 = vmatprep.mubr.f32.mxu0 0.0
      %6386 = vmatmul.mubr.f32.gmra.mrb[0].mxu0 %v6220
      %v6387 = vpop.f32.mrb[0].mxu0
      %v6388 = vadd.f32 0.0, %v6387
      %v6389 = vpop.f32.mrb[0].mxu0
      %6390 = vmatprep.mubr.f32.mxu0 0.0
      %6391 = vmatmul.mubr.f32.gmra.mrb[0].mxu0 %v6223
      %v6392 = vpop.f32.mrb[0].mxu0
      %v6393 = vadd.f32 0.0, %v6392
      %v6394 = vpop.f32.mrb[0].mxu0
      %6395 = vmatprep.mubr.f32.mxu0 0.0
      %6396 = vmatmul.mubr.f32.gmra.mrb[0].mxu0 %v6226
      %v6397 = vpop.f32.mrb[0].mxu0
      %v6398 = vadd.f32 0.0, %v6397
      %v6399 = vpop.f32.mrb[0].mxu0
      %6400 = vmatprep.mubr.f32.mxu0 0.0
      %6401 = vmatmul.mubr.f32.gmra.mrb[0].mxu0 %v6229
      %v6402 = vpop.f32.mrb[0].mxu0
      %v6403 = vadd.f32 0.0, %v6402
      %v6404 = vpop.f32.mrb[0].mxu0
      %6405 = vmatprep.mubr.f32.mxu0 0.0
      %6406 = vmatmul.mubr.f32.gmra.mrb[0].mxu0 %v6232
      %v6407 = vpop.f32.mrb[0].mxu0
      %v6408 = vadd.f32 0.0, %v6407
      %v6409 = vpop.f32.mrb[0].mxu0
      %6410 = vmatprep.mubr.f32.mxu0 0.0
      %6411 = vmatmul.mubr.f32.gmra.mrb[0].mxu0 %v6235
      %v6412 = vpop.f32.mrb[0].mxu0
      %v6413 = vadd.f32 0.0, %v6412
      %v6414 = vpop.f32.mrb[0].mxu0
      %6415 = vmatprep.mubr.f32.mxu0 0.0
      %6416 = vmatmul.mubr.f32.gmra.mrb[0].mxu0 %v6238
      %v6417 = vpop.f32.mrb[0].mxu0
      %v6418 = vadd.f32 0.0, %v6417
      %v6419 = vpop.f32.mrb[0].mxu0
      %6420 = vmatprep.mubr.f32.mxu0 0.0
      %6421 = vmatmul.mubr.f32.gmra.mrb[0].mxu0 %v6241
      %v6422 = vpop.f32.mrb[0].mxu0
      %v6423 = vadd.f32 0.0, %v6422
      %v6424 = vpop.f32.mrb[0].mxu0
      %6425 = vmatprep.mubr.f32.mxu0 0.0
      %6426 = vmatmul.mubr.f32.gmra.mrb[0].mxu0 %v6244
      %v6427 = vpop.f32.mrb[0].mxu0
      %v6428 = vadd.f32 0.0, %v6427
      %v6429 = vpop.f32.mrb[0].mxu0
      %6430 = vmatprep.mubr.f32.mxu0 0.0
      %6431 = vmatmul.mubr.f32.gmra.mrb[0].mxu0 %v6247
      %v6432 = vpop.f32.mrb[0].mxu0
      %v6433 = vadd.f32 0.0, %v6432
      %v6434 = vpop.f32.mrb[0].mxu0
      %6435 = vmatprep.mubr.f32.mxu0 0.0
      %6436 = vmatmul.mubr.f32.gmra.mrb[0].mxu0 %v6250
      %v6437 = vpop.f32.mrb[0].mxu0
      %v6438 = vadd.f32 0.0, %v6437
      %v6439 = vpop.f32.mrb[0].mxu0
      %6440 = vmatprep.mubr.f32.mxu0 0.0
      %6441 = vmatmul.mubr.f32.gmra.mrb[0].mxu0 %v6253
      %v6442 = vpop.f32.mrb[0].mxu0
      %v6443 = vadd.f32 0.0, %v6442
      %v6444 = vpop.f32.mrb[0].mxu0
      %6445 = vmatprep.mubr.f32.mxu0 0.0
      %6446 = vmatmul.mubr.f32.gmra.mrb[0].mxu0 %v6256
      %v6447 = vpop.f32.mrb[0].mxu0
      %v6448 = vadd.f32 0.0, %v6447
      %v6449 = vpop.f32.mrb[0].mxu0
      %6450 = vmatprep.mubr.f32.mxu0 0.0
      %6451 = vmatmul.mubr.f32.gmra.mrb[0].mxu0 %v6259
      %v6452 = vpop.f32.mrb[0].mxu0
      %v6453 = vadd.f32 0.0, %v6452
      %v6454 = vpop.f32.mrb[0].mxu0
      %6455 = vmatprep.mubr.f32.mxu0 0.0
      %6456 = vmatmul.mubr.f32.gmra.mrb[0].mxu0 %v6262
      %v6457 = vpop.f32.mrb[0].mxu0
      %v6458 = vadd.f32 0.0, %v6457
      %v6459 = vpop.f32.mrb[0].mxu0
      %6460 = vmatprep.mubr.f32.mxu0 0.0
      %6461 = vmatmul.mubr.f32.gmra.mrb[0].mxu0 %v6265
      %v6462 = vpop.f32.mrb[0].mxu0
      %v6463 = vadd.f32 0.0, %v6462
      %v6464 = vpop.f32.mrb[0].mxu0
      %6465 = vmatprep.mubr.f32.mxu0 0.0
      %6466 = vmatmul.mubr.f32.gmra.mrb[0].mxu0 %v6268
      %v6467 = vpop.f32.mrb[0].mxu0
      %v6468 = vadd.f32 0.0, %v6467
      %v6469 = vpop.f32.mrb[0].mxu0
      %6470 = vmatprep.mubr.f32.mxu0 0.0
      %6471 = vmatmul.mubr.f32.gmra.mrb[0].mxu0 %v6271
      %v6472 = vpop.f32.mrb[0].mxu0
      %v6473 = vadd.f32 0.0, %v6472
      %v6474 = vpop.f32.mrb[0].mxu0
      %6475 = vmatprep.mubr.f32.mxu0 0.0
      %6476 = vmatmul.mubr.f32.gmra.mrb[0].mxu0 %v6274
      %v6477 = vpop.f32.mrb[0].mxu0
      %v6478 = vadd.f32 0.0, %v6477
      %v6479 = vpop.f32.mrb[0].mxu0
      %6480 = vmatprep.mubr.f32.mxu0 0.0
      %6481 = vmatmul.mubr.f32.gmra.mrb[0].mxu0 %v6277
      %v6482 = vpop.f32.mrb[0].mxu0
      %v6483 = vadd.f32 0.0, %v6482
      %v6484 = vpop.f32.mrb[0].mxu0
      %6485 = vmatprep.mubr.f32.mxu0 0.0
      %6486 = vmatmul.mubr.f32.gmra.mrb[0].mxu0 %v6280
      %v6487 = vpop.f32.mrb[0].mxu0
      %v6488 = vadd.f32 0.0, %v6487
      %v6489 = vpop.f32.mrb[0].mxu0
      %6490 = vmatprep.mubr.f32.mxu0 0.0
      %6491 = vmatmul.mubr.f32.gmra.mrb[0].mxu0 %v6283
      %v6492 = vpop.f32.mrb[0].mxu0
      %v6493 = vadd.f32 0.0, %v6492
      %v6494 = vpop.f32.mrb[0].mxu0
      %6495 = vmatprep.mubr.f32.mxu0 0.0
      %6496 = vmatmul.mubr.f32.gmra.mrb[0].mxu0 %v6286
      %v6497 = vpop.f32.mrb[0].mxu0
      %v6498 = vadd.f32 0.0, %v6497
      %v6499 = vpop.f32.mrb[0].mxu0
      %6500 = vmatprep.mubr.f32.mxu0 0.0
      %6501 = vmatmul.mubr.f32.gmra.mrb[0].mxu0 %v6289
      %v6502 = vpop.f32.mrb[0].mxu0
      %v6503 = vadd.f32 0.0, %v6502
      %v6504 = vpop.f32.mrb[0].mxu0
      %6505 = vmatprep.mubr.f32.mxu0 0.0
      %6506 = vmatmul.mubr.f32.gmra.mrb[0].mxu0 %v6292
      %v6507 = vpop.f32.mrb[0].mxu0
      %v6508 = vadd.f32 0.0, %v6507
      %v6509 = vpop.f32.mrb[0].mxu0
      %6510 = vmatprep.mubr.f32.mxu0 0.0
      %6511 = vmatmul.mubr.f32.gmra.mrb[0].mxu0 %v6295
      %v6512 = vpop.f32.mrb[0].mxu0
      %v6513 = vadd.f32 0.0, %v6512
      %v6514 = vpop.f32.mrb[0].mxu0
      %6515 = vmatprep.mubr.f32.mxu0 0.0
      %6516 = vmatmul.mubr.f32.gmra.mrb[0].mxu0 %v6298
      %v6517 = vpop.f32.mrb[0].mxu0
      %v6518 = vadd.f32 0.0, %v6517
      %v6519 = vpop.f32.mrb[0].mxu0
      %6520 = vmatprep.mubr.f32.mxu0 0.0
      %6521 = vmatmul.mubr.f32.gmra.mrb[0].mxu0 %v6301
      %v6522 = vpop.f32.mrb[0].mxu0
      %v6523 = vadd.f32 0.0, %v6522
      %v6524 = vpop.f32.mrb[0].mxu0
      %6525 = vmatprep.mubr.f32.mxu0 0.0
      %6526 = vmatmul.mubr.f32.gmra.mrb[0].mxu0 %v6304
      %v6527 = vpop.f32.mrb[0].mxu0
      %v6528 = vadd.f32 0.0, %v6527
      %v6529 = vpop.f32.mrb[0].mxu0
      %6530 = vdwg.mxu0
      %v6531 = vadd.f32 %v6096, %v6373
      %v6532 = vadd.f32 %v6097, %v6378
      %v6533 = vadd.f32 %v6098, %v6383
      %v6534 = vadd.f32 %v6099, %v6388
      %v6535 = vadd.f32 %v6100, %v6393
      %v6536 = vadd.f32 %v6101, %v6398
      %v6537 = vadd.f32 %v6102, %v6403
      %v6538 = vadd.f32 %v6103, %v6408
      %v6539 = vadd.f32 %v6104, %v6413
      %v6540 = vadd.f32 %v6105, %v6418
      %v6541 = vadd.f32 %v6106, %v6423
      %v6542 = vadd.f32 %v6107, %v6428
      %v6543 = vadd.f32 %v6108, %v6433
      %v6544 = vadd.f32 %v6109, %v6438
      %v6545 = vadd.f32 %v6110, %v6443
      %v6546 = vadd.f32 %v6111, %v6448
      %v6547 = vadd.f32 %v6112, %v6453
      %v6548 = vadd.f32 %v6113, %v6458
      %v6549 = vadd.f32 %v6114, %v6463
      %v6550 = vadd.f32 %v6115, %v6468
      %v6551 = vadd.f32 %v6116, %v6473
      %v6552 = vadd.f32 %v6117, %v6478
      %v6553 = vadd.f32 %v6118, %v6483
      %v6554 = vadd.f32 %v6119, %v6488
      %v6555 = vadd.f32 %v6120, %v6493
      %v6556 = vadd.f32 %v6121, %v6498
      %v6557 = vadd.f32 %v6122, %v6503
      %v6558 = vadd.f32 %v6123, %v6508
      %v6559 = vadd.f32 %v6124, %v6513
      %v6560 = vadd.f32 %v6125, %v6518
      %v6561 = vadd.f32 %v6126, %v6523
      %v6562 = vadd.f32 %v6127, %v6528
      %s6563 = scalar_lea.vmem %s4, 40
      %v6564 = vld [vmem:[%s6563] sm:$0xff]
      %v6566 = vsel %vm279, %v6160, 0
      %v6569 = vsel %vm279, %v6161, 0
      %v6572 = vsel %vm279, %v6162, 0
      %v6575 = vsel %vm279, %v6163, 0
      %v6578 = vsel %vm279, %v6164, 0
      %v6581 = vsel %vm279, %v6165, 0
      %v6584 = vsel %vm279, %v6166, 0
      %v6587 = vsel %vm279, %v6167, 0
      %v6590 = vsel %vm279, %v6168, 0
      %v6593 = vsel %vm279, %v6169, 0
      %v6596 = vsel %vm279, %v6170, 0
      %v6599 = vsel %vm279, %v6171, 0
      %v6602 = vsel %vm279, %v6172, 0
      %v6605 = vsel %vm279, %v6173, 0
      %v6608 = vsel %vm279, %v6174, 0
      %v6611 = vsel %vm279, %v6175, 0
      %v6614 = vsel %vm279, %v6176, 0
      %v6617 = vsel %vm279, %v6177, 0
      %v6620 = vsel %vm279, %v6178, 0
      %v6623 = vsel %vm279, %v6179, 0
      %v6626 = vsel %vm279, %v6180, 0
      %v6629 = vsel %vm279, %v6181, 0
      %v6632 = vsel %vm279, %v6182, 0
      %v6635 = vsel %vm279, %v6183, 0
      %6637 = vmatprep.subr.mxu0 0.0
      %6638 = vmatpush1.msra.mxu0 %v6564
      %6639 = vmatprep.subr.mxu0 0.0
      %6640 = vmatpush1.msra.mxu0 0.0
      %6641 = vmatprep.subr.mxu0 0.0
      %6642 = vmatpush1.msra.mxu0 0.0
      %6643 = vmatprep.subr.mxu0 0.0
      %6644 = vmatpush1.msra.mxu0 0.0
      %6645 = vmatprep.subr.mxu0 0.0
      %6646 = vmatpush1.msra.mxu0 0.0
      %6647 = vmatprep.subr.mxu0 0.0
      %6648 = vmatpush1.msra.mxu0 0.0
      %6649 = vmatprep.subr.mxu0 0.0
      %6650 = vmatpush1.msra.mxu0 0.0
      %6651 = vmatprep.subr.mxu0 0.0
      %6652 = vmatpush1.msra.mxu0 0.0
      %6653 = vmatprep.subr.mxu0 0.0
      %6654 = vmatpush1.msra.mxu0 0.0
      %6655 = vmatprep.subr.mxu0 0.0
      %6656 = vmatpush1.msra.mxu0 0.0
      %6657 = vmatprep.subr.mxu0 0.0
      %6658 = vmatpush1.msra.mxu0 0.0
      %6659 = vmatprep.subr.mxu0 0.0
      %6660 = vmatpush1.msra.mxu0 0.0
      %6661 = vmatprep.subr.mxu0 0.0
      %6662 = vmatpush1.msra.mxu0 0.0
      %6663 = vmatprep.subr.mxu0 0.0
      %6664 = vmatpush1.msra.mxu0 0.0
      %6665 = vmatprep.subr.mxu0 0.0
      %6666 = vmatpush1.msra.mxu0 0.0
      %6667 = vmatprep.subr.mxu0 0.0
      %6668 = vmatpush1.msra.mxu0 0.0
      %6669 = vmatprep.subr.mxu0 0.0
      %6670 = vmatpush1.msra.mxu0 0.0
      %6671 = vmatprep.subr.mxu0 0.0
      %6672 = vmatpush1.msra.mxu0 0.0
      %6673 = vmatprep.subr.mxu0 0.0
      %6674 = vmatpush1.msra.mxu0 0.0
      %6675 = vmatprep.subr.mxu0 0.0
      %6676 = vmatpush1.msra.mxu0 0.0
      %6677 = vmatprep.subr.mxu0 0.0
      %6678 = vmatpush1.msra.mxu0 0.0
      %6679 = vmatprep.subr.mxu0 0.0
      %6680 = vmatpush1.msra.mxu0 0.0
      %6681 = vmatprep.subr.mxu0 0.0
      %6682 = vmatpush1.msra.mxu0 0.0
      %6683 = vmatprep.subr.mxu0 0.0
      %6684 = vmatpush1.msra.mxu0 0.0
      %6685 = vmatprep.subr.mxu0 0.0
      %6686 = vmatpush1.msra.mxu0 0.0
      %6687 = vmatprep.subr.mxu0 0.0
      %6688 = vmatpush1.msra.mxu0 0.0
      %6689 = vmatprep.subr.mxu0 0.0
      %6690 = vmatpush1.msra.mxu0 0.0
      %6691 = vmatprep.subr.mxu0 0.0
      %6692 = vmatpush1.msra.mxu0 0.0
      %6693 = vmatprep.subr.mxu0 0.0
      %6694 = vmatpush1.msra.mxu0 0.0
      %6695 = vmatprep.subr.mxu0 0.0
      %6696 = vmatpush1.msra.mxu0 0.0
      %6697 = vmatprep.subr.mxu0 0.0
      %6698 = vmatpush1.msra.mxu0 0.0
      %6699 = vmatprep.subr.mxu0 0.0
      %6700 = vmatpush1.msra.mxu0 0.0
      %6701 = vmatprep.mubr.f32.mxu0 0.0
      %6702 = vmatmul.mubr.f32.gmra.mrb[0].mxu0 %v6283
      %v6703 = vpop.f32.mrb[0].mxu0
      %v6704 = vadd.f32 0.0, %v6703
      %v6705 = vpop.f32.mrb[0].mxu0
      %6706 = vmatprep.mubr.f32.mxu0 0.0
      %6707 = vmatmul.mubr.f32.gmra.mrb[0].mxu0 %v6286
      %v6708 = vpop.f32.mrb[0].mxu0
      %v6709 = vadd.f32 0.0, %v6708
      %v6710 = vpop.f32.mrb[0].mxu0
      %6711 = vmatprep.mubr.f32.mxu0 0.0
      %6712 = vmatmul.mubr.f32.gmra.mrb[0].mxu0 %v6289
      %v6713 = vpop.f32.mrb[0].mxu0
      %v6714 = vadd.f32 0.0, %v6713
      %v6715 = vpop.f32.mrb[0].mxu0
      %6716 = vmatprep.mubr.f32.mxu0 0.0
      %6717 = vmatmul.mubr.f32.gmra.mrb[0].mxu0 %v6292
      %v6718 = vpop.f32.mrb[0].mxu0
      %v6719 = vadd.f32 0.0, %v6718
      %v6720 = vpop.f32.mrb[0].mxu0
      %6721 = vmatprep.mubr.f32.mxu0 0.0
      %6722 = vmatmul.mubr.f32.gmra.mrb[0].mxu0 %v6295
      %v6723 = vpop.f32.mrb[0].mxu0
      %v6724 = vadd.f32 0.0, %v6723
      %v6725 = vpop.f32.mrb[0].mxu0
      %6726 = vmatprep.mubr.f32.mxu0 0.0
      %6727 = vmatmul.mubr.f32.gmra.mrb[0].mxu0 %v6298
      %v6728 = vpop.f32.mrb[0].mxu0
      %v6729 = vadd.f32 0.0, %v6728
      %v6730 = vpop.f32.mrb[0].mxu0
      %6731 = vmatprep.mubr.f32.mxu0 0.0
      %6732 = vmatmul.mubr.f32.gmra.mrb[0].mxu0 %v6301
      %v6733 = vpop.f32.mrb[0].mxu0
      %v6734 = vadd.f32 0.0, %v6733
      %v6735 = vpop.f32.mrb[0].mxu0
      %6736 = vmatprep.mubr.f32.mxu0 0.0
      %6737 = vmatmul.mubr.f32.gmra.mrb[0].mxu0 %v6304
      %v6738 = vpop.f32.mrb[0].mxu0
      %v6739 = vadd.f32 0.0, %v6738
      %v6740 = vpop.f32.mrb[0].mxu0
      %6741 = vmatprep.mubr.f32.mxu0 0.0
      %6742 = vmatmul.mubr.f32.gmra.mrb[0].mxu0 %v6566
      %v6743 = vpop.f32.mrb[0].mxu0
      %v6744 = vadd.f32 0.0, %v6743
      %v6745 = vpop.f32.mrb[0].mxu0
      %6746 = vmatprep.mubr.f32.mxu0 0.0
      %6747 = vmatmul.mubr.f32.gmra.mrb[0].mxu0 %v6569
      %v6748 = vpop.f32.mrb[0].mxu0
      %v6749 = vadd.f32 0.0, %v6748
      %v6750 = vpop.f32.mrb[0].mxu0
      %6751 = vmatprep.mubr.f32.mxu0 0.0
      %6752 = vmatmul.mubr.f32.gmra.mrb[0].mxu0 %v6572
      %v6753 = vpop.f32.mrb[0].mxu0
      %v6754 = vadd.f32 0.0, %v6753
      %v6755 = vpop.f32.mrb[0].mxu0
      %6756 = vmatprep.mubr.f32.mxu0 0.0
      %6757 = vmatmul.mubr.f32.gmra.mrb[0].mxu0 %v6575
      %v6758 = vpop.f32.mrb[0].mxu0
      %v6759 = vadd.f32 0.0, %v6758
      %v6760 = vpop.f32.mrb[0].mxu0
      %6761 = vmatprep.mubr.f32.mxu0 0.0
      %6762 = vmatmul.mubr.f32.gmra.mrb[0].mxu0 %v6578
      %v6763 = vpop.f32.mrb[0].mxu0
      %v6764 = vadd.f32 0.0, %v6763
      %v6765 = vpop.f32.mrb[0].mxu0
      %6766 = vmatprep.mubr.f32.mxu0 0.0
      %6767 = vmatmul.mubr.f32.gmra.mrb[0].mxu0 %v6581
      %v6768 = vpop.f32.mrb[0].mxu0
      %v6769 = vadd.f32 0.0, %v6768
      %v6770 = vpop.f32.mrb[0].mxu0
      %6771 = vmatprep.mubr.f32.mxu0 0.0
      %6772 = vmatmul.mubr.f32.gmra.mrb[0].mxu0 %v6584
      %v6773 = vpop.f32.mrb[0].mxu0
      %v6774 = vadd.f32 0.0, %v6773
      %v6775 = vpop.f32.mrb[0].mxu0
      %6776 = vmatprep.mubr.f32.mxu0 0.0
      %6777 = vmatmul.mubr.f32.gmra.mrb[0].mxu0 %v6587
      %v6778 = vpop.f32.mrb[0].mxu0
      %v6779 = vadd.f32 0.0, %v6778
      %v6780 = vpop.f32.mrb[0].mxu0
      %6781 = vmatprep.mubr.f32.mxu0 0.0
      %6782 = vmatmul.mubr.f32.gmra.mrb[0].mxu0 %v6590
      %v6783 = vpop.f32.mrb[0].mxu0
      %v6784 = vadd.f32 0.0, %v6783
      %v6785 = vpop.f32.mrb[0].mxu0
      %6786 = vmatprep.mubr.f32.mxu0 0.0
      %6787 = vmatmul.mubr.f32.gmra.mrb[0].mxu0 %v6593
      %v6788 = vpop.f32.mrb[0].mxu0
      %v6789 = vadd.f32 0.0, %v6788
      %v6790 = vpop.f32.mrb[0].mxu0
      %6791 = vmatprep.mubr.f32.mxu0 0.0
      %6792 = vmatmul.mubr.f32.gmra.mrb[0].mxu0 %v6596
      %v6793 = vpop.f32.mrb[0].mxu0
      %v6794 = vadd.f32 0.0, %v6793
      %v6795 = vpop.f32.mrb[0].mxu0
      %6796 = vmatprep.mubr.f32.mxu0 0.0
      %6797 = vmatmul.mubr.f32.gmra.mrb[0].mxu0 %v6599
      %v6798 = vpop.f32.mrb[0].mxu0
      %v6799 = vadd.f32 0.0, %v6798
      %v6800 = vpop.f32.mrb[0].mxu0
      %6801 = vmatprep.mubr.f32.mxu0 0.0
      %6802 = vmatmul.mubr.f32.gmra.mrb[0].mxu0 %v6602
      %v6803 = vpop.f32.mrb[0].mxu0
      %v6804 = vadd.f32 0.0, %v6803
      %v6805 = vpop.f32.mrb[0].mxu0
      %6806 = vmatprep.mubr.f32.mxu0 0.0
      %6807 = vmatmul.mubr.f32.gmra.mrb[0].mxu0 %v6605
      %v6808 = vpop.f32.mrb[0].mxu0
      %v6809 = vadd.f32 0.0, %v6808
      %v6810 = vpop.f32.mrb[0].mxu0
      %6811 = vmatprep.mubr.f32.mxu0 0.0
      %6812 = vmatmul.mubr.f32.gmra.mrb[0].mxu0 %v6608
      %v6813 = vpop.f32.mrb[0].mxu0
      %v6814 = vadd.f32 0.0, %v6813
      %v6815 = vpop.f32.mrb[0].mxu0
      %6816 = vmatprep.mubr.f32.mxu0 0.0
      %6817 = vmatmul.mubr.f32.gmra.mrb[0].mxu0 %v6611
      %v6818 = vpop.f32.mrb[0].mxu0
      %v6819 = vadd.f32 0.0, %v6818
      %v6820 = vpop.f32.mrb[0].mxu0
      %6821 = vmatprep.mubr.f32.mxu0 0.0
      %6822 = vmatmul.mubr.f32.gmra.mrb[0].mxu0 %v6614
      %v6823 = vpop.f32.mrb[0].mxu0
      %v6824 = vadd.f32 0.0, %v6823
      %v6825 = vpop.f32.mrb[0].mxu0
      %6826 = vmatprep.mubr.f32.mxu0 0.0
      %6827 = vmatmul.mubr.f32.gmra.mrb[0].mxu0 %v6617
      %v6828 = vpop.f32.mrb[0].mxu0
      %v6829 = vadd.f32 0.0, %v6828
      %v6830 = vpop.f32.mrb[0].mxu0
      %6831 = vmatprep.mubr.f32.mxu0 0.0
      %6832 = vmatmul.mubr.f32.gmra.mrb[0].mxu0 %v6620
      %v6833 = vpop.f32.mrb[0].mxu0
      %v6834 = vadd.f32 0.0, %v6833
      %v6835 = vpop.f32.mrb[0].mxu0
      %6836 = vmatprep.mubr.f32.mxu0 0.0
      %6837 = vmatmul.mubr.f32.gmra.mrb[0].mxu0 %v6623
      %v6838 = vpop.f32.mrb[0].mxu0
      %v6839 = vadd.f32 0.0, %v6838
      %v6840 = vpop.f32.mrb[0].mxu0
      %6841 = vmatprep.mubr.f32.mxu0 0.0
      %6842 = vmatmul.mubr.f32.gmra.mrb[0].mxu0 %v6626
      %v6843 = vpop.f32.mrb[0].mxu0
      %v6844 = vadd.f32 0.0, %v6843
      %v6845 = vpop.f32.mrb[0].mxu0
      %6846 = vmatprep.mubr.f32.mxu0 0.0
      %6847 = vmatmul.mubr.f32.gmra.mrb[0].mxu0 %v6629
      %v6848 = vpop.f32.mrb[0].mxu0
      %v6849 = vadd.f32 0.0, %v6848
      %v6850 = vpop.f32.mrb[0].mxu0
      %6851 = vmatprep.mubr.f32.mxu0 0.0
      %6852 = vmatmul.mubr.f32.gmra.mrb[0].mxu0 %v6632
      %v6853 = vpop.f32.mrb[0].mxu0
      %v6854 = vadd.f32 0.0, %v6853
      %v6855 = vpop.f32.mrb[0].mxu0
      %6856 = vmatprep.mubr.f32.mxu0 0.0
      %6857 = vmatmul.mubr.f32.gmra.mrb[0].mxu0 %v6635
      %v6858 = vpop.f32.mrb[0].mxu0
      %v6859 = vadd.f32 0.0, %v6858
      %v6860 = vpop.f32.mrb[0].mxu0
      %6861 = vdwg.mxu0
      %v6862 = vadd.f32 %v6531, %v6704
      %v6863 = vadd.f32 %v6532, %v6709
      %v6864 = vadd.f32 %v6533, %v6714
      %v6865 = vadd.f32 %v6534, %v6719
      %v6866 = vadd.f32 %v6535, %v6724
      %v6867 = vadd.f32 %v6536, %v6729
      %v6868 = vadd.f32 %v6537, %v6734
      %v6869 = vadd.f32 %v6538, %v6739
      %v6870 = vadd.f32 %v6539, %v6744
      %v6871 = vadd.f32 %v6540, %v6749
      %v6872 = vadd.f32 %v6541, %v6754
      %v6873 = vadd.f32 %v6542, %v6759
      %v6874 = vadd.f32 %v6543, %v6764
      %v6875 = vadd.f32 %v6544, %v6769
      %v6876 = vadd.f32 %v6545, %v6774
      %v6877 = vadd.f32 %v6546, %v6779
      %v6878 = vadd.f32 %v6547, %v6784
      %v6879 = vadd.f32 %v6548, %v6789
      %v6880 = vadd.f32 %v6549, %v6794
      %v6881 = vadd.f32 %v6550, %v6799
      %v6882 = vadd.f32 %v6551, %v6804
      %v6883 = vadd.f32 %v6552, %v6809
      %v6884 = vadd.f32 %v6553, %v6814
      %v6885 = vadd.f32 %v6554, %v6819
      %v6886 = vadd.f32 %v6555, %v6824
      %v6887 = vadd.f32 %v6556, %v6829
      %v6888 = vadd.f32 %v6557, %v6834
      %v6889 = vadd.f32 %v6558, %v6839
      %v6890 = vadd.f32 %v6559, %v6844
      %v6891 = vadd.f32 %v6560, %v6849
      %v6892 = vadd.f32 %v6561, %v6854
      %v6893 = vadd.f32 %v6562, %v6859
      %s6894 = scalar_lea.vmem %s4, 64
      %v6895 = vld [vmem:[%s6894] sm:$0xff]
      %v6897 = vsel %vm279, %v6184, 0
      %v6900 = vsel %vm279, %v6185, 0
      %v6903 = vsel %vm279, %v6186, 0
      %v6906 = vsel %vm279, %v6187, 0
      %v6909 = vsel %vm279, %v6188, 0
      %v6912 = vsel %vm279, %v6189, 0
      %v6915 = vsel %vm279, %v6190, 0
      %v6918 = vsel %vm279, %v6191, 0
      %v6921 = vsel %vm279, %v6192, 0
      %v6924 = vsel %vm279, %v6193, 0
      %v6927 = vsel %vm279, %v6194, 0
      %v6930 = vsel %vm279, %v6195, 0
      %v6933 = vsel %vm279, %v6196, 0
      %v6936 = vsel %vm279, %v6197, 0
      %v6939 = vsel %vm279, %v6198, 0
      %v6942 = vsel %vm279, %v6199, 0
      %v6945 = vsel %vm279, %v6200, 0
      %v6948 = vsel %vm279, %v6201, 0
      %v6951 = vsel %vm279, %v6202, 0
      %v6954 = vsel %vm279, %v6203, 0
      %v6957 = vsel %vm279, %v6204, 0
      %v6960 = vsel %vm279, %v6205, 0
      %v6963 = vsel %vm279, %v6206, 0
      %v6966 = vsel %vm279, %v6207, 0
      %6968 = vmatprep.subr.mxu0 0.0
      %6969 = vmatpush1.msra.mxu0 %v6895
      %6970 = vmatprep.subr.mxu0 0.0
      %6971 = vmatpush1.msra.mxu0 0.0
      %6972 = vmatprep.subr.mxu0 0.0
      %6973 = vmatpush1.msra.mxu0 0.0
      %6974 = vmatprep.subr.mxu0 0.0
      %6975 = vmatpush1.msra.mxu0 0.0
      %6976 = vmatprep.subr.mxu0 0.0
      %6977 = vmatpush1.msra.mxu0 0.0
      %6978 = vmatprep.subr.mxu0 0.0
      %6979 = vmatpush1.msra.mxu0 0.0
      %6980 = vmatprep.subr.mxu0 0.0
      %6981 = vmatpush1.msra.mxu0 0.0
      %6982 = vmatprep.subr.mxu0 0.0
      %6983 = vmatpush1.msra.mxu0 0.0
      %6984 = vmatprep.subr.mxu0 0.0
      %6985 = vmatpush1.msra.mxu0 0.0
      %6986 = vmatprep.subr.mxu0 0.0
      %6987 = vmatpush1.msra.mxu0 0.0
      %6988 = vmatprep.subr.mxu0 0.0
      %6989 = vmatpush1.msra.mxu0 0.0
      %6990 = vmatprep.subr.mxu0 0.0
      %6991 = vmatpush1.msra.mxu0 0.0
      %6992 = vmatprep.subr.mxu0 0.0
      %6993 = vmatpush1.msra.mxu0 0.0
      %6994 = vmatprep.subr.mxu0 0.0
      %6995 = vmatpush1.msra.mxu0 0.0
      %6996 = vmatprep.subr.mxu0 0.0
      %6997 = vmatpush1.msra.mxu0 0.0
      %6998 = vmatprep.subr.mxu0 0.0
      %6999 = vmatpush1.msra.mxu0 0.0
      %7000 = vmatprep.subr.mxu0 0.0
      %7001 = vmatpush1.msra.mxu0 0.0
      %7002 = vmatprep.subr.mxu0 0.0
      %7003 = vmatpush1.msra.mxu0 0.0
      %7004 = vmatprep.subr.mxu0 0.0
      %7005 = vmatpush1.msra.mxu0 0.0
      %7006 = vmatprep.subr.mxu0 0.0
      %7007 = vmatpush1.msra.mxu0 0.0
      %7008 = vmatprep.subr.mxu0 0.0
      %7009 = vmatpush1.msra.mxu0 0.0
      %7010 = vmatprep.subr.mxu0 0.0
      %7011 = vmatpush1.msra.mxu0 0.0
      %7012 = vmatprep.subr.mxu0 0.0
      %7013 = vmatpush1.msra.mxu0 0.0
      %7014 = vmatprep.subr.mxu0 0.0
      %7015 = vmatpush1.msra.mxu0 0.0
      %7016 = vmatprep.subr.mxu0 0.0
      %7017 = vmatpush1.msra.mxu0 0.0
      %7018 = vmatprep.subr.mxu0 0.0
      %7019 = vmatpush1.msra.mxu0 0.0
      %7020 = vmatprep.subr.mxu0 0.0
      %7021 = vmatpush1.msra.mxu0 0.0
      %7022 = vmatprep.subr.mxu0 0.0
      %7023 = vmatpush1.msra.mxu0 0.0
      %7024 = vmatprep.subr.mxu0 0.0
      %7025 = vmatpush1.msra.mxu0 0.0
      %7026 = vmatprep.subr.mxu0 0.0
      %7027 = vmatpush1.msra.mxu0 0.0
      %7028 = vmatprep.subr.mxu0 0.0
      %7029 = vmatpush1.msra.mxu0 0.0
      %7030 = vmatprep.subr.mxu0 0.0
      %7031 = vmatpush1.msra.mxu0 0.0
      %7032 = vmatprep.mubr.f32.mxu0 0.0
      %7033 = vmatmul.mubr.f32.gmra.mrb[0].mxu0 %v6614
      %v7034 = vpop.f32.mrb[0].mxu0
      %v7035 = vadd.f32 0.0, %v7034
      %v7036 = vpop.f32.mrb[0].mxu0
      %7037 = vmatprep.mubr.f32.mxu0 0.0
      %7038 = vmatmul.mubr.f32.gmra.mrb[0].mxu0 %v6617
      %v7039 = vpop.f32.mrb[0].mxu0
      %v7040 = vadd.f32 0.0, %v7039
      %v7041 = vpop.f32.mrb[0].mxu0
      %7042 = vmatprep.mubr.f32.mxu0 0.0
      %7043 = vmatmul.mubr.f32.gmra.mrb[0].mxu0 %v6620
      %v7044 = vpop.f32.mrb[0].mxu0
      %v7045 = vadd.f32 0.0, %v7044
      %v7046 = vpop.f32.mrb[0].mxu0
      %7047 = vmatprep.mubr.f32.mxu0 0.0
      %7048 = vmatmul.mubr.f32.gmra.mrb[0].mxu0 %v6623
      %v7049 = vpop.f32.mrb[0].mxu0
      %v7050 = vadd.f32 0.0, %v7049
      %v7051 = vpop.f32.mrb[0].mxu0
      %7052 = vmatprep.mubr.f32.mxu0 0.0
      %7053 = vmatmul.mubr.f32.gmra.mrb[0].mxu0 %v6626
      %v7054 = vpop.f32.mrb[0].mxu0
      %v7055 = vadd.f32 0.0, %v7054
      %v7056 = vpop.f32.mrb[0].mxu0
      %7057 = vmatprep.mubr.f32.mxu0 0.0
      %7058 = vmatmul.mubr.f32.gmra.mrb[0].mxu0 %v6629
      %v7059 = vpop.f32.mrb[0].mxu0
      %v7060 = vadd.f32 0.0, %v7059
      %v7061 = vpop.f32.mrb[0].mxu0
      %7062 = vmatprep.mubr.f32.mxu0 0.0
      %7063 = vmatmul.mubr.f32.gmra.mrb[0].mxu0 %v6632
      %v7064 = vpop.f32.mrb[0].mxu0
      %v7065 = vadd.f32 0.0, %v7064
      %v7066 = vpop.f32.mrb[0].mxu0
      %7067 = vmatprep.mubr.f32.mxu0 0.0
      %7068 = vmatmul.mubr.f32.gmra.mrb[0].mxu0 %v6635
      %v7069 = vpop.f32.mrb[0].mxu0
      %v7070 = vadd.f32 0.0, %v7069
      %v7071 = vpop.f32.mrb[0].mxu0
      %7072 = vmatprep.mubr.f32.mxu0 0.0
      %7073 = vmatmul.mubr.f32.gmra.mrb[0].mxu0 %v6897
      %v7074 = vpop.f32.mrb[0].mxu0
      %v7075 = vadd.f32 0.0, %v7074
      %v7076 = vpop.f32.mrb[0].mxu0
      %7077 = vmatprep.mubr.f32.mxu0 0.0
      %7078 = vmatmul.mubr.f32.gmra.mrb[0].mxu0 %v6900
      %v7079 = vpop.f32.mrb[0].mxu0
      %v7080 = vadd.f32 0.0, %v7079
      %v7081 = vpop.f32.mrb[0].mxu0
      %7082 = vmatprep.mubr.f32.mxu0 0.0
      %7083 = vmatmul.mubr.f32.gmra.mrb[0].mxu0 %v6903
      %v7084 = vpop.f32.mrb[0].mxu0
      %v7085 = vadd.f32 0.0, %v7084
      %v7086 = vpop.f32.mrb[0].mxu0
      %7087 = vmatprep.mubr.f32.mxu0 0.0
      %7088 = vmatmul.mubr.f32.gmra.mrb[0].mxu0 %v6906
      %v7089 = vpop.f32.mrb[0].mxu0
      %v7090 = vadd.f32 0.0, %v7089
      %v7091 = vpop.f32.mrb[0].mxu0
      %7092 = vmatprep.mubr.f32.mxu0 0.0
      %7093 = vmatmul.mubr.f32.gmra.mrb[0].mxu0 %v6909
      %v7094 = vpop.f32.mrb[0].mxu0
      %v7095 = vadd.f32 0.0, %v7094
      %v7096 = vpop.f32.mrb[0].mxu0
      %7097 = vmatprep.mubr.f32.mxu0 0.0
      %7098 = vmatmul.mubr.f32.gmra.mrb[0].mxu0 %v6912
      %v7099 = vpop.f32.mrb[0].mxu0
      %v7100 = vadd.f32 0.0, %v7099
      %v7101 = vpop.f32.mrb[0].mxu0
      %7102 = vmatprep.mubr.f32.mxu0 0.0
      %7103 = vmatmul.mubr.f32.gmra.mrb[0].mxu0 %v6915
      %v7104 = vpop.f32.mrb[0].mxu0
      %v7105 = vadd.f32 0.0, %v7104
      %v7106 = vpop.f32.mrb[0].mxu0
      %7107 = vmatprep.mubr.f32.mxu0 0.0
      %7108 = vmatmul.mubr.f32.gmra.mrb[0].mxu0 %v6918
      %v7109 = vpop.f32.mrb[0].mxu0
      %v7110 = vadd.f32 0.0, %v7109
      %v7111 = vpop.f32.mrb[0].mxu0
      %7112 = vmatprep.mubr.f32.mxu0 0.0
      %7113 = vmatmul.mubr.f32.gmra.mrb[0].mxu0 %v6921
      %v7114 = vpop.f32.mrb[0].mxu0
      %v7115 = vadd.f32 0.0, %v7114
      %v7116 = vpop.f32.mrb[0].mxu0
      %7117 = vmatprep.mubr.f32.mxu0 0.0
      %7118 = vmatmul.mubr.f32.gmra.mrb[0].mxu0 %v6924
      %v7119 = vpop.f32.mrb[0].mxu0
      %v7120 = vadd.f32 0.0, %v7119
      %v7121 = vpop.f32.mrb[0].mxu0
      %7122 = vmatprep.mubr.f32.mxu0 0.0
      %7123 = vmatmul.mubr.f32.gmra.mrb[0].mxu0 %v6927
      %v7124 = vpop.f32.mrb[0].mxu0
      %v7125 = vadd.f32 0.0, %v7124
      %v7126 = vpop.f32.mrb[0].mxu0
      %7127 = vmatprep.mubr.f32.mxu0 0.0
      %7128 = vmatmul.mubr.f32.gmra.mrb[0].mxu0 %v6930
      %v7129 = vpop.f32.mrb[0].mxu0
      %v7130 = vadd.f32 0.0, %v7129
      %v7131 = vpop.f32.mrb[0].mxu0
      %7132 = vmatprep.mubr.f32.mxu0 0.0
      %7133 = vmatmul.mubr.f32.gmra.mrb[0].mxu0 %v6933
      %v7134 = vpop.f32.mrb[0].mxu0
      %v7135 = vadd.f32 0.0, %v7134
      %v7136 = vpop.f32.mrb[0].mxu0
      %7137 = vmatprep.mubr.f32.mxu0 0.0
      %7138 = vmatmul.mubr.f32.gmra.mrb[0].mxu0 %v6936
      %v7139 = vpop.f32.mrb[0].mxu0
      %v7140 = vadd.f32 0.0, %v7139
      %v7141 = vpop.f32.mrb[0].mxu0
      %7142 = vmatprep.mubr.f32.mxu0 0.0
      %7143 = vmatmul.mubr.f32.gmra.mrb[0].mxu0 %v6939
      %v7144 = vpop.f32.mrb[0].mxu0
      %v7145 = vadd.f32 0.0, %v7144
      %v7146 = vpop.f32.mrb[0].mxu0
      %7147 = vmatprep.mubr.f32.mxu0 0.0
      %7148 = vmatmul.mubr.f32.gmra.mrb[0].mxu0 %v6942
      %v7149 = vpop.f32.mrb[0].mxu0
      %v7150 = vadd.f32 0.0, %v7149
      %v7151 = vpop.f32.mrb[0].mxu0
      %7152 = vmatprep.mubr.f32.mxu0 0.0
      %7153 = vmatmul.mubr.f32.gmra.mrb[0].mxu0 %v6945
      %v7154 = vpop.f32.mrb[0].mxu0
      %v7155 = vadd.f32 0.0, %v7154
      %v7156 = vpop.f32.mrb[0].mxu0
      %7157 = vmatprep.mubr.f32.mxu0 0.0
      %7158 = vmatmul.mubr.f32.gmra.mrb[0].mxu0 %v6948
      %v7159 = vpop.f32.mrb[0].mxu0
      %v7160 = vadd.f32 0.0, %v7159
      %v7161 = vpop.f32.mrb[0].mxu0
      %7162 = vmatprep.mubr.f32.mxu0 0.0
      %7163 = vmatmul.mubr.f32.gmra.mrb[0].mxu0 %v6951
      %v7164 = vpop.f32.mrb[0].mxu0
      %v7165 = vadd.f32 0.0, %v7164
      %v7166 = vpop.f32.mrb[0].mxu0
      %7167 = vmatprep.mubr.f32.mxu0 0.0
      %7168 = vmatmul.mubr.f32.gmra.mrb[0].mxu0 %v6954
      %v7169 = vpop.f32.mrb[0].mxu0
      %v7170 = vadd.f32 0.0, %v7169
      %v7171 = vpop.f32.mrb[0].mxu0
      %7172 = vmatprep.mubr.f32.mxu0 0.0
      %7173 = vmatmul.mubr.f32.gmra.mrb[0].mxu0 %v6957
      %v7174 = vpop.f32.mrb[0].mxu0
      %v7175 = vadd.f32 0.0, %v7174
      %v7176 = vpop.f32.mrb[0].mxu0
      %7177 = vmatprep.mubr.f32.mxu0 0.0
      %7178 = vmatmul.mubr.f32.gmra.mrb[0].mxu0 %v6960
      %v7179 = vpop.f32.mrb[0].mxu0
      %v7180 = vadd.f32 0.0, %v7179
      %v7181 = vpop.f32.mrb[0].mxu0
      %7182 = vmatprep.mubr.f32.mxu0 0.0
      %7183 = vmatmul.mubr.f32.gmra.mrb[0].mxu0 %v6963
      %v7184 = vpop.f32.mrb[0].mxu0
      %v7185 = vadd.f32 0.0, %v7184
      %v7186 = vpop.f32.mrb[0].mxu0
      %7187 = vmatprep.mubr.f32.mxu0 0.0
      %7188 = vmatmul.mubr.f32.gmra.mrb[0].mxu0 %v6966
      %v7189 = vpop.f32.mrb[0].mxu0
      %v7190 = vadd.f32 0.0, %v7189
      %v7191 = vpop.f32.mrb[0].mxu0
      %7192 = vdwg.mxu0
      %v7193 = vadd.f32 %v6862, %v7035
      %v7194 = vadd.f32 %v6863, %v7040
      %v7195 = vadd.f32 %v6864, %v7045
      %v7196 = vadd.f32 %v6865, %v7050
      %v7197 = vadd.f32 %v6866, %v7055
      %v7198 = vadd.f32 %v6867, %v7060
      %v7199 = vadd.f32 %v6868, %v7065
      %v7200 = vadd.f32 %v6869, %v7070
      %v7201 = vadd.f32 %v6870, %v7075
      %v7202 = vadd.f32 %v6871, %v7080
      %v7203 = vadd.f32 %v6872, %v7085
      %v7204 = vadd.f32 %v6873, %v7090
      %v7205 = vadd.f32 %v6874, %v7095
      %v7206 = vadd.f32 %v6875, %v7100
      %v7207 = vadd.f32 %v6876, %v7105
      %v7208 = vadd.f32 %v6877, %v7110
      %v7209 = vadd.f32 %v6878, %v7115
      %v7210 = vadd.f32 %v6879, %v7120
      %v7211 = vadd.f32 %v6880, %v7125
      %v7212 = vadd.f32 %v6881, %v7130
      %v7213 = vadd.f32 %v6882, %v7135
      %v7214 = vadd.f32 %v6883, %v7140
      %v7215 = vadd.f32 %v6884, %v7145
      %v7216 = vadd.f32 %v6885, %v7150
      %v7217 = vadd.f32 %v6886, %v7155
      %v7218 = vadd.f32 %v6887, %v7160
      %v7219 = vadd.f32 %v6888, %v7165
      %v7220 = vadd.f32 %v6889, %v7170
      %v7221 = vadd.f32 %v6890, %v7175
      %v7222 = vadd.f32 %v6891, %v7180
      %v7223 = vadd.f32 %v6892, %v7185
      %v7224 = vadd.f32 %v6893, %v7190
      %v7225 = vld [vmem:[#allocation2] sm:$0xff]
      %v7226 = vld [vmem:[#allocation2 + $0x8] sm:$0xff]
      %v7227 = vld [vmem:[#allocation2 + $0x38] sm:$0xff]
      %v7228 = vld [vmem:[#allocation2 + $0x40] sm:$0xff]
      %v7229 = vld [vmem:[#allocation2 + $0x70] sm:$0xff]
      %v7230 = vld [vmem:[#allocation2 + $0x78] sm:$0xff]
      %v7231 = vld [vmem:[#allocation2 + $0xa8] sm:$0xff]
      %v7232 = vld [vmem:[#allocation2 + $0xb0] sm:$0xff]
      %v7233 = vld [vmem:[#allocation2 + $0xe0] sm:$0xff]
      %v7234 = vld [vmem:[#allocation2 + $0xe8] sm:$0xff]
      %v7235 = vld [vmem:[#allocation2 + $0x118] sm:$0xff]
      %v7236 = vld [vmem:[#allocation2 + $0x120] sm:$0xff]
      %v7237 = vld [vmem:[#allocation2 + $0x150] sm:$0xff]
      %v7238 = vld [vmem:[#allocation2 + $0x158] sm:$0xff]
      %v7239 = vld [vmem:[#allocation2 + $0x188] sm:$0xff]
      %v7240 = vld [vmem:[#allocation2 + $0x190] sm:$0xff]
      %v7241 = vld [vmem:[#allocation2 + $0x1c0] sm:$0xff]
      %v7242 = vld [vmem:[#allocation2 + $0x1c8] sm:$0xff]
      %v7243 = vld [vmem:[#allocation2 + $0x1f8] sm:$0xff]
      %v7244 = vld [vmem:[#allocation2 + $0x200] sm:$0xff]
      %v7245 = vld [vmem:[#allocation2 + $0x230] sm:$0xff]
      %v7246 = vld [vmem:[#allocation2 + $0x238] sm:$0xff]
      %v7247 = vld [vmem:[#allocation2 + $0x268] sm:$0xff]
      %v7248 = vld [vmem:[#allocation2 + $0x270] sm:$0xff]
      %v7249 = vld [vmem:[#allocation2 + $0x2a0] sm:$0xff]
      %v7250 = vld [vmem:[#allocation2 + $0x2a8] sm:$0xff]
      %v7251 = vld [vmem:[#allocation2 + $0x2d8] sm:$0xff]
      %v7252 = vld [vmem:[#allocation2 + $0x2e0] sm:$0xff]
      %v7253 = vld [vmem:[#allocation2 + $0x310] sm:$0xff]
      %v7254 = vld [vmem:[#allocation2 + $0x318] sm:$0xff]
      %v7255 = vld [vmem:[#allocation2 + $0x348] sm:$0xff]
      %v7256 = vld [vmem:[#allocation2 + $0x350] sm:$0xff]
      %v7257 = vld [vmem:[#allocation2 + $0x3f0] sm:$0xff]
      %v7258 = vld [vmem:[#allocation2 + $0x3f8] sm:$0xff]
      %v7259 = vld [vmem:[#allocation2 + $0x428] sm:$0xff]
      %v7260 = vld [vmem:[#allocation2 + $0x430] sm:$0xff]
      %v7261 = vld [vmem:[#allocation2 + $0x460] sm:$0xff]
      %v7262 = vld [vmem:[#allocation2 + $0x468] sm:$0xff]
      %v7263 = vld [vmem:[#allocation2 + $0x498] sm:$0xff]
      %v7264 = vld [vmem:[#allocation2 + $0x4a0] sm:$0xff]
      %v7265 = vld [vmem:[#allocation2 + $0x4d0] sm:$0xff]
      %v7266 = vld [vmem:[#allocation2 + $0x4d8] sm:$0xff]
      %v7267 = vld [vmem:[#allocation2 + $0x508] sm:$0xff]
      %v7268 = vld [vmem:[#allocation2 + $0x510] sm:$0xff]
      %v7269 = vld [vmem:[#allocation2 + $0x540] sm:$0xff]
      %v7270 = vld [vmem:[#allocation2 + $0x548] sm:$0xff]
      %v7271 = vld [vmem:[#allocation2 + $0x578] sm:$0xff]
      %v7272 = vld [vmem:[#allocation2 + $0x580] sm:$0xff]
      %v7273 = vld [vmem:[#allocation2 + $0x5b0] sm:$0xff]
      %v7274 = vld [vmem:[#allocation2 + $0x5b8] sm:$0xff]
      %v7275 = vld [vmem:[#allocation2 + $0x5e8] sm:$0xff]
      %v7276 = vld [vmem:[#allocation2 + $0x5f0] sm:$0xff]
      %v7277 = vld [vmem:[#allocation2 + $0x620] sm:$0xff]
      %v7278 = vld [vmem:[#allocation2 + $0x628] sm:$0xff]
      %v7279 = vld [vmem:[#allocation2 + $0x658] sm:$0xff]
      %v7280 = vld [vmem:[#allocation2 + $0x660] sm:$0xff]
      %v7281 = vld [vmem:[#allocation2 + $0x690] sm:$0xff]
      %v7282 = vld [vmem:[#allocation2 + $0x698] sm:$0xff]
      %v7283 = vld [vmem:[#allocation2 + $0x6c8] sm:$0xff]
      %v7284 = vld [vmem:[#allocation2 + $0x6d0] sm:$0xff]
      %v7285 = vld [vmem:[#allocation2 + $0x700] sm:$0xff]
      %v7286 = vld [vmem:[#allocation2 + $0x708] sm:$0xff]
      %v7287 = vld [vmem:[#allocation2 + $0x738] sm:$0xff]
      %v7288 = vld [vmem:[#allocation2 + $0x740] sm:$0xff]
      %v7289 = vld [vmem:[#allocation2 + $0x7e0] sm:$0xff]
      %v7290 = vld [vmem:[#allocation2 + $0x7e8] sm:$0xff]
      %v7291 = vld [vmem:[#allocation2 + $0x818] sm:$0xff]
      %v7292 = vld [vmem:[#allocation2 + $0x820] sm:$0xff]
      %v7293 = vld [vmem:[#allocation2 + $0x850] sm:$0xff]
      %v7294 = vld [vmem:[#allocation2 + $0x858] sm:$0xff]
      %v7295 = vld [vmem:[#allocation2 + $0x888] sm:$0xff]
      %v7296 = vld [vmem:[#allocation2 + $0x890] sm:$0xff]
      %v7297 = vld [vmem:[#allocation2 + $0x8c0] sm:$0xff]
      %v7298 = vld [vmem:[#allocation2 + $0x8c8] sm:$0xff]
      %v7299 = vld [vmem:[#allocation2 + $0x8f8] sm:$0xff]
      %v7300 = vld [vmem:[#allocation2 + $0x900] sm:$0xff]
      %v7301 = vld [vmem:[#allocation2 + $0x930] sm:$0xff]
      %v7302 = vld [vmem:[#allocation2 + $0x938] sm:$0xff]
      %v7303 = vld [vmem:[#allocation2 + $0x968] sm:$0xff]
      %v7304 = vld [vmem:[#allocation2 + $0x970] sm:$0xff]
      %v7305 = vld [vmem:[#allocation2 + $0x9a0] sm:$0xff]
      %v7306 = vld [vmem:[#allocation2 + $0x9a8] sm:$0xff]
      %v7307 = vld [vmem:[#allocation2 + $0x9d8] sm:$0xff]
      %v7308 = vld [vmem:[#allocation2 + $0x9e0] sm:$0xff]
      %v7309 = vld [vmem:[#allocation2 + $0xa10] sm:$0xff]
      %v7310 = vld [vmem:[#allocation2 + $0xa18] sm:$0xff]
      %v7311 = vld [vmem:[#allocation2 + $0xa48] sm:$0xff]
      %v7312 = vld [vmem:[#allocation2 + $0xa50] sm:$0xff]
      %v7313 = vld [vmem:[#allocation2 + $0xa80] sm:$0xff]
      %v7314 = vld [vmem:[#allocation2 + $0xa88] sm:$0xff]
      %v7315 = vld [vmem:[#allocation2 + $0xab8] sm:$0xff]
      %v7316 = vld [vmem:[#allocation2 + $0xac0] sm:$0xff]
      %v7317 = vld [vmem:[#allocation2 + $0xaf0] sm:$0xff]
      %v7318 = vld [vmem:[#allocation2 + $0xaf8] sm:$0xff]
      %v7319 = vld [vmem:[#allocation2 + $0xb28] sm:$0xff]
      %v7320 = vld [vmem:[#allocation2 + $0xb30] sm:$0xff]
      %v7321 = vld [vmem:[%s5] sm:$0xff]
      %v7323 = vsel %vm279, %v7225, 0
      %v7326 = vsel %vm279, %v7226, 0
      %v7329 = vsel %vm279, %v7227, 0
      %v7332 = vsel %vm279, %v7228, 0
      %v7335 = vsel %vm279, %v7229, 0
      %v7338 = vsel %vm279, %v7230, 0
      %v7341 = vsel %vm279, %v7231, 0
      %v7344 = vsel %vm279, %v7232, 0
      %v7347 = vsel %vm279, %v7233, 0
      %v7350 = vsel %vm279, %v7234, 0
      %v7353 = vsel %vm279, %v7235, 0
      %v7356 = vsel %vm279, %v7236, 0
      %v7359 = vsel %vm279, %v7237, 0
      %v7362 = vsel %vm279, %v7238, 0
      %v7365 = vsel %vm279, %v7239, 0
      %v7368 = vsel %vm279, %v7240, 0
      %v7371 = vsel %vm279, %v7241, 0
      %v7374 = vsel %vm279, %v7242, 0
      %v7377 = vsel %vm279, %v7243, 0
      %v7380 = vsel %vm279, %v7244, 0
      %v7383 = vsel %vm279, %v7245, 0
      %v7386 = vsel %vm279, %v7246, 0
      %v7389 = vsel %vm279, %v7247, 0
      %v7392 = vsel %vm279, %v7248, 0
      %v7395 = vsel %vm279, %v7249, 0
      %v7398 = vsel %vm279, %v7250, 0
      %v7401 = vsel %vm279, %v7251, 0
      %v7404 = vsel %vm279, %v7252, 0
      %v7407 = vsel %vm279, %v7253, 0
      %v7410 = vsel %vm279, %v7254, 0
      %v7413 = vsel %vm279, %v7255, 0
      %v7416 = vsel %vm279, %v7256, 0
      %7418 = vmatprep.subr.mxu0 0.0
      %7419 = vmatpush1.msra.mxu0 %v7321
      %7420 = vmatprep.subr.mxu0 0.0
      %7421 = vmatpush1.msra.mxu0 0.0
      %7422 = vmatprep.subr.mxu0 0.0
      %7423 = vmatpush1.msra.mxu0 0.0
      %7424 = vmatprep.subr.mxu0 0.0
      %7425 = vmatpush1.msra.mxu0 0.0
      %7426 = vmatprep.subr.mxu0 0.0
      %7427 = vmatpush1.msra.mxu0 0.0
      %7428 = vmatprep.subr.mxu0 0.0
      %7429 = vmatpush1.msra.mxu0 0.0
      %7430 = vmatprep.subr.mxu0 0.0
      %7431 = vmatpush1.msra.mxu0 0.0
      %7432 = vmatprep.subr.mxu0 0.0
      %7433 = vmatpush1.msra.mxu0 0.0
      %7434 = vmatprep.subr.mxu0 0.0
      %7435 = vmatpush1.msra.mxu0 0.0
      %7436 = vmatprep.subr.mxu0 0.0
      %7437 = vmatpush1.msra.mxu0 0.0
      %7438 = vmatprep.subr.mxu0 0.0
      %7439 = vmatpush1.msra.mxu0 0.0
      %7440 = vmatprep.subr.mxu0 0.0
      %7441 = vmatpush1.msra.mxu0 0.0
      %7442 = vmatprep.subr.mxu0 0.0
      %7443 = vmatpush1.msra.mxu0 0.0
      %7444 = vmatprep.subr.mxu0 0.0
      %7445 = vmatpush1.msra.mxu0 0.0
      %7446 = vmatprep.subr.mxu0 0.0
      %7447 = vmatpush1.msra.mxu0 0.0
      %7448 = vmatprep.subr.mxu0 0.0
      %7449 = vmatpush1.msra.mxu0 0.0
      %7450 = vmatprep.subr.mxu0 0.0
      %7451 = vmatpush1.msra.mxu0 0.0
      %7452 = vmatprep.subr.mxu0 0.0
      %7453 = vmatpush1.msra.mxu0 0.0
      %7454 = vmatprep.subr.mxu0 0.0
      %7455 = vmatpush1.msra.mxu0 0.0
      %7456 = vmatprep.subr.mxu0 0.0
      %7457 = vmatpush1.msra.mxu0 0.0
      %7458 = vmatprep.subr.mxu0 0.0
      %7459 = vmatpush1.msra.mxu0 0.0
      %7460 = vmatprep.subr.mxu0 0.0
      %7461 = vmatpush1.msra.mxu0 0.0
      %7462 = vmatprep.subr.mxu0 0.0
      %7463 = vmatpush1.msra.mxu0 0.0
      %7464 = vmatprep.subr.mxu0 0.0
      %7465 = vmatpush1.msra.mxu0 0.0
      %7466 = vmatprep.subr.mxu0 0.0
      %7467 = vmatpush1.msra.mxu0 0.0
      %7468 = vmatprep.subr.mxu0 0.0
      %7469 = vmatpush1.msra.mxu0 0.0
      %7470 = vmatprep.subr.mxu0 0.0
      %7471 = vmatpush1.msra.mxu0 0.0
      %7472 = vmatprep.subr.mxu0 0.0
      %7473 = vmatpush1.msra.mxu0 0.0
      %7474 = vmatprep.subr.mxu0 0.0
      %7475 = vmatpush1.msra.mxu0 0.0
      %7476 = vmatprep.subr.mxu0 0.0
      %7477 = vmatpush1.msra.mxu0 0.0
      %7478 = vmatprep.subr.mxu0 0.0
      %7479 = vmatpush1.msra.mxu0 0.0
      %7480 = vmatprep.subr.mxu0 0.0
      %7481 = vmatpush1.msra.mxu0 0.0
      %7482 = vmatprep.mubr.f32.mxu0 0.0
      %7483 = vmatmul.mubr.f32.gmra.mrb[0].mxu0 %v7323
      %v7484 = vpop.f32.mrb[0].mxu0
      %v7485 = vadd.f32 0.0, %v7484
      %v7486 = vpop.f32.mrb[0].mxu0
      %7487 = vmatprep.mubr.f32.mxu0 0.0
      %7488 = vmatmul.mubr.f32.gmra.mrb[0].mxu0 %v7326
      %v7489 = vpop.f32.mrb[0].mxu0
      %v7490 = vadd.f32 0.0, %v7489
      %v7491 = vpop.f32.mrb[0].mxu0
      %7492 = vmatprep.mubr.f32.mxu0 0.0
      %7493 = vmatmul.mubr.f32.gmra.mrb[0].mxu0 %v7329
      %v7494 = vpop.f32.mrb[0].mxu0
      %v7495 = vadd.f32 0.0, %v7494
      %v7496 = vpop.f32.mrb[0].mxu0
      %7497 = vmatprep.mubr.f32.mxu0 0.0
      %7498 = vmatmul.mubr.f32.gmra.mrb[0].mxu0 %v7332
      %v7499 = vpop.f32.mrb[0].mxu0
      %v7500 = vadd.f32 0.0, %v7499
      %v7501 = vpop.f32.mrb[0].mxu0
      %7502 = vmatprep.mubr.f32.mxu0 0.0
      %7503 = vmatmul.mubr.f32.gmra.mrb[0].mxu0 %v7335
      %v7504 = vpop.f32.mrb[0].mxu0
      %v7505 = vadd.f32 0.0, %v7504
      %v7506 = vpop.f32.mrb[0].mxu0
      %7507 = vmatprep.mubr.f32.mxu0 0.0
      %7508 = vmatmul.mubr.f32.gmra.mrb[0].mxu0 %v7338
      %v7509 = vpop.f32.mrb[0].mxu0
      %v7510 = vadd.f32 0.0, %v7509
      %v7511 = vpop.f32.mrb[0].mxu0
      %7512 = vmatprep.mubr.f32.mxu0 0.0
      %7513 = vmatmul.mubr.f32.gmra.mrb[0].mxu0 %v7341
      %v7514 = vpop.f32.mrb[0].mxu0
      %v7515 = vadd.f32 0.0, %v7514
      %v7516 = vpop.f32.mrb[0].mxu0
      %7517 = vmatprep.mubr.f32.mxu0 0.0
      %7518 = vmatmul.mubr.f32.gmra.mrb[0].mxu0 %v7344
      %v7519 = vpop.f32.mrb[0].mxu0
      %v7520 = vadd.f32 0.0, %v7519
      %v7521 = vpop.f32.mrb[0].mxu0
      %7522 = vmatprep.mubr.f32.mxu0 0.0
      %7523 = vmatmul.mubr.f32.gmra.mrb[0].mxu0 %v7347
      %v7524 = vpop.f32.mrb[0].mxu0
      %v7525 = vadd.f32 0.0, %v7524
      %v7526 = vpop.f32.mrb[0].mxu0
      %7527 = vmatprep.mubr.f32.mxu0 0.0
      %7528 = vmatmul.mubr.f32.gmra.mrb[0].mxu0 %v7350
      %v7529 = vpop.f32.mrb[0].mxu0
      %v7530 = vadd.f32 0.0, %v7529
      %v7531 = vpop.f32.mrb[0].mxu0
      %7532 = vmatprep.mubr.f32.mxu0 0.0
      %7533 = vmatmul.mubr.f32.gmra.mrb[0].mxu0 %v7353
      %v7534 = vpop.f32.mrb[0].mxu0
      %v7535 = vadd.f32 0.0, %v7534
      %v7536 = vpop.f32.mrb[0].mxu0
      %7537 = vmatprep.mubr.f32.mxu0 0.0
      %7538 = vmatmul.mubr.f32.gmra.mrb[0].mxu0 %v7356
      %v7539 = vpop.f32.mrb[0].mxu0
      %v7540 = vadd.f32 0.0, %v7539
      %v7541 = vpop.f32.mrb[0].mxu0
      %7542 = vmatprep.mubr.f32.mxu0 0.0
      %7543 = vmatmul.mubr.f32.gmra.mrb[0].mxu0 %v7359
      %v7544 = vpop.f32.mrb[0].mxu0
      %v7545 = vadd.f32 0.0, %v7544
      %v7546 = vpop.f32.mrb[0].mxu0
      %7547 = vmatprep.mubr.f32.mxu0 0.0
      %7548 = vmatmul.mubr.f32.gmra.mrb[0].mxu0 %v7362
      %v7549 = vpop.f32.mrb[0].mxu0
      %v7550 = vadd.f32 0.0, %v7549
      %v7551 = vpop.f32.mrb[0].mxu0
      %7552 = vmatprep.mubr.f32.mxu0 0.0
      %7553 = vmatmul.mubr.f32.gmra.mrb[0].mxu0 %v7365
      %v7554 = vpop.f32.mrb[0].mxu0
      %v7555 = vadd.f32 0.0, %v7554
      %v7556 = vpop.f32.mrb[0].mxu0
      %7557 = vmatprep.mubr.f32.mxu0 0.0
      %7558 = vmatmul.mubr.f32.gmra.mrb[0].mxu0 %v7368
      %v7559 = vpop.f32.mrb[0].mxu0
      %v7560 = vadd.f32 0.0, %v7559
      %v7561 = vpop.f32.mrb[0].mxu0
      %7562 = vmatprep.mubr.f32.mxu0 0.0
      %7563 = vmatmul.mubr.f32.gmra.mrb[0].mxu0 %v7371
      %v7564 = vpop.f32.mrb[0].mxu0
      %v7565 = vadd.f32 0.0, %v7564
      %v7566 = vpop.f32.mrb[0].mxu0
      %7567 = vmatprep.mubr.f32.mxu0 0.0
      %7568 = vmatmul.mubr.f32.gmra.mrb[0].mxu0 %v7374
      %v7569 = vpop.f32.mrb[0].mxu0
      %v7570 = vadd.f32 0.0, %v7569
      %v7571 = vpop.f32.mrb[0].mxu0
      %7572 = vmatprep.mubr.f32.mxu0 0.0
      %7573 = vmatmul.mubr.f32.gmra.mrb[0].mxu0 %v7377
      %v7574 = vpop.f32.mrb[0].mxu0
      %v7575 = vadd.f32 0.0, %v7574
      %v7576 = vpop.f32.mrb[0].mxu0
      %7577 = vmatprep.mubr.f32.mxu0 0.0
      %7578 = vmatmul.mubr.f32.gmra.mrb[0].mxu0 %v7380
      %v7579 = vpop.f32.mrb[0].mxu0
      %v7580 = vadd.f32 0.0, %v7579
      %v7581 = vpop.f32.mrb[0].mxu0
      %7582 = vmatprep.mubr.f32.mxu0 0.0
      %7583 = vmatmul.mubr.f32.gmra.mrb[0].mxu0 %v7383
      %v7584 = vpop.f32.mrb[0].mxu0
      %v7585 = vadd.f32 0.0, %v7584
      %v7586 = vpop.f32.mrb[0].mxu0
      %7587 = vmatprep.mubr.f32.mxu0 0.0
      %7588 = vmatmul.mubr.f32.gmra.mrb[0].mxu0 %v7386
      %v7589 = vpop.f32.mrb[0].mxu0
      %v7590 = vadd.f32 0.0, %v7589
      %v7591 = vpop.f32.mrb[0].mxu0
      %7592 = vmatprep.mubr.f32.mxu0 0.0
      %7593 = vmatmul.mubr.f32.gmra.mrb[0].mxu0 %v7389
      %v7594 = vpop.f32.mrb[0].mxu0
      %v7595 = vadd.f32 0.0, %v7594
      %v7596 = vpop.f32.mrb[0].mxu0
      %7597 = vmatprep.mubr.f32.mxu0 0.0
      %7598 = vmatmul.mubr.f32.gmra.mrb[0].mxu0 %v7392
      %v7599 = vpop.f32.mrb[0].mxu0
      %v7600 = vadd.f32 0.0, %v7599
      %v7601 = vpop.f32.mrb[0].mxu0
      %7602 = vmatprep.mubr.f32.mxu0 0.0
      %7603 = vmatmul.mubr.f32.gmra.mrb[0].mxu0 %v7395
      %v7604 = vpop.f32.mrb[0].mxu0
      %v7605 = vadd.f32 0.0, %v7604
      %v7606 = vpop.f32.mrb[0].mxu0
      %7607 = vmatprep.mubr.f32.mxu0 0.0
      %7608 = vmatmul.mubr.f32.gmra.mrb[0].mxu0 %v7398
      %v7609 = vpop.f32.mrb[0].mxu0
      %v7610 = vadd.f32 0.0, %v7609
      %v7611 = vpop.f32.mrb[0].mxu0
      %7612 = vmatprep.mubr.f32.mxu0 0.0
      %7613 = vmatmul.mubr.f32.gmra.mrb[0].mxu0 %v7401
      %v7614 = vpop.f32.mrb[0].mxu0
      %v7615 = vadd.f32 0.0, %v7614
      %v7616 = vpop.f32.mrb[0].mxu0
      %7617 = vmatprep.mubr.f32.mxu0 0.0
      %7618 = vmatmul.mubr.f32.gmra.mrb[0].mxu0 %v7404
      %v7619 = vpop.f32.mrb[0].mxu0
      %v7620 = vadd.f32 0.0, %v7619
      %v7621 = vpop.f32.mrb[0].mxu0
      %7622 = vmatprep.mubr.f32.mxu0 0.0
      %7623 = vmatmul.mubr.f32.gmra.mrb[0].mxu0 %v7407
      %v7624 = vpop.f32.mrb[0].mxu0
      %v7625 = vadd.f32 0.0, %v7624
      %v7626 = vpop.f32.mrb[0].mxu0
      %7627 = vmatprep.mubr.f32.mxu0 0.0
      %7628 = vmatmul.mubr.f32.gmra.mrb[0].mxu0 %v7410
      %v7629 = vpop.f32.mrb[0].mxu0
      %v7630 = vadd.f32 0.0, %v7629
      %v7631 = vpop.f32.mrb[0].mxu0
      %7632 = vmatprep.mubr.f32.mxu0 0.0
      %7633 = vmatmul.mubr.f32.gmra.mrb[0].mxu0 %v7413
      %v7634 = vpop.f32.mrb[0].mxu0
      %v7635 = vadd.f32 0.0, %v7634
      %v7636 = vpop.f32.mrb[0].mxu0
      %7637 = vmatprep.mubr.f32.mxu0 0.0
      %7638 = vmatmul.mubr.f32.gmra.mrb[0].mxu0 %v7416
      %v7639 = vpop.f32.mrb[0].mxu0
      %v7640 = vadd.f32 0.0, %v7639
      %v7641 = vpop.f32.mrb[0].mxu0
      %7642 = vdwg.mxu0
      %v7643 = vadd.f32 %v7193, %v7485
      %v7644 = vadd.f32 %v7194, %v7490
      %v7645 = vadd.f32 %v7195, %v7495
      %v7646 = vadd.f32 %v7196, %v7500
      %v7647 = vadd.f32 %v7197, %v7505
      %v7648 = vadd.f32 %v7198, %v7510
      %v7649 = vadd.f32 %v7199, %v7515
      %v7650 = vadd.f32 %v7200, %v7520
      %v7651 = vadd.f32 %v7201, %v7525
      %v7652 = vadd.f32 %v7202, %v7530
      %v7653 = vadd.f32 %v7203, %v7535
      %v7654 = vadd.f32 %v7204, %v7540
      %v7655 = vadd.f32 %v7205, %v7545
      %v7656 = vadd.f32 %v7206, %v7550
      %v7657 = vadd.f32 %v7207, %v7555
      %v7658 = vadd.f32 %v7208, %v7560
      %v7659 = vadd.f32 %v7209, %v7565
      %v7660 = vadd.f32 %v7210, %v7570
      %v7661 = vadd.f32 %v7211, %v7575
      %v7662 = vadd.f32 %v7212, %v7580
      %v7663 = vadd.f32 %v7213, %v7585
      %v7664 = vadd.f32 %v7214, %v7590
      %v7665 = vadd.f32 %v7215, %v7595
      %v7666 = vadd.f32 %v7216, %v7600
      %v7667 = vadd.f32 %v7217, %v7605
      %v7668 = vadd.f32 %v7218, %v7610
      %v7669 = vadd.f32 %v7219, %v7615
      %v7670 = vadd.f32 %v7220, %v7620
      %v7671 = vadd.f32 %v7221, %v7625
      %v7672 = vadd.f32 %v7222, %v7630
      %v7673 = vadd.f32 %v7223, %v7635
      %v7674 = vadd.f32 %v7224, %v7640
      %s7675 = scalar_lea.vmem %s5, 24
      %v7676 = vld [vmem:[%s7675] sm:$0xff]
      %v7678 = vsel %vm279, %v7257, 0
      %v7681 = vsel %vm279, %v7258, 0
      %v7684 = vsel %vm279, %v7259, 0
      %v7687 = vsel %vm279, %v7260, 0
      %v7690 = vsel %vm279, %v7261, 0
      %v7693 = vsel %vm279, %v7262, 0
      %v7696 = vsel %vm279, %v7263, 0
      %v7699 = vsel %vm279, %v7264, 0
      %v7702 = vsel %vm279, %v7265, 0
      %v7705 = vsel %vm279, %v7266, 0
      %v7708 = vsel %vm279, %v7267, 0
      %v7711 = vsel %vm279, %v7268, 0
      %v7714 = vsel %vm279, %v7269, 0
      %v7717 = vsel %vm279, %v7270, 0
      %v7720 = vsel %vm279, %v7271, 0
      %v7723 = vsel %vm279, %v7272, 0
      %v7726 = vsel %vm279, %v7273, 0
      %v7729 = vsel %vm279, %v7274, 0
      %v7732 = vsel %vm279, %v7275, 0
      %v7735 = vsel %vm279, %v7276, 0
      %v7738 = vsel %vm279, %v7277, 0
      %v7741 = vsel %vm279, %v7278, 0
      %v7744 = vsel %vm279, %v7279, 0
      %v7747 = vsel %vm279, %v7280, 0
      %v7750 = vsel %vm279, %v7281, 0
      %v7753 = vsel %vm279, %v7282, 0
      %v7756 = vsel %vm279, %v7283, 0
      %v7759 = vsel %vm279, %v7284, 0
      %v7762 = vsel %vm279, %v7285, 0
      %v7765 = vsel %vm279, %v7286, 0
      %v7768 = vsel %vm279, %v7287, 0
      %v7771 = vsel %vm279, %v7288, 0
      %7773 = vmatprep.subr.mxu0 0.0
      %7774 = vmatpush1.msra.mxu0 %v7676
      %7775 = vmatprep.subr.mxu0 0.0
      %7776 = vmatpush1.msra.mxu0 0.0
      %7777 = vmatprep.subr.mxu0 0.0
      %7778 = vmatpush1.msra.mxu0 0.0
      %7779 = vmatprep.subr.mxu0 0.0
      %7780 = vmatpush1.msra.mxu0 0.0
      %7781 = vmatprep.subr.mxu0 0.0
      %7782 = vmatpush1.msra.mxu0 0.0
      %7783 = vmatprep.subr.mxu0 0.0
      %7784 = vmatpush1.msra.mxu0 0.0
      %7785 = vmatprep.subr.mxu0 0.0
      %7786 = vmatpush1.msra.mxu0 0.0
      %7787 = vmatprep.subr.mxu0 0.0
      %7788 = vmatpush1.msra.mxu0 0.0
      %7789 = vmatprep.subr.mxu0 0.0
      %7790 = vmatpush1.msra.mxu0 0.0
      %7791 = vmatprep.subr.mxu0 0.0
      %7792 = vmatpush1.msra.mxu0 0.0
      %7793 = vmatprep.subr.mxu0 0.0
      %7794 = vmatpush1.msra.mxu0 0.0
      %7795 = vmatprep.subr.mxu0 0.0
      %7796 = vmatpush1.msra.mxu0 0.0
      %7797 = vmatprep.subr.mxu0 0.0
      %7798 = vmatpush1.msra.mxu0 0.0
      %7799 = vmatprep.subr.mxu0 0.0
      %7800 = vmatpush1.msra.mxu0 0.0
      %7801 = vmatprep.subr.mxu0 0.0
      %7802 = vmatpush1.msra.mxu0 0.0
      %7803 = vmatprep.subr.mxu0 0.0
      %7804 = vmatpush1.msra.mxu0 0.0
      %7805 = vmatprep.subr.mxu0 0.0
      %7806 = vmatpush1.msra.mxu0 0.0
      %7807 = vmatprep.subr.mxu0 0.0
      %7808 = vmatpush1.msra.mxu0 0.0
      %7809 = vmatprep.subr.mxu0 0.0
      %7810 = vmatpush1.msra.mxu0 0.0
      %7811 = vmatprep.subr.mxu0 0.0
      %7812 = vmatpush1.msra.mxu0 0.0
      %7813 = vmatprep.subr.mxu0 0.0
      %7814 = vmatpush1.msra.mxu0 0.0
      %7815 = vmatprep.subr.mxu0 0.0
      %7816 = vmatpush1.msra.mxu0 0.0
      %7817 = vmatprep.subr.mxu0 0.0
      %7818 = vmatpush1.msra.mxu0 0.0
      %7819 = vmatprep.subr.mxu0 0.0
      %7820 = vmatpush1.msra.mxu0 0.0
      %7821 = vmatprep.subr.mxu0 0.0
      %7822 = vmatpush1.msra.mxu0 0.0
      %7823 = vmatprep.subr.mxu0 0.0
      %7824 = vmatpush1.msra.mxu0 0.0
      %7825 = vmatprep.subr.mxu0 0.0
      %7826 = vmatpush1.msra.mxu0 0.0
      %7827 = vmatprep.subr.mxu0 0.0
      %7828 = vmatpush1.msra.mxu0 0.0
      %7829 = vmatprep.subr.mxu0 0.0
      %7830 = vmatpush1.msra.mxu0 0.0
      %7831 = vmatprep.subr.mxu0 0.0
      %7832 = vmatpush1.msra.mxu0 0.0
      %7833 = vmatprep.subr.mxu0 0.0
      %7834 = vmatpush1.msra.mxu0 0.0
      %7835 = vmatprep.subr.mxu0 0.0
      %7836 = vmatpush1.msra.mxu0 0.0
      %7837 = vmatprep.mubr.f32.mxu0 0.0
      %7838 = vmatmul.mubr.f32.gmra.mrb[0].mxu0 %v7678
      %v7839 = vpop.f32.mrb[0].mxu0
      %v7840 = vadd.f32 0.0, %v7839
      %v7841 = vpop.f32.mrb[0].mxu0
      %7842 = vmatprep.mubr.f32.mxu0 0.0
      %7843 = vmatmul.mubr.f32.gmra.mrb[0].mxu0 %v7681
      %v7844 = vpop.f32.mrb[0].mxu0
      %v7845 = vadd.f32 0.0, %v7844
      %v7846 = vpop.f32.mrb[0].mxu0
      %7847 = vmatprep.mubr.f32.mxu0 0.0
      %7848 = vmatmul.mubr.f32.gmra.mrb[0].mxu0 %v7684
      %v7849 = vpop.f32.mrb[0].mxu0
      %v7850 = vadd.f32 0.0, %v7849
      %v7851 = vpop.f32.mrb[0].mxu0
      %7852 = vmatprep.mubr.f32.mxu0 0.0
      %7853 = vmatmul.mubr.f32.gmra.mrb[0].mxu0 %v7687
      %v7854 = vpop.f32.mrb[0].mxu0
      %v7855 = vadd.f32 0.0, %v7854
      %v7856 = vpop.f32.mrb[0].mxu0
      %7857 = vmatprep.mubr.f32.mxu0 0.0
      %7858 = vmatmul.mubr.f32.gmra.mrb[0].mxu0 %v7690
      %v7859 = vpop.f32.mrb[0].mxu0
      %v7860 = vadd.f32 0.0, %v7859
      %v7861 = vpop.f32.mrb[0].mxu0
      %7862 = vmatprep.mubr.f32.mxu0 0.0
      %7863 = vmatmul.mubr.f32.gmra.mrb[0].mxu0 %v7693
      %v7864 = vpop.f32.mrb[0].mxu0
      %v7865 = vadd.f32 0.0, %v7864
      %v7866 = vpop.f32.mrb[0].mxu0
      %7867 = vmatprep.mubr.f32.mxu0 0.0
      %7868 = vmatmul.mubr.f32.gmra.mrb[0].mxu0 %v7696
      %v7869 = vpop.f32.mrb[0].mxu0
      %v7870 = vadd.f32 0.0, %v7869
      %v7871 = vpop.f32.mrb[0].mxu0
      %7872 = vmatprep.mubr.f32.mxu0 0.0
      %7873 = vmatmul.mubr.f32.gmra.mrb[0].mxu0 %v7699
      %v7874 = vpop.f32.mrb[0].mxu0
      %v7875 = vadd.f32 0.0, %v7874
      %v7876 = vpop.f32.mrb[0].mxu0
      %7877 = vmatprep.mubr.f32.mxu0 0.0
      %7878 = vmatmul.mubr.f32.gmra.mrb[0].mxu0 %v7702
      %v7879 = vpop.f32.mrb[0].mxu0
      %v7880 = vadd.f32 0.0, %v7879
      %v7881 = vpop.f32.mrb[0].mxu0
      %7882 = vmatprep.mubr.f32.mxu0 0.0
      %7883 = vmatmul.mubr.f32.gmra.mrb[0].mxu0 %v7705
      %v7884 = vpop.f32.mrb[0].mxu0
      %v7885 = vadd.f32 0.0, %v7884
      %v7886 = vpop.f32.mrb[0].mxu0
      %7887 = vmatprep.mubr.f32.mxu0 0.0
      %7888 = vmatmul.mubr.f32.gmra.mrb[0].mxu0 %v7708
      %v7889 = vpop.f32.mrb[0].mxu0
      %v7890 = vadd.f32 0.0, %v7889
      %v7891 = vpop.f32.mrb[0].mxu0
      %7892 = vmatprep.mubr.f32.mxu0 0.0
      %7893 = vmatmul.mubr.f32.gmra.mrb[0].mxu0 %v7711
      %v7894 = vpop.f32.mrb[0].mxu0
      %v7895 = vadd.f32 0.0, %v7894
      %v7896 = vpop.f32.mrb[0].mxu0
      %7897 = vmatprep.mubr.f32.mxu0 0.0
      %7898 = vmatmul.mubr.f32.gmra.mrb[0].mxu0 %v7714
      %v7899 = vpop.f32.mrb[0].mxu0
      %v7900 = vadd.f32 0.0, %v7899
      %v7901 = vpop.f32.mrb[0].mxu0
      %7902 = vmatprep.mubr.f32.mxu0 0.0
      %7903 = vmatmul.mubr.f32.gmra.mrb[0].mxu0 %v7717
      %v7904 = vpop.f32.mrb[0].mxu0
      %v7905 = vadd.f32 0.0, %v7904
      %v7906 = vpop.f32.mrb[0].mxu0
      %7907 = vmatprep.mubr.f32.mxu0 0.0
      %7908 = vmatmul.mubr.f32.gmra.mrb[0].mxu0 %v7720
      %v7909 = vpop.f32.mrb[0].mxu0
      %v7910 = vadd.f32 0.0, %v7909
      %v7911 = vpop.f32.mrb[0].mxu0
      %7912 = vmatprep.mubr.f32.mxu0 0.0
      %7913 = vmatmul.mubr.f32.gmra.mrb[0].mxu0 %v7723
      %v7914 = vpop.f32.mrb[0].mxu0
      %v7915 = vadd.f32 0.0, %v7914
      %v7916 = vpop.f32.mrb[0].mxu0
      %7917 = vmatprep.mubr.f32.mxu0 0.0
      %7918 = vmatmul.mubr.f32.gmra.mrb[0].mxu0 %v7726
      %v7919 = vpop.f32.mrb[0].mxu0
      %v7920 = vadd.f32 0.0, %v7919
      %v7921 = vpop.f32.mrb[0].mxu0
      %7922 = vmatprep.mubr.f32.mxu0 0.0
      %7923 = vmatmul.mubr.f32.gmra.mrb[0].mxu0 %v7729
      %v7924 = vpop.f32.mrb[0].mxu0
      %v7925 = vadd.f32 0.0, %v7924
      %v7926 = vpop.f32.mrb[0].mxu0
      %7927 = vmatprep.mubr.f32.mxu0 0.0
      %7928 = vmatmul.mubr.f32.gmra.mrb[0].mxu0 %v7732
      %v7929 = vpop.f32.mrb[0].mxu0
      %v7930 = vadd.f32 0.0, %v7929
      %v7931 = vpop.f32.mrb[0].mxu0
      %7932 = vmatprep.mubr.f32.mxu0 0.0
      %7933 = vmatmul.mubr.f32.gmra.mrb[0].mxu0 %v7735
      %v7934 = vpop.f32.mrb[0].mxu0
      %v7935 = vadd.f32 0.0, %v7934
      %v7936 = vpop.f32.mrb[0].mxu0
      %7937 = vmatprep.mubr.f32.mxu0 0.0
      %7938 = vmatmul.mubr.f32.gmra.mrb[0].mxu0 %v7738
      %v7939 = vpop.f32.mrb[0].mxu0
      %v7940 = vadd.f32 0.0, %v7939
      %v7941 = vpop.f32.mrb[0].mxu0
      %7942 = vmatprep.mubr.f32.mxu0 0.0
      %7943 = vmatmul.mubr.f32.gmra.mrb[0].mxu0 %v7741
      %v7944 = vpop.f32.mrb[0].mxu0
      %v7945 = vadd.f32 0.0, %v7944
      %v7946 = vpop.f32.mrb[0].mxu0
      %7947 = vmatprep.mubr.f32.mxu0 0.0
      %7948 = vmatmul.mubr.f32.gmra.mrb[0].mxu0 %v7744
      %v7949 = vpop.f32.mrb[0].mxu0
      %v7950 = vadd.f32 0.0, %v7949
      %v7951 = vpop.f32.mrb[0].mxu0
      %7952 = vmatprep.mubr.f32.mxu0 0.0
      %7953 = vmatmul.mubr.f32.gmra.mrb[0].mxu0 %v7747
      %v7954 = vpop.f32.mrb[0].mxu0
      %v7955 = vadd.f32 0.0, %v7954
      %v7956 = vpop.f32.mrb[0].mxu0
      %7957 = vmatprep.mubr.f32.mxu0 0.0
      %7958 = vmatmul.mubr.f32.gmra.mrb[0].mxu0 %v7750
      %v7959 = vpop.f32.mrb[0].mxu0
      %v7960 = vadd.f32 0.0, %v7959
      %v7961 = vpop.f32.mrb[0].mxu0
      %7962 = vmatprep.mubr.f32.mxu0 0.0
      %7963 = vmatmul.mubr.f32.gmra.mrb[0].mxu0 %v7753
      %v7964 = vpop.f32.mrb[0].mxu0
      %v7965 = vadd.f32 0.0, %v7964
      %v7966 = vpop.f32.mrb[0].mxu0
      %7967 = vmatprep.mubr.f32.mxu0 0.0
      %7968 = vmatmul.mubr.f32.gmra.mrb[0].mxu0 %v7756
      %v7969 = vpop.f32.mrb[0].mxu0
      %v7970 = vadd.f32 0.0, %v7969
      %v7971 = vpop.f32.mrb[0].mxu0
      %7972 = vmatprep.mubr.f32.mxu0 0.0
      %7973 = vmatmul.mubr.f32.gmra.mrb[0].mxu0 %v7759
      %v7974 = vpop.f32.mrb[0].mxu0
      %v7975 = vadd.f32 0.0, %v7974
      %v7976 = vpop.f32.mrb[0].mxu0
      %7977 = vmatprep.mubr.f32.mxu0 0.0
      %7978 = vmatmul.mubr.f32.gmra.mrb[0].mxu0 %v7762
      %v7979 = vpop.f32.mrb[0].mxu0
      %v7980 = vadd.f32 0.0, %v7979
      %v7981 = vpop.f32.mrb[0].mxu0
      %7982 = vmatprep.mubr.f32.mxu0 0.0
      %7983 = vmatmul.mubr.f32.gmra.mrb[0].mxu0 %v7765
      %v7984 = vpop.f32.mrb[0].mxu0
      %v7985 = vadd.f32 0.0, %v7984
      %v7986 = vpop.f32.mrb[0].mxu0
      %7987 = vmatprep.mubr.f32.mxu0 0.0
      %7988 = vmatmul.mubr.f32.gmra.mrb[0].mxu0 %v7768
      %v7989 = vpop.f32.mrb[0].mxu0
      %v7990 = vadd.f32 0.0, %v7989
      %v7991 = vpop.f32.mrb[0].mxu0
      %7992 = vmatprep.mubr.f32.mxu0 0.0
      %7993 = vmatmul.mubr.f32.gmra.mrb[0].mxu0 %v7771
      %v7994 = vpop.f32.mrb[0].mxu0
      %v7995 = vadd.f32 0.0, %v7994
      %v7996 = vpop.f32.mrb[0].mxu0
      %7997 = vdwg.mxu0
      %v7998 = vadd.f32 %v7643, %v7840
      %v7999 = vadd.f32 %v7644, %v7845
      %v8000 = vadd.f32 %v7645, %v7850
      %v8001 = vadd.f32 %v7646, %v7855
      %v8002 = vadd.f32 %v7647, %v7860
      %v8003 = vadd.f32 %v7648, %v7865
      %v8004 = vadd.f32 %v7649, %v7870
      %v8005 = vadd.f32 %v7650, %v7875
      %v8006 = vadd.f32 %v7651, %v7880
      %v8007 = vadd.f32 %v7652, %v7885
      %v8008 = vadd.f32 %v7653, %v7890
      %v8009 = vadd.f32 %v7654, %v7895
      %v8010 = vadd.f32 %v7655, %v7900
      %v8011 = vadd.f32 %v7656, %v7905
      %v8012 = vadd.f32 %v7657, %v7910
      %v8013 = vadd.f32 %v7658, %v7915
      %v8014 = vadd.f32 %v7659, %v7920
      %v8015 = vadd.f32 %v7660, %v7925
      %v8016 = vadd.f32 %v7661, %v7930
      %v8017 = vadd.f32 %v7662, %v7935
      %v8018 = vadd.f32 %v7663, %v7940
      %v8019 = vadd.f32 %v7664, %v7945
      %v8020 = vadd.f32 %v7665, %v7950
      %v8021 = vadd.f32 %v7666, %v7955
      %v8022 = vadd.f32 %v7667, %v7960
      %v8023 = vadd.f32 %v7668, %v7965
      %v8024 = vadd.f32 %v7669, %v7970
      %v8025 = vadd.f32 %v7670, %v7975
      %v8026 = vadd.f32 %v7671, %v7980
      %v8027 = vadd.f32 %v7672, %v7985
      %v8028 = vadd.f32 %v7673, %v7990
      %v8029 = vadd.f32 %v7674, %v7995
      %s8030 = scalar_lea.vmem %s5, 48
      %v8031 = vld [vmem:[%s8030] sm:$0xff]
      %v8033 = vsel %vm279, %v7289, 0
      %v8036 = vsel %vm279, %v7290, 0
      %v8039 = vsel %vm279, %v7291, 0
      %v8042 = vsel %vm279, %v7292, 0
      %v8045 = vsel %vm279, %v7293, 0
      %v8048 = vsel %vm279, %v7294, 0
      %v8051 = vsel %vm279, %v7295, 0
      %v8054 = vsel %vm279, %v7296, 0
      %v8057 = vsel %vm279, %v7297, 0
      %v8060 = vsel %vm279, %v7298, 0
      %v8063 = vsel %vm279, %v7299, 0
      %v8066 = vsel %vm279, %v7300, 0
      %v8069 = vsel %vm279, %v7301, 0
      %v8072 = vsel %vm279, %v7302, 0
      %v8075 = vsel %vm279, %v7303, 0
      %v8078 = vsel %vm279, %v7304, 0
      %v8081 = vsel %vm279, %v7305, 0
      %v8084 = vsel %vm279, %v7306, 0
      %v8087 = vsel %vm279, %v7307, 0
      %v8090 = vsel %vm279, %v7308, 0
      %v8093 = vsel %vm279, %v7309, 0
      %v8096 = vsel %vm279, %v7310, 0
      %v8099 = vsel %vm279, %v7311, 0
      %v8102 = vsel %vm279, %v7312, 0
      %v8105 = vsel %vm279, %v7313, 0
      %v8108 = vsel %vm279, %v7314, 0
      %v8111 = vsel %vm279, %v7315, 0
      %v8114 = vsel %vm279, %v7316, 0
      %v8117 = vsel %vm279, %v7317, 0
      %v8120 = vsel %vm279, %v7318, 0
      %v8123 = vsel %vm279, %v7319, 0
      %v8126 = vsel %vm279, %v7320, 0
      %8128 = vmatprep.subr.mxu0 0.0
      %8129 = vmatpush1.msra.mxu0 %v8031
      %8130 = vmatprep.subr.mxu0 0.0
      %8131 = vmatpush1.msra.mxu0 0.0
      %8132 = vmatprep.subr.mxu0 0.0
      %8133 = vmatpush1.msra.mxu0 0.0
      %8134 = vmatprep.subr.mxu0 0.0
      %8135 = vmatpush1.msra.mxu0 0.0
      %8136 = vmatprep.subr.mxu0 0.0
      %8137 = vmatpush1.msra.mxu0 0.0
      %8138 = vmatprep.subr.mxu0 0.0
      %8139 = vmatpush1.msra.mxu0 0.0
      %8140 = vmatprep.subr.mxu0 0.0
      %8141 = vmatpush1.msra.mxu0 0.0
      %8142 = vmatprep.subr.mxu0 0.0
      %8143 = vmatpush1.msra.mxu0 0.0
      %8144 = vmatprep.subr.mxu0 0.0
      %8145 = vmatpush1.msra.mxu0 0.0
      %8146 = vmatprep.subr.mxu0 0.0
      %8147 = vmatpush1.msra.mxu0 0.0
      %8148 = vmatprep.subr.mxu0 0.0
      %8149 = vmatpush1.msra.mxu0 0.0
      %8150 = vmatprep.subr.mxu0 0.0
      %8151 = vmatpush1.msra.mxu0 0.0
      %8152 = vmatprep.subr.mxu0 0.0
      %8153 = vmatpush1.msra.mxu0 0.0
      %8154 = vmatprep.subr.mxu0 0.0
      %8155 = vmatpush1.msra.mxu0 0.0
      %8156 = vmatprep.subr.mxu0 0.0
      %8157 = vmatpush1.msra.mxu0 0.0
      %8158 = vmatprep.subr.mxu0 0.0
      %8159 = vmatpush1.msra.mxu0 0.0
      %8160 = vmatprep.subr.mxu0 0.0
      %8161 = vmatpush1.msra.mxu0 0.0
      %8162 = vmatprep.subr.mxu0 0.0
      %8163 = vmatpush1.msra.mxu0 0.0
      %8164 = vmatprep.subr.mxu0 0.0
      %8165 = vmatpush1.msra.mxu0 0.0
      %8166 = vmatprep.subr.mxu0 0.0
      %8167 = vmatpush1.msra.mxu0 0.0
      %8168 = vmatprep.subr.mxu0 0.0
      %8169 = vmatpush1.msra.mxu0 0.0
      %8170 = vmatprep.subr.mxu0 0.0
      %8171 = vmatpush1.msra.mxu0 0.0
      %8172 = vmatprep.subr.mxu0 0.0
      %8173 = vmatpush1.msra.mxu0 0.0
      %8174 = vmatprep.subr.mxu0 0.0
      %8175 = vmatpush1.msra.mxu0 0.0
      %8176 = vmatprep.subr.mxu0 0.0
      %8177 = vmatpush1.msra.mxu0 0.0
      %8178 = vmatprep.subr.mxu0 0.0
      %8179 = vmatpush1.msra.mxu0 0.0
      %8180 = vmatprep.subr.mxu0 0.0
      %8181 = vmatpush1.msra.mxu0 0.0
      %8182 = vmatprep.subr.mxu0 0.0
      %8183 = vmatpush1.msra.mxu0 0.0
      %8184 = vmatprep.subr.mxu0 0.0
      %8185 = vmatpush1.msra.mxu0 0.0
      %8186 = vmatprep.subr.mxu0 0.0
      %8187 = vmatpush1.msra.mxu0 0.0
      %8188 = vmatprep.subr.mxu0 0.0
      %8189 = vmatpush1.msra.mxu0 0.0
      %8190 = vmatprep.subr.mxu0 0.0
      %8191 = vmatpush1.msra.mxu0 0.0
      %8192 = vmatprep.mubr.f32.mxu0 0.0
      %8193 = vmatmul.mubr.f32.gmra.mrb[0].mxu0 %v8033
      %v8194 = vpop.f32.mrb[0].mxu0
      %v8195 = vadd.f32 0.0, %v8194
      %v8196 = vpop.f32.mrb[0].mxu0
      %8197 = vmatprep.mubr.f32.mxu0 0.0
      %8198 = vmatmul.mubr.f32.gmra.mrb[0].mxu0 %v8036
      %v8199 = vpop.f32.mrb[0].mxu0
      %v8200 = vadd.f32 0.0, %v8199
      %v8201 = vpop.f32.mrb[0].mxu0
      %8202 = vmatprep.mubr.f32.mxu0 0.0
      %8203 = vmatmul.mubr.f32.gmra.mrb[0].mxu0 %v8039
      %v8204 = vpop.f32.mrb[0].mxu0
      %v8205 = vadd.f32 0.0, %v8204
      %v8206 = vpop.f32.mrb[0].mxu0
      %8207 = vmatprep.mubr.f32.mxu0 0.0
      %8208 = vmatmul.mubr.f32.gmra.mrb[0].mxu0 %v8042
      %v8209 = vpop.f32.mrb[0].mxu0
      %v8210 = vadd.f32 0.0, %v8209
      %v8211 = vpop.f32.mrb[0].mxu0
      %8212 = vmatprep.mubr.f32.mxu0 0.0
      %8213 = vmatmul.mubr.f32.gmra.mrb[0].mxu0 %v8045
      %v8214 = vpop.f32.mrb[0].mxu0
      %v8215 = vadd.f32 0.0, %v8214
      %v8216 = vpop.f32.mrb[0].mxu0
      %8217 = vmatprep.mubr.f32.mxu0 0.0
      %8218 = vmatmul.mubr.f32.gmra.mrb[0].mxu0 %v8048
      %v8219 = vpop.f32.mrb[0].mxu0
      %v8220 = vadd.f32 0.0, %v8219
      %v8221 = vpop.f32.mrb[0].mxu0
      %8222 = vmatprep.mubr.f32.mxu0 0.0
      %8223 = vmatmul.mubr.f32.gmra.mrb[0].mxu0 %v8051
      %v8224 = vpop.f32.mrb[0].mxu0
      %v8225 = vadd.f32 0.0, %v8224
      %v8226 = vpop.f32.mrb[0].mxu0
      %8227 = vmatprep.mubr.f32.mxu0 0.0
      %8228 = vmatmul.mubr.f32.gmra.mrb[0].mxu0 %v8054
      %v8229 = vpop.f32.mrb[0].mxu0
      %v8230 = vadd.f32 0.0, %v8229
      %v8231 = vpop.f32.mrb[0].mxu0
      %8232 = vmatprep.mubr.f32.mxu0 0.0
      %8233 = vmatmul.mubr.f32.gmra.mrb[0].mxu0 %v8057
      %v8234 = vpop.f32.mrb[0].mxu0
      %v8235 = vadd.f32 0.0, %v8234
      %v8236 = vpop.f32.mrb[0].mxu0
      %8237 = vmatprep.mubr.f32.mxu0 0.0
      %8238 = vmatmul.mubr.f32.gmra.mrb[0].mxu0 %v8060
      %v8239 = vpop.f32.mrb[0].mxu0
      %v8240 = vadd.f32 0.0, %v8239
      %v8241 = vpop.f32.mrb[0].mxu0
      %8242 = vmatprep.mubr.f32.mxu0 0.0
      %8243 = vmatmul.mubr.f32.gmra.mrb[0].mxu0 %v8063
      %v8244 = vpop.f32.mrb[0].mxu0
      %v8245 = vadd.f32 0.0, %v8244
      %v8246 = vpop.f32.mrb[0].mxu0
      %8247 = vmatprep.mubr.f32.mxu0 0.0
      %8248 = vmatmul.mubr.f32.gmra.mrb[0].mxu0 %v8066
      %v8249 = vpop.f32.mrb[0].mxu0
      %v8250 = vadd.f32 0.0, %v8249
      %v8251 = vpop.f32.mrb[0].mxu0
      %8252 = vmatprep.mubr.f32.mxu0 0.0
      %8253 = vmatmul.mubr.f32.gmra.mrb[0].mxu0 %v8069
      %v8254 = vpop.f32.mrb[0].mxu0
      %v8255 = vadd.f32 0.0, %v8254
      %v8256 = vpop.f32.mrb[0].mxu0
      %8257 = vmatprep.mubr.f32.mxu0 0.0
      %8258 = vmatmul.mubr.f32.gmra.mrb[0].mxu0 %v8072
      %v8259 = vpop.f32.mrb[0].mxu0
      %v8260 = vadd.f32 0.0, %v8259
      %v8261 = vpop.f32.mrb[0].mxu0
      %8262 = vmatprep.mubr.f32.mxu0 0.0
      %8263 = vmatmul.mubr.f32.gmra.mrb[0].mxu0 %v8075
      %v8264 = vpop.f32.mrb[0].mxu0
      %v8265 = vadd.f32 0.0, %v8264
      %v8266 = vpop.f32.mrb[0].mxu0
      %8267 = vmatprep.mubr.f32.mxu0 0.0
      %8268 = vmatmul.mubr.f32.gmra.mrb[0].mxu0 %v8078
      %v8269 = vpop.f32.mrb[0].mxu0
      %v8270 = vadd.f32 0.0, %v8269
      %v8271 = vpop.f32.mrb[0].mxu0
      %8272 = vmatprep.mubr.f32.mxu0 0.0
      %8273 = vmatmul.mubr.f32.gmra.mrb[0].mxu0 %v8081
      %v8274 = vpop.f32.mrb[0].mxu0
      %v8275 = vadd.f32 0.0, %v8274
      %v8276 = vpop.f32.mrb[0].mxu0
      %8277 = vmatprep.mubr.f32.mxu0 0.0
      %8278 = vmatmul.mubr.f32.gmra.mrb[0].mxu0 %v8084
      %v8279 = vpop.f32.mrb[0].mxu0
      %v8280 = vadd.f32 0.0, %v8279
      %v8281 = vpop.f32.mrb[0].mxu0
      %8282 = vmatprep.mubr.f32.mxu0 0.0
      %8283 = vmatmul.mubr.f32.gmra.mrb[0].mxu0 %v8087
      %v8284 = vpop.f32.mrb[0].mxu0
      %v8285 = vadd.f32 0.0, %v8284
      %v8286 = vpop.f32.mrb[0].mxu0
      %8287 = vmatprep.mubr.f32.mxu0 0.0
      %8288 = vmatmul.mubr.f32.gmra.mrb[0].mxu0 %v8090
      %v8289 = vpop.f32.mrb[0].mxu0
      %v8290 = vadd.f32 0.0, %v8289
      %v8291 = vpop.f32.mrb[0].mxu0
      %8292 = vmatprep.mubr.f32.mxu0 0.0
      %8293 = vmatmul.mubr.f32.gmra.mrb[0].mxu0 %v8093
      %v8294 = vpop.f32.mrb[0].mxu0
      %v8295 = vadd.f32 0.0, %v8294
      %v8296 = vpop.f32.mrb[0].mxu0
      %8297 = vmatprep.mubr.f32.mxu0 0.0
      %8298 = vmatmul.mubr.f32.gmra.mrb[0].mxu0 %v8096
      %v8299 = vpop.f32.mrb[0].mxu0
      %v8300 = vadd.f32 0.0, %v8299
      %v8301 = vpop.f32.mrb[0].mxu0
      %8302 = vmatprep.mubr.f32.mxu0 0.0
      %8303 = vmatmul.mubr.f32.gmra.mrb[0].mxu0 %v8099
      %v8304 = vpop.f32.mrb[0].mxu0
      %v8305 = vadd.f32 0.0, %v8304
      %v8306 = vpop.f32.mrb[0].mxu0
      %8307 = vmatprep.mubr.f32.mxu0 0.0
      %8308 = vmatmul.mubr.f32.gmra.mrb[0].mxu0 %v8102
      %v8309 = vpop.f32.mrb[0].mxu0
      %v8310 = vadd.f32 0.0, %v8309
      %v8311 = vpop.f32.mrb[0].mxu0
      %8312 = vmatprep.mubr.f32.mxu0 0.0
      %8313 = vmatmul.mubr.f32.gmra.mrb[0].mxu0 %v8105
      %v8314 = vpop.f32.mrb[0].mxu0
      %v8315 = vadd.f32 0.0, %v8314
      %v8316 = vpop.f32.mrb[0].mxu0
      %8317 = vmatprep.mubr.f32.mxu0 0.0
      %8318 = vmatmul.mubr.f32.gmra.mrb[0].mxu0 %v8108
      %v8319 = vpop.f32.mrb[0].mxu0
      %v8320 = vadd.f32 0.0, %v8319
      %v8321 = vpop.f32.mrb[0].mxu0
      %8322 = vmatprep.mubr.f32.mxu0 0.0
      %8323 = vmatmul.mubr.f32.gmra.mrb[0].mxu0 %v8111
      %v8324 = vpop.f32.mrb[0].mxu0
      %v8325 = vadd.f32 0.0, %v8324
      %v8326 = vpop.f32.mrb[0].mxu0
      %8327 = vmatprep.mubr.f32.mxu0 0.0
      %8328 = vmatmul.mubr.f32.gmra.mrb[0].mxu0 %v8114
      %v8329 = vpop.f32.mrb[0].mxu0
      %v8330 = vadd.f32 0.0, %v8329
      %v8331 = vpop.f32.mrb[0].mxu0
      %8332 = vmatprep.mubr.f32.mxu0 0.0
      %8333 = vmatmul.mubr.f32.gmra.mrb[0].mxu0 %v8117
      %v8334 = vpop.f32.mrb[0].mxu0
      %v8335 = vadd.f32 0.0, %v8334
      %v8336 = vpop.f32.mrb[0].mxu0
      %8337 = vmatprep.mubr.f32.mxu0 0.0
      %8338 = vmatmul.mubr.f32.gmra.mrb[0].mxu0 %v8120
      %v8339 = vpop.f32.mrb[0].mxu0
      %v8340 = vadd.f32 0.0, %v8339
      %v8341 = vpop.f32.mrb[0].mxu0
      %8342 = vmatprep.mubr.f32.mxu0 0.0
      %8343 = vmatmul.mubr.f32.gmra.mrb[0].mxu0 %v8123
      %v8344 = vpop.f32.mrb[0].mxu0
      %v8345 = vadd.f32 0.0, %v8344
      %v8346 = vpop.f32.mrb[0].mxu0
      %8347 = vmatprep.mubr.f32.mxu0 0.0
      %8348 = vmatmul.mubr.f32.gmra.mrb[0].mxu0 %v8126
      %v8349 = vpop.f32.mrb[0].mxu0
      %v8350 = vadd.f32 0.0, %v8349
      %v8351 = vpop.f32.mrb[0].mxu0
      %8352 = vdwg.mxu0
      %v8353 = vadd.f32 %v7998, %v8195
      %v8354 = vadd.f32 %v7999, %v8200
      %v8355 = vadd.f32 %v8000, %v8205
      %v8356 = vadd.f32 %v8001, %v8210
      %v8357 = vadd.f32 %v8002, %v8215
      %v8358 = vadd.f32 %v8003, %v8220
      %v8359 = vadd.f32 %v8004, %v8225
      %v8360 = vadd.f32 %v8005, %v8230
      %v8361 = vadd.f32 %v8006, %v8235
      %v8362 = vadd.f32 %v8007, %v8240
      %v8363 = vadd.f32 %v8008, %v8245
      %v8364 = vadd.f32 %v8009, %v8250
      %v8365 = vadd.f32 %v8010, %v8255
      %v8366 = vadd.f32 %v8011, %v8260
      %v8367 = vadd.f32 %v8012, %v8265
      %v8368 = vadd.f32 %v8013, %v8270
      %v8369 = vadd.f32 %v8014, %v8275
      %v8370 = vadd.f32 %v8015, %v8280
      %v8371 = vadd.f32 %v8016, %v8285
      %v8372 = vadd.f32 %v8017, %v8290
      %v8373 = vadd.f32 %v8018, %v8295
      %v8374 = vadd.f32 %v8019, %v8300
      %v8375 = vadd.f32 %v8020, %v8305
      %v8376 = vadd.f32 %v8021, %v8310
      %v8377 = vadd.f32 %v8022, %v8315
      %v8378 = vadd.f32 %v8023, %v8320
      %v8379 = vadd.f32 %v8024, %v8325
      %v8380 = vadd.f32 %v8025, %v8330
      %v8381 = vadd.f32 %v8026, %v8335
      %v8382 = vadd.f32 %v8027, %v8340
      %v8383 = vadd.f32 %v8028, %v8345
      %v8384 = vadd.f32 %v8029, %v8350
      %s8385 = scalar_lea.vmem %s5, 8
      %v8386 = vld [vmem:[%s8385] sm:$0xff]
      %v8388 = vsel %vm279, %v2133, 0
      %v8391 = vsel %vm279, %v2134, 0
      %v8394 = vsel %vm279, %v2135, 0
      %v8397 = vsel %vm279, %v2136, 0
      %v8400 = vsel %vm279, %v2137, 0
      %v8403 = vsel %vm279, %v2138, 0
      %v8406 = vsel %vm279, %v2139, 0
      %v8409 = vsel %vm279, %v2140, 0
      %v8412 = vsel %vm279, %v2141, 0
      %v8415 = vsel %vm279, %v2142, 0
      %v8418 = vsel %vm279, %v2143, 0
      %v8421 = vsel %vm279, %v2144, 0
      %8423 = vmatprep.subr.mxu0 0.0
      %8424 = vmatpush1.msra.mxu0 %v8386
      %8425 = vmatprep.subr.mxu0 0.0
      %8426 = vmatpush1.msra.mxu0 0.0
      %8427 = vmatprep.subr.mxu0 0.0
      %8428 = vmatpush1.msra.mxu0 0.0
      %8429 = vmatprep.subr.mxu0 0.0
      %8430 = vmatpush1.msra.mxu0 0.0
      %8431 = vmatprep.subr.mxu0 0.0
      %8432 = vmatpush1.msra.mxu0 0.0
      %8433 = vmatprep.subr.mxu0 0.0
      %8434 = vmatpush1.msra.mxu0 0.0
      %8435 = vmatprep.subr.mxu0 0.0
      %8436 = vmatpush1.msra.mxu0 0.0
      %8437 = vmatprep.subr.mxu0 0.0
      %8438 = vmatpush1.msra.mxu0 0.0
      %8439 = vmatprep.subr.mxu0 0.0
      %8440 = vmatpush1.msra.mxu0 0.0
      %8441 = vmatprep.subr.mxu0 0.0
      %8442 = vmatpush1.msra.mxu0 0.0
      %8443 = vmatprep.subr.mxu0 0.0
      %8444 = vmatpush1.msra.mxu0 0.0
      %8445 = vmatprep.subr.mxu0 0.0
      %8446 = vmatpush1.msra.mxu0 0.0
      %8447 = vmatprep.subr.mxu0 0.0
      %8448 = vmatpush1.msra.mxu0 0.0
      %8449 = vmatprep.subr.mxu0 0.0
      %8450 = vmatpush1.msra.mxu0 0.0
      %8451 = vmatprep.subr.mxu0 0.0
      %8452 = vmatpush1.msra.mxu0 0.0
      %8453 = vmatprep.subr.mxu0 0.0
      %8454 = vmatpush1.msra.mxu0 0.0
      %8455 = vmatprep.subr.mxu0 0.0
      %8456 = vmatpush1.msra.mxu0 0.0
      %8457 = vmatprep.subr.mxu0 0.0
      %8458 = vmatpush1.msra.mxu0 0.0
      %8459 = vmatprep.subr.mxu0 0.0
      %8460 = vmatpush1.msra.mxu0 0.0
      %8461 = vmatprep.subr.mxu0 0.0
      %8462 = vmatpush1.msra.mxu0 0.0
      %8463 = vmatprep.subr.mxu0 0.0
      %8464 = vmatpush1.msra.mxu0 0.0
      %8465 = vmatprep.subr.mxu0 0.0
      %8466 = vmatpush1.msra.mxu0 0.0
      %8467 = vmatprep.subr.mxu0 0.0
      %8468 = vmatpush1.msra.mxu0 0.0
      %8469 = vmatprep.subr.mxu0 0.0
      %8470 = vmatpush1.msra.mxu0 0.0
      %8471 = vmatprep.subr.mxu0 0.0
      %8472 = vmatpush1.msra.mxu0 0.0
      %8473 = vmatprep.subr.mxu0 0.0
      %8474 = vmatpush1.msra.mxu0 0.0
      %8475 = vmatprep.subr.mxu0 0.0
      %8476 = vmatpush1.msra.mxu0 0.0
      %8477 = vmatprep.subr.mxu0 0.0
      %8478 = vmatpush1.msra.mxu0 0.0
      %8479 = vmatprep.subr.mxu0 0.0
      %8480 = vmatpush1.msra.mxu0 0.0
      %8481 = vmatprep.subr.mxu0 0.0
      %8482 = vmatpush1.msra.mxu0 0.0
      %8483 = vmatprep.subr.mxu0 0.0
      %8484 = vmatpush1.msra.mxu0 0.0
      %8485 = vmatprep.subr.mxu0 0.0
      %8486 = vmatpush1.msra.mxu0 0.0
      %8487 = vmatprep.mubr.f32.mxu0 0.0
      %8488 = vmatmul.mubr.f32.gmra.mrb[0].mxu0 %v8388
      %v8489 = vpop.f32.mrb[0].mxu0
      %v8490 = vadd.f32 0.0, %v8489
      %v8491 = vpop.f32.mrb[0].mxu0
      %8492 = vmatprep.mubr.f32.mxu0 0.0
      %8493 = vmatmul.mubr.f32.gmra.mrb[0].mxu0 %v8391
      %v8494 = vpop.f32.mrb[0].mxu0
      %v8495 = vadd.f32 0.0, %v8494
      %v8496 = vpop.f32.mrb[0].mxu0
      %8497 = vmatprep.mubr.f32.mxu0 0.0
      %8498 = vmatmul.mubr.f32.gmra.mrb[0].mxu0 %v8394
      %v8499 = vpop.f32.mrb[0].mxu0
      %v8500 = vadd.f32 0.0, %v8499
      %v8501 = vpop.f32.mrb[0].mxu0
      %8502 = vmatprep.mubr.f32.mxu0 0.0
      %8503 = vmatmul.mubr.f32.gmra.mrb[0].mxu0 %v8397
      %v8504 = vpop.f32.mrb[0].mxu0
      %v8505 = vadd.f32 0.0, %v8504
      %v8506 = vpop.f32.mrb[0].mxu0
      %8507 = vmatprep.mubr.f32.mxu0 0.0
      %8508 = vmatmul.mubr.f32.gmra.mrb[0].mxu0 %v8400
      %v8509 = vpop.f32.mrb[0].mxu0
      %v8510 = vadd.f32 0.0, %v8509
      %v8511 = vpop.f32.mrb[0].mxu0
      %8512 = vmatprep.mubr.f32.mxu0 0.0
      %8513 = vmatmul.mubr.f32.gmra.mrb[0].mxu0 %v8403
      %v8514 = vpop.f32.mrb[0].mxu0
      %v8515 = vadd.f32 0.0, %v8514
      %v8516 = vpop.f32.mrb[0].mxu0
      %8517 = vmatprep.mubr.f32.mxu0 0.0
      %8518 = vmatmul.mubr.f32.gmra.mrb[0].mxu0 %v8406
      %v8519 = vpop.f32.mrb[0].mxu0
      %v8520 = vadd.f32 0.0, %v8519
      %v8521 = vpop.f32.mrb[0].mxu0
      %8522 = vmatprep.mubr.f32.mxu0 0.0
      %8523 = vmatmul.mubr.f32.gmra.mrb[0].mxu0 %v8409
      %v8524 = vpop.f32.mrb[0].mxu0
      %v8525 = vadd.f32 0.0, %v8524
      %v8526 = vpop.f32.mrb[0].mxu0
      %8527 = vmatprep.mubr.f32.mxu0 0.0
      %8528 = vmatmul.mubr.f32.gmra.mrb[0].mxu0 %v8412
      %v8529 = vpop.f32.mrb[0].mxu0
      %v8530 = vadd.f32 0.0, %v8529
      %v8531 = vpop.f32.mrb[0].mxu0
      %8532 = vmatprep.mubr.f32.mxu0 0.0
      %8533 = vmatmul.mubr.f32.gmra.mrb[0].mxu0 %v8415
      %v8534 = vpop.f32.mrb[0].mxu0
      %v8535 = vadd.f32 0.0, %v8534
      %v8536 = vpop.f32.mrb[0].mxu0
      %8537 = vmatprep.mubr.f32.mxu0 0.0
      %8538 = vmatmul.mubr.f32.gmra.mrb[0].mxu0 %v8418
      %v8539 = vpop.f32.mrb[0].mxu0
      %v8540 = vadd.f32 0.0, %v8539
      %v8541 = vpop.f32.mrb[0].mxu0
      %8542 = vmatprep.mubr.f32.mxu0 0.0
      %8543 = vmatmul.mubr.f32.gmra.mrb[0].mxu0 %v8421
      %v8544 = vpop.f32.mrb[0].mxu0
      %v8545 = vadd.f32 0.0, %v8544
      %v8546 = vpop.f32.mrb[0].mxu0
      %8547 = vmatprep.mubr.f32.mxu0 0.0
      %8548 = vmatmul.mubr.f32.gmra.mrb[0].mxu0 %v5282
      %v8549 = vpop.f32.mrb[0].mxu0
      %v8550 = vadd.f32 0.0, %v8549
      %v8551 = vpop.f32.mrb[0].mxu0
      %8552 = vmatprep.mubr.f32.mxu0 0.0
      %8553 = vmatmul.mubr.f32.gmra.mrb[0].mxu0 %v5285
      %v8554 = vpop.f32.mrb[0].mxu0
      %v8555 = vadd.f32 0.0, %v8554
      %v8556 = vpop.f32.mrb[0].mxu0
      %8557 = vmatprep.mubr.f32.mxu0 0.0
      %8558 = vmatmul.mubr.f32.gmra.mrb[0].mxu0 %v5288
      %v8559 = vpop.f32.mrb[0].mxu0
      %v8560 = vadd.f32 0.0, %v8559
      %v8561 = vpop.f32.mrb[0].mxu0
      %8562 = vmatprep.mubr.f32.mxu0 0.0
      %8563 = vmatmul.mubr.f32.gmra.mrb[0].mxu0 %v5291
      %v8564 = vpop.f32.mrb[0].mxu0
      %v8565 = vadd.f32 0.0, %v8564
      %v8566 = vpop.f32.mrb[0].mxu0
      %8567 = vmatprep.mubr.f32.mxu0 0.0
      %8568 = vmatmul.mubr.f32.gmra.mrb[0].mxu0 %v5294
      %v8569 = vpop.f32.mrb[0].mxu0
      %v8570 = vadd.f32 0.0, %v8569
      %v8571 = vpop.f32.mrb[0].mxu0
      %8572 = vmatprep.mubr.f32.mxu0 0.0
      %8573 = vmatmul.mubr.f32.gmra.mrb[0].mxu0 %v5297
      %v8574 = vpop.f32.mrb[0].mxu0
      %v8575 = vadd.f32 0.0, %v8574
      %v8576 = vpop.f32.mrb[0].mxu0
      %8577 = vmatprep.mubr.f32.mxu0 0.0
      %8578 = vmatmul.mubr.f32.gmra.mrb[0].mxu0 %v5300
      %v8579 = vpop.f32.mrb[0].mxu0
      %v8580 = vadd.f32 0.0, %v8579
      %v8581 = vpop.f32.mrb[0].mxu0
      %8582 = vmatprep.mubr.f32.mxu0 0.0
      %8583 = vmatmul.mubr.f32.gmra.mrb[0].mxu0 %v5303
      %v8584 = vpop.f32.mrb[0].mxu0
      %v8585 = vadd.f32 0.0, %v8584
      %v8586 = vpop.f32.mrb[0].mxu0
      %8587 = vmatprep.mubr.f32.mxu0 0.0
      %8588 = vmatmul.mubr.f32.gmra.mrb[0].mxu0 %v5306
      %v8589 = vpop.f32.mrb[0].mxu0
      %v8590 = vadd.f32 0.0, %v8589
      %v8591 = vpop.f32.mrb[0].mxu0
      %8592 = vmatprep.mubr.f32.mxu0 0.0
      %8593 = vmatmul.mubr.f32.gmra.mrb[0].mxu0 %v5309
      %v8594 = vpop.f32.mrb[0].mxu0
      %v8595 = vadd.f32 0.0, %v8594
      %v8596 = vpop.f32.mrb[0].mxu0
      %8597 = vmatprep.mubr.f32.mxu0 0.0
      %8598 = vmatmul.mubr.f32.gmra.mrb[0].mxu0 %v5312
      %v8599 = vpop.f32.mrb[0].mxu0
      %v8600 = vadd.f32 0.0, %v8599
      %v8601 = vpop.f32.mrb[0].mxu0
      %8602 = vmatprep.mubr.f32.mxu0 0.0
      %8603 = vmatmul.mubr.f32.gmra.mrb[0].mxu0 %v5315
      %v8604 = vpop.f32.mrb[0].mxu0
      %v8605 = vadd.f32 0.0, %v8604
      %v8606 = vpop.f32.mrb[0].mxu0
      %8607 = vmatprep.mubr.f32.mxu0 0.0
      %8608 = vmatmul.mubr.f32.gmra.mrb[0].mxu0 %v2240
      %v8609 = vpop.f32.mrb[0].mxu0
      %v8610 = vadd.f32 0.0, %v8609
      %v8611 = vpop.f32.mrb[0].mxu0
      %8612 = vmatprep.mubr.f32.mxu0 0.0
      %8613 = vmatmul.mubr.f32.gmra.mrb[0].mxu0 %v2243
      %v8614 = vpop.f32.mrb[0].mxu0
      %v8615 = vadd.f32 0.0, %v8614
      %v8616 = vpop.f32.mrb[0].mxu0
      %8617 = vmatprep.mubr.f32.mxu0 0.0
      %8618 = vmatmul.mubr.f32.gmra.mrb[0].mxu0 %v2246
      %v8619 = vpop.f32.mrb[0].mxu0
      %v8620 = vadd.f32 0.0, %v8619
      %v8621 = vpop.f32.mrb[0].mxu0
      %8622 = vmatprep.mubr.f32.mxu0 0.0
      %8623 = vmatmul.mubr.f32.gmra.mrb[0].mxu0 %v2249
      %v8624 = vpop.f32.mrb[0].mxu0
      %v8625 = vadd.f32 0.0, %v8624
      %v8626 = vpop.f32.mrb[0].mxu0
      %8627 = vmatprep.mubr.f32.mxu0 0.0
      %8628 = vmatmul.mubr.f32.gmra.mrb[0].mxu0 %v2252
      %v8629 = vpop.f32.mrb[0].mxu0
      %v8630 = vadd.f32 0.0, %v8629
      %v8631 = vpop.f32.mrb[0].mxu0
      %8632 = vmatprep.mubr.f32.mxu0 0.0
      %8633 = vmatmul.mubr.f32.gmra.mrb[0].mxu0 %v2255
      %v8634 = vpop.f32.mrb[0].mxu0
      %v8635 = vadd.f32 0.0, %v8634
      %v8636 = vpop.f32.mrb[0].mxu0
      %8637 = vmatprep.mubr.f32.mxu0 0.0
      %8638 = vmatmul.mubr.f32.gmra.mrb[0].mxu0 %v2258
      %v8639 = vpop.f32.mrb[0].mxu0
      %v8640 = vadd.f32 0.0, %v8639
      %v8641 = vpop.f32.mrb[0].mxu0
      %8642 = vmatprep.mubr.f32.mxu0 0.0
      %8643 = vmatmul.mubr.f32.gmra.mrb[0].mxu0 %v2261
      %v8644 = vpop.f32.mrb[0].mxu0
      %v8645 = vadd.f32 0.0, %v8644
      %v8646 = vpop.f32.mrb[0].mxu0
      %8647 = vdwg.mxu0
      %v8648 = vadd.f32 %v8353, %v8490
      %v8649 = vadd.f32 %v8354, %v8495
      %v8650 = vadd.f32 %v8355, %v8500
      %v8651 = vadd.f32 %v8356, %v8505
      %v8652 = vadd.f32 %v8357, %v8510
      %v8653 = vadd.f32 %v8358, %v8515
      %v8654 = vadd.f32 %v8359, %v8520
      %v8655 = vadd.f32 %v8360, %v8525
      %v8656 = vadd.f32 %v8361, %v8530
      %v8657 = vadd.f32 %v8362, %v8535
      %v8658 = vadd.f32 %v8363, %v8540
      %v8659 = vadd.f32 %v8364, %v8545
      %v8660 = vadd.f32 %v8365, %v8550
      %v8661 = vadd.f32 %v8366, %v8555
      %v8662 = vadd.f32 %v8367, %v8560
      %v8663 = vadd.f32 %v8368, %v8565
      %v8664 = vadd.f32 %v8369, %v8570
      %v8665 = vadd.f32 %v8370, %v8575
      %v8666 = vadd.f32 %v8371, %v8580
      %v8667 = vadd.f32 %v8372, %v8585
      %v8668 = vadd.f32 %v8373, %v8590
      %v8669 = vadd.f32 %v8374, %v8595
      %v8670 = vadd.f32 %v8375, %v8600
      %v8671 = vadd.f32 %v8376, %v8605
      %v8672 = vadd.f32 %v8377, %v8610
      %v8673 = vadd.f32 %v8378, %v8615
      %v8674 = vadd.f32 %v8379, %v8620
      %v8675 = vadd.f32 %v8380, %v8625
      %v8676 = vadd.f32 %v8381, %v8630
      %v8677 = vadd.f32 %v8382, %v8635
      %v8678 = vadd.f32 %v8383, %v8640
      %v8679 = vadd.f32 %v8384, %v8645
      %s8680 = scalar_lea.vmem %s5, 32
      %v8681 = vld [vmem:[%s8680] sm:$0xff]
      %8682 = vmatprep.subr.mxu0 0.0
      %8683 = vmatpush1.msra.mxu0 %v8681
      %8684 = vmatprep.subr.mxu0 0.0
      %8685 = vmatpush1.msra.mxu0 0.0
      %8686 = vmatprep.subr.mxu0 0.0
      %8687 = vmatpush1.msra.mxu0 0.0
      %8688 = vmatprep.subr.mxu0 0.0
      %8689 = vmatpush1.msra.mxu0 0.0
      %8690 = vmatprep.subr.mxu0 0.0
      %8691 = vmatpush1.msra.mxu0 0.0
      %8692 = vmatprep.subr.mxu0 0.0
      %8693 = vmatpush1.msra.mxu0 0.0
      %8694 = vmatprep.subr.mxu0 0.0
      %8695 = vmatpush1.msra.mxu0 0.0
      %8696 = vmatprep.subr.mxu0 0.0
      %8697 = vmatpush1.msra.mxu0 0.0
      %8698 = vmatprep.subr.mxu0 0.0
      %8699 = vmatpush1.msra.mxu0 0.0
      %8700 = vmatprep.subr.mxu0 0.0
      %8701 = vmatpush1.msra.mxu0 0.0
      %8702 = vmatprep.subr.mxu0 0.0
      %8703 = vmatpush1.msra.mxu0 0.0
      %8704 = vmatprep.subr.mxu0 0.0
      %8705 = vmatpush1.msra.mxu0 0.0
      %8706 = vmatprep.subr.mxu0 0.0
      %8707 = vmatpush1.msra.mxu0 0.0
      %8708 = vmatprep.subr.mxu0 0.0
      %8709 = vmatpush1.msra.mxu0 0.0
      %8710 = vmatprep.subr.mxu0 0.0
      %8711 = vmatpush1.msra.mxu0 0.0
      %8712 = vmatprep.subr.mxu0 0.0
      %8713 = vmatpush1.msra.mxu0 0.0
      %8714 = vmatprep.subr.mxu0 0.0
      %8715 = vmatpush1.msra.mxu0 0.0
      %8716 = vmatprep.subr.mxu0 0.0
      %8717 = vmatpush1.msra.mxu0 0.0
      %8718 = vmatprep.subr.mxu0 0.0
      %8719 = vmatpush1.msra.mxu0 0.0
      %8720 = vmatprep.subr.mxu0 0.0
      %8721 = vmatpush1.msra.mxu0 0.0
      %8722 = vmatprep.subr.mxu0 0.0
      %8723 = vmatpush1.msra.mxu0 0.0
      %8724 = vmatprep.subr.mxu0 0.0
      %8725 = vmatpush1.msra.mxu0 0.0
      %8726 = vmatprep.subr.mxu0 0.0
      %8727 = vmatpush1.msra.mxu0 0.0
      %8728 = vmatprep.subr.mxu0 0.0
      %8729 = vmatpush1.msra.mxu0 0.0
      %8730 = vmatprep.subr.mxu0 0.0
      %8731 = vmatpush1.msra.mxu0 0.0
      %8732 = vmatprep.subr.mxu0 0.0
      %8733 = vmatpush1.msra.mxu0 0.0
      %8734 = vmatprep.subr.mxu0 0.0
      %8735 = vmatpush1.msra.mxu0 0.0
      %8736 = vmatprep.subr.mxu0 0.0
      %8737 = vmatpush1.msra.mxu0 0.0
      %8738 = vmatprep.subr.mxu0 0.0
      %8739 = vmatpush1.msra.mxu0 0.0
      %8740 = vmatprep.subr.mxu0 0.0
      %8741 = vmatpush1.msra.mxu0 0.0
      %8742 = vmatprep.subr.mxu0 0.0
      %8743 = vmatpush1.msra.mxu0 0.0
      %8744 = vmatprep.subr.mxu0 0.0
      %8745 = vmatpush1.msra.mxu0 0.0
      %8746 = vmatprep.mubr.f32.mxu0 0.0
      %8747 = vmatmul.mubr.f32.gmra.mrb[0].mxu0 %v2276
      %v8748 = vpop.f32.mrb[0].mxu0
      %v8749 = vadd.f32 0.0, %v8748
      %v8750 = vpop.f32.mrb[0].mxu0
      %8751 = vmatprep.mubr.f32.mxu0 0.0
      %8752 = vmatmul.mubr.f32.gmra.mrb[0].mxu0 %v2279
      %v8753 = vpop.f32.mrb[0].mxu0
      %v8754 = vadd.f32 0.0, %v8753
      %v8755 = vpop.f32.mrb[0].mxu0
      %8756 = vmatprep.mubr.f32.mxu0 0.0
      %8757 = vmatmul.mubr.f32.gmra.mrb[0].mxu0 %v2282
      %v8758 = vpop.f32.mrb[0].mxu0
      %v8759 = vadd.f32 0.0, %v8758
      %v8760 = vpop.f32.mrb[0].mxu0
      %8761 = vmatprep.mubr.f32.mxu0 0.0
      %8762 = vmatmul.mubr.f32.gmra.mrb[0].mxu0 %v2285
      %v8763 = vpop.f32.mrb[0].mxu0
      %v8764 = vadd.f32 0.0, %v8763
      %v8765 = vpop.f32.mrb[0].mxu0
      %8766 = vmatprep.mubr.f32.mxu0 0.0
      %8767 = vmatmul.mubr.f32.gmra.mrb[0].mxu0 %v2288
      %v8768 = vpop.f32.mrb[0].mxu0
      %v8769 = vadd.f32 0.0, %v8768
      %v8770 = vpop.f32.mrb[0].mxu0
      %8771 = vmatprep.mubr.f32.mxu0 0.0
      %8772 = vmatmul.mubr.f32.gmra.mrb[0].mxu0 %v2291
      %v8773 = vpop.f32.mrb[0].mxu0
      %v8774 = vadd.f32 0.0, %v8773
      %v8775 = vpop.f32.mrb[0].mxu0
      %8776 = vmatprep.mubr.f32.mxu0 0.0
      %8777 = vmatmul.mubr.f32.gmra.mrb[0].mxu0 %v2294
      %v8778 = vpop.f32.mrb[0].mxu0
      %v8779 = vadd.f32 0.0, %v8778
      %v8780 = vpop.f32.mrb[0].mxu0
      %8781 = vmatprep.mubr.f32.mxu0 0.0
      %8782 = vmatmul.mubr.f32.gmra.mrb[0].mxu0 %v2297
      %v8783 = vpop.f32.mrb[0].mxu0
      %v8784 = vadd.f32 0.0, %v8783
      %v8785 = vpop.f32.mrb[0].mxu0
      %8786 = vmatprep.mubr.f32.mxu0 0.0
      %8787 = vmatmul.mubr.f32.gmra.mrb[0].mxu0 %v2300
      %v8788 = vpop.f32.mrb[0].mxu0
      %v8789 = vadd.f32 0.0, %v8788
      %v8790 = vpop.f32.mrb[0].mxu0
      %8791 = vmatprep.mubr.f32.mxu0 0.0
      %8792 = vmatmul.mubr.f32.gmra.mrb[0].mxu0 %v2303
      %v8793 = vpop.f32.mrb[0].mxu0
      %v8794 = vadd.f32 0.0, %v8793
      %v8795 = vpop.f32.mrb[0].mxu0
      %8796 = vmatprep.mubr.f32.mxu0 0.0
      %8797 = vmatmul.mubr.f32.gmra.mrb[0].mxu0 %v2306
      %v8798 = vpop.f32.mrb[0].mxu0
      %v8799 = vadd.f32 0.0, %v8798
      %v8800 = vpop.f32.mrb[0].mxu0
      %8801 = vmatprep.mubr.f32.mxu0 0.0
      %8802 = vmatmul.mubr.f32.gmra.mrb[0].mxu0 %v2309
      %v8803 = vpop.f32.mrb[0].mxu0
      %v8804 = vadd.f32 0.0, %v8803
      %v8805 = vpop.f32.mrb[0].mxu0
      %8806 = vmatprep.mubr.f32.mxu0 0.0
      %8807 = vmatmul.mubr.f32.gmra.mrb[0].mxu0 %v2312
      %v8808 = vpop.f32.mrb[0].mxu0
      %v8809 = vadd.f32 0.0, %v8808
      %v8810 = vpop.f32.mrb[0].mxu0
      %8811 = vmatprep.mubr.f32.mxu0 0.0
      %8812 = vmatmul.mubr.f32.gmra.mrb[0].mxu0 %v2315
      %v8813 = vpop.f32.mrb[0].mxu0
      %v8814 = vadd.f32 0.0, %v8813
      %v8815 = vpop.f32.mrb[0].mxu0
      %8816 = vmatprep.mubr.f32.mxu0 0.0
      %8817 = vmatmul.mubr.f32.gmra.mrb[0].mxu0 %v2318
      %v8818 = vpop.f32.mrb[0].mxu0
      %v8819 = vadd.f32 0.0, %v8818
      %v8820 = vpop.f32.mrb[0].mxu0
      %8821 = vmatprep.mubr.f32.mxu0 0.0
      %8822 = vmatmul.mubr.f32.gmra.mrb[0].mxu0 %v2321
      %v8823 = vpop.f32.mrb[0].mxu0
      %v8824 = vadd.f32 0.0, %v8823
      %v8825 = vpop.f32.mrb[0].mxu0
      %8826 = vmatprep.mubr.f32.mxu0 0.0
      %8827 = vmatmul.mubr.f32.gmra.mrb[0].mxu0 %v2324
      %v8828 = vpop.f32.mrb[0].mxu0
      %v8829 = vadd.f32 0.0, %v8828
      %v8830 = vpop.f32.mrb[0].mxu0
      %8831 = vmatprep.mubr.f32.mxu0 0.0
      %8832 = vmatmul.mubr.f32.gmra.mrb[0].mxu0 %v2327
      %v8833 = vpop.f32.mrb[0].mxu0
      %v8834 = vadd.f32 0.0, %v8833
      %v8835 = vpop.f32.mrb[0].mxu0
      %8836 = vmatprep.mubr.f32.mxu0 0.0
      %8837 = vmatmul.mubr.f32.gmra.mrb[0].mxu0 %v2330
      %v8838 = vpop.f32.mrb[0].mxu0
      %v8839 = vadd.f32 0.0, %v8838
      %v8840 = vpop.f32.mrb[0].mxu0
      %8841 = vmatprep.mubr.f32.mxu0 0.0
      %8842 = vmatmul.mubr.f32.gmra.mrb[0].mxu0 %v2333
      %v8843 = vpop.f32.mrb[0].mxu0
      %v8844 = vadd.f32 0.0, %v8843
      %v8845 = vpop.f32.mrb[0].mxu0
      %8846 = vmatprep.mubr.f32.mxu0 0.0
      %8847 = vmatmul.mubr.f32.gmra.mrb[0].mxu0 %v2595
      %v8848 = vpop.f32.mrb[0].mxu0
      %v8849 = vadd.f32 0.0, %v8848
      %v8850 = vpop.f32.mrb[0].mxu0
      %8851 = vmatprep.mubr.f32.mxu0 0.0
      %8852 = vmatmul.mubr.f32.gmra.mrb[0].mxu0 %v2598
      %v8853 = vpop.f32.mrb[0].mxu0
      %v8854 = vadd.f32 0.0, %v8853
      %v8855 = vpop.f32.mrb[0].mxu0
      %8856 = vmatprep.mubr.f32.mxu0 0.0
      %8857 = vmatmul.mubr.f32.gmra.mrb[0].mxu0 %v2601
      %v8858 = vpop.f32.mrb[0].mxu0
      %v8859 = vadd.f32 0.0, %v8858
      %v8860 = vpop.f32.mrb[0].mxu0
      %8861 = vmatprep.mubr.f32.mxu0 0.0
      %8862 = vmatmul.mubr.f32.gmra.mrb[0].mxu0 %v2604
      %v8863 = vpop.f32.mrb[0].mxu0
      %v8864 = vadd.f32 0.0, %v8863
      %v8865 = vpop.f32.mrb[0].mxu0
      %8866 = vmatprep.mubr.f32.mxu0 0.0
      %8867 = vmatmul.mubr.f32.gmra.mrb[0].mxu0 %v2607
      %v8868 = vpop.f32.mrb[0].mxu0
      %v8869 = vadd.f32 0.0, %v8868
      %v8870 = vpop.f32.mrb[0].mxu0
      %8871 = vmatprep.mubr.f32.mxu0 0.0
      %8872 = vmatmul.mubr.f32.gmra.mrb[0].mxu0 %v2610
      %v8873 = vpop.f32.mrb[0].mxu0
      %v8874 = vadd.f32 0.0, %v8873
      %v8875 = vpop.f32.mrb[0].mxu0
      %8876 = vmatprep.mubr.f32.mxu0 0.0
      %8877 = vmatmul.mubr.f32.gmra.mrb[0].mxu0 %v2613
      %v8878 = vpop.f32.mrb[0].mxu0
      %v8879 = vadd.f32 0.0, %v8878
      %v8880 = vpop.f32.mrb[0].mxu0
      %8881 = vmatprep.mubr.f32.mxu0 0.0
      %8882 = vmatmul.mubr.f32.gmra.mrb[0].mxu0 %v2616
      %v8883 = vpop.f32.mrb[0].mxu0
      %v8884 = vadd.f32 0.0, %v8883
      %v8885 = vpop.f32.mrb[0].mxu0
      %8886 = vmatprep.mubr.f32.mxu0 0.0
      %8887 = vmatmul.mubr.f32.gmra.mrb[0].mxu0 %v2619
      %v8888 = vpop.f32.mrb[0].mxu0
      %v8889 = vadd.f32 0.0, %v8888
      %v8890 = vpop.f32.mrb[0].mxu0
      %8891 = vmatprep.mubr.f32.mxu0 0.0
      %8892 = vmatmul.mubr.f32.gmra.mrb[0].mxu0 %v2622
      %v8893 = vpop.f32.mrb[0].mxu0
      %v8894 = vadd.f32 0.0, %v8893
      %v8895 = vpop.f32.mrb[0].mxu0
      %8896 = vmatprep.mubr.f32.mxu0 0.0
      %8897 = vmatmul.mubr.f32.gmra.mrb[0].mxu0 %v2625
      %v8898 = vpop.f32.mrb[0].mxu0
      %v8899 = vadd.f32 0.0, %v8898
      %v8900 = vpop.f32.mrb[0].mxu0
      %8901 = vmatprep.mubr.f32.mxu0 0.0
      %8902 = vmatmul.mubr.f32.gmra.mrb[0].mxu0 %v2628
      %v8903 = vpop.f32.mrb[0].mxu0
      %v8904 = vadd.f32 0.0, %v8903
      %v8905 = vpop.f32.mrb[0].mxu0
      %8906 = vdwg.mxu0
      %v8907 = vadd.f32 %v8648, %v8749
      %v8908 = vadd.f32 %v8649, %v8754
      %v8909 = vadd.f32 %v8650, %v8759
      %v8910 = vadd.f32 %v8651, %v8764
      %v8911 = vadd.f32 %v8652, %v8769
      %v8912 = vadd.f32 %v8653, %v8774
      %v8913 = vadd.f32 %v8654, %v8779
      %v8914 = vadd.f32 %v8655, %v8784
      %v8915 = vadd.f32 %v8656, %v8789
      %v8916 = vadd.f32 %v8657, %v8794
      %v8917 = vadd.f32 %v8658, %v8799
      %v8918 = vadd.f32 %v8659, %v8804
      %v8919 = vadd.f32 %v8660, %v8809
      %v8920 = vadd.f32 %v8661, %v8814
      %v8921 = vadd.f32 %v8662, %v8819
      %v8922 = vadd.f32 %v8663, %v8824
      %v8923 = vadd.f32 %v8664, %v8829
      %v8924 = vadd.f32 %v8665, %v8834
      %v8925 = vadd.f32 %v8666, %v8839
      %v8926 = vadd.f32 %v8667, %v8844
      %v8927 = vadd.f32 %v8668, %v8849
      %v8928 = vadd.f32 %v8669, %v8854
      %v8929 = vadd.f32 %v8670, %v8859
      %v8930 = vadd.f32 %v8671, %v8864
      %v8931 = vadd.f32 %v8672, %v8869
      %v8932 = vadd.f32 %v8673, %v8874
      %v8933 = vadd.f32 %v8674, %v8879
      %v8934 = vadd.f32 %v8675, %v8884
      %v8935 = vadd.f32 %v8676, %v8889
      %v8936 = vadd.f32 %v8677, %v8894
      %v8937 = vadd.f32 %v8678, %v8899
      %v8938 = vadd.f32 %v8679, %v8904
      %s8939 = scalar_lea.vmem %s5, 56
      %v8940 = vld [vmem:[%s8939] sm:$0xff]
      %v8942 = vsel %vm279, %v2225, 0
      %v8945 = vsel %vm279, %v2226, 0
      %v8948 = vsel %vm279, %v2227, 0
      %v8951 = vsel %vm279, %v2228, 0
      %v8954 = vsel %vm279, %v2229, 0
      %v8957 = vsel %vm279, %v2230, 0
      %v8960 = vsel %vm279, %v2231, 0
      %v8963 = vsel %vm279, %v2232, 0
      %v8966 = vsel %vm279, %v2233, 0
      %v8969 = vsel %vm279, %v2234, 0
      %v8972 = vsel %vm279, %v2235, 0
      %v8975 = vsel %vm279, %v2236, 0
      %8977 = vmatprep.subr.mxu0 0.0
      %8978 = vmatpush1.msra.mxu0 %v8940
      %8979 = vmatprep.subr.mxu0 0.0
      %8980 = vmatpush1.msra.mxu0 0.0
      %8981 = vmatprep.subr.mxu0 0.0
      %8982 = vmatpush1.msra.mxu0 0.0
      %8983 = vmatprep.subr.mxu0 0.0
      %8984 = vmatpush1.msra.mxu0 0.0
      %8985 = vmatprep.subr.mxu0 0.0
      %8986 = vmatpush1.msra.mxu0 0.0
      %8987 = vmatprep.subr.mxu0 0.0
      %8988 = vmatpush1.msra.mxu0 0.0
      %8989 = vmatprep.subr.mxu0 0.0
      %8990 = vmatpush1.msra.mxu0 0.0
      %8991 = vmatprep.subr.mxu0 0.0
      %8992 = vmatpush1.msra.mxu0 0.0
      %8993 = vmatprep.subr.mxu0 0.0
      %8994 = vmatpush1.msra.mxu0 0.0
      %8995 = vmatprep.subr.mxu0 0.0
      %8996 = vmatpush1.msra.mxu0 0.0
      %8997 = vmatprep.subr.mxu0 0.0
      %8998 = vmatpush1.msra.mxu0 0.0
      %8999 = vmatprep.subr.mxu0 0.0
      %9000 = vmatpush1.msra.mxu0 0.0
      %9001 = vmatprep.subr.mxu0 0.0
      %9002 = vmatpush1.msra.mxu0 0.0
      %9003 = vmatprep.subr.mxu0 0.0
      %9004 = vmatpush1.msra.mxu0 0.0
      %9005 = vmatprep.subr.mxu0 0.0
      %9006 = vmatpush1.msra.mxu0 0.0
      %9007 = vmatprep.subr.mxu0 0.0
      %9008 = vmatpush1.msra.mxu0 0.0
      %9009 = vmatprep.subr.mxu0 0.0
      %9010 = vmatpush1.msra.mxu0 0.0
      %9011 = vmatprep.subr.mxu0 0.0
      %9012 = vmatpush1.msra.mxu0 0.0
      %9013 = vmatprep.subr.mxu0 0.0
      %9014 = vmatpush1.msra.mxu0 0.0
      %9015 = vmatprep.subr.mxu0 0.0
      %9016 = vmatpush1.msra.mxu0 0.0
      %9017 = vmatprep.subr.mxu0 0.0
      %9018 = vmatpush1.msra.mxu0 0.0
      %9019 = vmatprep.subr.mxu0 0.0
      %9020 = vmatpush1.msra.mxu0 0.0
      %9021 = vmatprep.subr.mxu0 0.0
      %9022 = vmatpush1.msra.mxu0 0.0
      %9023 = vmatprep.subr.mxu0 0.0
      %9024 = vmatpush1.msra.mxu0 0.0
      %9025 = vmatprep.subr.mxu0 0.0
      %9026 = vmatpush1.msra.mxu0 0.0
      %9027 = vmatprep.subr.mxu0 0.0
      %9028 = vmatpush1.msra.mxu0 0.0
      %9029 = vmatprep.subr.mxu0 0.0
      %9030 = vmatpush1.msra.mxu0 0.0
      %9031 = vmatprep.subr.mxu0 0.0
      %9032 = vmatpush1.msra.mxu0 0.0
      %9033 = vmatprep.subr.mxu0 0.0
      %9034 = vmatpush1.msra.mxu0 0.0
      %9035 = vmatprep.subr.mxu0 0.0
      %9036 = vmatpush1.msra.mxu0 0.0
      %9037 = vmatprep.subr.mxu0 0.0
      %9038 = vmatpush1.msra.mxu0 0.0
      %9039 = vmatprep.subr.mxu0 0.0
      %9040 = vmatpush1.msra.mxu0 0.0
      %9041 = vmatprep.mubr.f32.mxu0 0.0
      %9042 = vmatmul.mubr.f32.gmra.mrb[0].mxu0 %v2902
      %v9043 = vpop.f32.mrb[0].mxu0
      %v9044 = vadd.f32 0.0, %v9043
      %v9045 = vpop.f32.mrb[0].mxu0
      %9046 = vmatprep.mubr.f32.mxu0 0.0
      %9047 = vmatmul.mubr.f32.gmra.mrb[0].mxu0 %v2905
      %v9048 = vpop.f32.mrb[0].mxu0
      %v9049 = vadd.f32 0.0, %v9048
      %v9050 = vpop.f32.mrb[0].mxu0
      %9051 = vmatprep.mubr.f32.mxu0 0.0
      %9052 = vmatmul.mubr.f32.gmra.mrb[0].mxu0 %v2908
      %v9053 = vpop.f32.mrb[0].mxu0
      %v9054 = vadd.f32 0.0, %v9053
      %v9055 = vpop.f32.mrb[0].mxu0
      %9056 = vmatprep.mubr.f32.mxu0 0.0
      %9057 = vmatmul.mubr.f32.gmra.mrb[0].mxu0 %v2911
      %v9058 = vpop.f32.mrb[0].mxu0
      %v9059 = vadd.f32 0.0, %v9058
      %v9060 = vpop.f32.mrb[0].mxu0
      %9061 = vmatprep.mubr.f32.mxu0 0.0
      %9062 = vmatmul.mubr.f32.gmra.mrb[0].mxu0 %v2914
      %v9063 = vpop.f32.mrb[0].mxu0
      %v9064 = vadd.f32 0.0, %v9063
      %v9065 = vpop.f32.mrb[0].mxu0
      %9066 = vmatprep.mubr.f32.mxu0 0.0
      %9067 = vmatmul.mubr.f32.gmra.mrb[0].mxu0 %v2917
      %v9068 = vpop.f32.mrb[0].mxu0
      %v9069 = vadd.f32 0.0, %v9068
      %v9070 = vpop.f32.mrb[0].mxu0
      %9071 = vmatprep.mubr.f32.mxu0 0.0
      %9072 = vmatmul.mubr.f32.gmra.mrb[0].mxu0 %v2920
      %v9073 = vpop.f32.mrb[0].mxu0
      %v9074 = vadd.f32 0.0, %v9073
      %v9075 = vpop.f32.mrb[0].mxu0
      %9076 = vmatprep.mubr.f32.mxu0 0.0
      %9077 = vmatmul.mubr.f32.gmra.mrb[0].mxu0 %v2923
      %v9078 = vpop.f32.mrb[0].mxu0
      %v9079 = vadd.f32 0.0, %v9078
      %v9080 = vpop.f32.mrb[0].mxu0
      %9081 = vmatprep.mubr.f32.mxu0 0.0
      %9082 = vmatmul.mubr.f32.gmra.mrb[0].mxu0 %v5836
      %v9083 = vpop.f32.mrb[0].mxu0
      %v9084 = vadd.f32 0.0, %v9083
      %v9085 = vpop.f32.mrb[0].mxu0
      %9086 = vmatprep.mubr.f32.mxu0 0.0
      %9087 = vmatmul.mubr.f32.gmra.mrb[0].mxu0 %v5839
      %v9088 = vpop.f32.mrb[0].mxu0
      %v9089 = vadd.f32 0.0, %v9088
      %v9090 = vpop.f32.mrb[0].mxu0
      %9091 = vmatprep.mubr.f32.mxu0 0.0
      %9092 = vmatmul.mubr.f32.gmra.mrb[0].mxu0 %v5842
      %v9093 = vpop.f32.mrb[0].mxu0
      %v9094 = vadd.f32 0.0, %v9093
      %v9095 = vpop.f32.mrb[0].mxu0
      %9096 = vmatprep.mubr.f32.mxu0 0.0
      %9097 = vmatmul.mubr.f32.gmra.mrb[0].mxu0 %v5845
      %v9098 = vpop.f32.mrb[0].mxu0
      %v9099 = vadd.f32 0.0, %v9098
      %v9100 = vpop.f32.mrb[0].mxu0
      %9101 = vmatprep.mubr.f32.mxu0 0.0
      %9102 = vmatmul.mubr.f32.gmra.mrb[0].mxu0 %v5848
      %v9103 = vpop.f32.mrb[0].mxu0
      %v9104 = vadd.f32 0.0, %v9103
      %v9105 = vpop.f32.mrb[0].mxu0
      %9106 = vmatprep.mubr.f32.mxu0 0.0
      %9107 = vmatmul.mubr.f32.gmra.mrb[0].mxu0 %v5851
      %v9108 = vpop.f32.mrb[0].mxu0
      %v9109 = vadd.f32 0.0, %v9108
      %v9110 = vpop.f32.mrb[0].mxu0
      %9111 = vmatprep.mubr.f32.mxu0 0.0
      %9112 = vmatmul.mubr.f32.gmra.mrb[0].mxu0 %v5854
      %v9113 = vpop.f32.mrb[0].mxu0
      %v9114 = vadd.f32 0.0, %v9113
      %v9115 = vpop.f32.mrb[0].mxu0
      %9116 = vmatprep.mubr.f32.mxu0 0.0
      %9117 = vmatmul.mubr.f32.gmra.mrb[0].mxu0 %v5857
      %v9118 = vpop.f32.mrb[0].mxu0
      %v9119 = vadd.f32 0.0, %v9118
      %v9120 = vpop.f32.mrb[0].mxu0
      %9121 = vmatprep.mubr.f32.mxu0 0.0
      %9122 = vmatmul.mubr.f32.gmra.mrb[0].mxu0 %v5860
      %v9123 = vpop.f32.mrb[0].mxu0
      %v9124 = vadd.f32 0.0, %v9123
      %v9125 = vpop.f32.mrb[0].mxu0
      %9126 = vmatprep.mubr.f32.mxu0 0.0
      %9127 = vmatmul.mubr.f32.gmra.mrb[0].mxu0 %v5863
      %v9128 = vpop.f32.mrb[0].mxu0
      %v9129 = vadd.f32 0.0, %v9128
      %v9130 = vpop.f32.mrb[0].mxu0
      %9131 = vmatprep.mubr.f32.mxu0 0.0
      %9132 = vmatmul.mubr.f32.gmra.mrb[0].mxu0 %v5866
      %v9133 = vpop.f32.mrb[0].mxu0
      %v9134 = vadd.f32 0.0, %v9133
      %v9135 = vpop.f32.mrb[0].mxu0
      %9136 = vmatprep.mubr.f32.mxu0 0.0
      %9137 = vmatmul.mubr.f32.gmra.mrb[0].mxu0 %v5869
      %v9138 = vpop.f32.mrb[0].mxu0
      %v9139 = vadd.f32 0.0, %v9138
      %v9140 = vpop.f32.mrb[0].mxu0
      %9141 = vmatprep.mubr.f32.mxu0 0.0
      %9142 = vmatmul.mubr.f32.gmra.mrb[0].mxu0 %v8942
      %v9143 = vpop.f32.mrb[0].mxu0
      %v9144 = vadd.f32 0.0, %v9143
      %v9145 = vpop.f32.mrb[0].mxu0
      %9146 = vmatprep.mubr.f32.mxu0 0.0
      %9147 = vmatmul.mubr.f32.gmra.mrb[0].mxu0 %v8945
      %v9148 = vpop.f32.mrb[0].mxu0
      %v9149 = vadd.f32 0.0, %v9148
      %v9150 = vpop.f32.mrb[0].mxu0
      %9151 = vmatprep.mubr.f32.mxu0 0.0
      %9152 = vmatmul.mubr.f32.gmra.mrb[0].mxu0 %v8948
      %v9153 = vpop.f32.mrb[0].mxu0
      %v9154 = vadd.f32 0.0, %v9153
      %v9155 = vpop.f32.mrb[0].mxu0
      %9156 = vmatprep.mubr.f32.mxu0 0.0
      %9157 = vmatmul.mubr.f32.gmra.mrb[0].mxu0 %v8951
      %v9158 = vpop.f32.mrb[0].mxu0
      %v9159 = vadd.f32 0.0, %v9158
      %v9160 = vpop.f32.mrb[0].mxu0
      %9161 = vmatprep.mubr.f32.mxu0 0.0
      %9162 = vmatmul.mubr.f32.gmra.mrb[0].mxu0 %v8954
      %v9163 = vpop.f32.mrb[0].mxu0
      %v9164 = vadd.f32 0.0, %v9163
      %v9165 = vpop.f32.mrb[0].mxu0
      %9166 = vmatprep.mubr.f32.mxu0 0.0
      %9167 = vmatmul.mubr.f32.gmra.mrb[0].mxu0 %v8957
      %v9168 = vpop.f32.mrb[0].mxu0
      %v9169 = vadd.f32 0.0, %v9168
      %v9170 = vpop.f32.mrb[0].mxu0
      %9171 = vmatprep.mubr.f32.mxu0 0.0
      %9172 = vmatmul.mubr.f32.gmra.mrb[0].mxu0 %v8960
      %v9173 = vpop.f32.mrb[0].mxu0
      %v9174 = vadd.f32 0.0, %v9173
      %v9175 = vpop.f32.mrb[0].mxu0
      %9176 = vmatprep.mubr.f32.mxu0 0.0
      %9177 = vmatmul.mubr.f32.gmra.mrb[0].mxu0 %v8963
      %v9178 = vpop.f32.mrb[0].mxu0
      %v9179 = vadd.f32 0.0, %v9178
      %v9180 = vpop.f32.mrb[0].mxu0
      %9181 = vmatprep.mubr.f32.mxu0 0.0
      %9182 = vmatmul.mubr.f32.gmra.mrb[0].mxu0 %v8966
      %v9183 = vpop.f32.mrb[0].mxu0
      %v9184 = vadd.f32 0.0, %v9183
      %v9185 = vpop.f32.mrb[0].mxu0
      %9186 = vmatprep.mubr.f32.mxu0 0.0
      %9187 = vmatmul.mubr.f32.gmra.mrb[0].mxu0 %v8969
      %v9188 = vpop.f32.mrb[0].mxu0
      %v9189 = vadd.f32 0.0, %v9188
      %v9190 = vpop.f32.mrb[0].mxu0
      %9191 = vmatprep.mubr.f32.mxu0 0.0
      %9192 = vmatmul.mubr.f32.gmra.mrb[0].mxu0 %v8972
      %v9193 = vpop.f32.mrb[0].mxu0
      %v9194 = vadd.f32 0.0, %v9193
      %v9195 = vpop.f32.mrb[0].mxu0
      %9196 = vmatprep.mubr.f32.mxu0 0.0
      %9197 = vmatmul.mubr.f32.gmra.mrb[0].mxu0 %v8975
      %v9198 = vpop.f32.mrb[0].mxu0
      %v9199 = vadd.f32 0.0, %v9198
      %v9200 = vpop.f32.mrb[0].mxu0
      %9201 = vdwg.mxu0
      %v9202 = vadd.f32 %v8907, %v9044
      %v9203 = vadd.f32 %v8908, %v9049
      %v9204 = vadd.f32 %v8909, %v9054
      %v9205 = vadd.f32 %v8910, %v9059
      %v9206 = vadd.f32 %v8911, %v9064
      %v9207 = vadd.f32 %v8912, %v9069
      %v9208 = vadd.f32 %v8913, %v9074
      %v9209 = vadd.f32 %v8914, %v9079
      %v9210 = vadd.f32 %v8915, %v9084
      %v9211 = vadd.f32 %v8916, %v9089
      %v9212 = vadd.f32 %v8917, %v9094
      %v9213 = vadd.f32 %v8918, %v9099
      %v9214 = vadd.f32 %v8919, %v9104
      %v9215 = vadd.f32 %v8920, %v9109
      %v9216 = vadd.f32 %v8921, %v9114
      %v9217 = vadd.f32 %v8922, %v9119
      %v9218 = vadd.f32 %v8923, %v9124
      %v9219 = vadd.f32 %v8924, %v9129
      %v9220 = vadd.f32 %v8925, %v9134
      %v9221 = vadd.f32 %v8926, %v9139
      %v9222 = vadd.f32 %v8927, %v9144
      %v9223 = vadd.f32 %v8928, %v9149
      %v9224 = vadd.f32 %v8929, %v9154
      %v9225 = vadd.f32 %v8930, %v9159
      %v9226 = vadd.f32 %v8931, %v9164
      %v9227 = vadd.f32 %v8932, %v9169
      %v9228 = vadd.f32 %v8933, %v9174
      %v9229 = vadd.f32 %v8934, %v9179
      %v9230 = vadd.f32 %v8935, %v9184
      %v9231 = vadd.f32 %v8936, %v9189
      %v9232 = vadd.f32 %v8937, %v9194
      %v9233 = vadd.f32 %v8938, %v9199
      %v9234 = vld [vmem:[#allocation2 + $0x24] sm:$0xff]
      %v9235 = vld [vmem:[#allocation2 + $0x2c] sm:$0xff]
      %v9236 = vld [vmem:[#allocation2 + $0x5c] sm:$0xff]
      %v9237 = vld [vmem:[#allocation2 + $0x64] sm:$0xff]
      %v9238 = vld [vmem:[#allocation2 + $0x94] sm:$0xff]
      %v9239 = vld [vmem:[#allocation2 + $0x9c] sm:$0xff]
      %v9240 = vld [vmem:[#allocation2 + $0xcc] sm:$0xff]
      %v9241 = vld [vmem:[#allocation2 + $0xd4] sm:$0xff]
      %v9242 = vld [vmem:[#allocation2 + $0x104] sm:$0xff]
      %v9243 = vld [vmem:[#allocation2 + $0x10c] sm:$0xff]
      %v9244 = vld [vmem:[#allocation2 + $0x13c] sm:$0xff]
      %v9245 = vld [vmem:[#allocation2 + $0x144] sm:$0xff]
      %v9246 = vld [vmem:[#allocation2 + $0x174] sm:$0xff]
      %v9247 = vld [vmem:[#allocation2 + $0x17c] sm:$0xff]
      %v9248 = vld [vmem:[#allocation2 + $0x1ac] sm:$0xff]
      %v9249 = vld [vmem:[#allocation2 + $0x1b4] sm:$0xff]
      %v9250 = vld [vmem:[#allocation2 + $0x1e4] sm:$0xff]
      %v9251 = vld [vmem:[#allocation2 + $0x1ec] sm:$0xff]
      %v9252 = vld [vmem:[#allocation2 + $0x21c] sm:$0xff]
      %v9253 = vld [vmem:[#allocation2 + $0x224] sm:$0xff]
      %v9254 = vld [vmem:[#allocation2 + $0x254] sm:$0xff]
      %v9255 = vld [vmem:[#allocation2 + $0x25c] sm:$0xff]
      %v9256 = vld [vmem:[#allocation2 + $0x28c] sm:$0xff]
      %v9257 = vld [vmem:[#allocation2 + $0x294] sm:$0xff]
      %v9258 = vld [vmem:[#allocation2 + $0x2c4] sm:$0xff]
      %v9259 = vld [vmem:[#allocation2 + $0x2cc] sm:$0xff]
      %v9260 = vld [vmem:[#allocation2 + $0x2fc] sm:$0xff]
      %v9261 = vld [vmem:[#allocation2 + $0x304] sm:$0xff]
      %v9262 = vld [vmem:[#allocation2 + $0x334] sm:$0xff]
      %v9263 = vld [vmem:[#allocation2 + $0x33c] sm:$0xff]
      %v9264 = vld [vmem:[#allocation2 + $0x36c] sm:$0xff]
      %v9265 = vld [vmem:[#allocation2 + $0x374] sm:$0xff]
      %v9266 = vld [vmem:[#allocation2 + $0x414] sm:$0xff]
      %v9267 = vld [vmem:[#allocation2 + $0x41c] sm:$0xff]
      %v9268 = vld [vmem:[#allocation2 + $0x44c] sm:$0xff]
      %v9269 = vld [vmem:[#allocation2 + $0x454] sm:$0xff]
      %v9270 = vld [vmem:[#allocation2 + $0x484] sm:$0xff]
      %v9271 = vld [vmem:[#allocation2 + $0x48c] sm:$0xff]
      %v9272 = vld [vmem:[#allocation2 + $0x4bc] sm:$0xff]
      %v9273 = vld [vmem:[#allocation2 + $0x4c4] sm:$0xff]
      %v9274 = vld [vmem:[#allocation2 + $0x4f4] sm:$0xff]
      %v9275 = vld [vmem:[#allocation2 + $0x4fc] sm:$0xff]
      %v9276 = vld [vmem:[#allocation2 + $0x52c] sm:$0xff]
      %v9277 = vld [vmem:[#allocation2 + $0x534] sm:$0xff]
      %v9278 = vld [vmem:[#allocation2 + $0x564] sm:$0xff]
      %v9279 = vld [vmem:[#allocation2 + $0x56c] sm:$0xff]
      %v9280 = vld [vmem:[#allocation2 + $0x59c] sm:$0xff]
      %v9281 = vld [vmem:[#allocation2 + $0x5a4] sm:$0xff]
      %v9282 = vld [vmem:[#allocation2 + $0x5d4] sm:$0xff]
      %v9283 = vld [vmem:[#allocation2 + $0x5dc] sm:$0xff]
      %v9284 = vld [vmem:[#allocation2 + $0x60c] sm:$0xff]
      %v9285 = vld [vmem:[#allocation2 + $0x614] sm:$0xff]
      %v9286 = vld [vmem:[#allocation2 + $0x644] sm:$0xff]
      %v9287 = vld [vmem:[#allocation2 + $0x64c] sm:$0xff]
      %v9288 = vld [vmem:[#allocation2 + $0x67c] sm:$0xff]
      %v9289 = vld [vmem:[#allocation2 + $0x684] sm:$0xff]
      %v9290 = vld [vmem:[#allocation2 + $0x6b4] sm:$0xff]
      %v9291 = vld [vmem:[#allocation2 + $0x6bc] sm:$0xff]
      %v9292 = vld [vmem:[#allocation2 + $0x6ec] sm:$0xff]
      %v9293 = vld [vmem:[#allocation2 + $0x6f4] sm:$0xff]
      %v9294 = vld [vmem:[#allocation2 + $0x724] sm:$0xff]
      %v9295 = vld [vmem:[#allocation2 + $0x72c] sm:$0xff]
      %v9296 = vld [vmem:[#allocation2 + $0x75c] sm:$0xff]
      %v9297 = vld [vmem:[#allocation2 + $0x764] sm:$0xff]
      %v9298 = vld [vmem:[#allocation2 + $0x804] sm:$0xff]
      %v9299 = vld [vmem:[#allocation2 + $0x80c] sm:$0xff]
      %v9300 = vld [vmem:[#allocation2 + $0x83c] sm:$0xff]
      %v9301 = vld [vmem:[#allocation2 + $0x844] sm:$0xff]
      %v9302 = vld [vmem:[#allocation2 + $0x874] sm:$0xff]
      %v9303 = vld [vmem:[#allocation2 + $0x87c] sm:$0xff]
      %v9304 = vld [vmem:[#allocation2 + $0x8ac] sm:$0xff]
      %v9305 = vld [vmem:[#allocation2 + $0x8b4] sm:$0xff]
      %v9306 = vld [vmem:[#allocation2 + $0x8e4] sm:$0xff]
      %v9307 = vld [vmem:[#allocation2 + $0x8ec] sm:$0xff]
      %v9308 = vld [vmem:[#allocation2 + $0x91c] sm:$0xff]
      %v9309 = vld [vmem:[#allocation2 + $0x924] sm:$0xff]
      %v9310 = vld [vmem:[#allocation2 + $0x954] sm:$0xff]
      %v9311 = vld [vmem:[#allocation2 + $0x95c] sm:$0xff]
      %v9312 = vld [vmem:[#allocation2 + $0x98c] sm:$0xff]
      %v9313 = vld [vmem:[#allocation2 + $0x994] sm:$0xff]
      %v9314 = vld [vmem:[#allocation2 + $0x9c4] sm:$0xff]
      %v9315 = vld [vmem:[#allocation2 + $0x9cc] sm:$0xff]
      %v9316 = vld [vmem:[#allocation2 + $0x9fc] sm:$0xff]
      %v9317 = vld [vmem:[#allocation2 + $0xa04] sm:$0xff]
      %v9318 = vld [vmem:[#allocation2 + $0xa34] sm:$0xff]
      %v9319 = vld [vmem:[#allocation2 + $0xa3c] sm:$0xff]
      %v9320 = vld [vmem:[#allocation2 + $0xa6c] sm:$0xff]
      %v9321 = vld [vmem:[#allocation2 + $0xa74] sm:$0xff]
      %v9322 = vld [vmem:[#allocation2 + $0xaa4] sm:$0xff]
      %v9323 = vld [vmem:[#allocation2 + $0xaac] sm:$0xff]
      %v9324 = vld [vmem:[#allocation2 + $0xadc] sm:$0xff]
      %v9325 = vld [vmem:[#allocation2 + $0xae4] sm:$0xff]
      %v9326 = vld [vmem:[#allocation2 + $0xb14] sm:$0xff]
      %v9327 = vld [vmem:[#allocation2 + $0xb1c] sm:$0xff]
      %v9328 = vld [vmem:[#allocation2 + $0xb4c] sm:$0xff]
      %v9329 = vld [vmem:[#allocation2 + $0xb54] sm:$0xff]
      %s9330 = scalar_lea.vmem %s5, 16
      %v9331 = vld [vmem:[%s9330] sm:$0xff]
      %v9333 = vsel %vm279, %v9234, 0
      %v9336 = vsel %vm279, %v9235, 0
      %v9339 = vsel %vm279, %v9236, 0
      %v9342 = vsel %vm279, %v9237, 0
      %v9345 = vsel %vm279, %v9238, 0
      %v9348 = vsel %vm279, %v9239, 0
      %v9351 = vsel %vm279, %v9240, 0
      %v9354 = vsel %vm279, %v9241, 0
      %v9357 = vsel %vm279, %v9242, 0
      %v9360 = vsel %vm279, %v9243, 0
      %v9363 = vsel %vm279, %v9244, 0
      %v9366 = vsel %vm279, %v9245, 0
      %v9369 = vsel %vm279, %v9246, 0
      %v9372 = vsel %vm279, %v9247, 0
      %v9375 = vsel %vm279, %v9248, 0
      %v9378 = vsel %vm279, %v9249, 0
      %v9381 = vsel %vm279, %v9250, 0
      %v9384 = vsel %vm279, %v9251, 0
      %v9387 = vsel %vm279, %v9252, 0
      %v9390 = vsel %vm279, %v9253, 0
      %v9393 = vsel %vm279, %v9254, 0
      %v9396 = vsel %vm279, %v9255, 0
      %v9399 = vsel %vm279, %v9256, 0
      %v9402 = vsel %vm279, %v9257, 0
      %v9405 = vsel %vm279, %v9258, 0
      %v9408 = vsel %vm279, %v9259, 0
      %v9411 = vsel %vm279, %v9260, 0
      %v9414 = vsel %vm279, %v9261, 0
      %v9417 = vsel %vm279, %v9262, 0
      %v9420 = vsel %vm279, %v9263, 0
      %v9423 = vsel %vm279, %v9264, 0
      %v9426 = vsel %vm279, %v9265, 0
      %9428 = vmatprep.subr.mxu0 0.0
      %9429 = vmatpush1.msra.mxu0 %v9331
      %9430 = vmatprep.subr.mxu0 0.0
      %9431 = vmatpush1.msra.mxu0 0.0
      %9432 = vmatprep.subr.mxu0 0.0
      %9433 = vmatpush1.msra.mxu0 0.0
      %9434 = vmatprep.subr.mxu0 0.0
      %9435 = vmatpush1.msra.mxu0 0.0
      %9436 = vmatprep.subr.mxu0 0.0
      %9437 = vmatpush1.msra.mxu0 0.0
      %9438 = vmatprep.subr.mxu0 0.0
      %9439 = vmatpush1.msra.mxu0 0.0
      %9440 = vmatprep.subr.mxu0 0.0
      %9441 = vmatpush1.msra.mxu0 0.0
      %9442 = vmatprep.subr.mxu0 0.0
      %9443 = vmatpush1.msra.mxu0 0.0
      %9444 = vmatprep.subr.mxu0 0.0
      %9445 = vmatpush1.msra.mxu0 0.0
      %9446 = vmatprep.subr.mxu0 0.0
      %9447 = vmatpush1.msra.mxu0 0.0
      %9448 = vmatprep.subr.mxu0 0.0
      %9449 = vmatpush1.msra.mxu0 0.0
      %9450 = vmatprep.subr.mxu0 0.0
      %9451 = vmatpush1.msra.mxu0 0.0
      %9452 = vmatprep.subr.mxu0 0.0
      %9453 = vmatpush1.msra.mxu0 0.0
      %9454 = vmatprep.subr.mxu0 0.0
      %9455 = vmatpush1.msra.mxu0 0.0
      %9456 = vmatprep.subr.mxu0 0.0
      %9457 = vmatpush1.msra.mxu0 0.0
      %9458 = vmatprep.subr.mxu0 0.0
      %9459 = vmatpush1.msra.mxu0 0.0
      %9460 = vmatprep.subr.mxu0 0.0
      %9461 = vmatpush1.msra.mxu0 0.0
      %9462 = vmatprep.subr.mxu0 0.0
      %9463 = vmatpush1.msra.mxu0 0.0
      %9464 = vmatprep.subr.mxu0 0.0
      %9465 = vmatpush1.msra.mxu0 0.0
      %9466 = vmatprep.subr.mxu0 0.0
      %9467 = vmatpush1.msra.mxu0 0.0
      %9468 = vmatprep.subr.mxu0 0.0
      %9469 = vmatpush1.msra.mxu0 0.0
      %9470 = vmatprep.subr.mxu0 0.0
      %9471 = vmatpush1.msra.mxu0 0.0
      %9472 = vmatprep.subr.mxu0 0.0
      %9473 = vmatpush1.msra.mxu0 0.0
      %9474 = vmatprep.subr.mxu0 0.0
      %9475 = vmatpush1.msra.mxu0 0.0
      %9476 = vmatprep.subr.mxu0 0.0
      %9477 = vmatpush1.msra.mxu0 0.0
      %9478 = vmatprep.subr.mxu0 0.0
      %9479 = vmatpush1.msra.mxu0 0.0
      %9480 = vmatprep.subr.mxu0 0.0
      %9481 = vmatpush1.msra.mxu0 0.0
      %9482 = vmatprep.subr.mxu0 0.0
      %9483 = vmatpush1.msra.mxu0 0.0
      %9484 = vmatprep.subr.mxu0 0.0
      %9485 = vmatpush1.msra.mxu0 0.0
      %9486 = vmatprep.subr.mxu0 0.0
      %9487 = vmatpush1.msra.mxu0 0.0
      %9488 = vmatprep.subr.mxu0 0.0
      %9489 = vmatpush1.msra.mxu0 0.0
      %9490 = vmatprep.subr.mxu0 0.0
      %9491 = vmatpush1.msra.mxu0 0.0
      %9492 = vmatprep.mubr.f32.mxu0 0.0
      %9493 = vmatmul.mubr.f32.gmra.mrb[0].mxu0 %v9333
      %v9494 = vpop.f32.mrb[0].mxu0
      %v9495 = vadd.f32 0.0, %v9494
      %v9496 = vpop.f32.mrb[0].mxu0
      %9497 = vmatprep.mubr.f32.mxu0 0.0
      %9498 = vmatmul.mubr.f32.gmra.mrb[0].mxu0 %v9336
      %v9499 = vpop.f32.mrb[0].mxu0
      %v9500 = vadd.f32 0.0, %v9499
      %v9501 = vpop.f32.mrb[0].mxu0
      %9502 = vmatprep.mubr.f32.mxu0 0.0
      %9503 = vmatmul.mubr.f32.gmra.mrb[0].mxu0 %v9339
      %v9504 = vpop.f32.mrb[0].mxu0
      %v9505 = vadd.f32 0.0, %v9504
      %v9506 = vpop.f32.mrb[0].mxu0
      %9507 = vmatprep.mubr.f32.mxu0 0.0
      %9508 = vmatmul.mubr.f32.gmra.mrb[0].mxu0 %v9342
      %v9509 = vpop.f32.mrb[0].mxu0
      %v9510 = vadd.f32 0.0, %v9509
      %v9511 = vpop.f32.mrb[0].mxu0
      %9512 = vmatprep.mubr.f32.mxu0 0.0
      %9513 = vmatmul.mubr.f32.gmra.mrb[0].mxu0 %v9345
      %v9514 = vpop.f32.mrb[0].mxu0
      %v9515 = vadd.f32 0.0, %v9514
      %v9516 = vpop.f32.mrb[0].mxu0
      %9517 = vmatprep.mubr.f32.mxu0 0.0
      %9518 = vmatmul.mubr.f32.gmra.mrb[0].mxu0 %v9348
      %v9519 = vpop.f32.mrb[0].mxu0
      %v9520 = vadd.f32 0.0, %v9519
      %v9521 = vpop.f32.mrb[0].mxu0
      %9522 = vmatprep.mubr.f32.mxu0 0.0
      %9523 = vmatmul.mubr.f32.gmra.mrb[0].mxu0 %v9351
      %v9524 = vpop.f32.mrb[0].mxu0
      %v9525 = vadd.f32 0.0, %v9524
      %v9526 = vpop.f32.mrb[0].mxu0
      %9527 = vmatprep.mubr.f32.mxu0 0.0
      %9528 = vmatmul.mubr.f32.gmra.mrb[0].mxu0 %v9354
      %v9529 = vpop.f32.mrb[0].mxu0
      %v9530 = vadd.f32 0.0, %v9529
      %v9531 = vpop.f32.mrb[0].mxu0
      %9532 = vmatprep.mubr.f32.mxu0 0.0
      %9533 = vmatmul.mubr.f32.gmra.mrb[0].mxu0 %v9357
      %v9534 = vpop.f32.mrb[0].mxu0
      %v9535 = vadd.f32 0.0, %v9534
      %v9536 = vpop.f32.mrb[0].mxu0
      %9537 = vmatprep.mubr.f32.mxu0 0.0
      %9538 = vmatmul.mubr.f32.gmra.mrb[0].mxu0 %v9360
      %v9539 = vpop.f32.mrb[0].mxu0
      %v9540 = vadd.f32 0.0, %v9539
      %v9541 = vpop.f32.mrb[0].mxu0
      %9542 = vmatprep.mubr.f32.mxu0 0.0
      %9543 = vmatmul.mubr.f32.gmra.mrb[0].mxu0 %v9363
      %v9544 = vpop.f32.mrb[0].mxu0
      %v9545 = vadd.f32 0.0, %v9544
      %v9546 = vpop.f32.mrb[0].mxu0
      %9547 = vmatprep.mubr.f32.mxu0 0.0
      %9548 = vmatmul.mubr.f32.gmra.mrb[0].mxu0 %v9366
      %v9549 = vpop.f32.mrb[0].mxu0
      %v9550 = vadd.f32 0.0, %v9549
      %v9551 = vpop.f32.mrb[0].mxu0
      %9552 = vmatprep.mubr.f32.mxu0 0.0
      %9553 = vmatmul.mubr.f32.gmra.mrb[0].mxu0 %v9369
      %v9554 = vpop.f32.mrb[0].mxu0
      %v9555 = vadd.f32 0.0, %v9554
      %v9556 = vpop.f32.mrb[0].mxu0
      %9557 = vmatprep.mubr.f32.mxu0 0.0
      %9558 = vmatmul.mubr.f32.gmra.mrb[0].mxu0 %v9372
      %v9559 = vpop.f32.mrb[0].mxu0
      %v9560 = vadd.f32 0.0, %v9559
      %v9561 = vpop.f32.mrb[0].mxu0
      %9562 = vmatprep.mubr.f32.mxu0 0.0
      %9563 = vmatmul.mubr.f32.gmra.mrb[0].mxu0 %v9375
      %v9564 = vpop.f32.mrb[0].mxu0
      %v9565 = vadd.f32 0.0, %v9564
      %v9566 = vpop.f32.mrb[0].mxu0
      %9567 = vmatprep.mubr.f32.mxu0 0.0
      %9568 = vmatmul.mubr.f32.gmra.mrb[0].mxu0 %v9378
      %v9569 = vpop.f32.mrb[0].mxu0
      %v9570 = vadd.f32 0.0, %v9569
      %v9571 = vpop.f32.mrb[0].mxu0
      %9572 = vmatprep.mubr.f32.mxu0 0.0
      %9573 = vmatmul.mubr.f32.gmra.mrb[0].mxu0 %v9381
      %v9574 = vpop.f32.mrb[0].mxu0
      %v9575 = vadd.f32 0.0, %v9574
      %v9576 = vpop.f32.mrb[0].mxu0
      %9577 = vmatprep.mubr.f32.mxu0 0.0
      %9578 = vmatmul.mubr.f32.gmra.mrb[0].mxu0 %v9384
      %v9579 = vpop.f32.mrb[0].mxu0
      %v9580 = vadd.f32 0.0, %v9579
      %v9581 = vpop.f32.mrb[0].mxu0
      %9582 = vmatprep.mubr.f32.mxu0 0.0
      %9583 = vmatmul.mubr.f32.gmra.mrb[0].mxu0 %v9387
      %v9584 = vpop.f32.mrb[0].mxu0
      %v9585 = vadd.f32 0.0, %v9584
      %v9586 = vpop.f32.mrb[0].mxu0
      %9587 = vmatprep.mubr.f32.mxu0 0.0
      %9588 = vmatmul.mubr.f32.gmra.mrb[0].mxu0 %v9390
      %v9589 = vpop.f32.mrb[0].mxu0
      %v9590 = vadd.f32 0.0, %v9589
      %v9591 = vpop.f32.mrb[0].mxu0
      %9592 = vmatprep.mubr.f32.mxu0 0.0
      %9593 = vmatmul.mubr.f32.gmra.mrb[0].mxu0 %v9393
      %v9594 = vpop.f32.mrb[0].mxu0
      %v9595 = vadd.f32 0.0, %v9594
      %v9596 = vpop.f32.mrb[0].mxu0
      %9597 = vmatprep.mubr.f32.mxu0 0.0
      %9598 = vmatmul.mubr.f32.gmra.mrb[0].mxu0 %v9396
      %v9599 = vpop.f32.mrb[0].mxu0
      %v9600 = vadd.f32 0.0, %v9599
      %v9601 = vpop.f32.mrb[0].mxu0
      %9602 = vmatprep.mubr.f32.mxu0 0.0
      %9603 = vmatmul.mubr.f32.gmra.mrb[0].mxu0 %v9399
      %v9604 = vpop.f32.mrb[0].mxu0
      %v9605 = vadd.f32 0.0, %v9604
      %v9606 = vpop.f32.mrb[0].mxu0
      %9607 = vmatprep.mubr.f32.mxu0 0.0
      %9608 = vmatmul.mubr.f32.gmra.mrb[0].mxu0 %v9402
      %v9609 = vpop.f32.mrb[0].mxu0
      %v9610 = vadd.f32 0.0, %v9609
      %v9611 = vpop.f32.mrb[0].mxu0
      %9612 = vmatprep.mubr.f32.mxu0 0.0
      %9613 = vmatmul.mubr.f32.gmra.mrb[0].mxu0 %v9405
      %v9614 = vpop.f32.mrb[0].mxu0
      %v9615 = vadd.f32 0.0, %v9614
      %v9616 = vpop.f32.mrb[0].mxu0
      %9617 = vmatprep.mubr.f32.mxu0 0.0
      %9618 = vmatmul.mubr.f32.gmra.mrb[0].mxu0 %v9408
      %v9619 = vpop.f32.mrb[0].mxu0
      %v9620 = vadd.f32 0.0, %v9619
      %v9621 = vpop.f32.mrb[0].mxu0
      %9622 = vmatprep.mubr.f32.mxu0 0.0
      %9623 = vmatmul.mubr.f32.gmra.mrb[0].mxu0 %v9411
      %v9624 = vpop.f32.mrb[0].mxu0
      %v9625 = vadd.f32 0.0, %v9624
      %v9626 = vpop.f32.mrb[0].mxu0
      %9627 = vmatprep.mubr.f32.mxu0 0.0
      %9628 = vmatmul.mubr.f32.gmra.mrb[0].mxu0 %v9414
      %v9629 = vpop.f32.mrb[0].mxu0
      %v9630 = vadd.f32 0.0, %v9629
      %v9631 = vpop.f32.mrb[0].mxu0
      %9632 = vmatprep.mubr.f32.mxu0 0.0
      %9633 = vmatmul.mubr.f32.gmra.mrb[0].mxu0 %v9417
      %v9634 = vpop.f32.mrb[0].mxu0
      %v9635 = vadd.f32 0.0, %v9634
      %v9636 = vpop.f32.mrb[0].mxu0
      %9637 = vmatprep.mubr.f32.mxu0 0.0
      %9638 = vmatmul.mubr.f32.gmra.mrb[0].mxu0 %v9420
      %v9639 = vpop.f32.mrb[0].mxu0
      %v9640 = vadd.f32 0.0, %v9639
      %v9641 = vpop.f32.mrb[0].mxu0
      %9642 = vmatprep.mubr.f32.mxu0 0.0
      %9643 = vmatmul.mubr.f32.gmra.mrb[0].mxu0 %v9423
      %v9644 = vpop.f32.mrb[0].mxu0
      %v9645 = vadd.f32 0.0, %v9644
      %v9646 = vpop.f32.mrb[0].mxu0
      %9647 = vmatprep.mubr.f32.mxu0 0.0
      %9648 = vmatmul.mubr.f32.gmra.mrb[0].mxu0 %v9426
      %v9649 = vpop.f32.mrb[0].mxu0
      %v9650 = vadd.f32 0.0, %v9649
      %v9651 = vpop.f32.mrb[0].mxu0
      %9652 = vdwg.mxu0
      %v9653 = vadd.f32 %v9202, %v9495
      %v9654 = vadd.f32 %v9203, %v9500
      %v9655 = vadd.f32 %v9204, %v9505
      %v9656 = vadd.f32 %v9205, %v9510
      %v9657 = vadd.f32 %v9206, %v9515
      %v9658 = vadd.f32 %v9207, %v9520
      %v9659 = vadd.f32 %v9208, %v9525
      %v9660 = vadd.f32 %v9209, %v9530
      %v9661 = vadd.f32 %v9210, %v9535
      %v9662 = vadd.f32 %v9211, %v9540
      %v9663 = vadd.f32 %v9212, %v9545
      %v9664 = vadd.f32 %v9213, %v9550
      %v9665 = vadd.f32 %v9214, %v9555
      %v9666 = vadd.f32 %v9215, %v9560
      %v9667 = vadd.f32 %v9216, %v9565
      %v9668 = vadd.f32 %v9217, %v9570
      %v9669 = vadd.f32 %v9218, %v9575
      %v9670 = vadd.f32 %v9219, %v9580
      %v9671 = vadd.f32 %v9220, %v9585
      %v9672 = vadd.f32 %v9221, %v9590
      %v9673 = vadd.f32 %v9222, %v9595
      %v9674 = vadd.f32 %v9223, %v9600
      %v9675 = vadd.f32 %v9224, %v9605
      %v9676 = vadd.f32 %v9225, %v9610
      %v9677 = vadd.f32 %v9226, %v9615
      %v9678 = vadd.f32 %v9227, %v9620
      %v9679 = vadd.f32 %v9228, %v9625
      %v9680 = vadd.f32 %v9229, %v9630
      %v9681 = vadd.f32 %v9230, %v9635
      %v9682 = vadd.f32 %v9231, %v9640
      %v9683 = vadd.f32 %v9232, %v9645
      %v9684 = vadd.f32 %v9233, %v9650
      %s9685 = scalar_lea.vmem %s5, 40
      %v9686 = vld [vmem:[%s9685] sm:$0xff]
      %v9688 = vsel %vm279, %v9266, 0
      %v9691 = vsel %vm279, %v9267, 0
      %v9694 = vsel %vm279, %v9268, 0
      %v9697 = vsel %vm279, %v9269, 0
      %v9700 = vsel %vm279, %v9270, 0
      %v9703 = vsel %vm279, %v9271, 0
      %v9706 = vsel %vm279, %v9272, 0
      %v9709 = vsel %vm279, %v9273, 0
      %v9712 = vsel %vm279, %v9274, 0
      %v9715 = vsel %vm279, %v9275, 0
      %v9718 = vsel %vm279, %v9276, 0
      %v9721 = vsel %vm279, %v9277, 0
      %v9724 = vsel %vm279, %v9278, 0
      %v9727 = vsel %vm279, %v9279, 0
      %v9730 = vsel %vm279, %v9280, 0
      %v9733 = vsel %vm279, %v9281, 0
      %v9736 = vsel %vm279, %v9282, 0
      %v9739 = vsel %vm279, %v9283, 0
      %v9742 = vsel %vm279, %v9284, 0
      %v9745 = vsel %vm279, %v9285, 0
      %v9748 = vsel %vm279, %v9286, 0
      %v9751 = vsel %vm279, %v9287, 0
      %v9754 = vsel %vm279, %v9288, 0
      %v9757 = vsel %vm279, %v9289, 0
      %v9760 = vsel %vm279, %v9290, 0
      %v9763 = vsel %vm279, %v9291, 0
      %v9766 = vsel %vm279, %v9292, 0
      %v9769 = vsel %vm279, %v9293, 0
      %v9772 = vsel %vm279, %v9294, 0
      %v9775 = vsel %vm279, %v9295, 0
      %v9778 = vsel %vm279, %v9296, 0
      %v9781 = vsel %vm279, %v9297, 0
      %9783 = vmatprep.subr.mxu0 0.0
      %9784 = vmatpush1.msra.mxu0 %v9686
      %9785 = vmatprep.subr.mxu0 0.0
      %9786 = vmatpush1.msra.mxu0 0.0
      %9787 = vmatprep.subr.mxu0 0.0
      %9788 = vmatpush1.msra.mxu0 0.0
      %9789 = vmatprep.subr.mxu0 0.0
      %9790 = vmatpush1.msra.mxu0 0.0
      %9791 = vmatprep.subr.mxu0 0.0
      %9792 = vmatpush1.msra.mxu0 0.0
      %9793 = vmatprep.subr.mxu0 0.0
      %9794 = vmatpush1.msra.mxu0 0.0
      %9795 = vmatprep.subr.mxu0 0.0
      %9796 = vmatpush1.msra.mxu0 0.0
      %9797 = vmatprep.subr.mxu0 0.0
      %9798 = vmatpush1.msra.mxu0 0.0
      %9799 = vmatprep.subr.mxu0 0.0
      %9800 = vmatpush1.msra.mxu0 0.0
      %9801 = vmatprep.subr.mxu0 0.0
      %9802 = vmatpush1.msra.mxu0 0.0
      %9803 = vmatprep.subr.mxu0 0.0
      %9804 = vmatpush1.msra.mxu0 0.0
      %9805 = vmatprep.subr.mxu0 0.0
      %9806 = vmatpush1.msra.mxu0 0.0
      %9807 = vmatprep.subr.mxu0 0.0
      %9808 = vmatpush1.msra.mxu0 0.0
      %9809 = vmatprep.subr.mxu0 0.0
      %9810 = vmatpush1.msra.mxu0 0.0
      %9811 = vmatprep.subr.mxu0 0.0
      %9812 = vmatpush1.msra.mxu0 0.0
      %9813 = vmatprep.subr.mxu0 0.0
      %9814 = vmatpush1.msra.mxu0 0.0
      %9815 = vmatprep.subr.mxu0 0.0
      %9816 = vmatpush1.msra.mxu0 0.0
      %9817 = vmatprep.subr.mxu0 0.0
      %9818 = vmatpush1.msra.mxu0 0.0
      %9819 = vmatprep.subr.mxu0 0.0
      %9820 = vmatpush1.msra.mxu0 0.0
      %9821 = vmatprep.subr.mxu0 0.0
      %9822 = vmatpush1.msra.mxu0 0.0
      %9823 = vmatprep.subr.mxu0 0.0
      %9824 = vmatpush1.msra.mxu0 0.0
      %9825 = vmatprep.subr.mxu0 0.0
      %9826 = vmatpush1.msra.mxu0 0.0
      %9827 = vmatprep.subr.mxu0 0.0
      %9828 = vmatpush1.msra.mxu0 0.0
      %9829 = vmatprep.subr.mxu0 0.0
      %9830 = vmatpush1.msra.mxu0 0.0
      %9831 = vmatprep.subr.mxu0 0.0
      %9832 = vmatpush1.msra.mxu0 0.0
      %9833 = vmatprep.subr.mxu0 0.0
      %9834 = vmatpush1.msra.mxu0 0.0
      %9835 = vmatprep.subr.mxu0 0.0
      %9836 = vmatpush1.msra.mxu0 0.0
      %9837 = vmatprep.subr.mxu0 0.0
      %9838 = vmatpush1.msra.mxu0 0.0
      %9839 = vmatprep.subr.mxu0 0.0
      %9840 = vmatpush1.msra.mxu0 0.0
      %9841 = vmatprep.subr.mxu0 0.0
      %9842 = vmatpush1.msra.mxu0 0.0
      %9843 = vmatprep.subr.mxu0 0.0
      %9844 = vmatpush1.msra.mxu0 0.0
      %9845 = vmatprep.subr.mxu0 0.0
      %9846 = vmatpush1.msra.mxu0 0.0
      %9847 = vmatprep.mubr.f32.mxu0 0.0
      %9848 = vmatmul.mubr.f32.gmra.mrb[0].mxu0 %v9688
      %v9849 = vpop.f32.mrb[0].mxu0
      %v9850 = vadd.f32 0.0, %v9849
      %v9851 = vpop.f32.mrb[0].mxu0
      %9852 = vmatprep.mubr.f32.mxu0 0.0
      %9853 = vmatmul.mubr.f32.gmra.mrb[0].mxu0 %v9691
      %v9854 = vpop.f32.mrb[0].mxu0
      %v9855 = vadd.f32 0.0, %v9854
      %v9856 = vpop.f32.mrb[0].mxu0
      %9857 = vmatprep.mubr.f32.mxu0 0.0
      %9858 = vmatmul.mubr.f32.gmra.mrb[0].mxu0 %v9694
      %v9859 = vpop.f32.mrb[0].mxu0
      %v9860 = vadd.f32 0.0, %v9859
      %v9861 = vpop.f32.mrb[0].mxu0
      %9862 = vmatprep.mubr.f32.mxu0 0.0
      %9863 = vmatmul.mubr.f32.gmra.mrb[0].mxu0 %v9697
      %v9864 = vpop.f32.mrb[0].mxu0
      %v9865 = vadd.f32 0.0, %v9864
      %v9866 = vpop.f32.mrb[0].mxu0
      %9867 = vmatprep.mubr.f32.mxu0 0.0
      %9868 = vmatmul.mubr.f32.gmra.mrb[0].mxu0 %v9700
      %v9869 = vpop.f32.mrb[0].mxu0
      %v9870 = vadd.f32 0.0, %v9869
      %v9871 = vpop.f32.mrb[0].mxu0
      %9872 = vmatprep.mubr.f32.mxu0 0.0
      %9873 = vmatmul.mubr.f32.gmra.mrb[0].mxu0 %v9703
      %v9874 = vpop.f32.mrb[0].mxu0
      %v9875 = vadd.f32 0.0, %v9874
      %v9876 = vpop.f32.mrb[0].mxu0
      %9877 = vmatprep.mubr.f32.mxu0 0.0
      %9878 = vmatmul.mubr.f32.gmra.mrb[0].mxu0 %v9706
      %v9879 = vpop.f32.mrb[0].mxu0
      %v9880 = vadd.f32 0.0, %v9879
      %v9881 = vpop.f32.mrb[0].mxu0
      %9882 = vmatprep.mubr.f32.mxu0 0.0
      %9883 = vmatmul.mubr.f32.gmra.mrb[0].mxu0 %v9709
      %v9884 = vpop.f32.mrb[0].mxu0
      %v9885 = vadd.f32 0.0, %v9884
      %v9886 = vpop.f32.mrb[0].mxu0
      %9887 = vmatprep.mubr.f32.mxu0 0.0
      %9888 = vmatmul.mubr.f32.gmra.mrb[0].mxu0 %v9712
      %v9889 = vpop.f32.mrb[0].mxu0
      %v9890 = vadd.f32 0.0, %v9889
      %v9891 = vpop.f32.mrb[0].mxu0
      %9892 = vmatprep.mubr.f32.mxu0 0.0
      %9893 = vmatmul.mubr.f32.gmra.mrb[0].mxu0 %v9715
      %v9894 = vpop.f32.mrb[0].mxu0
      %v9895 = vadd.f32 0.0, %v9894
      %v9896 = vpop.f32.mrb[0].mxu0
      %9897 = vmatprep.mubr.f32.mxu0 0.0
      %9898 = vmatmul.mubr.f32.gmra.mrb[0].mxu0 %v9718
      %v9899 = vpop.f32.mrb[0].mxu0
      %v9900 = vadd.f32 0.0, %v9899
      %v9901 = vpop.f32.mrb[0].mxu0
      %9902 = vmatprep.mubr.f32.mxu0 0.0
      %9903 = vmatmul.mubr.f32.gmra.mrb[0].mxu0 %v9721
      %v9904 = vpop.f32.mrb[0].mxu0
      %v9905 = vadd.f32 0.0, %v9904
      %v9906 = vpop.f32.mrb[0].mxu0
      %9907 = vmatprep.mubr.f32.mxu0 0.0
      %9908 = vmatmul.mubr.f32.gmra.mrb[0].mxu0 %v9724
      %v9909 = vpop.f32.mrb[0].mxu0
      %v9910 = vadd.f32 0.0, %v9909
      %v9911 = vpop.f32.mrb[0].mxu0
      %9912 = vmatprep.mubr.f32.mxu0 0.0
      %9913 = vmatmul.mubr.f32.gmra.mrb[0].mxu0 %v9727
      %v9914 = vpop.f32.mrb[0].mxu0
      %v9915 = vadd.f32 0.0, %v9914
      %v9916 = vpop.f32.mrb[0].mxu0
      %9917 = vmatprep.mubr.f32.mxu0 0.0
      %9918 = vmatmul.mubr.f32.gmra.mrb[0].mxu0 %v9730
      %v9919 = vpop.f32.mrb[0].mxu0
      %v9920 = vadd.f32 0.0, %v9919
      %v9921 = vpop.f32.mrb[0].mxu0
      %9922 = vmatprep.mubr.f32.mxu0 0.0
      %9923 = vmatmul.mubr.f32.gmra.mrb[0].mxu0 %v9733
      %v9924 = vpop.f32.mrb[0].mxu0
      %v9925 = vadd.f32 0.0, %v9924
      %v9926 = vpop.f32.mrb[0].mxu0
      %9927 = vmatprep.mubr.f32.mxu0 0.0
      %9928 = vmatmul.mubr.f32.gmra.mrb[0].mxu0 %v9736
      %v9929 = vpop.f32.mrb[0].mxu0
      %v9930 = vadd.f32 0.0, %v9929
      %v9931 = vpop.f32.mrb[0].mxu0
      %9932 = vmatprep.mubr.f32.mxu0 0.0
      %9933 = vmatmul.mubr.f32.gmra.mrb[0].mxu0 %v9739
      %v9934 = vpop.f32.mrb[0].mxu0
      %v9935 = vadd.f32 0.0, %v9934
      %v9936 = vpop.f32.mrb[0].mxu0
      %9937 = vmatprep.mubr.f32.mxu0 0.0
      %9938 = vmatmul.mubr.f32.gmra.mrb[0].mxu0 %v9742
      %v9939 = vpop.f32.mrb[0].mxu0
      %v9940 = vadd.f32 0.0, %v9939
      %v9941 = vpop.f32.mrb[0].mxu0
      %9942 = vmatprep.mubr.f32.mxu0 0.0
      %9943 = vmatmul.mubr.f32.gmra.mrb[0].mxu0 %v9745
      %v9944 = vpop.f32.mrb[0].mxu0
      %v9945 = vadd.f32 0.0, %v9944
      %v9946 = vpop.f32.mrb[0].mxu0
      %9947 = vmatprep.mubr.f32.mxu0 0.0
      %9948 = vmatmul.mubr.f32.gmra.mrb[0].mxu0 %v9748
      %v9949 = vpop.f32.mrb[0].mxu0
      %v9950 = vadd.f32 0.0, %v9949
      %v9951 = vpop.f32.mrb[0].mxu0
      %9952 = vmatprep.mubr.f32.mxu0 0.0
      %9953 = vmatmul.mubr.f32.gmra.mrb[0].mxu0 %v9751
      %v9954 = vpop.f32.mrb[0].mxu0
      %v9955 = vadd.f32 0.0, %v9954
      %v9956 = vpop.f32.mrb[0].mxu0
      %9957 = vmatprep.mubr.f32.mxu0 0.0
      %9958 = vmatmul.mubr.f32.gmra.mrb[0].mxu0 %v9754
      %v9959 = vpop.f32.mrb[0].mxu0
      %v9960 = vadd.f32 0.0, %v9959
      %v9961 = vpop.f32.mrb[0].mxu0
      %9962 = vmatprep.mubr.f32.mxu0 0.0
      %9963 = vmatmul.mubr.f32.gmra.mrb[0].mxu0 %v9757
      %v9964 = vpop.f32.mrb[0].mxu0
      %v9965 = vadd.f32 0.0, %v9964
      %v9966 = vpop.f32.mrb[0].mxu0
      %9967 = vmatprep.mubr.f32.mxu0 0.0
      %9968 = vmatmul.mubr.f32.gmra.mrb[0].mxu0 %v9760
      %v9969 = vpop.f32.mrb[0].mxu0
      %v9970 = vadd.f32 0.0, %v9969
      %v9971 = vpop.f32.mrb[0].mxu0
      %9972 = vmatprep.mubr.f32.mxu0 0.0
      %9973 = vmatmul.mubr.f32.gmra.mrb[0].mxu0 %v9763
      %v9974 = vpop.f32.mrb[0].mxu0
      %v9975 = vadd.f32 0.0, %v9974
      %v9976 = vpop.f32.mrb[0].mxu0
      %9977 = vmatprep.mubr.f32.mxu0 0.0
      %9978 = vmatmul.mubr.f32.gmra.mrb[0].mxu0 %v9766
      %v9979 = vpop.f32.mrb[0].mxu0
      %v9980 = vadd.f32 0.0, %v9979
      %v9981 = vpop.f32.mrb[0].mxu0
      %9982 = vmatprep.mubr.f32.mxu0 0.0
      %9983 = vmatmul.mubr.f32.gmra.mrb[0].mxu0 %v9769
      %v9984 = vpop.f32.mrb[0].mxu0
      %v9985 = vadd.f32 0.0, %v9984
      %v9986 = vpop.f32.mrb[0].mxu0
      %9987 = vmatprep.mubr.f32.mxu0 0.0
      %9988 = vmatmul.mubr.f32.gmra.mrb[0].mxu0 %v9772
      %v9989 = vpop.f32.mrb[0].mxu0
      %v9990 = vadd.f32 0.0, %v9989
      %v9991 = vpop.f32.mrb[0].mxu0
      %9992 = vmatprep.mubr.f32.mxu0 0.0
      %9993 = vmatmul.mubr.f32.gmra.mrb[0].mxu0 %v9775
      %v9994 = vpop.f32.mrb[0].mxu0
      %v9995 = vadd.f32 0.0, %v9994
      %v9996 = vpop.f32.mrb[0].mxu0
      %9997 = vmatprep.mubr.f32.mxu0 0.0
      %9998 = vmatmul.mubr.f32.gmra.mrb[0].mxu0 %v9778
      %v9999 = vpop.f32.mrb[0].mxu0
      %v10000 = vadd.f32 0.0, %v9999
      %v10001 = vpop.f32.mrb[0].mxu0
      %10002 = vmatprep.mubr.f32.mxu0 0.0
      %10003 = vmatmul.mubr.f32.gmra.mrb[0].mxu0 %v9781
      %v10004 = vpop.f32.mrb[0].mxu0
      %v10005 = vadd.f32 0.0, %v10004
      %v10006 = vpop.f32.mrb[0].mxu0
      %10007 = vdwg.mxu0
      %v10008 = vadd.f32 %v9653, %v9850
      %v10009 = vadd.f32 %v9654, %v9855
      %v10010 = vadd.f32 %v9655, %v9860
      %v10011 = vadd.f32 %v9656, %v9865
      %v10012 = vadd.f32 %v9657, %v9870
      %v10013 = vadd.f32 %v9658, %v9875
      %v10014 = vadd.f32 %v9659, %v9880
      %v10015 = vadd.f32 %v9660, %v9885
      %v10016 = vadd.f32 %v9661, %v9890
      %v10017 = vadd.f32 %v9662, %v9895
      %v10018 = vadd.f32 %v9663, %v9900
      %v10019 = vadd.f32 %v9664, %v9905
      %v10020 = vadd.f32 %v9665, %v9910
      %v10021 = vadd.f32 %v9666, %v9915
      %v10022 = vadd.f32 %v9667, %v9920
      %v10023 = vadd.f32 %v9668, %v9925
      %v10024 = vadd.f32 %v9669, %v9930
      %v10025 = vadd.f32 %v9670, %v9935
      %v10026 = vadd.f32 %v9671, %v9940
      %v10027 = vadd.f32 %v9672, %v9945
      %v10028 = vadd.f32 %v9673, %v9950
      %v10029 = vadd.f32 %v9674, %v9955
      %v10030 = vadd.f32 %v9675, %v9960
      %v10031 = vadd.f32 %v9676, %v9965
      %v10032 = vadd.f32 %v9677, %v9970
      %v10033 = vadd.f32 %v9678, %v9975
      %v10034 = vadd.f32 %v9679, %v9980
      %v10035 = vadd.f32 %v9680, %v9985
      %v10036 = vadd.f32 %v9681, %v9990
      %v10037 = vadd.f32 %v9682, %v9995
      %v10038 = vadd.f32 %v9683, %v10000
      %v10039 = vadd.f32 %v9684, %v10005
      %s10040 = scalar_lea.vmem %s5, 64
      %v10041 = vld [vmem:[%s10040] sm:$0xff]
      %v10043 = vsel %vm279, %v9298, 0
      %v10046 = vsel %vm279, %v9299, 0
      %v10049 = vsel %vm279, %v9300, 0
      %v10052 = vsel %vm279, %v9301, 0
      %v10055 = vsel %vm279, %v9302, 0
      %v10058 = vsel %vm279, %v9303, 0
      %v10061 = vsel %vm279, %v9304, 0
      %v10064 = vsel %vm279, %v9305, 0
      %v10067 = vsel %vm279, %v9306, 0
      %v10070 = vsel %vm279, %v9307, 0
      %v10073 = vsel %vm279, %v9308, 0
      %v10076 = vsel %vm279, %v9309, 0
      %v10079 = vsel %vm279, %v9310, 0
      %v10082 = vsel %vm279, %v9311, 0
      %v10085 = vsel %vm279, %v9312, 0
      %v10088 = vsel %vm279, %v9313, 0
      %v10091 = vsel %vm279, %v9314, 0
      %v10094 = vsel %vm279, %v9315, 0
      %v10097 = vsel %vm279, %v9316, 0
      %v10100 = vsel %vm279, %v9317, 0
      %v10103 = vsel %vm279, %v9318, 0
      %v10106 = vsel %vm279, %v9319, 0
      %v10109 = vsel %vm279, %v9320, 0
      %v10112 = vsel %vm279, %v9321, 0
      %v10115 = vsel %vm279, %v9322, 0
      %v10118 = vsel %vm279, %v9323, 0
      %v10121 = vsel %vm279, %v9324, 0
      %v10124 = vsel %vm279, %v9325, 0
      %v10127 = vsel %vm279, %v9326, 0
      %v10130 = vsel %vm279, %v9327, 0
      %v10133 = vsel %vm279, %v9328, 0
      %v10136 = vsel %vm279, %v9329, 0
      %10138 = vmatprep.subr.mxu0 0.0
      %10139 = vmatpush1.msra.mxu0 %v10041
      %10140 = vmatprep.subr.mxu0 0.0
      %10141 = vmatpush1.msra.mxu0 0.0
      %10142 = vmatprep.subr.mxu0 0.0
      %10143 = vmatpush1.msra.mxu0 0.0
      %10144 = vmatprep.subr.mxu0 0.0
      %10145 = vmatpush1.msra.mxu0 0.0
      %10146 = vmatprep.subr.mxu0 0.0
      %10147 = vmatpush1.msra.mxu0 0.0
      %10148 = vmatprep.subr.mxu0 0.0
      %10149 = vmatpush1.msra.mxu0 0.0
      %10150 = vmatprep.subr.mxu0 0.0
      %10151 = vmatpush1.msra.mxu0 0.0
      %10152 = vmatprep.subr.mxu0 0.0
      %10153 = vmatpush1.msra.mxu0 0.0
      %10154 = vmatprep.subr.mxu0 0.0
      %10155 = vmatpush1.msra.mxu0 0.0
      %10156 = vmatprep.subr.mxu0 0.0
      %10157 = vmatpush1.msra.mxu0 0.0
      %10158 = vmatprep.subr.mxu0 0.0
      %10159 = vmatpush1.msra.mxu0 0.0
      %10160 = vmatprep.subr.mxu0 0.0
      %10161 = vmatpush1.msra.mxu0 0.0
      %10162 = vmatprep.subr.mxu0 0.0
      %10163 = vmatpush1.msra.mxu0 0.0
      %10164 = vmatprep.subr.mxu0 0.0
      %10165 = vmatpush1.msra.mxu0 0.0
      %10166 = vmatprep.subr.mxu0 0.0
      %10167 = vmatpush1.msra.mxu0 0.0
      %10168 = vmatprep.subr.mxu0 0.0
      %10169 = vmatpush1.msra.mxu0 0.0
      %10170 = vmatprep.subr.mxu0 0.0
      %10171 = vmatpush1.msra.mxu0 0.0
      %10172 = vmatprep.subr.mxu0 0.0
      %10173 = vmatpush1.msra.mxu0 0.0
      %10174 = vmatprep.subr.mxu0 0.0
      %10175 = vmatpush1.msra.mxu0 0.0
      %10176 = vmatprep.subr.mxu0 0.0
      %10177 = vmatpush1.msra.mxu0 0.0
      %10178 = vmatprep.subr.mxu0 0.0
      %10179 = vmatpush1.msra.mxu0 0.0
      %10180 = vmatprep.subr.mxu0 0.0
      %10181 = vmatpush1.msra.mxu0 0.0
      %10182 = vmatprep.subr.mxu0 0.0
      %10183 = vmatpush1.msra.mxu0 0.0
      %10184 = vmatprep.subr.mxu0 0.0
      %10185 = vmatpush1.msra.mxu0 0.0
      %10186 = vmatprep.subr.mxu0 0.0
      %10187 = vmatpush1.msra.mxu0 0.0
      %10188 = vmatprep.subr.mxu0 0.0
      %10189 = vmatpush1.msra.mxu0 0.0
      %10190 = vmatprep.subr.mxu0 0.0
      %10191 = vmatpush1.msra.mxu0 0.0
      %10192 = vmatprep.subr.mxu0 0.0
      %10193 = vmatpush1.msra.mxu0 0.0
      %10194 = vmatprep.subr.mxu0 0.0
      %10195 = vmatpush1.msra.mxu0 0.0
      %10196 = vmatprep.subr.mxu0 0.0
      %10197 = vmatpush1.msra.mxu0 0.0
      %10198 = vmatprep.subr.mxu0 0.0
      %10199 = vmatpush1.msra.mxu0 0.0
      %10200 = vmatprep.subr.mxu0 0.0
      %10201 = vmatpush1.msra.mxu0 0.0
      %10202 = vmatprep.mubr.f32.mxu0 0.0
      %10203 = vmatmul.mubr.f32.gmra.mrb[0].mxu0 %v10043
      %v10204 = vpop.f32.mrb[0].mxu0
      %v10205 = vadd.f32 0.0, %v10204
      %v10206 = vpop.f32.mrb[0].mxu0
      %10207 = vmatprep.mubr.f32.mxu0 0.0
      %10208 = vmatmul.mubr.f32.gmra.mrb[0].mxu0 %v10046
      %v10209 = vpop.f32.mrb[0].mxu0
      %v10210 = vadd.f32 0.0, %v10209
      %v10211 = vpop.f32.mrb[0].mxu0
      %10212 = vmatprep.mubr.f32.mxu0 0.0
      %10213 = vmatmul.mubr.f32.gmra.mrb[0].mxu0 %v10049
      %v10214 = vpop.f32.mrb[0].mxu0
      %v10215 = vadd.f32 0.0, %v10214
      %v10216 = vpop.f32.mrb[0].mxu0
      %10217 = vmatprep.mubr.f32.mxu0 0.0
      %10218 = vmatmul.mubr.f32.gmra.mrb[0].mxu0 %v10052
      %v10219 = vpop.f32.mrb[0].mxu0
      %v10220 = vadd.f32 0.0, %v10219
      %v10221 = vpop.f32.mrb[0].mxu0
      %10222 = vmatprep.mubr.f32.mxu0 0.0
      %10223 = vmatmul.mubr.f32.gmra.mrb[0].mxu0 %v10055
      %v10224 = vpop.f32.mrb[0].mxu0
      %v10225 = vadd.f32 0.0, %v10224
      %v10226 = vpop.f32.mrb[0].mxu0
      %10227 = vmatprep.mubr.f32.mxu0 0.0
      %10228 = vmatmul.mubr.f32.gmra.mrb[0].mxu0 %v10058
      %v10229 = vpop.f32.mrb[0].mxu0
      %v10230 = vadd.f32 0.0, %v10229
      %v10231 = vpop.f32.mrb[0].mxu0
      %10232 = vmatprep.mubr.f32.mxu0 0.0
      %10233 = vmatmul.mubr.f32.gmra.mrb[0].mxu0 %v10061
      %v10234 = vpop.f32.mrb[0].mxu0
      %v10235 = vadd.f32 0.0, %v10234
      %v10236 = vpop.f32.mrb[0].mxu0
      %10237 = vmatprep.mubr.f32.mxu0 0.0
      %10238 = vmatmul.mubr.f32.gmra.mrb[0].mxu0 %v10064
      %v10239 = vpop.f32.mrb[0].mxu0
      %v10240 = vadd.f32 0.0, %v10239
      %v10241 = vpop.f32.mrb[0].mxu0
      %10242 = vmatprep.mubr.f32.mxu0 0.0
      %10243 = vmatmul.mubr.f32.gmra.mrb[0].mxu0 %v10067
      %v10244 = vpop.f32.mrb[0].mxu0
      %v10245 = vadd.f32 0.0, %v10244
      %v10246 = vpop.f32.mrb[0].mxu0
      %10247 = vmatprep.mubr.f32.mxu0 0.0
      %10248 = vmatmul.mubr.f32.gmra.mrb[0].mxu0 %v10070
      %v10249 = vpop.f32.mrb[0].mxu0
      %v10250 = vadd.f32 0.0, %v10249
      %v10251 = vpop.f32.mrb[0].mxu0
      %10252 = vmatprep.mubr.f32.mxu0 0.0
      %10253 = vmatmul.mubr.f32.gmra.mrb[0].mxu0 %v10073
      %v10254 = vpop.f32.mrb[0].mxu0
      %v10255 = vadd.f32 0.0, %v10254
      %v10256 = vpop.f32.mrb[0].mxu0
      %10257 = vmatprep.mubr.f32.mxu0 0.0
      %10258 = vmatmul.mubr.f32.gmra.mrb[0].mxu0 %v10076
      %v10259 = vpop.f32.mrb[0].mxu0
      %v10260 = vadd.f32 0.0, %v10259
      %v10261 = vpop.f32.mrb[0].mxu0
      %10262 = vmatprep.mubr.f32.mxu0 0.0
      %10263 = vmatmul.mubr.f32.gmra.mrb[0].mxu0 %v10079
      %v10264 = vpop.f32.mrb[0].mxu0
      %v10265 = vadd.f32 0.0, %v10264
      %v10266 = vpop.f32.mrb[0].mxu0
      %10267 = vmatprep.mubr.f32.mxu0 0.0
      %10268 = vmatmul.mubr.f32.gmra.mrb[0].mxu0 %v10082
      %v10269 = vpop.f32.mrb[0].mxu0
      %v10270 = vadd.f32 0.0, %v10269
      %v10271 = vpop.f32.mrb[0].mxu0
      %10272 = vmatprep.mubr.f32.mxu0 0.0
      %10273 = vmatmul.mubr.f32.gmra.mrb[0].mxu0 %v10085
      %v10274 = vpop.f32.mrb[0].mxu0
      %v10275 = vadd.f32 0.0, %v10274
      %v10276 = vpop.f32.mrb[0].mxu0
      %10277 = vmatprep.mubr.f32.mxu0 0.0
      %10278 = vmatmul.mubr.f32.gmra.mrb[0].mxu0 %v10088
      %v10279 = vpop.f32.mrb[0].mxu0
      %v10280 = vadd.f32 0.0, %v10279
      %v10281 = vpop.f32.mrb[0].mxu0
      %10282 = vmatprep.mubr.f32.mxu0 0.0
      %10283 = vmatmul.mubr.f32.gmra.mrb[0].mxu0 %v10091
      %v10284 = vpop.f32.mrb[0].mxu0
      %v10285 = vadd.f32 0.0, %v10284
      %v10286 = vpop.f32.mrb[0].mxu0
      %10287 = vmatprep.mubr.f32.mxu0 0.0
      %10288 = vmatmul.mubr.f32.gmra.mrb[0].mxu0 %v10094
      %v10289 = vpop.f32.mrb[0].mxu0
      %v10290 = vadd.f32 0.0, %v10289
      %v10291 = vpop.f32.mrb[0].mxu0
      %10292 = vmatprep.mubr.f32.mxu0 0.0
      %10293 = vmatmul.mubr.f32.gmra.mrb[0].mxu0 %v10097
      %v10294 = vpop.f32.mrb[0].mxu0
      %v10295 = vadd.f32 0.0, %v10294
      %v10296 = vpop.f32.mrb[0].mxu0
      %10297 = vmatprep.mubr.f32.mxu0 0.0
      %10298 = vmatmul.mubr.f32.gmra.mrb[0].mxu0 %v10100
      %v10299 = vpop.f32.mrb[0].mxu0
      %v10300 = vadd.f32 0.0, %v10299
      %v10301 = vpop.f32.mrb[0].mxu0
      %10302 = vmatprep.mubr.f32.mxu0 0.0
      %10303 = vmatmul.mubr.f32.gmra.mrb[0].mxu0 %v10103
      %v10304 = vpop.f32.mrb[0].mxu0
      %v10305 = vadd.f32 0.0, %v10304
      %v10306 = vpop.f32.mrb[0].mxu0
      %10307 = vmatprep.mubr.f32.mxu0 0.0
      %10308 = vmatmul.mubr.f32.gmra.mrb[0].mxu0 %v10106
      %v10309 = vpop.f32.mrb[0].mxu0
      %v10310 = vadd.f32 0.0, %v10309
      %v10311 = vpop.f32.mrb[0].mxu0
      %10312 = vmatprep.mubr.f32.mxu0 0.0
      %10313 = vmatmul.mubr.f32.gmra.mrb[0].mxu0 %v10109
      %v10314 = vpop.f32.mrb[0].mxu0
      %v10315 = vadd.f32 0.0, %v10314
      %v10316 = vpop.f32.mrb[0].mxu0
      %10317 = vmatprep.mubr.f32.mxu0 0.0
      %10318 = vmatmul.mubr.f32.gmra.mrb[0].mxu0 %v10112
      %v10319 = vpop.f32.mrb[0].mxu0
      %v10320 = vadd.f32 0.0, %v10319
      %v10321 = vpop.f32.mrb[0].mxu0
      %10322 = vmatprep.mubr.f32.mxu0 0.0
      %10323 = vmatmul.mubr.f32.gmra.mrb[0].mxu0 %v10115
      %v10324 = vpop.f32.mrb[0].mxu0
      %v10325 = vadd.f32 0.0, %v10324
      %v10326 = vpop.f32.mrb[0].mxu0
      %10327 = vmatprep.mubr.f32.mxu0 0.0
      %10328 = vmatmul.mubr.f32.gmra.mrb[0].mxu0 %v10118
      %v10329 = vpop.f32.mrb[0].mxu0
      %v10330 = vadd.f32 0.0, %v10329
      %v10331 = vpop.f32.mrb[0].mxu0
      %10332 = vmatprep.mubr.f32.mxu0 0.0
      %10333 = vmatmul.mubr.f32.gmra.mrb[0].mxu0 %v10121
      %v10334 = vpop.f32.mrb[0].mxu0
      %v10335 = vadd.f32 0.0, %v10334
      %v10336 = vpop.f32.mrb[0].mxu0
      %10337 = vmatprep.mubr.f32.mxu0 0.0
      %10338 = vmatmul.mubr.f32.gmra.mrb[0].mxu0 %v10124
      %v10339 = vpop.f32.mrb[0].mxu0
      %v10340 = vadd.f32 0.0, %v10339
      %v10341 = vpop.f32.mrb[0].mxu0
      %10342 = vmatprep.mubr.f32.mxu0 0.0
      %10343 = vmatmul.mubr.f32.gmra.mrb[0].mxu0 %v10127
      %v10344 = vpop.f32.mrb[0].mxu0
      %v10345 = vadd.f32 0.0, %v10344
      %v10346 = vpop.f32.mrb[0].mxu0
      %10347 = vmatprep.mubr.f32.mxu0 0.0
      %10348 = vmatmul.mubr.f32.gmra.mrb[0].mxu0 %v10130
      %v10349 = vpop.f32.mrb[0].mxu0
      %v10350 = vadd.f32 0.0, %v10349
      %v10351 = vpop.f32.mrb[0].mxu0
      %10352 = vmatprep.mubr.f32.mxu0 0.0
      %10353 = vmatmul.mubr.f32.gmra.mrb[0].mxu0 %v10133
      %v10354 = vpop.f32.mrb[0].mxu0
      %v10355 = vadd.f32 0.0, %v10354
      %v10356 = vpop.f32.mrb[0].mxu0
      %10357 = vmatprep.mubr.f32.mxu0 0.0
      %10358 = vmatmul.mubr.f32.gmra.mrb[0].mxu0 %v10136
      %v10359 = vpop.f32.mrb[0].mxu0
      %v10360 = vadd.f32 0.0, %v10359
      %v10361 = vpop.f32.mrb[0].mxu0
      %10362 = vdwg.mxu0
      %v10363 = vadd.f32 %v10008, %v10205
      %v10364 = vadd.f32 %v10009, %v10210
      %v10365 = vadd.f32 %v10010, %v10215
      %v10366 = vadd.f32 %v10011, %v10220
      %v10367 = vadd.f32 %v10012, %v10225
      %v10368 = vadd.f32 %v10013, %v10230
      %v10369 = vadd.f32 %v10014, %v10235
      %v10370 = vadd.f32 %v10015, %v10240
      %v10371 = vadd.f32 %v10016, %v10245
      %v10372 = vadd.f32 %v10017, %v10250
      %v10373 = vadd.f32 %v10018, %v10255
      %v10374 = vadd.f32 %v10019, %v10260
      %v10375 = vadd.f32 %v10020, %v10265
      %v10376 = vadd.f32 %v10021, %v10270
      %v10377 = vadd.f32 %v10022, %v10275
      %v10378 = vadd.f32 %v10023, %v10280
      %v10379 = vadd.f32 %v10024, %v10285
      %v10380 = vadd.f32 %v10025, %v10290
      %v10381 = vadd.f32 %v10026, %v10295
      %v10382 = vadd.f32 %v10027, %v10300
      %v10383 = vadd.f32 %v10028, %v10305
      %v10384 = vadd.f32 %v10029, %v10310
      %v10385 = vadd.f32 %v10030, %v10315
      %v10386 = vadd.f32 %v10031, %v10320
      %v10387 = vadd.f32 %v10032, %v10325
      %v10388 = vadd.f32 %v10033, %v10330
      %v10389 = vadd.f32 %v10034, %v10335
      %v10390 = vadd.f32 %v10035, %v10340
      %v10391 = vadd.f32 %v10036, %v10345
      %v10392 = vadd.f32 %v10037, %v10350
      %v10393 = vadd.f32 %v10038, %v10355
      %v10394 = vadd.f32 %v10039, %v10360
      %v10396 = vlaneseq
      %v10397 = vshrl.u32 %v10396, 7
      %v10398 = vsub.s32 0, %v10397
      %v10399 = vrot.slane %v842, %v10398
      %v10401 = vadd.f32 %v10363, %v10399
      %v10402 = vadd.f32 %v10364, %v10399
      %v10403 = vadd.f32 %v10365, %v10399
      %v10404 = vadd.f32 %v10366, %v10399
      %v10405 = vadd.f32 %v10367, %v10399
      %v10406 = vadd.f32 %v10368, %v10399
      %v10407 = vadd.f32 %v10369, %v10399
      %v10408 = vadd.f32 %v10370, %v10399
      %v10409 = vadd.f32 %v10371, %v10399
      %v10410 = vadd.f32 %v10372, %v10399
      %v10411 = vadd.f32 %v10373, %v10399
      %v10412 = vadd.f32 %v10374, %v10399
      %v10413 = vadd.f32 %v10375, %v10399
      %v10414 = vadd.f32 %v10376, %v10399
      %v10415 = vadd.f32 %v10377, %v10399
      %v10416 = vadd.f32 %v10378, %v10399
      %v10417 = vadd.f32 %v10379, %v10399
      %v10418 = vadd.f32 %v10380, %v10399
      %v10419 = vadd.f32 %v10381, %v10399
      %v10420 = vadd.f32 %v10382, %v10399
      %v10421 = vadd.f32 %v10383, %v10399
      %v10422 = vadd.f32 %v10384, %v10399
      %v10423 = vadd.f32 %v10385, %v10399
      %v10424 = vadd.f32 %v10386, %v10399
      %v10425 = vadd.f32 %v10387, %v10399
      %v10426 = vadd.f32 %v10388, %v10399
      %v10427 = vadd.f32 %v10389, %v10399
      %v10428 = vadd.f32 %v10390, %v10399
      %v10429 = vadd.f32 %v10391, %v10399
      %v10430 = vadd.f32 %v10392, %v10399
      %v10431 = vadd.f32 %v10393, %v10399
      %v10432 = vadd.f32 %v10394, %v10399
      %10433 = vst.msk [vmem:[%s278] sm:$0xff] %vm279, %v10401
      %10434 = vst.msk [vmem:[%s278 + $0x8] sm:$0xff] %vm279, %v10402
      %10435 = vst.msk [vmem:[%s278 + $0x10] sm:$0xff] %vm279, %v10403
      %10436 = vst.msk [vmem:[%s278 + $0x18] sm:$0xff] %vm279, %v10404
      %10437 = vst.msk [vmem:[%s278 + $0x20] sm:$0xff] %vm279, %v10405
      %10438 = vst.msk [vmem:[%s278 + $0x28] sm:$0xff] %vm279, %v10406
      %10439 = vst.msk [vmem:[%s278 + $0x30] sm:$0xff] %vm279, %v10407
      %10440 = vst.msk [vmem:[%s278 + $0x38] sm:$0xff] %vm279, %v10408
      %10441 = vst.msk [vmem:[%s278 + $0x40] sm:$0xff] %vm279, %v10409
      %10442 = vst.msk [vmem:[%s278 + $0x48] sm:$0xff] %vm279, %v10410
      %10443 = vst.msk [vmem:[%s278 + $0x50] sm:$0xff] %vm279, %v10411
      %10444 = vst.msk [vmem:[%s278 + $0x58] sm:$0xff] %vm279, %v10412
      %10445 = vst.msk [vmem:[%s278 + $0x60] sm:$0xff] %vm279, %v10413
      %10446 = vst.msk [vmem:[%s278 + $0x68] sm:$0xff] %vm279, %v10414
      %10447 = vst.msk [vmem:[%s278 + $0x70] sm:$0xff] %vm279, %v10415
      %10448 = vst.msk [vmem:[%s278 + $0x78] sm:$0xff] %vm279, %v10416
      %10449 = vst.msk [vmem:[%s278 + $0x80] sm:$0xff] %vm279, %v10417
      %10450 = vst.msk [vmem:[%s278 + $0x88] sm:$0xff] %vm279, %v10418
      %10451 = vst.msk [vmem:[%s278 + $0x90] sm:$0xff] %vm279, %v10419
      %10452 = vst.msk [vmem:[%s278 + $0x98] sm:$0xff] %vm279, %v10420
      %10453 = vst.msk [vmem:[%s278 + $0xa0] sm:$0xff] %vm279, %v10421
      %10454 = vst.msk [vmem:[%s278 + $0xa8] sm:$0xff] %vm279, %v10422
      %10455 = vst.msk [vmem:[%s278 + $0xb0] sm:$0xff] %vm279, %v10423
      %10456 = vst.msk [vmem:[%s278 + $0xb8] sm:$0xff] %vm279, %v10424
      %10457 = vst.msk [vmem:[%s278 + $0xc0] sm:$0xff] %vm279, %v10425
      %10458 = vst.msk [vmem:[%s278 + $0xc8] sm:$0xff] %vm279, %v10426
      %10459 = vst.msk [vmem:[%s278 + $0xd0] sm:$0xff] %vm279, %v10427
      %10460 = vst.msk [vmem:[%s278 + $0xd8] sm:$0xff] %vm279, %v10428
      %10461 = vst.msk [vmem:[%s278 + $0xe0] sm:$0xff] %vm279, %v10429
      %10462 = vst.msk [vmem:[%s278 + $0xe8] sm:$0xff] %vm279, %v10430
      %10463 = vst.msk [vmem:[%s278 + $0xf0] sm:$0xff] %vm279, %v10431
      %10464 = vst.msk [vmem:[%s278 + $0xf8] sm:$0xff] %vm279, %v10432
      %p10465 = scmp.lt.s32.totalorder %s18, 1
      %s10466 = scalar_select %p10465, %s18, 1
      %s10467 = smul.addr %s10466, 32
      %s10468 = smul.addr %s10467, 8
      %s10469 = scalar_lea.vmem %s7, %s10468
      // Predicated region
      $region49: #{tpu_custom_call.1} parent=47 // pred_check
        %p10470 = pneg %p188
      $region50: #{tpu_custom_call.1} parent=47 // pred_check_branch
        %10472 = sbr.rel (%p10470) target = $region52
      $region51: #{tpu_custom_call.1} parent=47 // pred_region
        _
      $region52: #{tpu_custom_call.1} parent=47 // pred_fallthru
        _
    $region48: #{tpu_custom_call.1} parent=5 // pred_fallthru
      _
    %p10473 = scmp.le.s32.totalorder 2, %s13
    // Predicated region
    $region53: #{tpu_custom_call.1} parent=5 // pred_check
      %p10474 = pneg %p10473
    $region54: #{tpu_custom_call.1} parent=5 // pred_check_branch
      %10476 = sbr.rel (%p10474) target = $region56
    $region55: #{tpu_custom_call.1} parent=5 // pred_region
      %s10477 = ssub.s32 %s13, 2
      // Predicated region
      $region57: #{tpu_custom_call.1} parent=55 // pred_check
        %p10478 = pneg %p194
      $region58: #{tpu_custom_call.1} parent=55 // pred_check_branch
        %10480 = sbr.rel (%p10478) target = $region60
      $region59: #{tpu_custom_call.1} parent=55 // pred_region
        %p10481 = scmp.lt.s32.totalorder %s19, 1
        %s10482 = scalar_select %p10481, %s19, 1
        %s10483 = smul.addr %s10482, 32
        %s10484 = smul.addr %s10483, 8
        %s10485 = scalar_lea.vmem %s7, %s10484
      $region60: #{tpu_custom_call.1} parent=55 // pred_fallthru
        _
    $region56: #{tpu_custom_call.1} parent=5 // pred_fallthru
      _
  $region6: #{tpu_custom_call.1} parent=0 // loop_footer
    %s17 = sadd.s32 1, %s13
  $region7: #{tpu_custom_call.1} parent=0 // loop_footer_branch
    %12 = sbr.rel target = $region3
  $region8: #{tpu_custom_call.1} parent=0 // loop_exit
    _

</llo_original>
